<compile_context>
chip_gen: v6e
topology: v6e:2x2x1
jax: 0.10.0
libtpu: 0.0.40
codegen_flags: <defaults>
</compile_context>

<pallas_src>
import functools

import jax
import jax.numpy as jnp
from jax.experimental import pallas as pl
from jax.experimental.pallas import tpu as pltpu

NEG_SLOPE = 0.01               # nn.LeakyReLU default negative_slope
H1, H2, H3 = 2048, 1024, 512   # hidden dims fixed by the module

TM_MAX = 128          # batch rows per grid step (could be 256 on v6e/v7x)
TN_TILE = 512         # head column tile when the output is too wide to fuse
MAX_FUSED_OUT = 2048  # collapse the column axis when padded out_dim <= this


def _round_up(x, m):
    return ((x + m - 1) // m) * m


def _leaky_relu(x):
    return jnp.where(x > 0, x, NEG_SLOPE * x)


@functools.lru_cache(maxsize=None)
def _vmem_limit_bytes():
    """~75% of physical VMEM, capped at 96 MiB (=> ~48 MiB on 64-MiB v7x)."""
    try:
        cap = pltpu.get_tpu_info().vmem_capacity_bytes
    except Exception:
        cap = 64 * 1024 * 1024
    return int(min(cap * 3 // 4, 96 * 1024 * 1024))


def _trunk(x, w1, b1, w2, b2, w3, b3):
    """512 -> 2048 -> 1024 -> 512, bf16 operands, f32 MXU accumulation."""
    h = jnp.dot(x, w1, preferred_element_type=jnp.float32)
    h = _leaky_relu(h + b1.astype(jnp.float32))
    h = jnp.dot(h.astype(jnp.bfloat16), w2, preferred_element_type=jnp.float32)
    h = _leaky_relu(h + b2.astype(jnp.float32))
    h = jnp.dot(h.astype(jnp.bfloat16), w3, preferred_element_type=jnp.float32)
    h = _leaky_relu(h + b3.astype(jnp.float32))
    return h.astype(jnp.bfloat16)


def _fused_kernel(x_ref, w1_ref, b1_ref, w2_ref, b2_ref, w3_ref, b3_ref,
                  w4_ref, b4_ref, o_ref):
    """1-D grid over batch tiles; full head in one lane-dense store."""
    h = _trunk(x_ref[...], w1_ref[...], b1_ref[...], w2_ref[...], b2_ref[...],
               w3_ref[...], b3_ref[...])
    out = jnp.dot(h, w4_ref[...], preferred_element_type=jnp.float32)
    o_ref[...] = (out + b4_ref[...].astype(jnp.float32)).astype(o_ref.dtype)


def _tiled_kernel(x_ref, w1_ref, b1_ref, w2_ref, b2_ref, w3_ref, b3_ref,
                  w4_ref, b4_ref, o_ref, h_ref):
    """2-D grid (batch, head-columns); trunk cached in VMEM at column 0."""
    col = pl.program_id(1)

    @pl.when(col == 0)
    def _():
        h_ref[...] = _trunk(x_ref[...], w1_ref[...], b1_ref[...], w2_ref[...],
                            b2_ref[...], w3_ref[...], b3_ref[...])

    out = jnp.dot(h_ref[...], w4_ref[...], preferred_element_type=jnp.float32)
    o_ref[...] = (out + b4_ref[...].astype(jnp.float32)).astype(o_ref.dtype)


def head_out_pad(mesh_shape):
    out_dim = mesh_shape * 3
    out_pad = _round_up(out_dim, 128)
    if out_pad > MAX_FUSED_OUT:
        out_pad = _round_up(out_dim, TN_TILE)
    return out_pad


def prepare_params(params, mesh_shape):
    """Pad w4/b4 columns once; call outside the hot loop and reuse the result."""
    out_dim = mesh_shape * 3
    out_pad = head_out_pad(mesh_shape)
    p = dict(params)
    if out_pad != out_dim:
        p["w4"] = jnp.pad(params["w4"].astype(jnp.bfloat16),
                          ((0, 0), (0, out_pad - out_dim)))
        p["b4"] = jnp.pad(params["b4"].astype(jnp.bfloat16),
                          ((0, 0), (0, out_pad - out_dim)))
    return p


@functools.partial(jax.jit, static_argnames=("mesh_shape", "out_dtype"))
def mesh_decoder_forward(x, params, *, mesh_shape, out_dtype=jnp.float32):
    """MeshDecoder.forward: (B, in_dim) -> (B, mesh_shape * 3)."""
    B, in_dim = x.shape
    out_dim = mesh_shape * 3
    out_pad = params["w4"].shape[1]
    assert out_pad == head_out_pad(mesh_shape), "call prepare_params() first"

    tm = min(TM_MAX, _round_up(B, 16))     # bf16 sublane tile multiple
    b_pad = _round_up(B, tm)

    x_p = x.astype(jnp.bfloat16)
    if b_pad != B:
        x_p = jnp.pad(x_p, ((0, b_pad - B), (0, 0)))

    n_rows = b_pad // tm
    fused = out_pad <= MAX_FUSED_OUT

    # Grid-invariant operands: single VMEM buffer, DMA'd once, stays resident.
    def const_spec(shape, index_map):
        return pl.BlockSpec(shape, index_map, pipeline_mode=pl.Buffered(1))

    flops = 2 * b_pad * (in_dim * H1 + H1 * H2 + H2 * H3 + H3 * out_pad)
    weight_bytes = 2 * (in_dim * H1 + H1 * H2 + H2 * H3 + H3 * out_pad)
    out_itemsize = jnp.dtype(out_dtype).itemsize
    cost = pl.CostEstimate(
        flops=flops, transcendentals=0,
        bytes_accessed=weight_bytes + 2 * b_pad * in_dim
        + out_itemsize * b_pad * out_pad)

    if fused:
        grid = (n_rows,)
        row = lambda b: (b, 0)
        const = lambda b: (0, 0)
        in_specs = [
            pl.BlockSpec((tm, in_dim), row),
            const_spec((in_dim, H1), const), const_spec((1, H1), const),
            const_spec((H1, H2), const),     const_spec((1, H2), const),
            const_spec((H2, H3), const),     const_spec((1, H3), const),
            const_spec((H3, out_pad), const), const_spec((1, out_pad), const),
        ]
        out_specs = pl.BlockSpec((tm, out_pad), row)
        scratch_shapes = []
        kernel = _fused_kernel
        dims = ("parallel",)
    else:
        # Very wide head: tile columns at 512, keep the trunk result in VMEM.
        n_cols = out_pad // TN_TILE
        grid = (n_rows, n_cols)
        row = lambda b, c: (b, 0)
        const = lambda b, c: (0, 0)
        colmap = lambda b, c: (0, c)
        outmap = lambda b, c: (b, c)
        in_specs = [
            pl.BlockSpec((tm, in_dim), row),
            const_spec((in_dim, H1), const), const_spec((1, H1), const),
            const_spec((H1, H2), const),     const_spec((1, H2), const),
            const_spec((H2, H3), const),     const_spec((1, H3), const),
            pl.BlockSpec((H3, TN_TILE), colmap),
            pl.BlockSpec((1, TN_TILE), colmap),
        ]
        out_specs = pl.BlockSpec((tm, TN_TILE), outmap)
        scratch_shapes = [pltpu.VMEM((tm, H3), jnp.bfloat16)]
        kernel = _tiled_kernel
        dims = ("parallel", "arbitrary")   # column axis must stay innermost

    out = pl.pallas_call(
        kernel,
        out_shape=jax.ShapeDtypeStruct((b_pad, out_pad), out_dtype),
        grid_spec=pltpu.PrefetchScalarGridSpec(
            num_scalar_prefetch=0,
            grid=grid,
            in_specs=in_specs,
            out_specs=out_specs,
            scratch_shapes=scratch_shapes,
        ),
        compiler_params=pltpu.CompilerParams(
            dimension_semantics=dims,
            vmem_limit_bytes=_vmem_limit_bytes(),
        ),
        cost_estimate=cost,
    )(x_p, params["w1"], params["b1"], params["w2"], params["b2"],
      params["w3"], params["b3"], params["w4"], params["b4"])

    # x.view(-1, mesh_shape * 3); slice away padding only if any was added.
    if b_pad != B or out_pad != out_dim:
        out = out[:B, :out_dim]
    return out


def init_mesh_decoder_params(key, in_dim=512, mesh_shape=162):
    """nn.Linear default init U(-1/sqrt(fan_in), +); stored bf16 as (in, out)."""
    dims = [(in_dim, H1), (H1, H2), (H2, H3), (H3, mesh_shape * 3)]
    params = {}
    keys = jax.random.split(key, 2 * len(dims))
    for idx, (fan_in, fan_out) in enumerate(dims):
        bound = 1.0 / (fan_in ** 0.5)
        w = jax.random.uniform(keys[2 * idx], (fan_in, fan_out),
                               dtype=jnp.float32, minval=-bound, maxval=bound)
        b = jax.random.uniform(keys[2 * idx + 1], (1, fan_out),
                               dtype=jnp.float32, minval=-bound, maxval=bound)
        params[f"w{idx + 1}"] = w.astype(jnp.bfloat16)  # (in, out) == W.T
        params[f"b{idx + 1}"] = b.astype(jnp.bfloat16)
    return params


def _reference_forward(x, params):
    """Pure-JAX reference with identical bf16-input / f32-accumulate numerics."""
    h = x.astype(jnp.bfloat16)
    for i in (1, 2, 3):
        h = jnp.dot(h, params[f"w{i}"], preferred_element_type=jnp.float32)
        h = _leaky_relu(h + params[f"b{i}"].astype(jnp.float32))
        h = h.astype(jnp.bfloat16)
    out = jnp.dot(h, params["w4"], preferred_element_type=jnp.float32)
    return out + params["b4"].astype(jnp.float32)


if __name__ == "__main__":
    B = 2
    IN_DIM = 512      # encoder feature dim (module default)
    MESH_SHAPE = 162  # small ico-sphere vertex count -> out_dim = 486

    key = jax.random.PRNGKey(0)
    k_x, k_p = jax.random.split(key)

    x = jax.random.normal(k_x, (B, IN_DIM), dtype=jnp.float32)
    params = init_mesh_decoder_params(k_p, in_dim=IN_DIM,
                                      mesh_shape=MESH_SHAPE)
    padded_params = prepare_params(params, MESH_SHAPE)

    out = mesh_decoder_forward(x, padded_params, mesh_shape=MESH_SHAPE)
    out = jax.block_until_ready(out)

    ref = _reference_forward(x, params)
    assert out.shape == (B, MESH_SHAPE * 3), out.shape
    max_err = float(jnp.max(jnp.abs(out - ref)))
    assert jnp.allclose(out, ref, rtol=1e-2, atol=1e-2), f"max_err={max_err}"

    print("KERNEL_OK")
</pallas_src>

<mosaic_0001>
module attributes {stable_mosaic.version = 11 : i64} {
  func.func @_fused_kernel(%arg0: i32, %arg1: memref<16x512xbf16, #tpu.memory_space<vmem>>, %arg2: memref<512x2048xbf16, #tpu.memory_space<vmem>>, %arg3: memref<1x2048xbf16, #tpu.memory_space<vmem>>, %arg4: memref<2048x1024xbf16, #tpu.memory_space<vmem>>, %arg5: memref<1x1024xbf16, #tpu.memory_space<vmem>>, %arg6: memref<1024x512xbf16, #tpu.memory_space<vmem>>, %arg7: memref<1x512xbf16, #tpu.memory_space<vmem>>, %arg8: memref<512x512xbf16, #tpu.memory_space<vmem>>, %arg9: memref<1x512xbf16, #tpu.memory_space<vmem>>, %arg10: memref<16x512xf32, #tpu.memory_space<vmem>>) attributes {dimension_semantics = [#tpu.dimension_semantics<parallel>], iteration_bounds = array<i64: 1>, scalar_prefetch = 0 : i64, scratch_operands = 0 : i64, tpu.core_type = #tpu.core_type<tc>, window_params = [{transform_indices = @transform_0, window_bounds = array<i64: 16, 512>}, {pipeline_mode = #tpu.pipeline_mode<synchronous>, transform_indices = @transform_1, window_bounds = array<i64: 512, 2048>}, {pipeline_mode = #tpu.pipeline_mode<synchronous>, transform_indices = @transform_2, window_bounds = array<i64: 1, 2048>}, {pipeline_mode = #tpu.pipeline_mode<synchronous>, transform_indices = @transform_3, window_bounds = array<i64: 2048, 1024>}, {pipeline_mode = #tpu.pipeline_mode<synchronous>, transform_indices = @transform_4, window_bounds = array<i64: 1, 1024>}, {pipeline_mode = #tpu.pipeline_mode<synchronous>, transform_indices = @transform_5, window_bounds = array<i64: 1024, 512>}, {pipeline_mode = #tpu.pipeline_mode<synchronous>, transform_indices = @transform_6, window_bounds = array<i64: 1, 512>}, {pipeline_mode = #tpu.pipeline_mode<synchronous>, transform_indices = @transform_7, window_bounds = array<i64: 512, 512>}, {pipeline_mode = #tpu.pipeline_mode<synchronous>, transform_indices = @transform_8, window_bounds = array<i64: 1, 512>}, {transform_indices = @transform_9, window_bounds = array<i64: 16, 512>}]} {
    %c0 = arith.constant 0 : index
    %c0_0 = arith.constant 0 : index
    %0 = vector.load %arg1[%c0, %c0_0] : memref<16x512xbf16, #tpu.memory_space<vmem>>, vector<16x512xbf16>
    %c0_1 = arith.constant 0 : index
    %c0_2 = arith.constant 0 : index
    %1 = vector.load %arg2[%c0_1, %c0_2] : memref<512x2048xbf16, #tpu.memory_space<vmem>>, vector<512x2048xbf16>
    %c0_3 = arith.constant 0 : index
    %c0_4 = arith.constant 0 : index
    %2 = vector.load %arg3[%c0_3, %c0_4] : memref<1x2048xbf16, #tpu.memory_space<vmem>>, vector<1x2048xbf16>
    %c0_5 = arith.constant 0 : index
    %c0_6 = arith.constant 0 : index
    %3 = vector.load %arg4[%c0_5, %c0_6] : memref<2048x1024xbf16, #tpu.memory_space<vmem>>, vector<2048x1024xbf16>
    %c0_7 = arith.constant 0 : index
    %c0_8 = arith.constant 0 : index
    %4 = vector.load %arg5[%c0_7, %c0_8] : memref<1x1024xbf16, #tpu.memory_space<vmem>>, vector<1x1024xbf16>
    %c0_9 = arith.constant 0 : index
    %c0_10 = arith.constant 0 : index
    %5 = vector.load %arg6[%c0_9, %c0_10] : memref<1024x512xbf16, #tpu.memory_space<vmem>>, vector<1024x512xbf16>
    %c0_11 = arith.constant 0 : index
    %c0_12 = arith.constant 0 : index
    %6 = vector.load %arg7[%c0_11, %c0_12] : memref<1x512xbf16, #tpu.memory_space<vmem>>, vector<1x512xbf16>
    %cst = arith.constant dense<0.000000e+00> : vector<16x2048xf32>
    %7 = tpu.matmul %0, %1, %cst {dimension_numbers = #tpu.dot_dimension_numbers<[1], [0], [0], [1], [0, 0, 1, 1], [], []>} : vector<16x512xbf16>, vector<512x2048xbf16>, vector<16x2048xf32> -> vector<16x2048xf32>
    %8 = arith.extf %2 : vector<1x2048xbf16> to vector<1x2048xf32>
    %9 = vector.broadcast %8 : vector<1x2048xf32> to vector<16x2048xf32>
    %10 = arith.addf %7, %9 : vector<16x2048xf32>
    %cst_13 = arith.constant 0.000000e+00 : f32
    %11 = vector.broadcast %cst_13 : f32 to vector<16x2048xf32>
    %12 = arith.cmpf ogt, %10, %11 : vector<16x2048xf32>
    %cst_14 = arith.constant 0.00999999977 : f32
    %13 = vector.broadcast %cst_14 : f32 to vector<16x2048xf32>
    %14 = arith.mulf %13, %10 : vector<16x2048xf32>
    %15 = arith.select %12, %10, %14 : vector<16x2048xi1>, vector<16x2048xf32>
    %16 = arith.truncf %15 : vector<16x2048xf32> to vector<16x2048xbf16>
    %cst_15 = arith.constant dense<0.000000e+00> : vector<16x1024xf32>
    %17 = tpu.matmul %16, %3, %cst_15 {dimension_numbers = #tpu.dot_dimension_numbers<[1], [0], [0], [1], [0, 0, 1, 1], [], []>} : vector<16x2048xbf16>, vector<2048x1024xbf16>, vector<16x1024xf32> -> vector<16x1024xf32>
    %18 = arith.extf %4 : vector<1x1024xbf16> to vector<1x1024xf32>
    %19 = vector.broadcast %18 : vector<1x1024xf32> to vector<16x1024xf32>
    %20 = arith.addf %17, %19 : vector<16x1024xf32>
    %cst_16 = arith.constant 0.000000e+00 : f32
    %21 = vector.broadcast %cst_16 : f32 to vector<16x1024xf32>
    %22 = arith.cmpf ogt, %20, %21 : vector<16x1024xf32>
    %cst_17 = arith.constant 0.00999999977 : f32
    %23 = vector.broadcast %cst_17 : f32 to vector<16x1024xf32>
    %24 = arith.mulf %23, %20 : vector<16x1024xf32>
    %25 = arith.select %22, %20, %24 : vector<16x1024xi1>, vector<16x1024xf32>
    %26 = arith.truncf %25 : vector<16x1024xf32> to vector<16x1024xbf16>
    %cst_18 = arith.constant dense<0.000000e+00> : vector<16x512xf32>
    %27 = tpu.matmul %26, %5, %cst_18 {dimension_numbers = #tpu.dot_dimension_numbers<[1], [0], [0], [1], [0, 0, 1, 1], [], []>} : vector<16x1024xbf16>, vector<1024x512xbf16>, vector<16x512xf32> -> vector<16x512xf32>
    %28 = arith.extf %6 : vector<1x512xbf16> to vector<1x512xf32>
    %29 = vector.broadcast %28 : vector<1x512xf32> to vector<16x512xf32>
    %30 = arith.addf %27, %29 : vector<16x512xf32>
    %cst_19 = arith.constant 0.000000e+00 : f32
    %31 = vector.broadcast %cst_19 : f32 to vector<16x512xf32>
    %32 = arith.cmpf ogt, %30, %31 : vector<16x512xf32>
    %cst_20 = arith.constant 0.00999999977 : f32
    %33 = vector.broadcast %cst_20 : f32 to vector<16x512xf32>
    %34 = arith.mulf %33, %30 : vector<16x512xf32>
    %35 = arith.select %32, %30, %34 : vector<16x512xi1>, vector<16x512xf32>
    %36 = arith.truncf %35 : vector<16x512xf32> to vector<16x512xbf16>
    %c0_21 = arith.constant 0 : index
    %c0_22 = arith.constant 0 : index
    %37 = vector.load %arg8[%c0_21, %c0_22] : memref<512x512xbf16, #tpu.memory_space<vmem>>, vector<512x512xbf16>
    %cst_23 = arith.constant dense<0.000000e+00> : vector<16x512xf32>
    %38 = tpu.matmul %36, %37, %cst_23 {dimension_numbers = #tpu.dot_dimension_numbers<[1], [0], [0], [1], [0, 0, 1, 1], [], []>} : vector<16x512xbf16>, vector<512x512xbf16>, vector<16x512xf32> -> vector<16x512xf32>
    %c0_24 = arith.constant 0 : index
    %c0_25 = arith.constant 0 : index
    %39 = vector.load %arg9[%c0_24, %c0_25] : memref<1x512xbf16, #tpu.memory_space<vmem>>, vector<1x512xbf16>
    %40 = arith.extf %39 : vector<1x512xbf16> to vector<1x512xf32>
    %41 = vector.broadcast %40 : vector<1x512xf32> to vector<16x512xf32>
    %42 = arith.addf %38, %41 : vector<16x512xf32>
    %c0_26 = arith.constant 0 : index
    %c0_27 = arith.constant 0 : index
    %43 = vector.load %arg10[%c0_26, %c0_27] : memref<16x512xf32, #tpu.memory_space<vmem>>, vector<16x512xf32>
    tpu.vector_store %arg10[%c0_26, %c0_27], %42 {strides = array<i32>} : memref<16x512xf32, #tpu.memory_space<vmem>>, vector<16x512xf32>,
    return
  }
  func.func @transform_0(%arg0: i32) -> (i32, i32) {
    %c0_i32 = arith.constant 0 : i32
    %c0_i32_0 = arith.constant 0 : i32
    return %arg0, %c0_i32 : i32, i32
  }
  func.func @transform_1(%arg0: i32) -> (i32, i32) {
    %c0_i32 = arith.constant 0 : i32
    %c0_i32_0 = arith.constant 0 : i32
    %c0_i32_1 = arith.constant 0 : i32
    return %c0_i32, %c0_i32_0 : i32, i32
  }
  func.func @transform_2(%arg0: i32) -> (i32, i32) {
    %c0_i32 = arith.constant 0 : i32
    %c0_i32_0 = arith.constant 0 : i32
    %c0_i32_1 = arith.constant 0 : i32
    return %c0_i32, %c0_i32_0 : i32, i32
  }
  func.func @transform_3(%arg0: i32) -> (i32, i32) {
    %c0_i32 = arith.constant 0 : i32
    %c0_i32_0 = arith.constant 0 : i32
    %c0_i32_1 = arith.constant 0 : i32
    return %c0_i32, %c0_i32_0 : i32, i32
  }
  func.func @transform_4(%arg0: i32) -> (i32, i32) {
    %c0_i32 = arith.constant 0 : i32
    %c0_i32_0 = arith.constant 0 : i32
    %c0_i32_1 = arith.constant 0 : i32
    return %c0_i32, %c0_i32_0 : i32, i32
  }
  func.func @transform_5(%arg0: i32) -> (i32, i32) {
    %c0_i32 = arith.constant 0 : i32
    %c0_i32_0 = arith.constant 0 : i32
    %c0_i32_1 = arith.constant 0 : i32
    return %c0_i32, %c0_i32_0 : i32, i32
  }
  func.func @transform_6(%arg0: i32) -> (i32, i32) {
    %c0_i32 = arith.constant 0 : i32
    %c0_i32_0 = arith.constant 0 : i32
    %c0_i32_1 = arith.constant 0 : i32
    return %c0_i32, %c0_i32_0 : i32, i32
  }
  func.func @transform_7(%arg0: i32) -> (i32, i32) {
    %c0_i32 = arith.constant 0 : i32
    %c0_i32_0 = arith.constant 0 : i32
    %c0_i32_1 = arith.constant 0 : i32
    return %c0_i32, %c0_i32_0 : i32, i32
  }
  func.func @transform_8(%arg0: i32) -> (i32, i32) {
    %c0_i32 = arith.constant 0 : i32
    %c0_i32_0 = arith.constant 0 : i32
    %c0_i32_1 = arith.constant 0 : i32
    return %c0_i32, %c0_i32_0 : i32, i32
  }
  func.func @transform_9(%arg0: i32) -> (i32, i32) {
    %c0_i32 = arith.constant 0 : i32
    %c0_i32_0 = arith.constant 0 : i32
    return %arg0, %c0_i32 : i32, i32
  }
}

</mosaic_0001>

<llo_original>
// kernel: mesh_decoder_forward.1
$region0: #{mesh_decoder_forward.1}
  #allocation0 [shape = 'u32[]', space=smem, size = 0x4, offset = 0x4, fixed_abs, tag = 'smem constant byte address 0x4 - core index']
  #allocation1 [shape = 'u32[144,128]{1,0:T(1,128)}', space=vmem, size = 0x12000, scoped, tag = 'internal scratch']
  %s0 = inlined_call_operand.vmem [shape: bf16[16,512], index: 0, kind: input, shape index: {}]
  %s1 = inlined_call_operand.hbm [shape: bf16[512,2048], index: 1, kind: input, shape index: {}]
  %s2 = inlined_call_operand.hbm [shape: bf16[1,2048], index: 2, kind: input, shape index: {}]
  %s3 = inlined_call_operand.hbm [shape: bf16[2048,1024], index: 3, kind: input, shape index: {}]
  %s4 = inlined_call_operand.hbm [shape: bf16[1,1024], index: 4, kind: input, shape index: {}]
  %s5 = inlined_call_operand.hbm [shape: bf16[1024,512], index: 5, kind: input, shape index: {}]
  %s6 = inlined_call_operand.hbm [shape: bf16[1,512], index: 6, kind: input, shape index: {}]
  %s7 = inlined_call_operand.hbm [shape: bf16[512,512], index: 7, kind: input, shape index: {}]
  %s8 = inlined_call_operand.hbm [shape: bf16[1,512], index: 8, kind: input, shape index: {}]
  %s9 = inlined_call_operand.vmem [shape: f32[16,512], index: 9, kind: output, shape index: {}]
  %s10 = sld [smem:[#allocation0]]
  $region78: #{mesh_decoder_forward.1} parent=0
    _
  %s12 = ssub.s32 1, %s10
  %s13 = scalar_select 0, %s12, %s10
  $region1: #{mesh_decoder_forward.1} parent=0
    #allocation2 [shape = 'u8[2097152]{0}', space=vmem, size = 0x200000, scoped, tag = 'input window, operand 1, single buffered']
    #allocation3 [shape = 's32[1]{0}', space=sflag, size = 0x4, scoped, tag = 'scoped memory for mesh_decoder_forward.1']
    #allocation4 [shape = 'u8[8192]{0}', space=vmem, size = 0x2000, scoped, tag = 'input window, operand 2, single buffered']
    #allocation5 [shape = 's32[1]{0}', space=sflag, size = 0x4, scoped, tag = 'scoped memory for mesh_decoder_forward.1']
    #allocation6 [shape = 'u8[4194304]{0}', space=vmem, size = 0x400000, scoped, tag = 'input window, operand 3, single buffered']
    #allocation7 [shape = 'u8[4096]{0}', space=vmem, size = 0x1000, scoped, tag = 'input window, operand 4, single buffered']
    #allocation8 [shape = 's32[1]{0}', space=sflag, size = 0x4, scoped, tag = 'scoped memory for mesh_decoder_forward.1']
    #allocation9 [shape = 'u8[1048576]{0}', space=vmem, size = 0x100000, scoped, tag = 'input window, operand 5, single buffered']
    #allocation10 [shape = 'u8[2048]{0}', space=vmem, size = 0x800, scoped, tag = 'input window, operand 6, single buffered']
    #allocation11 [shape = 's32[1]{0}', space=sflag, size = 0x4, scoped, tag = 'scoped memory for mesh_decoder_forward.1']
    #allocation12 [shape = 'u8[524288]{0}', space=vmem, size = 0x80000, scoped, tag = 'input window, operand 7, single buffered']
    #allocation13 [shape = 'u8[2048]{0}', space=vmem, size = 0x800, scoped, tag = 'input window, operand 8, single buffered']
    #allocation14 [shape = 's32[1]{0}', space=sflag, size = 0x4, scoped, tag = 'scoped memory for mesh_decoder_forward.1']
    %14 = vsyncpa [#allocation3], 0
    %15 = vsyncpa [#allocation5], 0
    %16 = vsyncpa [#allocation8], 0
    %17 = vsyncpa [#allocation11], 0
    %18 = vsyncpa [#allocation14], 0
    // Predicated region
    $region2: #{mesh_decoder_forward.1} parent=1 // pred_check
      _
    $region3: #{mesh_decoder_forward.1} parent=1 // pred_check_branch
      %20 = sbr.rel (0) target = $region5
    $region4: #{mesh_decoder_forward.1} parent=1 // pred_region
      _
    $region5: #{mesh_decoder_forward.1} parent=1 // pred_fallthru
      _
    // Predicated region
    $region6: #{mesh_decoder_forward.1} parent=1 // pred_check
      _
    $region7: #{mesh_decoder_forward.1} parent=1 // pred_check_branch
      %22 = sbr.rel (0) target = $region9
    $region8: #{mesh_decoder_forward.1} parent=1 // pred_region
      %s24 = ssub.s32 65536, 65536
      %25 = vsyncadd [#allocation3], %s24
      %s26 = sshll.u32 [#allocation2], 4
      %s27 = int_to_ptr.vmem [resolvable:$true] %s26
      %32 = dma.hbm_to_vmem [thread:$0]  %s1, 65536, %s27, [#allocation3], 1024, 1024, 64
    $region9: #{mesh_decoder_forward.1} parent=1 // pred_fallthru
      _
    // Predicated region
    $region10: #{mesh_decoder_forward.1} parent=1 // pred_check
      _
    $region11: #{mesh_decoder_forward.1} parent=1 // pred_check_branch
      %34 = sbr.rel (0) target = $region13
    $region12: #{mesh_decoder_forward.1} parent=1 // pred_region
      %s36 = ssub.s32 256, 256
      %37 = vsyncadd [#allocation5], %s36
      %s39 = sshll.u32 [#allocation4], 4
      %s40 = int_to_ptr.vmem [resolvable:$true] %s39
      %42 = dma.hbm_to_vmem [thread:$0]  %s2, 256, %s40, [#allocation5]
    $region13: #{mesh_decoder_forward.1} parent=1 // pred_fallthru
      _
    // Predicated region
    $region14: #{mesh_decoder_forward.1} parent=1 // pred_check
      _
    $region15: #{mesh_decoder_forward.1} parent=1 // pred_check_branch
      %44 = sbr.rel (0) target = $region17
    $region16: #{mesh_decoder_forward.1} parent=1 // pred_region
      %s46 = ssub.s32 131072, 131072
      %47 = vsyncadd [#allocation5], %s46
      %s48 = sshll.u32 [#allocation6], 4
      %s49 = int_to_ptr.vmem [resolvable:$true] %s48
      %54 = dma.hbm_to_vmem [thread:$0]  %s3, 131072, %s49, [#allocation5], 512, 512, 32
    $region17: #{mesh_decoder_forward.1} parent=1 // pred_fallthru
      _
    // Predicated region
    $region18: #{mesh_decoder_forward.1} parent=1 // pred_check
      _
    $region19: #{mesh_decoder_forward.1} parent=1 // pred_check_branch
      %56 = sbr.rel (0) target = $region21
    $region20: #{mesh_decoder_forward.1} parent=1 // pred_region
      %s58 = ssub.s32 128, 128
      %59 = vsyncadd [#allocation8], %s58
      %s61 = sshll.u32 [#allocation7], 4
      %s62 = int_to_ptr.vmem [resolvable:$true] %s61
      %64 = dma.hbm_to_vmem [thread:$0]  %s4, 128, %s62, [#allocation8]
    $region21: #{mesh_decoder_forward.1} parent=1 // pred_fallthru
      _
    // Predicated region
    $region22: #{mesh_decoder_forward.1} parent=1 // pred_check
      _
    $region23: #{mesh_decoder_forward.1} parent=1 // pred_check_branch
      %66 = sbr.rel (0) target = $region25
    $region24: #{mesh_decoder_forward.1} parent=1 // pred_region
      %s68 = ssub.s32 32768, 32768
      %69 = vsyncadd [#allocation8], %s68
      %s70 = sshll.u32 [#allocation9], 4
      %s71 = int_to_ptr.vmem [resolvable:$true] %s70
      %76 = dma.hbm_to_vmem [thread:$0]  %s5, 32768, %s71, [#allocation8], 256, 256, 16
    $region25: #{mesh_decoder_forward.1} parent=1 // pred_fallthru
      _
    // Predicated region
    $region26: #{mesh_decoder_forward.1} parent=1 // pred_check
      _
    $region27: #{mesh_decoder_forward.1} parent=1 // pred_check_branch
      %78 = sbr.rel (0) target = $region29
    $region28: #{mesh_decoder_forward.1} parent=1 // pred_region
      %s80 = ssub.s32 64, 64
      %81 = vsyncadd [#allocation11], %s80
      %s83 = sshll.u32 [#allocation10], 4
      %s84 = int_to_ptr.vmem [resolvable:$true] %s83
      %86 = dma.hbm_to_vmem [thread:$0]  %s6, 64, %s84, [#allocation11]
    $region29: #{mesh_decoder_forward.1} parent=1 // pred_fallthru
      _
    // Predicated region
    $region30: #{mesh_decoder_forward.1} parent=1 // pred_check
      _
    $region31: #{mesh_decoder_forward.1} parent=1 // pred_check_branch
      %88 = sbr.rel (0) target = $region33
    $region32: #{mesh_decoder_forward.1} parent=1 // pred_region
      %s90 = ssub.s32 16384, 16384
      %91 = vsyncadd [#allocation11], %s90
      %s92 = sshll.u32 [#allocation12], 4
      %s93 = int_to_ptr.vmem [resolvable:$true] %s92
      %98 = dma.hbm_to_vmem [thread:$0]  %s7, 16384, %s93, [#allocation11], 256, 256, 16
    $region33: #{mesh_decoder_forward.1} parent=1 // pred_fallthru
      _
    // Predicated region
    $region34: #{mesh_decoder_forward.1} parent=1 // pred_check
      _
    $region35: #{mesh_decoder_forward.1} parent=1 // pred_check_branch
      %100 = sbr.rel (0) target = $region37
    $region36: #{mesh_decoder_forward.1} parent=1 // pred_region
      %s102 = ssub.s32 64, 64
      %103 = vsyncadd [#allocation14], %s102
      %s105 = sshll.u32 [#allocation13], 4
      %s106 = int_to_ptr.vmem [resolvable:$true] %s105
      %108 = dma.hbm_to_vmem [thread:$0]  %s8, 64, %s106, [#allocation14]
    $region37: #{mesh_decoder_forward.1} parent=1 // pred_fallthru
      _
    // Predicated region
    $region38: #{mesh_decoder_forward.1} parent=1 // pred_check
      _
    $region39: #{mesh_decoder_forward.1} parent=1 // pred_check_branch
      %110 = sbr.rel (0) target = $region41
    $region40: #{mesh_decoder_forward.1} parent=1 // pred_region
      %111 = dma.done [#allocation3], 65536
    $region41: #{mesh_decoder_forward.1} parent=1 // pred_fallthru
      _
    // Predicated region
    $region42: #{mesh_decoder_forward.1} parent=1 // pred_check
      _
    $region43: #{mesh_decoder_forward.1} parent=1 // pred_check_branch
      %113 = sbr.rel (0) target = $region45
    $region44: #{mesh_decoder_forward.1} parent=1 // pred_region
      %114 = dma.done [#allocation5], 256
    $region45: #{mesh_decoder_forward.1} parent=1 // pred_fallthru
      _
    // Predicated region
    $region46: #{mesh_decoder_forward.1} parent=1 // pred_check
      _
    $region47: #{mesh_decoder_forward.1} parent=1 // pred_check_branch
      %116 = sbr.rel (0) target = $region49
    $region48: #{mesh_decoder_forward.1} parent=1 // pred_region
      %117 = dma.done [#allocation5], 131072
    $region49: #{mesh_decoder_forward.1} parent=1 // pred_fallthru
      _
    // Predicated region
    $region50: #{mesh_decoder_forward.1} parent=1 // pred_check
      _
    $region51: #{mesh_decoder_forward.1} parent=1 // pred_check_branch
      %119 = sbr.rel (0) target = $region53
    $region52: #{mesh_decoder_forward.1} parent=1 // pred_region
      %120 = dma.done [#allocation8], 128
    $region53: #{mesh_decoder_forward.1} parent=1 // pred_fallthru
      _
    // Predicated region
    $region54: #{mesh_decoder_forward.1} parent=1 // pred_check
      _
    $region55: #{mesh_decoder_forward.1} parent=1 // pred_check_branch
      %122 = sbr.rel (0) target = $region57
    $region56: #{mesh_decoder_forward.1} parent=1 // pred_region
      %123 = dma.done [#allocation8], 32768
    $region57: #{mesh_decoder_forward.1} parent=1 // pred_fallthru
      _
    // Predicated region
    $region58: #{mesh_decoder_forward.1} parent=1 // pred_check
      _
    $region59: #{mesh_decoder_forward.1} parent=1 // pred_check_branch
      %125 = sbr.rel (0) target = $region61
    $region60: #{mesh_decoder_forward.1} parent=1 // pred_region
      %126 = dma.done [#allocation11], 64
    $region61: #{mesh_decoder_forward.1} parent=1 // pred_fallthru
      _
    // Predicated region
    $region62: #{mesh_decoder_forward.1} parent=1 // pred_check
      _
    $region63: #{mesh_decoder_forward.1} parent=1 // pred_check_branch
      %128 = sbr.rel (0) target = $region65
    $region64: #{mesh_decoder_forward.1} parent=1 // pred_region
      %129 = dma.done [#allocation11], 16384
    $region65: #{mesh_decoder_forward.1} parent=1 // pred_fallthru
      _
    // Predicated region
    $region66: #{mesh_decoder_forward.1} parent=1 // pred_check
      _
    $region67: #{mesh_decoder_forward.1} parent=1 // pred_check_branch
      %131 = sbr.rel (0) target = $region69
    $region68: #{mesh_decoder_forward.1} parent=1 // pred_region
      %132 = dma.done [#allocation14], 64
    $region69: #{mesh_decoder_forward.1} parent=1 // pred_fallthru
      _
    %v133 = vld [vmem:[%s0] sm:$0xff]
    %v134 = vld [vmem:[%s0 + $0x8] sm:$0xff]
    %v135 = vld [vmem:[%s0 + $0x10] sm:$0xff]
    %v136 = vld [vmem:[%s0 + $0x18] sm:$0xff]
    %v137 = vld [vmem:[#allocation2] sm:$0xff]
    %v138 = vld [vmem:[#allocation2 + $0x8] sm:$0xff]
    %v139 = vld [vmem:[#allocation2 + $0x10] sm:$0xff]
    %v140 = vld [vmem:[#allocation2 + $0x18] sm:$0xff]
    %v141 = vld [vmem:[#allocation2 + $0x20] sm:$0xff]
    %v142 = vld [vmem:[#allocation2 + $0x28] sm:$0xff]
    %v143 = vld [vmem:[#allocation2 + $0x30] sm:$0xff]
    %v144 = vld [vmem:[#allocation2 + $0x38] sm:$0xff]
    %v145 = vld [vmem:[#allocation2 + $0x40] sm:$0xff]
    %v146 = vld [vmem:[#allocation2 + $0x48] sm:$0xff]
    %v147 = vld [vmem:[#allocation2 + $0x50] sm:$0xff]
    %v148 = vld [vmem:[#allocation2 + $0x58] sm:$0xff]
    %v149 = vld [vmem:[#allocation2 + $0x60] sm:$0xff]
    %v150 = vld [vmem:[#allocation2 + $0x68] sm:$0xff]
    %v151 = vld [vmem:[#allocation2 + $0x70] sm:$0xff]
    %v152 = vld [vmem:[#allocation2 + $0x78] sm:$0xff]
    %v153 = vld [vmem:[#allocation2 + $0x80] sm:$0xff]
    %v154 = vld [vmem:[#allocation2 + $0x88] sm:$0xff]
    %v155 = vld [vmem:[#allocation2 + $0x90] sm:$0xff]
    %v156 = vld [vmem:[#allocation2 + $0x98] sm:$0xff]
    %v157 = vld [vmem:[#allocation2 + $0xa0] sm:$0xff]
    %v158 = vld [vmem:[#allocation2 + $0xa8] sm:$0xff]
    %v159 = vld [vmem:[#allocation2 + $0xb0] sm:$0xff]
    %v160 = vld [vmem:[#allocation2 + $0xb8] sm:$0xff]
    %v161 = vld [vmem:[#allocation2 + $0xc0] sm:$0xff]
    %v162 = vld [vmem:[#allocation2 + $0xc8] sm:$0xff]
    %v163 = vld [vmem:[#allocation2 + $0xd0] sm:$0xff]
    %v164 = vld [vmem:[#allocation2 + $0xd8] sm:$0xff]
    %v165 = vld [vmem:[#allocation2 + $0xe0] sm:$0xff]
    %v166 = vld [vmem:[#allocation2 + $0xe8] sm:$0xff]
    %v167 = vld [vmem:[#allocation2 + $0xf0] sm:$0xff]
    %v168 = vld [vmem:[#allocation2 + $0xf8] sm:$0xff]
    %v169 = vld [vmem:[#allocation2 + $0x100] sm:$0xff]
    %v170 = vld [vmem:[#allocation2 + $0x108] sm:$0xff]
    %v171 = vld [vmem:[#allocation2 + $0x110] sm:$0xff]
    %v172 = vld [vmem:[#allocation2 + $0x118] sm:$0xff]
    %v173 = vld [vmem:[#allocation2 + $0x120] sm:$0xff]
    %v174 = vld [vmem:[#allocation2 + $0x128] sm:$0xff]
    %v175 = vld [vmem:[#allocation2 + $0x130] sm:$0xff]
    %v176 = vld [vmem:[#allocation2 + $0x138] sm:$0xff]
    %v177 = vld [vmem:[#allocation2 + $0x140] sm:$0xff]
    %v178 = vld [vmem:[#allocation2 + $0x148] sm:$0xff]
    %v179 = vld [vmem:[#allocation2 + $0x150] sm:$0xff]
    %v180 = vld [vmem:[#allocation2 + $0x158] sm:$0xff]
    %v181 = vld [vmem:[#allocation2 + $0x160] sm:$0xff]
    %v182 = vld [vmem:[#allocation2 + $0x168] sm:$0xff]
    %v183 = vld [vmem:[#allocation2 + $0x170] sm:$0xff]
    %v184 = vld [vmem:[#allocation2 + $0x178] sm:$0xff]
    %v185 = vld [vmem:[#allocation2 + $0x180] sm:$0xff]
    %v186 = vld [vmem:[#allocation2 + $0x188] sm:$0xff]
    %v187 = vld [vmem:[#allocation2 + $0x190] sm:$0xff]
    %v188 = vld [vmem:[#allocation2 + $0x198] sm:$0xff]
    %v189 = vld [vmem:[#allocation2 + $0x1a0] sm:$0xff]
    %v190 = vld [vmem:[#allocation2 + $0x1a8] sm:$0xff]
    %v191 = vld [vmem:[#allocation2 + $0x1b0] sm:$0xff]
    %v192 = vld [vmem:[#allocation2 + $0x1b8] sm:$0xff]
    %v193 = vld [vmem:[#allocation2 + $0x1c0] sm:$0xff]
    %v194 = vld [vmem:[#allocation2 + $0x1c8] sm:$0xff]
    %v195 = vld [vmem:[#allocation2 + $0x1d0] sm:$0xff]
    %v196 = vld [vmem:[#allocation2 + $0x1d8] sm:$0xff]
    %v197 = vld [vmem:[#allocation2 + $0x1e0] sm:$0xff]
    %v198 = vld [vmem:[#allocation2 + $0x1e8] sm:$0xff]
    %v199 = vld [vmem:[#allocation2 + $0x1f0] sm:$0xff]
    %v200 = vld [vmem:[#allocation2 + $0x1f8] sm:$0xff]
    %v201 = vld [vmem:[#allocation2 + $0x200] sm:$0xff]
    %v202 = vld [vmem:[#allocation2 + $0x208] sm:$0xff]
    %v203 = vld [vmem:[#allocation2 + $0x210] sm:$0xff]
    %v204 = vld [vmem:[#allocation2 + $0x218] sm:$0xff]
    %v205 = vld [vmem:[#allocation2 + $0x220] sm:$0xff]
    %v206 = vld [vmem:[#allocation2 + $0x228] sm:$0xff]
    %v207 = vld [vmem:[#allocation2 + $0x230] sm:$0xff]
    %v208 = vld [vmem:[#allocation2 + $0x238] sm:$0xff]
    %v209 = vld [vmem:[#allocation2 + $0x240] sm:$0xff]
    %v210 = vld [vmem:[#allocation2 + $0x248] sm:$0xff]
    %v211 = vld [vmem:[#allocation2 + $0x250] sm:$0xff]
    %v212 = vld [vmem:[#allocation2 + $0x258] sm:$0xff]
    %v213 = vld [vmem:[#allocation2 + $0x260] sm:$0xff]
    %v214 = vld [vmem:[#allocation2 + $0x268] sm:$0xff]
    %v215 = vld [vmem:[#allocation2 + $0x270] sm:$0xff]
    %v216 = vld [vmem:[#allocation2 + $0x278] sm:$0xff]
    %v217 = vld [vmem:[#allocation2 + $0x280] sm:$0xff]
    %v218 = vld [vmem:[#allocation2 + $0x288] sm:$0xff]
    %v219 = vld [vmem:[#allocation2 + $0x290] sm:$0xff]
    %v220 = vld [vmem:[#allocation2 + $0x298] sm:$0xff]
    %v221 = vld [vmem:[#allocation2 + $0x2a0] sm:$0xff]
    %v222 = vld [vmem:[#allocation2 + $0x2a8] sm:$0xff]
    %v223 = vld [vmem:[#allocation2 + $0x2b0] sm:$0xff]
    %v224 = vld [vmem:[#allocation2 + $0x2b8] sm:$0xff]
    %v225 = vld [vmem:[#allocation2 + $0x2c0] sm:$0xff]
    %v226 = vld [vmem:[#allocation2 + $0x2c8] sm:$0xff]
    %v227 = vld [vmem:[#allocation2 + $0x2d0] sm:$0xff]
    %v228 = vld [vmem:[#allocation2 + $0x2d8] sm:$0xff]
    %v229 = vld [vmem:[#allocation2 + $0x2e0] sm:$0xff]
    %v230 = vld [vmem:[#allocation2 + $0x2e8] sm:$0xff]
    %v231 = vld [vmem:[#allocation2 + $0x2f0] sm:$0xff]
    %v232 = vld [vmem:[#allocation2 + $0x2f8] sm:$0xff]
    %v233 = vld [vmem:[#allocation2 + $0x300] sm:$0xff]
    %v234 = vld [vmem:[#allocation2 + $0x308] sm:$0xff]
    %v235 = vld [vmem:[#allocation2 + $0x310] sm:$0xff]
    %v236 = vld [vmem:[#allocation2 + $0x318] sm:$0xff]
    %v237 = vld [vmem:[#allocation2 + $0x320] sm:$0xff]
    %v238 = vld [vmem:[#allocation2 + $0x328] sm:$0xff]
    %v239 = vld [vmem:[#allocation2 + $0x330] sm:$0xff]
    %v240 = vld [vmem:[#allocation2 + $0x338] sm:$0xff]
    %v241 = vld [vmem:[#allocation2 + $0x340] sm:$0xff]
    %v242 = vld [vmem:[#allocation2 + $0x348] sm:$0xff]
    %v243 = vld [vmem:[#allocation2 + $0x350] sm:$0xff]
    %v244 = vld [vmem:[#allocation2 + $0x358] sm:$0xff]
    %v245 = vld [vmem:[#allocation2 + $0x360] sm:$0xff]
    %v246 = vld [vmem:[#allocation2 + $0x368] sm:$0xff]
    %v247 = vld [vmem:[#allocation2 + $0x370] sm:$0xff]
    %v248 = vld [vmem:[#allocation2 + $0x378] sm:$0xff]
    %v249 = vld [vmem:[#allocation2 + $0x380] sm:$0xff]
    %v250 = vld [vmem:[#allocation2 + $0x388] sm:$0xff]
    %v251 = vld [vmem:[#allocation2 + $0x390] sm:$0xff]
    %v252 = vld [vmem:[#allocation2 + $0x398] sm:$0xff]
    %v253 = vld [vmem:[#allocation2 + $0x3a0] sm:$0xff]
    %v254 = vld [vmem:[#allocation2 + $0x3a8] sm:$0xff]
    %v255 = vld [vmem:[#allocation2 + $0x3b0] sm:$0xff]
    %v256 = vld [vmem:[#allocation2 + $0x3b8] sm:$0xff]
    %v257 = vld [vmem:[#allocation2 + $0x3c0] sm:$0xff]
    %v258 = vld [vmem:[#allocation2 + $0x3c8] sm:$0xff]
    %v259 = vld [vmem:[#allocation2 + $0x3d0] sm:$0xff]
    %v260 = vld [vmem:[#allocation2 + $0x3d8] sm:$0xff]
    %v261 = vld [vmem:[#allocation2 + $0x3e0] sm:$0xff]
    %v262 = vld [vmem:[#allocation2 + $0x3e8] sm:$0xff]
    %v263 = vld [vmem:[#allocation2 + $0x3f0] sm:$0xff]
    %v264 = vld [vmem:[#allocation2 + $0x3f8] sm:$0xff]
    %v265 = vld [vmem:[#allocation2 + $0x400] sm:$0xff]
    %v266 = vld [vmem:[#allocation2 + $0x408] sm:$0xff]
    %v267 = vld [vmem:[#allocation2 + $0x410] sm:$0xff]
    %v268 = vld [vmem:[#allocation2 + $0x418] sm:$0xff]
    %v269 = vld [vmem:[#allocation2 + $0x420] sm:$0xff]
    %v270 = vld [vmem:[#allocation2 + $0x428] sm:$0xff]
    %v271 = vld [vmem:[#allocation2 + $0x430] sm:$0xff]
    %v272 = vld [vmem:[#allocation2 + $0x438] sm:$0xff]
    %v273 = vld [vmem:[#allocation2 + $0x440] sm:$0xff]
    %v274 = vld [vmem:[#allocation2 + $0x448] sm:$0xff]
    %v275 = vld [vmem:[#allocation2 + $0x450] sm:$0xff]
    %v276 = vld [vmem:[#allocation2 + $0x458] sm:$0xff]
    %v277 = vld [vmem:[#allocation2 + $0x460] sm:$0xff]
    %v278 = vld [vmem:[#allocation2 + $0x468] sm:$0xff]
    %v279 = vld [vmem:[#allocation2 + $0x470] sm:$0xff]
    %v280 = vld [vmem:[#allocation2 + $0x478] sm:$0xff]
    %v281 = vld [vmem:[#allocation2 + $0x480] sm:$0xff]
    %v282 = vld [vmem:[#allocation2 + $0x488] sm:$0xff]
    %v283 = vld [vmem:[#allocation2 + $0x490] sm:$0xff]
    %v284 = vld [vmem:[#allocation2 + $0x498] sm:$0xff]
    %v285 = vld [vmem:[#allocation2 + $0x4a0] sm:$0xff]
    %v286 = vld [vmem:[#allocation2 + $0x4a8] sm:$0xff]
    %v287 = vld [vmem:[#allocation2 + $0x4b0] sm:$0xff]
    %v288 = vld [vmem:[#allocation2 + $0x4b8] sm:$0xff]
    %v289 = vld [vmem:[#allocation2 + $0x4c0] sm:$0xff]
    %v290 = vld [vmem:[#allocation2 + $0x4c8] sm:$0xff]
    %v291 = vld [vmem:[#allocation2 + $0x4d0] sm:$0xff]
    %v292 = vld [vmem:[#allocation2 + $0x4d8] sm:$0xff]
    %v293 = vld [vmem:[#allocation2 + $0x4e0] sm:$0xff]
    %v294 = vld [vmem:[#allocation2 + $0x4e8] sm:$0xff]
    %v295 = vld [vmem:[#allocation2 + $0x4f0] sm:$0xff]
    %v296 = vld [vmem:[#allocation2 + $0x4f8] sm:$0xff]
    %v297 = vld [vmem:[#allocation2 + $0x500] sm:$0xff]
    %v298 = vld [vmem:[#allocation2 + $0x508] sm:$0xff]
    %v299 = vld [vmem:[#allocation2 + $0x510] sm:$0xff]
    %v300 = vld [vmem:[#allocation2 + $0x518] sm:$0xff]
    %v301 = vld [vmem:[#allocation2 + $0x520] sm:$0xff]
    %v302 = vld [vmem:[#allocation2 + $0x528] sm:$0xff]
    %v303 = vld [vmem:[#allocation2 + $0x530] sm:$0xff]
    %v304 = vld [vmem:[#allocation2 + $0x538] sm:$0xff]
    %v305 = vld [vmem:[#allocation2 + $0x540] sm:$0xff]
    %v306 = vld [vmem:[#allocation2 + $0x548] sm:$0xff]
    %v307 = vld [vmem:[#allocation2 + $0x550] sm:$0xff]
    %v308 = vld [vmem:[#allocation2 + $0x558] sm:$0xff]
    %v309 = vld [vmem:[#allocation2 + $0x560] sm:$0xff]
    %v310 = vld [vmem:[#allocation2 + $0x568] sm:$0xff]
    %v311 = vld [vmem:[#allocation2 + $0x570] sm:$0xff]
    %v312 = vld [vmem:[#allocation2 + $0x578] sm:$0xff]
    %v313 = vld [vmem:[#allocation2 + $0x580] sm:$0xff]
    %v314 = vld [vmem:[#allocation2 + $0x588] sm:$0xff]
    %v315 = vld [vmem:[#allocation2 + $0x590] sm:$0xff]
    %v316 = vld [vmem:[#allocation2 + $0x598] sm:$0xff]
    %v317 = vld [vmem:[#allocation2 + $0x5a0] sm:$0xff]
    %v318 = vld [vmem:[#allocation2 + $0x5a8] sm:$0xff]
    %v319 = vld [vmem:[#allocation2 + $0x5b0] sm:$0xff]
    %v320 = vld [vmem:[#allocation2 + $0x5b8] sm:$0xff]
    %v321 = vld [vmem:[#allocation2 + $0x5c0] sm:$0xff]
    %v322 = vld [vmem:[#allocation2 + $0x5c8] sm:$0xff]
    %v323 = vld [vmem:[#allocation2 + $0x5d0] sm:$0xff]
    %v324 = vld [vmem:[#allocation2 + $0x5d8] sm:$0xff]
    %v325 = vld [vmem:[#allocation2 + $0x5e0] sm:$0xff]
    %v326 = vld [vmem:[#allocation2 + $0x5e8] sm:$0xff]
    %v327 = vld [vmem:[#allocation2 + $0x5f0] sm:$0xff]
    %v328 = vld [vmem:[#allocation2 + $0x5f8] sm:$0xff]
    %v329 = vld [vmem:[#allocation2 + $0x600] sm:$0xff]
    %v330 = vld [vmem:[#allocation2 + $0x608] sm:$0xff]
    %v331 = vld [vmem:[#allocation2 + $0x610] sm:$0xff]
    %v332 = vld [vmem:[#allocation2 + $0x618] sm:$0xff]
    %v333 = vld [vmem:[#allocation2 + $0x620] sm:$0xff]
    %v334 = vld [vmem:[#allocation2 + $0x628] sm:$0xff]
    %v335 = vld [vmem:[#allocation2 + $0x630] sm:$0xff]
    %v336 = vld [vmem:[#allocation2 + $0x638] sm:$0xff]
    %v337 = vld [vmem:[#allocation2 + $0x640] sm:$0xff]
    %v338 = vld [vmem:[#allocation2 + $0x648] sm:$0xff]
    %v339 = vld [vmem:[#allocation2 + $0x650] sm:$0xff]
    %v340 = vld [vmem:[#allocation2 + $0x658] sm:$0xff]
    %v341 = vld [vmem:[#allocation2 + $0x660] sm:$0xff]
    %v342 = vld [vmem:[#allocation2 + $0x668] sm:$0xff]
    %v343 = vld [vmem:[#allocation2 + $0x670] sm:$0xff]
    %v344 = vld [vmem:[#allocation2 + $0x678] sm:$0xff]
    %v345 = vld [vmem:[#allocation2 + $0x680] sm:$0xff]
    %v346 = vld [vmem:[#allocation2 + $0x688] sm:$0xff]
    %v347 = vld [vmem:[#allocation2 + $0x690] sm:$0xff]
    %v348 = vld [vmem:[#allocation2 + $0x698] sm:$0xff]
    %v349 = vld [vmem:[#allocation2 + $0x6a0] sm:$0xff]
    %v350 = vld [vmem:[#allocation2 + $0x6a8] sm:$0xff]
    %v351 = vld [vmem:[#allocation2 + $0x6b0] sm:$0xff]
    %v352 = vld [vmem:[#allocation2 + $0x6b8] sm:$0xff]
    %v353 = vld [vmem:[#allocation2 + $0x6c0] sm:$0xff]
    %v354 = vld [vmem:[#allocation2 + $0x6c8] sm:$0xff]
    %v355 = vld [vmem:[#allocation2 + $0x6d0] sm:$0xff]
    %v356 = vld [vmem:[#allocation2 + $0x6d8] sm:$0xff]
    %v357 = vld [vmem:[#allocation2 + $0x6e0] sm:$0xff]
    %v358 = vld [vmem:[#allocation2 + $0x6e8] sm:$0xff]
    %v359 = vld [vmem:[#allocation2 + $0x6f0] sm:$0xff]
    %v360 = vld [vmem:[#allocation2 + $0x6f8] sm:$0xff]
    %v361 = vld [vmem:[#allocation2 + $0x700] sm:$0xff]
    %v362 = vld [vmem:[#allocation2 + $0x708] sm:$0xff]
    %v363 = vld [vmem:[#allocation2 + $0x710] sm:$0xff]
    %v364 = vld [vmem:[#allocation2 + $0x718] sm:$0xff]
    %v365 = vld [vmem:[#allocation2 + $0x720] sm:$0xff]
    %v366 = vld [vmem:[#allocation2 + $0x728] sm:$0xff]
    %v367 = vld [vmem:[#allocation2 + $0x730] sm:$0xff]
    %v368 = vld [vmem:[#allocation2 + $0x738] sm:$0xff]
    %v369 = vld [vmem:[#allocation2 + $0x740] sm:$0xff]
    %v370 = vld [vmem:[#allocation2 + $0x748] sm:$0xff]
    %v371 = vld [vmem:[#allocation2 + $0x750] sm:$0xff]
    %v372 = vld [vmem:[#allocation2 + $0x758] sm:$0xff]
    %v373 = vld [vmem:[#allocation2 + $0x760] sm:$0xff]
    %v374 = vld [vmem:[#allocation2 + $0x768] sm:$0xff]
    %v375 = vld [vmem:[#allocation2 + $0x770] sm:$0xff]
    %v376 = vld [vmem:[#allocation2 + $0x778] sm:$0xff]
    %v377 = vld [vmem:[#allocation2 + $0x780] sm:$0xff]
    %v378 = vld [vmem:[#allocation2 + $0x788] sm:$0xff]
    %v379 = vld [vmem:[#allocation2 + $0x790] sm:$0xff]
    %v380 = vld [vmem:[#allocation2 + $0x798] sm:$0xff]
    %v381 = vld [vmem:[#allocation2 + $0x7a0] sm:$0xff]
    %v382 = vld [vmem:[#allocation2 + $0x7a8] sm:$0xff]
    %v383 = vld [vmem:[#allocation2 + $0x7b0] sm:$0xff]
    %v384 = vld [vmem:[#allocation2 + $0x7b8] sm:$0xff]
    %v385 = vld [vmem:[#allocation2 + $0x7c0] sm:$0xff]
    %v386 = vld [vmem:[#allocation2 + $0x7c8] sm:$0xff]
    %v387 = vld [vmem:[#allocation2 + $0x7d0] sm:$0xff]
    %v388 = vld [vmem:[#allocation2 + $0x7d8] sm:$0xff]
    %v389 = vld [vmem:[#allocation2 + $0x7e0] sm:$0xff]
    %v390 = vld [vmem:[#allocation2 + $0x7e8] sm:$0xff]
    %v391 = vld [vmem:[#allocation2 + $0x7f0] sm:$0xff]
    %v392 = vld [vmem:[#allocation2 + $0x7f8] sm:$0xff]
    %v393 = vld [vmem:[#allocation2 + $0x800] sm:$0xff]
    %v394 = vld [vmem:[#allocation2 + $0x808] sm:$0xff]
    %v395 = vld [vmem:[#allocation2 + $0x810] sm:$0xff]
    %v396 = vld [vmem:[#allocation2 + $0x818] sm:$0xff]
    %v397 = vld [vmem:[#allocation2 + $0x820] sm:$0xff]
    %v398 = vld [vmem:[#allocation2 + $0x828] sm:$0xff]
    %v399 = vld [vmem:[#allocation2 + $0x830] sm:$0xff]
    %v400 = vld [vmem:[#allocation2 + $0x838] sm:$0xff]
    %v401 = vld [vmem:[#allocation2 + $0x840] sm:$0xff]
    %v402 = vld [vmem:[#allocation2 + $0x848] sm:$0xff]
    %v403 = vld [vmem:[#allocation2 + $0x850] sm:$0xff]
    %v404 = vld [vmem:[#allocation2 + $0x858] sm:$0xff]
    %v405 = vld [vmem:[#allocation2 + $0x860] sm:$0xff]
    %v406 = vld [vmem:[#allocation2 + $0x868] sm:$0xff]
    %v407 = vld [vmem:[#allocation2 + $0x870] sm:$0xff]
    %v408 = vld [vmem:[#allocation2 + $0x878] sm:$0xff]
    %v409 = vld [vmem:[#allocation2 + $0x880] sm:$0xff]
    %v410 = vld [vmem:[#allocation2 + $0x888] sm:$0xff]
    %v411 = vld [vmem:[#allocation2 + $0x890] sm:$0xff]
    %v412 = vld [vmem:[#allocation2 + $0x898] sm:$0xff]
    %v413 = vld [vmem:[#allocation2 + $0x8a0] sm:$0xff]
    %v414 = vld [vmem:[#allocation2 + $0x8a8] sm:$0xff]
    %v415 = vld [vmem:[#allocation2 + $0x8b0] sm:$0xff]
    %v416 = vld [vmem:[#allocation2 + $0x8b8] sm:$0xff]
    %v417 = vld [vmem:[#allocation2 + $0x8c0] sm:$0xff]
    %v418 = vld [vmem:[#allocation2 + $0x8c8] sm:$0xff]
    %v419 = vld [vmem:[#allocation2 + $0x8d0] sm:$0xff]
    %v420 = vld [vmem:[#allocation2 + $0x8d8] sm:$0xff]
    %v421 = vld [vmem:[#allocation2 + $0x8e0] sm:$0xff]
    %v422 = vld [vmem:[#allocation2 + $0x8e8] sm:$0xff]
    %v423 = vld [vmem:[#allocation2 + $0x8f0] sm:$0xff]
    %v424 = vld [vmem:[#allocation2 + $0x8f8] sm:$0xff]
    %v425 = vld [vmem:[#allocation2 + $0x900] sm:$0xff]
    %v426 = vld [vmem:[#allocation2 + $0x908] sm:$0xff]
    %v427 = vld [vmem:[#allocation2 + $0x910] sm:$0xff]
    %v428 = vld [vmem:[#allocation2 + $0x918] sm:$0xff]
    %v429 = vld [vmem:[#allocation2 + $0x920] sm:$0xff]
    %v430 = vld [vmem:[#allocation2 + $0x928] sm:$0xff]
    %v431 = vld [vmem:[#allocation2 + $0x930] sm:$0xff]
    %v432 = vld [vmem:[#allocation2 + $0x938] sm:$0xff]
    %v433 = vld [vmem:[#allocation2 + $0x940] sm:$0xff]
    %v434 = vld [vmem:[#allocation2 + $0x948] sm:$0xff]
    %v435 = vld [vmem:[#allocation2 + $0x950] sm:$0xff]
    %v436 = vld [vmem:[#allocation2 + $0x958] sm:$0xff]
    %v437 = vld [vmem:[#allocation2 + $0x960] sm:$0xff]
    %v438 = vld [vmem:[#allocation2 + $0x968] sm:$0xff]
    %v439 = vld [vmem:[#allocation2 + $0x970] sm:$0xff]
    %v440 = vld [vmem:[#allocation2 + $0x978] sm:$0xff]
    %v441 = vld [vmem:[#allocation2 + $0x980] sm:$0xff]
    %v442 = vld [vmem:[#allocation2 + $0x988] sm:$0xff]
    %v443 = vld [vmem:[#allocation2 + $0x990] sm:$0xff]
    %v444 = vld [vmem:[#allocation2 + $0x998] sm:$0xff]
    %v445 = vld [vmem:[#allocation2 + $0x9a0] sm:$0xff]
    %v446 = vld [vmem:[#allocation2 + $0x9a8] sm:$0xff]
    %v447 = vld [vmem:[#allocation2 + $0x9b0] sm:$0xff]
    %v448 = vld [vmem:[#allocation2 + $0x9b8] sm:$0xff]
    %v449 = vld [vmem:[#allocation2 + $0x9c0] sm:$0xff]
    %v450 = vld [vmem:[#allocation2 + $0x9c8] sm:$0xff]
    %v451 = vld [vmem:[#allocation2 + $0x9d0] sm:$0xff]
    %v452 = vld [vmem:[#allocation2 + $0x9d8] sm:$0xff]
    %v453 = vld [vmem:[#allocation2 + $0x9e0] sm:$0xff]
    %v454 = vld [vmem:[#allocation2 + $0x9e8] sm:$0xff]
    %v455 = vld [vmem:[#allocation2 + $0x9f0] sm:$0xff]
    %v456 = vld [vmem:[#allocation2 + $0x9f8] sm:$0xff]
    %v457 = vld [vmem:[#allocation2 + $0xa00] sm:$0xff]
    %v458 = vld [vmem:[#allocation2 + $0xa08] sm:$0xff]
    %v459 = vld [vmem:[#allocation2 + $0xa10] sm:$0xff]
    %v460 = vld [vmem:[#allocation2 + $0xa18] sm:$0xff]
    %v461 = vld [vmem:[#allocation2 + $0xa20] sm:$0xff]
    %v462 = vld [vmem:[#allocation2 + $0xa28] sm:$0xff]
    %v463 = vld [vmem:[#allocation2 + $0xa30] sm:$0xff]
    %v464 = vld [vmem:[#allocation2 + $0xa38] sm:$0xff]
    %v465 = vld [vmem:[#allocation2 + $0xa40] sm:$0xff]
    %v466 = vld [vmem:[#allocation2 + $0xa48] sm:$0xff]
    %v467 = vld [vmem:[#allocation2 + $0xa50] sm:$0xff]
    %v468 = vld [vmem:[#allocation2 + $0xa58] sm:$0xff]
    %v469 = vld [vmem:[#allocation2 + $0xa60] sm:$0xff]
    %v470 = vld [vmem:[#allocation2 + $0xa68] sm:$0xff]
    %v471 = vld [vmem:[#allocation2 + $0xa70] sm:$0xff]
    %v472 = vld [vmem:[#allocation2 + $0xa78] sm:$0xff]
    %v473 = vld [vmem:[#allocation2 + $0xa80] sm:$0xff]
    %v474 = vld [vmem:[#allocation2 + $0xa88] sm:$0xff]
    %v475 = vld [vmem:[#allocation2 + $0xa90] sm:$0xff]
    %v476 = vld [vmem:[#allocation2 + $0xa98] sm:$0xff]
    %v477 = vld [vmem:[#allocation2 + $0xaa0] sm:$0xff]
    %v478 = vld [vmem:[#allocation2 + $0xaa8] sm:$0xff]
    %v479 = vld [vmem:[#allocation2 + $0xab0] sm:$0xff]
    %v480 = vld [vmem:[#allocation2 + $0xab8] sm:$0xff]
    %v481 = vld [vmem:[#allocation2 + $0xac0] sm:$0xff]
    %v482 = vld [vmem:[#allocation2 + $0xac8] sm:$0xff]
    %v483 = vld [vmem:[#allocation2 + $0xad0] sm:$0xff]
    %v484 = vld [vmem:[#allocation2 + $0xad8] sm:$0xff]
    %v485 = vld [vmem:[#allocation2 + $0xae0] sm:$0xff]
    %v486 = vld [vmem:[#allocation2 + $0xae8] sm:$0xff]
    %v487 = vld [vmem:[#allocation2 + $0xaf0] sm:$0xff]
    %v488 = vld [vmem:[#allocation2 + $0xaf8] sm:$0xff]
    %v489 = vld [vmem:[#allocation2 + $0xb00] sm:$0xff]
    %v490 = vld [vmem:[#allocation2 + $0xb08] sm:$0xff]
    %v491 = vld [vmem:[#allocation2 + $0xb10] sm:$0xff]
    %v492 = vld [vmem:[#allocation2 + $0xb18] sm:$0xff]
    %v493 = vld [vmem:[#allocation2 + $0xb20] sm:$0xff]
    %v494 = vld [vmem:[#allocation2 + $0xb28] sm:$0xff]
    %v495 = vld [vmem:[#allocation2 + $0xb30] sm:$0xff]
    %v496 = vld [vmem:[#allocation2 + $0xb38] sm:$0xff]
    %v497 = vld [vmem:[#allocation2 + $0xb40] sm:$0xff]
    %v498 = vld [vmem:[#allocation2 + $0xb48] sm:$0xff]
    %v499 = vld [vmem:[#allocation2 + $0xb50] sm:$0xff]
    %v500 = vld [vmem:[#allocation2 + $0xb58] sm:$0xff]
    %v501 = vld [vmem:[#allocation2 + $0xb60] sm:$0xff]
    %v502 = vld [vmem:[#allocation2 + $0xb68] sm:$0xff]
    %v503 = vld [vmem:[#allocation2 + $0xb70] sm:$0xff]
    %v504 = vld [vmem:[#allocation2 + $0xb78] sm:$0xff]
    %v505 = vld [vmem:[#allocation2 + $0xb80] sm:$0xff]
    %v506 = vld [vmem:[#allocation2 + $0xb88] sm:$0xff]
    %v507 = vld [vmem:[#allocation2 + $0xb90] sm:$0xff]
    %v508 = vld [vmem:[#allocation2 + $0xb98] sm:$0xff]
    %v509 = vld [vmem:[#allocation2 + $0xba0] sm:$0xff]
    %v510 = vld [vmem:[#allocation2 + $0xba8] sm:$0xff]
    %v511 = vld [vmem:[#allocation2 + $0xbb0] sm:$0xff]
    %v512 = vld [vmem:[#allocation2 + $0xbb8] sm:$0xff]
    %v513 = vld [vmem:[#allocation2 + $0xbc0] sm:$0xff]
    %v514 = vld [vmem:[#allocation2 + $0xbc8] sm:$0xff]
    %v515 = vld [vmem:[#allocation2 + $0xbd0] sm:$0xff]
    %v516 = vld [vmem:[#allocation2 + $0xbd8] sm:$0xff]
    %v517 = vld [vmem:[#allocation2 + $0xbe0] sm:$0xff]
    %v518 = vld [vmem:[#allocation2 + $0xbe8] sm:$0xff]
    %v519 = vld [vmem:[#allocation2 + $0xbf0] sm:$0xff]
    %v520 = vld [vmem:[#allocation2 + $0xbf8] sm:$0xff]
    %v521 = vld [vmem:[#allocation2 + $0xc00] sm:$0xff]
    %v522 = vld [vmem:[#allocation2 + $0xc08] sm:$0xff]
    %v523 = vld [vmem:[#allocation2 + $0xc10] sm:$0xff]
    %v524 = vld [vmem:[#allocation2 + $0xc18] sm:$0xff]
    %v525 = vld [vmem:[#allocation2 + $0xc20] sm:$0xff]
    %v526 = vld [vmem:[#allocation2 + $0xc28] sm:$0xff]
    %v527 = vld [vmem:[#allocation2 + $0xc30] sm:$0xff]
    %v528 = vld [vmem:[#allocation2 + $0xc38] sm:$0xff]
    %v529 = vld [vmem:[#allocation2 + $0xc40] sm:$0xff]
    %v530 = vld [vmem:[#allocation2 + $0xc48] sm:$0xff]
    %v531 = vld [vmem:[#allocation2 + $0xc50] sm:$0xff]
    %v532 = vld [vmem:[#allocation2 + $0xc58] sm:$0xff]
    %v533 = vld [vmem:[#allocation2 + $0xc60] sm:$0xff]
    %v534 = vld [vmem:[#allocation2 + $0xc68] sm:$0xff]
    %v535 = vld [vmem:[#allocation2 + $0xc70] sm:$0xff]
    %v536 = vld [vmem:[#allocation2 + $0xc78] sm:$0xff]
    %v537 = vld [vmem:[#allocation2 + $0xc80] sm:$0xff]
    %v538 = vld [vmem:[#allocation2 + $0xc88] sm:$0xff]
    %v539 = vld [vmem:[#allocation2 + $0xc90] sm:$0xff]
    %v540 = vld [vmem:[#allocation2 + $0xc98] sm:$0xff]
    %v541 = vld [vmem:[#allocation2 + $0xca0] sm:$0xff]
    %v542 = vld [vmem:[#allocation2 + $0xca8] sm:$0xff]
    %v543 = vld [vmem:[#allocation2 + $0xcb0] sm:$0xff]
    %v544 = vld [vmem:[#allocation2 + $0xcb8] sm:$0xff]
    %v545 = vld [vmem:[#allocation2 + $0xcc0] sm:$0xff]
    %v546 = vld [vmem:[#allocation2 + $0xcc8] sm:$0xff]
    %v547 = vld [vmem:[#allocation2 + $0xcd0] sm:$0xff]
    %v548 = vld [vmem:[#allocation2 + $0xcd8] sm:$0xff]
    %v549 = vld [vmem:[#allocation2 + $0xce0] sm:$0xff]
    %v550 = vld [vmem:[#allocation2 + $0xce8] sm:$0xff]
    %v551 = vld [vmem:[#allocation2 + $0xcf0] sm:$0xff]
    %v552 = vld [vmem:[#allocation2 + $0xcf8] sm:$0xff]
    %v553 = vld [vmem:[#allocation2 + $0xd00] sm:$0xff]
    %v554 = vld [vmem:[#allocation2 + $0xd08] sm:$0xff]
    %v555 = vld [vmem:[#allocation2 + $0xd10] sm:$0xff]
    %v556 = vld [vmem:[#allocation2 + $0xd18] sm:$0xff]
    %v557 = vld [vmem:[#allocation2 + $0xd20] sm:$0xff]
    %v558 = vld [vmem:[#allocation2 + $0xd28] sm:$0xff]
    %v559 = vld [vmem:[#allocation2 + $0xd30] sm:$0xff]
    %v560 = vld [vmem:[#allocation2 + $0xd38] sm:$0xff]
    %v561 = vld [vmem:[#allocation2 + $0xd40] sm:$0xff]
    %v562 = vld [vmem:[#allocation2 + $0xd48] sm:$0xff]
    %v563 = vld [vmem:[#allocation2 + $0xd50] sm:$0xff]
    %v564 = vld [vmem:[#allocation2 + $0xd58] sm:$0xff]
    %v565 = vld [vmem:[#allocation2 + $0xd60] sm:$0xff]
    %v566 = vld [vmem:[#allocation2 + $0xd68] sm:$0xff]
    %v567 = vld [vmem:[#allocation2 + $0xd70] sm:$0xff]
    %v568 = vld [vmem:[#allocation2 + $0xd78] sm:$0xff]
    %v569 = vld [vmem:[#allocation2 + $0xd80] sm:$0xff]
    %v570 = vld [vmem:[#allocation2 + $0xd88] sm:$0xff]
    %v571 = vld [vmem:[#allocation2 + $0xd90] sm:$0xff]
    %v572 = vld [vmem:[#allocation2 + $0xd98] sm:$0xff]
    %v573 = vld [vmem:[#allocation2 + $0xda0] sm:$0xff]
    %v574 = vld [vmem:[#allocation2 + $0xda8] sm:$0xff]
    %v575 = vld [vmem:[#allocation2 + $0xdb0] sm:$0xff]
    %v576 = vld [vmem:[#allocation2 + $0xdb8] sm:$0xff]
    %v577 = vld [vmem:[#allocation2 + $0xdc0] sm:$0xff]
    %v578 = vld [vmem:[#allocation2 + $0xdc8] sm:$0xff]
    %v579 = vld [vmem:[#allocation2 + $0xdd0] sm:$0xff]
    %v580 = vld [vmem:[#allocation2 + $0xdd8] sm:$0xff]
    %v581 = vld [vmem:[#allocation2 + $0xde0] sm:$0xff]
    %v582 = vld [vmem:[#allocation2 + $0xde8] sm:$0xff]
    %v583 = vld [vmem:[#allocation2 + $0xdf0] sm:$0xff]
    %v584 = vld [vmem:[#allocation2 + $0xdf8] sm:$0xff]
    %v585 = vld [vmem:[#allocation2 + $0xe00] sm:$0xff]
    %v586 = vld [vmem:[#allocation2 + $0xe08] sm:$0xff]
    %v587 = vld [vmem:[#allocation2 + $0xe10] sm:$0xff]
    %v588 = vld [vmem:[#allocation2 + $0xe18] sm:$0xff]
    %v589 = vld [vmem:[#allocation2 + $0xe20] sm:$0xff]
    %v590 = vld [vmem:[#allocation2 + $0xe28] sm:$0xff]
    %v591 = vld [vmem:[#allocation2 + $0xe30] sm:$0xff]
    %v592 = vld [vmem:[#allocation2 + $0xe38] sm:$0xff]
    %v593 = vld [vmem:[#allocation2 + $0xe40] sm:$0xff]
    %v594 = vld [vmem:[#allocation2 + $0xe48] sm:$0xff]
    %v595 = vld [vmem:[#allocation2 + $0xe50] sm:$0xff]
    %v596 = vld [vmem:[#allocation2 + $0xe58] sm:$0xff]
    %v597 = vld [vmem:[#allocation2 + $0xe60] sm:$0xff]
    %v598 = vld [vmem:[#allocation2 + $0xe68] sm:$0xff]
    %v599 = vld [vmem:[#allocation2 + $0xe70] sm:$0xff]
    %v600 = vld [vmem:[#allocation2 + $0xe78] sm:$0xff]
    %v601 = vld [vmem:[#allocation2 + $0xe80] sm:$0xff]
    %v602 = vld [vmem:[#allocation2 + $0xe88] sm:$0xff]
    %v603 = vld [vmem:[#allocation2 + $0xe90] sm:$0xff]
    %v604 = vld [vmem:[#allocation2 + $0xe98] sm:$0xff]
    %v605 = vld [vmem:[#allocation2 + $0xea0] sm:$0xff]
    %v606 = vld [vmem:[#allocation2 + $0xea8] sm:$0xff]
    %v607 = vld [vmem:[#allocation2 + $0xeb0] sm:$0xff]
    %v608 = vld [vmem:[#allocation2 + $0xeb8] sm:$0xff]
    %v609 = vld [vmem:[#allocation2 + $0xec0] sm:$0xff]
    %v610 = vld [vmem:[#allocation2 + $0xec8] sm:$0xff]
    %v611 = vld [vmem:[#allocation2 + $0xed0] sm:$0xff]
    %v612 = vld [vmem:[#allocation2 + $0xed8] sm:$0xff]
    %v613 = vld [vmem:[#allocation2 + $0xee0] sm:$0xff]
    %v614 = vld [vmem:[#allocation2 + $0xee8] sm:$0xff]
    %v615 = vld [vmem:[#allocation2 + $0xef0] sm:$0xff]
    %v616 = vld [vmem:[#allocation2 + $0xef8] sm:$0xff]
    %v617 = vld [vmem:[#allocation2 + $0xf00] sm:$0xff]
    %v618 = vld [vmem:[#allocation2 + $0xf08] sm:$0xff]
    %v619 = vld [vmem:[#allocation2 + $0xf10] sm:$0xff]
    %v620 = vld [vmem:[#allocation2 + $0xf18] sm:$0xff]
    %v621 = vld [vmem:[#allocation2 + $0xf20] sm:$0xff]
    %v622 = vld [vmem:[#allocation2 + $0xf28] sm:$0xff]
    %v623 = vld [vmem:[#allocation2 + $0xf30] sm:$0xff]
    %v624 = vld [vmem:[#allocation2 + $0xf38] sm:$0xff]
    %v625 = vld [vmem:[#allocation2 + $0xf40] sm:$0xff]
    %v626 = vld [vmem:[#allocation2 + $0xf48] sm:$0xff]
    %v627 = vld [vmem:[#allocation2 + $0xf50] sm:$0xff]
    %v628 = vld [vmem:[#allocation2 + $0xf58] sm:$0xff]
    %v629 = vld [vmem:[#allocation2 + $0xf60] sm:$0xff]
    %v630 = vld [vmem:[#allocation2 + $0xf68] sm:$0xff]
    %v631 = vld [vmem:[#allocation2 + $0xf70] sm:$0xff]
    %v632 = vld [vmem:[#allocation2 + $0xf78] sm:$0xff]
    %v633 = vld [vmem:[#allocation2 + $0xf80] sm:$0xff]
    %v634 = vld [vmem:[#allocation2 + $0xf88] sm:$0xff]
    %v635 = vld [vmem:[#allocation2 + $0xf90] sm:$0xff]
    %v636 = vld [vmem:[#allocation2 + $0xf98] sm:$0xff]
    %v637 = vld [vmem:[#allocation2 + $0xfa0] sm:$0xff]
    %v638 = vld [vmem:[#allocation2 + $0xfa8] sm:$0xff]
    %v639 = vld [vmem:[#allocation2 + $0xfb0] sm:$0xff]
    %v640 = vld [vmem:[#allocation2 + $0xfb8] sm:$0xff]
    %v641 = vld [vmem:[#allocation2 + $0xfc0] sm:$0xff]
    %v642 = vld [vmem:[#allocation2 + $0xfc8] sm:$0xff]
    %v643 = vld [vmem:[#allocation2 + $0xfd0] sm:$0xff]
    %v644 = vld [vmem:[#allocation2 + $0xfd8] sm:$0xff]
    %v645 = vld [vmem:[#allocation2 + $0xfe0] sm:$0xff]
    %v646 = vld [vmem:[#allocation2 + $0xfe8] sm:$0xff]
    %v647 = vld [vmem:[#allocation2 + $0xff0] sm:$0xff]
    %v648 = vld [vmem:[#allocation2 + $0xff8] sm:$0xff]
    %v649 = vld [vmem:[#allocation4] sm:$0xff]
    %v650 = vld [vmem:[#allocation4 + $0x8] sm:$0xff]
    %v651 = vld [vmem:[#allocation6] sm:$0xff]
    %v652 = vld [vmem:[#allocation6 + $0x8] sm:$0xff]
    %v653 = vld [vmem:[#allocation6 + $0x10] sm:$0xff]
    %v654 = vld [vmem:[#allocation6 + $0x18] sm:$0xff]
    %v655 = vld [vmem:[#allocation6 + $0x20] sm:$0xff]
    %v656 = vld [vmem:[#allocation6 + $0x28] sm:$0xff]
    %v657 = vld [vmem:[#allocation6 + $0x30] sm:$0xff]
    %v658 = vld [vmem:[#allocation6 + $0x38] sm:$0xff]
    %v659 = vld [vmem:[#allocation6 + $0x40] sm:$0xff]
    %v660 = vld [vmem:[#allocation6 + $0x48] sm:$0xff]
    %v661 = vld [vmem:[#allocation6 + $0x50] sm:$0xff]
    %v662 = vld [vmem:[#allocation6 + $0x58] sm:$0xff]
    %v663 = vld [vmem:[#allocation6 + $0x60] sm:$0xff]
    %v664 = vld [vmem:[#allocation6 + $0x68] sm:$0xff]
    %v665 = vld [vmem:[#allocation6 + $0x70] sm:$0xff]
    %v666 = vld [vmem:[#allocation6 + $0x78] sm:$0xff]
    %v667 = vld [vmem:[#allocation6 + $0x80] sm:$0xff]
    %v668 = vld [vmem:[#allocation6 + $0x88] sm:$0xff]
    %v669 = vld [vmem:[#allocation6 + $0x90] sm:$0xff]
    %v670 = vld [vmem:[#allocation6 + $0x98] sm:$0xff]
    %v671 = vld [vmem:[#allocation6 + $0xa0] sm:$0xff]
    %v672 = vld [vmem:[#allocation6 + $0xa8] sm:$0xff]
    %v673 = vld [vmem:[#allocation6 + $0xb0] sm:$0xff]
    %v674 = vld [vmem:[#allocation6 + $0xb8] sm:$0xff]
    %v675 = vld [vmem:[#allocation6 + $0xc0] sm:$0xff]
    %v676 = vld [vmem:[#allocation6 + $0xc8] sm:$0xff]
    %v677 = vld [vmem:[#allocation6 + $0xd0] sm:$0xff]
    %v678 = vld [vmem:[#allocation6 + $0xd8] sm:$0xff]
    %v679 = vld [vmem:[#allocation6 + $0xe0] sm:$0xff]
    %v680 = vld [vmem:[#allocation6 + $0xe8] sm:$0xff]
    %v681 = vld [vmem:[#allocation6 + $0xf0] sm:$0xff]
    %v682 = vld [vmem:[#allocation6 + $0xf8] sm:$0xff]
    %v683 = vld [vmem:[#allocation6 + $0x100] sm:$0xff]
    %v684 = vld [vmem:[#allocation6 + $0x108] sm:$0xff]
    %v685 = vld [vmem:[#allocation6 + $0x110] sm:$0xff]
    %v686 = vld [vmem:[#allocation6 + $0x118] sm:$0xff]
    %v687 = vld [vmem:[#allocation6 + $0x120] sm:$0xff]
    %v688 = vld [vmem:[#allocation6 + $0x128] sm:$0xff]
    %v689 = vld [vmem:[#allocation6 + $0x130] sm:$0xff]
    %v690 = vld [vmem:[#allocation6 + $0x138] sm:$0xff]
    %v691 = vld [vmem:[#allocation6 + $0x140] sm:$0xff]
    %v692 = vld [vmem:[#allocation6 + $0x148] sm:$0xff]
    %v693 = vld [vmem:[#allocation6 + $0x150] sm:$0xff]
    %v694 = vld [vmem:[#allocation6 + $0x158] sm:$0xff]
    %v695 = vld [vmem:[#allocation6 + $0x160] sm:$0xff]
    %v696 = vld [vmem:[#allocation6 + $0x168] sm:$0xff]
    %v697 = vld [vmem:[#allocation6 + $0x170] sm:$0xff]
    %v698 = vld [vmem:[#allocation6 + $0x178] sm:$0xff]
    %v699 = vld [vmem:[#allocation6 + $0x180] sm:$0xff]
    %v700 = vld [vmem:[#allocation6 + $0x188] sm:$0xff]
    %v701 = vld [vmem:[#allocation6 + $0x190] sm:$0xff]
    %v702 = vld [vmem:[#allocation6 + $0x198] sm:$0xff]
    %v703 = vld [vmem:[#allocation6 + $0x1a0] sm:$0xff]
    %v704 = vld [vmem:[#allocation6 + $0x1a8] sm:$0xff]
    %v705 = vld [vmem:[#allocation6 + $0x1b0] sm:$0xff]
    %v706 = vld [vmem:[#allocation6 + $0x1b8] sm:$0xff]
    %v707 = vld [vmem:[#allocation6 + $0x1c0] sm:$0xff]
    %v708 = vld [vmem:[#allocation6 + $0x1c8] sm:$0xff]
    %v709 = vld [vmem:[#allocation6 + $0x1d0] sm:$0xff]
    %v710 = vld [vmem:[#allocation6 + $0x1d8] sm:$0xff]
    %v711 = vld [vmem:[#allocation6 + $0x1e0] sm:$0xff]
    %v712 = vld [vmem:[#allocation6 + $0x1e8] sm:$0xff]
    %v713 = vld [vmem:[#allocation6 + $0x1f0] sm:$0xff]
    %v714 = vld [vmem:[#allocation6 + $0x1f8] sm:$0xff]
    %v715 = vld [vmem:[#allocation6 + $0x200] sm:$0xff]
    %v716 = vld [vmem:[#allocation6 + $0x208] sm:$0xff]
    %v717 = vld [vmem:[#allocation6 + $0x210] sm:$0xff]
    %v718 = vld [vmem:[#allocation6 + $0x218] sm:$0xff]
    %v719 = vld [vmem:[#allocation6 + $0x220] sm:$0xff]
    %v720 = vld [vmem:[#allocation6 + $0x228] sm:$0xff]
    %v721 = vld [vmem:[#allocation6 + $0x230] sm:$0xff]
    %v722 = vld [vmem:[#allocation6 + $0x238] sm:$0xff]
    %v723 = vld [vmem:[#allocation6 + $0x240] sm:$0xff]
    %v724 = vld [vmem:[#allocation6 + $0x248] sm:$0xff]
    %v725 = vld [vmem:[#allocation6 + $0x250] sm:$0xff]
    %v726 = vld [vmem:[#allocation6 + $0x258] sm:$0xff]
    %v727 = vld [vmem:[#allocation6 + $0x260] sm:$0xff]
    %v728 = vld [vmem:[#allocation6 + $0x268] sm:$0xff]
    %v729 = vld [vmem:[#allocation6 + $0x270] sm:$0xff]
    %v730 = vld [vmem:[#allocation6 + $0x278] sm:$0xff]
    %v731 = vld [vmem:[#allocation6 + $0x280] sm:$0xff]
    %v732 = vld [vmem:[#allocation6 + $0x288] sm:$0xff]
    %v733 = vld [vmem:[#allocation6 + $0x290] sm:$0xff]
    %v734 = vld [vmem:[#allocation6 + $0x298] sm:$0xff]
    %v735 = vld [vmem:[#allocation6 + $0x2a0] sm:$0xff]
    %v736 = vld [vmem:[#allocation6 + $0x2a8] sm:$0xff]
    %v737 = vld [vmem:[#allocation6 + $0x2b0] sm:$0xff]
    %v738 = vld [vmem:[#allocation6 + $0x2b8] sm:$0xff]
    %v739 = vld [vmem:[#allocation6 + $0x2c0] sm:$0xff]
    %v740 = vld [vmem:[#allocation6 + $0x2c8] sm:$0xff]
    %v741 = vld [vmem:[#allocation6 + $0x2d0] sm:$0xff]
    %v742 = vld [vmem:[#allocation6 + $0x2d8] sm:$0xff]
    %v743 = vld [vmem:[#allocation6 + $0x2e0] sm:$0xff]
    %v744 = vld [vmem:[#allocation6 + $0x2e8] sm:$0xff]
    %v745 = vld [vmem:[#allocation6 + $0x2f0] sm:$0xff]
    %v746 = vld [vmem:[#allocation6 + $0x2f8] sm:$0xff]
    %v747 = vld [vmem:[#allocation6 + $0x300] sm:$0xff]
    %v748 = vld [vmem:[#allocation6 + $0x308] sm:$0xff]
    %v749 = vld [vmem:[#allocation6 + $0x310] sm:$0xff]
    %v750 = vld [vmem:[#allocation6 + $0x318] sm:$0xff]
    %v751 = vld [vmem:[#allocation6 + $0x320] sm:$0xff]
    %v752 = vld [vmem:[#allocation6 + $0x328] sm:$0xff]
    %v753 = vld [vmem:[#allocation6 + $0x330] sm:$0xff]
    %v754 = vld [vmem:[#allocation6 + $0x338] sm:$0xff]
    %v755 = vld [vmem:[#allocation6 + $0x340] sm:$0xff]
    %v756 = vld [vmem:[#allocation6 + $0x348] sm:$0xff]
    %v757 = vld [vmem:[#allocation6 + $0x350] sm:$0xff]
    %v758 = vld [vmem:[#allocation6 + $0x358] sm:$0xff]
    %v759 = vld [vmem:[#allocation6 + $0x360] sm:$0xff]
    %v760 = vld [vmem:[#allocation6 + $0x368] sm:$0xff]
    %v761 = vld [vmem:[#allocation6 + $0x370] sm:$0xff]
    %v762 = vld [vmem:[#allocation6 + $0x378] sm:$0xff]
    %v763 = vld [vmem:[#allocation6 + $0x380] sm:$0xff]
    %v764 = vld [vmem:[#allocation6 + $0x388] sm:$0xff]
    %v765 = vld [vmem:[#allocation6 + $0x390] sm:$0xff]
    %v766 = vld [vmem:[#allocation6 + $0x398] sm:$0xff]
    %v767 = vld [vmem:[#allocation6 + $0x3a0] sm:$0xff]
    %v768 = vld [vmem:[#allocation6 + $0x3a8] sm:$0xff]
    %v769 = vld [vmem:[#allocation6 + $0x3b0] sm:$0xff]
    %v770 = vld [vmem:[#allocation6 + $0x3b8] sm:$0xff]
    %v771 = vld [vmem:[#allocation6 + $0x3c0] sm:$0xff]
    %v772 = vld [vmem:[#allocation6 + $0x3c8] sm:$0xff]
    %v773 = vld [vmem:[#allocation6 + $0x3d0] sm:$0xff]
    %v774 = vld [vmem:[#allocation6 + $0x3d8] sm:$0xff]
    %v775 = vld [vmem:[#allocation6 + $0x3e0] sm:$0xff]
    %v776 = vld [vmem:[#allocation6 + $0x3e8] sm:$0xff]
    %v777 = vld [vmem:[#allocation6 + $0x3f0] sm:$0xff]
    %v778 = vld [vmem:[#allocation6 + $0x3f8] sm:$0xff]
    %v779 = vld [vmem:[#allocation6 + $0x400] sm:$0xff]
    %v780 = vld [vmem:[#allocation6 + $0x408] sm:$0xff]
    %v781 = vld [vmem:[#allocation6 + $0x410] sm:$0xff]
    %v782 = vld [vmem:[#allocation6 + $0x418] sm:$0xff]
    %v783 = vld [vmem:[#allocation6 + $0x420] sm:$0xff]
    %v784 = vld [vmem:[#allocation6 + $0x428] sm:$0xff]
    %v785 = vld [vmem:[#allocation6 + $0x430] sm:$0xff]
    %v786 = vld [vmem:[#allocation6 + $0x438] sm:$0xff]
    %v787 = vld [vmem:[#allocation6 + $0x440] sm:$0xff]
    %v788 = vld [vmem:[#allocation6 + $0x448] sm:$0xff]
    %v789 = vld [vmem:[#allocation6 + $0x450] sm:$0xff]
    %v790 = vld [vmem:[#allocation6 + $0x458] sm:$0xff]
    %v791 = vld [vmem:[#allocation6 + $0x460] sm:$0xff]
    %v792 = vld [vmem:[#allocation6 + $0x468] sm:$0xff]
    %v793 = vld [vmem:[#allocation6 + $0x470] sm:$0xff]
    %v794 = vld [vmem:[#allocation6 + $0x478] sm:$0xff]
    %v795 = vld [vmem:[#allocation6 + $0x480] sm:$0xff]
    %v796 = vld [vmem:[#allocation6 + $0x488] sm:$0xff]
    %v797 = vld [vmem:[#allocation6 + $0x490] sm:$0xff]
    %v798 = vld [vmem:[#allocation6 + $0x498] sm:$0xff]
    %v799 = vld [vmem:[#allocation6 + $0x4a0] sm:$0xff]
    %v800 = vld [vmem:[#allocation6 + $0x4a8] sm:$0xff]
    %v801 = vld [vmem:[#allocation6 + $0x4b0] sm:$0xff]
    %v802 = vld [vmem:[#allocation6 + $0x4b8] sm:$0xff]
    %v803 = vld [vmem:[#allocation6 + $0x4c0] sm:$0xff]
    %v804 = vld [vmem:[#allocation6 + $0x4c8] sm:$0xff]
    %v805 = vld [vmem:[#allocation6 + $0x4d0] sm:$0xff]
    %v806 = vld [vmem:[#allocation6 + $0x4d8] sm:$0xff]
    %v807 = vld [vmem:[#allocation6 + $0x4e0] sm:$0xff]
    %v808 = vld [vmem:[#allocation6 + $0x4e8] sm:$0xff]
    %v809 = vld [vmem:[#allocation6 + $0x4f0] sm:$0xff]
    %v810 = vld [vmem:[#allocation6 + $0x4f8] sm:$0xff]
    %v811 = vld [vmem:[#allocation6 + $0x500] sm:$0xff]
    %v812 = vld [vmem:[#allocation6 + $0x508] sm:$0xff]
    %v813 = vld [vmem:[#allocation6 + $0x510] sm:$0xff]
    %v814 = vld [vmem:[#allocation6 + $0x518] sm:$0xff]
    %v815 = vld [vmem:[#allocation6 + $0x520] sm:$0xff]
    %v816 = vld [vmem:[#allocation6 + $0x528] sm:$0xff]
    %v817 = vld [vmem:[#allocation6 + $0x530] sm:$0xff]
    %v818 = vld [vmem:[#allocation6 + $0x538] sm:$0xff]
    %v819 = vld [vmem:[#allocation6 + $0x540] sm:$0xff]
    %v820 = vld [vmem:[#allocation6 + $0x548] sm:$0xff]
    %v821 = vld [vmem:[#allocation6 + $0x550] sm:$0xff]
    %v822 = vld [vmem:[#allocation6 + $0x558] sm:$0xff]
    %v823 = vld [vmem:[#allocation6 + $0x560] sm:$0xff]
    %v824 = vld [vmem:[#allocation6 + $0x568] sm:$0xff]
    %v825 = vld [vmem:[#allocation6 + $0x570] sm:$0xff]
    %v826 = vld [vmem:[#allocation6 + $0x578] sm:$0xff]
    %v827 = vld [vmem:[#allocation6 + $0x580] sm:$0xff]
    %v828 = vld [vmem:[#allocation6 + $0x588] sm:$0xff]
    %v829 = vld [vmem:[#allocation6 + $0x590] sm:$0xff]
    %v830 = vld [vmem:[#allocation6 + $0x598] sm:$0xff]
    %v831 = vld [vmem:[#allocation6 + $0x5a0] sm:$0xff]
    %v832 = vld [vmem:[#allocation6 + $0x5a8] sm:$0xff]
    %v833 = vld [vmem:[#allocation6 + $0x5b0] sm:$0xff]
    %v834 = vld [vmem:[#allocation6 + $0x5b8] sm:$0xff]
    %v835 = vld [vmem:[#allocation6 + $0x5c0] sm:$0xff]
    %v836 = vld [vmem:[#allocation6 + $0x5c8] sm:$0xff]
    %v837 = vld [vmem:[#allocation6 + $0x5d0] sm:$0xff]
    %v838 = vld [vmem:[#allocation6 + $0x5d8] sm:$0xff]
    %v839 = vld [vmem:[#allocation6 + $0x5e0] sm:$0xff]
    %v840 = vld [vmem:[#allocation6 + $0x5e8] sm:$0xff]
    %v841 = vld [vmem:[#allocation6 + $0x5f0] sm:$0xff]
    %v842 = vld [vmem:[#allocation6 + $0x5f8] sm:$0xff]
    %v843 = vld [vmem:[#allocation6 + $0x600] sm:$0xff]
    %v844 = vld [vmem:[#allocation6 + $0x608] sm:$0xff]
    %v845 = vld [vmem:[#allocation6 + $0x610] sm:$0xff]
    %v846 = vld [vmem:[#allocation6 + $0x618] sm:$0xff]
    %v847 = vld [vmem:[#allocation6 + $0x620] sm:$0xff]
    %v848 = vld [vmem:[#allocation6 + $0x628] sm:$0xff]
    %v849 = vld [vmem:[#allocation6 + $0x630] sm:$0xff]
    %v850 = vld [vmem:[#allocation6 + $0x638] sm:$0xff]
    %v851 = vld [vmem:[#allocation6 + $0x640] sm:$0xff]
    %v852 = vld [vmem:[#allocation6 + $0x648] sm:$0xff]
    %v853 = vld [vmem:[#allocation6 + $0x650] sm:$0xff]
    %v854 = vld [vmem:[#allocation6 + $0x658] sm:$0xff]
    %v855 = vld [vmem:[#allocation6 + $0x660] sm:$0xff]
    %v856 = vld [vmem:[#allocation6 + $0x668] sm:$0xff]
    %v857 = vld [vmem:[#allocation6 + $0x670] sm:$0xff]
    %v858 = vld [vmem:[#allocation6 + $0x678] sm:$0xff]
    %v859 = vld [vmem:[#allocation6 + $0x680] sm:$0xff]
    %v860 = vld [vmem:[#allocation6 + $0x688] sm:$0xff]
    %v861 = vld [vmem:[#allocation6 + $0x690] sm:$0xff]
    %v862 = vld [vmem:[#allocation6 + $0x698] sm:$0xff]
    %v863 = vld [vmem:[#allocation6 + $0x6a0] sm:$0xff]
    %v864 = vld [vmem:[#allocation6 + $0x6a8] sm:$0xff]
    %v865 = vld [vmem:[#allocation6 + $0x6b0] sm:$0xff]
    %v866 = vld [vmem:[#allocation6 + $0x6b8] sm:$0xff]
    %v867 = vld [vmem:[#allocation6 + $0x6c0] sm:$0xff]
    %v868 = vld [vmem:[#allocation6 + $0x6c8] sm:$0xff]
    %v869 = vld [vmem:[#allocation6 + $0x6d0] sm:$0xff]
    %v870 = vld [vmem:[#allocation6 + $0x6d8] sm:$0xff]
    %v871 = vld [vmem:[#allocation6 + $0x6e0] sm:$0xff]
    %v872 = vld [vmem:[#allocation6 + $0x6e8] sm:$0xff]
    %v873 = vld [vmem:[#allocation6 + $0x6f0] sm:$0xff]
    %v874 = vld [vmem:[#allocation6 + $0x6f8] sm:$0xff]
    %v875 = vld [vmem:[#allocation6 + $0x700] sm:$0xff]
    %v876 = vld [vmem:[#allocation6 + $0x708] sm:$0xff]
    %v877 = vld [vmem:[#allocation6 + $0x710] sm:$0xff]
    %v878 = vld [vmem:[#allocation6 + $0x718] sm:$0xff]
    %v879 = vld [vmem:[#allocation6 + $0x720] sm:$0xff]
    %v880 = vld [vmem:[#allocation6 + $0x728] sm:$0xff]
    %v881 = vld [vmem:[#allocation6 + $0x730] sm:$0xff]
    %v882 = vld [vmem:[#allocation6 + $0x738] sm:$0xff]
    %v883 = vld [vmem:[#allocation6 + $0x740] sm:$0xff]
    %v884 = vld [vmem:[#allocation6 + $0x748] sm:$0xff]
    %v885 = vld [vmem:[#allocation6 + $0x750] sm:$0xff]
    %v886 = vld [vmem:[#allocation6 + $0x758] sm:$0xff]
    %v887 = vld [vmem:[#allocation6 + $0x760] sm:$0xff]
    %v888 = vld [vmem:[#allocation6 + $0x768] sm:$0xff]
    %v889 = vld [vmem:[#allocation6 + $0x770] sm:$0xff]
    %v890 = vld [vmem:[#allocation6 + $0x778] sm:$0xff]
    %v891 = vld [vmem:[#allocation6 + $0x780] sm:$0xff]
    %v892 = vld [vmem:[#allocation6 + $0x788] sm:$0xff]
    %v893 = vld [vmem:[#allocation6 + $0x790] sm:$0xff]
    %v894 = vld [vmem:[#allocation6 + $0x798] sm:$0xff]
    %v895 = vld [vmem:[#allocation6 + $0x7a0] sm:$0xff]
    %v896 = vld [vmem:[#allocation6 + $0x7a8] sm:$0xff]
    %v897 = vld [vmem:[#allocation6 + $0x7b0] sm:$0xff]
    %v898 = vld [vmem:[#allocation6 + $0x7b8] sm:$0xff]
    %v899 = vld [vmem:[#allocation6 + $0x7c0] sm:$0xff]
    %v900 = vld [vmem:[#allocation6 + $0x7c8] sm:$0xff]
    %v901 = vld [vmem:[#allocation6 + $0x7d0] sm:$0xff]
    %v902 = vld [vmem:[#allocation6 + $0x7d8] sm:$0xff]
    %v903 = vld [vmem:[#allocation6 + $0x7e0] sm:$0xff]
    %v904 = vld [vmem:[#allocation6 + $0x7e8] sm:$0xff]
    %v905 = vld [vmem:[#allocation6 + $0x7f0] sm:$0xff]
    %v906 = vld [vmem:[#allocation6 + $0x7f8] sm:$0xff]
    %v907 = vld [vmem:[#allocation6 + $0x800] sm:$0xff]
    %v908 = vld [vmem:[#allocation6 + $0x808] sm:$0xff]
    %v909 = vld [vmem:[#allocation6 + $0x810] sm:$0xff]
    %v910 = vld [vmem:[#allocation6 + $0x818] sm:$0xff]
    %v911 = vld [vmem:[#allocation6 + $0x820] sm:$0xff]
    %v912 = vld [vmem:[#allocation6 + $0x828] sm:$0xff]
    %v913 = vld [vmem:[#allocation6 + $0x830] sm:$0xff]
    %v914 = vld [vmem:[#allocation6 + $0x838] sm:$0xff]
    %v915 = vld [vmem:[#allocation6 + $0x840] sm:$0xff]
    %v916 = vld [vmem:[#allocation6 + $0x848] sm:$0xff]
    %v917 = vld [vmem:[#allocation6 + $0x850] sm:$0xff]
    %v918 = vld [vmem:[#allocation6 + $0x858] sm:$0xff]
    %v919 = vld [vmem:[#allocation6 + $0x860] sm:$0xff]
    %v920 = vld [vmem:[#allocation6 + $0x868] sm:$0xff]
    %v921 = vld [vmem:[#allocation6 + $0x870] sm:$0xff]
    %v922 = vld [vmem:[#allocation6 + $0x878] sm:$0xff]
    %v923 = vld [vmem:[#allocation6 + $0x880] sm:$0xff]
    %v924 = vld [vmem:[#allocation6 + $0x888] sm:$0xff]
    %v925 = vld [vmem:[#allocation6 + $0x890] sm:$0xff]
    %v926 = vld [vmem:[#allocation6 + $0x898] sm:$0xff]
    %v927 = vld [vmem:[#allocation6 + $0x8a0] sm:$0xff]
    %v928 = vld [vmem:[#allocation6 + $0x8a8] sm:$0xff]
    %v929 = vld [vmem:[#allocation6 + $0x8b0] sm:$0xff]
    %v930 = vld [vmem:[#allocation6 + $0x8b8] sm:$0xff]
    %v931 = vld [vmem:[#allocation6 + $0x8c0] sm:$0xff]
    %v932 = vld [vmem:[#allocation6 + $0x8c8] sm:$0xff]
    %v933 = vld [vmem:[#allocation6 + $0x8d0] sm:$0xff]
    %v934 = vld [vmem:[#allocation6 + $0x8d8] sm:$0xff]
    %v935 = vld [vmem:[#allocation6 + $0x8e0] sm:$0xff]
    %v936 = vld [vmem:[#allocation6 + $0x8e8] sm:$0xff]
    %v937 = vld [vmem:[#allocation6 + $0x8f0] sm:$0xff]
    %v938 = vld [vmem:[#allocation6 + $0x8f8] sm:$0xff]
    %v939 = vld [vmem:[#allocation6 + $0x900] sm:$0xff]
    %v940 = vld [vmem:[#allocation6 + $0x908] sm:$0xff]
    %v941 = vld [vmem:[#allocation6 + $0x910] sm:$0xff]
    %v942 = vld [vmem:[#allocation6 + $0x918] sm:$0xff]
    %v943 = vld [vmem:[#allocation6 + $0x920] sm:$0xff]
    %v944 = vld [vmem:[#allocation6 + $0x928] sm:$0xff]
    %v945 = vld [vmem:[#allocation6 + $0x930] sm:$0xff]
    %v946 = vld [vmem:[#allocation6 + $0x938] sm:$0xff]
    %v947 = vld [vmem:[#allocation6 + $0x940] sm:$0xff]
    %v948 = vld [vmem:[#allocation6 + $0x948] sm:$0xff]
    %v949 = vld [vmem:[#allocation6 + $0x950] sm:$0xff]
    %v950 = vld [vmem:[#allocation6 + $0x958] sm:$0xff]
    %v951 = vld [vmem:[#allocation6 + $0x960] sm:$0xff]
    %v952 = vld [vmem:[#allocation6 + $0x968] sm:$0xff]
    %v953 = vld [vmem:[#allocation6 + $0x970] sm:$0xff]
    %v954 = vld [vmem:[#allocation6 + $0x978] sm:$0xff]
    %v955 = vld [vmem:[#allocation6 + $0x980] sm:$0xff]
    %v956 = vld [vmem:[#allocation6 + $0x988] sm:$0xff]
    %v957 = vld [vmem:[#allocation6 + $0x990] sm:$0xff]
    %v958 = vld [vmem:[#allocation6 + $0x998] sm:$0xff]
    %v959 = vld [vmem:[#allocation6 + $0x9a0] sm:$0xff]
    %v960 = vld [vmem:[#allocation6 + $0x9a8] sm:$0xff]
    %v961 = vld [vmem:[#allocation6 + $0x9b0] sm:$0xff]
    %v962 = vld [vmem:[#allocation6 + $0x9b8] sm:$0xff]
    %v963 = vld [vmem:[#allocation6 + $0x9c0] sm:$0xff]
    %v964 = vld [vmem:[#allocation6 + $0x9c8] sm:$0xff]
    %v965 = vld [vmem:[#allocation6 + $0x9d0] sm:$0xff]
    %v966 = vld [vmem:[#allocation6 + $0x9d8] sm:$0xff]
    %v967 = vld [vmem:[#allocation6 + $0x9e0] sm:$0xff]
    %v968 = vld [vmem:[#allocation6 + $0x9e8] sm:$0xff]
    %v969 = vld [vmem:[#allocation6 + $0x9f0] sm:$0xff]
    %v970 = vld [vmem:[#allocation6 + $0x9f8] sm:$0xff]
    %v971 = vld [vmem:[#allocation6 + $0xa00] sm:$0xff]
    %v972 = vld [vmem:[#allocation6 + $0xa08] sm:$0xff]
    %v973 = vld [vmem:[#allocation6 + $0xa10] sm:$0xff]
    %v974 = vld [vmem:[#allocation6 + $0xa18] sm:$0xff]
    %v975 = vld [vmem:[#allocation6 + $0xa20] sm:$0xff]
    %v976 = vld [vmem:[#allocation6 + $0xa28] sm:$0xff]
    %v977 = vld [vmem:[#allocation6 + $0xa30] sm:$0xff]
    %v978 = vld [vmem:[#allocation6 + $0xa38] sm:$0xff]
    %v979 = vld [vmem:[#allocation6 + $0xa40] sm:$0xff]
    %v980 = vld [vmem:[#allocation6 + $0xa48] sm:$0xff]
    %v981 = vld [vmem:[#allocation6 + $0xa50] sm:$0xff]
    %v982 = vld [vmem:[#allocation6 + $0xa58] sm:$0xff]
    %v983 = vld [vmem:[#allocation6 + $0xa60] sm:$0xff]
    %v984 = vld [vmem:[#allocation6 + $0xa68] sm:$0xff]
    %v985 = vld [vmem:[#allocation6 + $0xa70] sm:$0xff]
    %v986 = vld [vmem:[#allocation6 + $0xa78] sm:$0xff]
    %v987 = vld [vmem:[#allocation6 + $0xa80] sm:$0xff]
    %v988 = vld [vmem:[#allocation6 + $0xa88] sm:$0xff]
    %v989 = vld [vmem:[#allocation6 + $0xa90] sm:$0xff]
    %v990 = vld [vmem:[#allocation6 + $0xa98] sm:$0xff]
    %v991 = vld [vmem:[#allocation6 + $0xaa0] sm:$0xff]
    %v992 = vld [vmem:[#allocation6 + $0xaa8] sm:$0xff]
    %v993 = vld [vmem:[#allocation6 + $0xab0] sm:$0xff]
    %v994 = vld [vmem:[#allocation6 + $0xab8] sm:$0xff]
    %v995 = vld [vmem:[#allocation6 + $0xac0] sm:$0xff]
    %v996 = vld [vmem:[#allocation6 + $0xac8] sm:$0xff]
    %v997 = vld [vmem:[#allocation6 + $0xad0] sm:$0xff]
    %v998 = vld [vmem:[#allocation6 + $0xad8] sm:$0xff]
    %v999 = vld [vmem:[#allocation6 + $0xae0] sm:$0xff]
    %v1000 = vld [vmem:[#allocation6 + $0xae8] sm:$0xff]
    %v1001 = vld [vmem:[#allocation6 + $0xaf0] sm:$0xff]
    %v1002 = vld [vmem:[#allocation6 + $0xaf8] sm:$0xff]
    %v1003 = vld [vmem:[#allocation6 + $0xb00] sm:$0xff]
    %v1004 = vld [vmem:[#allocation6 + $0xb08] sm:$0xff]
    %v1005 = vld [vmem:[#allocation6 + $0xb10] sm:$0xff]
    %v1006 = vld [vmem:[#allocation6 + $0xb18] sm:$0xff]
    %v1007 = vld [vmem:[#allocation6 + $0xb20] sm:$0xff]
    %v1008 = vld [vmem:[#allocation6 + $0xb28] sm:$0xff]
    %v1009 = vld [vmem:[#allocation6 + $0xb30] sm:$0xff]
    %v1010 = vld [vmem:[#allocation6 + $0xb38] sm:$0xff]
    %v1011 = vld [vmem:[#allocation6 + $0xb40] sm:$0xff]
    %v1012 = vld [vmem:[#allocation6 + $0xb48] sm:$0xff]
    %v1013 = vld [vmem:[#allocation6 + $0xb50] sm:$0xff]
    %v1014 = vld [vmem:[#allocation6 + $0xb58] sm:$0xff]
    %v1015 = vld [vmem:[#allocation6 + $0xb60] sm:$0xff]
    %v1016 = vld [vmem:[#allocation6 + $0xb68] sm:$0xff]
    %v1017 = vld [vmem:[#allocation6 + $0xb70] sm:$0xff]
    %v1018 = vld [vmem:[#allocation6 + $0xb78] sm:$0xff]
    %v1019 = vld [vmem:[#allocation6 + $0xb80] sm:$0xff]
    %v1020 = vld [vmem:[#allocation6 + $0xb88] sm:$0xff]
    %v1021 = vld [vmem:[#allocation6 + $0xb90] sm:$0xff]
    %v1022 = vld [vmem:[#allocation6 + $0xb98] sm:$0xff]
    %v1023 = vld [vmem:[#allocation6 + $0xba0] sm:$0xff]
    %v1024 = vld [vmem:[#allocation6 + $0xba8] sm:$0xff]
    %v1025 = vld [vmem:[#allocation6 + $0xbb0] sm:$0xff]
    %v1026 = vld [vmem:[#allocation6 + $0xbb8] sm:$0xff]
    %v1027 = vld [vmem:[#allocation6 + $0xbc0] sm:$0xff]
    %v1028 = vld [vmem:[#allocation6 + $0xbc8] sm:$0xff]
    %v1029 = vld [vmem:[#allocation6 + $0xbd0] sm:$0xff]
    %v1030 = vld [vmem:[#allocation6 + $0xbd8] sm:$0xff]
    %v1031 = vld [vmem:[#allocation6 + $0xbe0] sm:$0xff]
    %v1032 = vld [vmem:[#allocation6 + $0xbe8] sm:$0xff]
    %v1033 = vld [vmem:[#allocation6 + $0xbf0] sm:$0xff]
    %v1034 = vld [vmem:[#allocation6 + $0xbf8] sm:$0xff]
    %v1035 = vld [vmem:[#allocation6 + $0xc00] sm:$0xff]
    %v1036 = vld [vmem:[#allocation6 + $0xc08] sm:$0xff]
    %v1037 = vld [vmem:[#allocation6 + $0xc10] sm:$0xff]
    %v1038 = vld [vmem:[#allocation6 + $0xc18] sm:$0xff]
    %v1039 = vld [vmem:[#allocation6 + $0xc20] sm:$0xff]
    %v1040 = vld [vmem:[#allocation6 + $0xc28] sm:$0xff]
    %v1041 = vld [vmem:[#allocation6 + $0xc30] sm:$0xff]
    %v1042 = vld [vmem:[#allocation6 + $0xc38] sm:$0xff]
    %v1043 = vld [vmem:[#allocation6 + $0xc40] sm:$0xff]
    %v1044 = vld [vmem:[#allocation6 + $0xc48] sm:$0xff]
    %v1045 = vld [vmem:[#allocation6 + $0xc50] sm:$0xff]
    %v1046 = vld [vmem:[#allocation6 + $0xc58] sm:$0xff]
    %v1047 = vld [vmem:[#allocation6 + $0xc60] sm:$0xff]
    %v1048 = vld [vmem:[#allocation6 + $0xc68] sm:$0xff]
    %v1049 = vld [vmem:[#allocation6 + $0xc70] sm:$0xff]
    %v1050 = vld [vmem:[#allocation6 + $0xc78] sm:$0xff]
    %v1051 = vld [vmem:[#allocation6 + $0xc80] sm:$0xff]
    %v1052 = vld [vmem:[#allocation6 + $0xc88] sm:$0xff]
    %v1053 = vld [vmem:[#allocation6 + $0xc90] sm:$0xff]
    %v1054 = vld [vmem:[#allocation6 + $0xc98] sm:$0xff]
    %v1055 = vld [vmem:[#allocation6 + $0xca0] sm:$0xff]
    %v1056 = vld [vmem:[#allocation6 + $0xca8] sm:$0xff]
    %v1057 = vld [vmem:[#allocation6 + $0xcb0] sm:$0xff]
    %v1058 = vld [vmem:[#allocation6 + $0xcb8] sm:$0xff]
    %v1059 = vld [vmem:[#allocation6 + $0xcc0] sm:$0xff]
    %v1060 = vld [vmem:[#allocation6 + $0xcc8] sm:$0xff]
    %v1061 = vld [vmem:[#allocation6 + $0xcd0] sm:$0xff]
    %v1062 = vld [vmem:[#allocation6 + $0xcd8] sm:$0xff]
    %v1063 = vld [vmem:[#allocation6 + $0xce0] sm:$0xff]
    %v1064 = vld [vmem:[#allocation6 + $0xce8] sm:$0xff]
    %v1065 = vld [vmem:[#allocation6 + $0xcf0] sm:$0xff]
    %v1066 = vld [vmem:[#allocation6 + $0xcf8] sm:$0xff]
    %v1067 = vld [vmem:[#allocation6 + $0xd00] sm:$0xff]
    %v1068 = vld [vmem:[#allocation6 + $0xd08] sm:$0xff]
    %v1069 = vld [vmem:[#allocation6 + $0xd10] sm:$0xff]
    %v1070 = vld [vmem:[#allocation6 + $0xd18] sm:$0xff]
    %v1071 = vld [vmem:[#allocation6 + $0xd20] sm:$0xff]
    %v1072 = vld [vmem:[#allocation6 + $0xd28] sm:$0xff]
    %v1073 = vld [vmem:[#allocation6 + $0xd30] sm:$0xff]
    %v1074 = vld [vmem:[#allocation6 + $0xd38] sm:$0xff]
    %v1075 = vld [vmem:[#allocation6 + $0xd40] sm:$0xff]
    %v1076 = vld [vmem:[#allocation6 + $0xd48] sm:$0xff]
    %v1077 = vld [vmem:[#allocation6 + $0xd50] sm:$0xff]
    %v1078 = vld [vmem:[#allocation6 + $0xd58] sm:$0xff]
    %v1079 = vld [vmem:[#allocation6 + $0xd60] sm:$0xff]
    %v1080 = vld [vmem:[#allocation6 + $0xd68] sm:$0xff]
    %v1081 = vld [vmem:[#allocation6 + $0xd70] sm:$0xff]
    %v1082 = vld [vmem:[#allocation6 + $0xd78] sm:$0xff]
    %v1083 = vld [vmem:[#allocation6 + $0xd80] sm:$0xff]
    %v1084 = vld [vmem:[#allocation6 + $0xd88] sm:$0xff]
    %v1085 = vld [vmem:[#allocation6 + $0xd90] sm:$0xff]
    %v1086 = vld [vmem:[#allocation6 + $0xd98] sm:$0xff]
    %v1087 = vld [vmem:[#allocation6 + $0xda0] sm:$0xff]
    %v1088 = vld [vmem:[#allocation6 + $0xda8] sm:$0xff]
    %v1089 = vld [vmem:[#allocation6 + $0xdb0] sm:$0xff]
    %v1090 = vld [vmem:[#allocation6 + $0xdb8] sm:$0xff]
    %v1091 = vld [vmem:[#allocation6 + $0xdc0] sm:$0xff]
    %v1092 = vld [vmem:[#allocation6 + $0xdc8] sm:$0xff]
    %v1093 = vld [vmem:[#allocation6 + $0xdd0] sm:$0xff]
    %v1094 = vld [vmem:[#allocation6 + $0xdd8] sm:$0xff]
    %v1095 = vld [vmem:[#allocation6 + $0xde0] sm:$0xff]
    %v1096 = vld [vmem:[#allocation6 + $0xde8] sm:$0xff]
    %v1097 = vld [vmem:[#allocation6 + $0xdf0] sm:$0xff]
    %v1098 = vld [vmem:[#allocation6 + $0xdf8] sm:$0xff]
    %v1099 = vld [vmem:[#allocation6 + $0xe00] sm:$0xff]
    %v1100 = vld [vmem:[#allocation6 + $0xe08] sm:$0xff]
    %v1101 = vld [vmem:[#allocation6 + $0xe10] sm:$0xff]
    %v1102 = vld [vmem:[#allocation6 + $0xe18] sm:$0xff]
    %v1103 = vld [vmem:[#allocation6 + $0xe20] sm:$0xff]
    %v1104 = vld [vmem:[#allocation6 + $0xe28] sm:$0xff]
    %v1105 = vld [vmem:[#allocation6 + $0xe30] sm:$0xff]
    %v1106 = vld [vmem:[#allocation6 + $0xe38] sm:$0xff]
    %v1107 = vld [vmem:[#allocation6 + $0xe40] sm:$0xff]
    %v1108 = vld [vmem:[#allocation6 + $0xe48] sm:$0xff]
    %v1109 = vld [vmem:[#allocation6 + $0xe50] sm:$0xff]
    %v1110 = vld [vmem:[#allocation6 + $0xe58] sm:$0xff]
    %v1111 = vld [vmem:[#allocation6 + $0xe60] sm:$0xff]
    %v1112 = vld [vmem:[#allocation6 + $0xe68] sm:$0xff]
    %v1113 = vld [vmem:[#allocation6 + $0xe70] sm:$0xff]
    %v1114 = vld [vmem:[#allocation6 + $0xe78] sm:$0xff]
    %v1115 = vld [vmem:[#allocation6 + $0xe80] sm:$0xff]
    %v1116 = vld [vmem:[#allocation6 + $0xe88] sm:$0xff]
    %v1117 = vld [vmem:[#allocation6 + $0xe90] sm:$0xff]
    %v1118 = vld [vmem:[#allocation6 + $0xe98] sm:$0xff]
    %v1119 = vld [vmem:[#allocation6 + $0xea0] sm:$0xff]
    %v1120 = vld [vmem:[#allocation6 + $0xea8] sm:$0xff]
    %v1121 = vld [vmem:[#allocation6 + $0xeb0] sm:$0xff]
    %v1122 = vld [vmem:[#allocation6 + $0xeb8] sm:$0xff]
    %v1123 = vld [vmem:[#allocation6 + $0xec0] sm:$0xff]
    %v1124 = vld [vmem:[#allocation6 + $0xec8] sm:$0xff]
    %v1125 = vld [vmem:[#allocation6 + $0xed0] sm:$0xff]
    %v1126 = vld [vmem:[#allocation6 + $0xed8] sm:$0xff]
    %v1127 = vld [vmem:[#allocation6 + $0xee0] sm:$0xff]
    %v1128 = vld [vmem:[#allocation6 + $0xee8] sm:$0xff]
    %v1129 = vld [vmem:[#allocation6 + $0xef0] sm:$0xff]
    %v1130 = vld [vmem:[#allocation6 + $0xef8] sm:$0xff]
    %v1131 = vld [vmem:[#allocation6 + $0xf00] sm:$0xff]
    %v1132 = vld [vmem:[#allocation6 + $0xf08] sm:$0xff]
    %v1133 = vld [vmem:[#allocation6 + $0xf10] sm:$0xff]
    %v1134 = vld [vmem:[#allocation6 + $0xf18] sm:$0xff]
    %v1135 = vld [vmem:[#allocation6 + $0xf20] sm:$0xff]
    %v1136 = vld [vmem:[#allocation6 + $0xf28] sm:$0xff]
    %v1137 = vld [vmem:[#allocation6 + $0xf30] sm:$0xff]
    %v1138 = vld [vmem:[#allocation6 + $0xf38] sm:$0xff]
    %v1139 = vld [vmem:[#allocation6 + $0xf40] sm:$0xff]
    %v1140 = vld [vmem:[#allocation6 + $0xf48] sm:$0xff]
    %v1141 = vld [vmem:[#allocation6 + $0xf50] sm:$0xff]
    %v1142 = vld [vmem:[#allocation6 + $0xf58] sm:$0xff]
    %v1143 = vld [vmem:[#allocation6 + $0xf60] sm:$0xff]
    %v1144 = vld [vmem:[#allocation6 + $0xf68] sm:$0xff]
    %v1145 = vld [vmem:[#allocation6 + $0xf70] sm:$0xff]
    %v1146 = vld [vmem:[#allocation6 + $0xf78] sm:$0xff]
    %v1147 = vld [vmem:[#allocation6 + $0xf80] sm:$0xff]
    %v1148 = vld [vmem:[#allocation6 + $0xf88] sm:$0xff]
    %v1149 = vld [vmem:[#allocation6 + $0xf90] sm:$0xff]
    %v1150 = vld [vmem:[#allocation6 + $0xf98] sm:$0xff]
    %v1151 = vld [vmem:[#allocation6 + $0xfa0] sm:$0xff]
    %v1152 = vld [vmem:[#allocation6 + $0xfa8] sm:$0xff]
    %v1153 = vld [vmem:[#allocation6 + $0xfb0] sm:$0xff]
    %v1154 = vld [vmem:[#allocation6 + $0xfb8] sm:$0xff]
    %v1155 = vld [vmem:[#allocation6 + $0xfc0] sm:$0xff]
    %v1156 = vld [vmem:[#allocation6 + $0xfc8] sm:$0xff]
    %v1157 = vld [vmem:[#allocation6 + $0xfd0] sm:$0xff]
    %v1158 = vld [vmem:[#allocation6 + $0xfd8] sm:$0xff]
    %v1159 = vld [vmem:[#allocation6 + $0xfe0] sm:$0xff]
    %v1160 = vld [vmem:[#allocation6 + $0xfe8] sm:$0xff]
    %v1161 = vld [vmem:[#allocation6 + $0xff0] sm:$0xff]
    %v1162 = vld [vmem:[#allocation6 + $0xff8] sm:$0xff]
    %v1163 = vld [vmem:[#allocation6 + $0x1000] sm:$0xff]
    %v1164 = vld [vmem:[#allocation6 + $0x1008] sm:$0xff]
    %v1165 = vld [vmem:[#allocation6 + $0x1010] sm:$0xff]
    %v1166 = vld [vmem:[#allocation6 + $0x1018] sm:$0xff]
    %v1167 = vld [vmem:[#allocation6 + $0x1020] sm:$0xff]
    %v1168 = vld [vmem:[#allocation6 + $0x1028] sm:$0xff]
    %v1169 = vld [vmem:[#allocation6 + $0x1030] sm:$0xff]
    %v1170 = vld [vmem:[#allocation6 + $0x1038] sm:$0xff]
    %v1171 = vld [vmem:[#allocation6 + $0x1040] sm:$0xff]
    %v1172 = vld [vmem:[#allocation6 + $0x1048] sm:$0xff]
    %v1173 = vld [vmem:[#allocation6 + $0x1050] sm:$0xff]
    %v1174 = vld [vmem:[#allocation6 + $0x1058] sm:$0xff]
    %v1175 = vld [vmem:[#allocation6 + $0x1060] sm:$0xff]
    %v1176 = vld [vmem:[#allocation6 + $0x1068] sm:$0xff]
    %v1177 = vld [vmem:[#allocation6 + $0x1070] sm:$0xff]
    %v1178 = vld [vmem:[#allocation6 + $0x1078] sm:$0xff]
    %v1179 = vld [vmem:[#allocation6 + $0x1080] sm:$0xff]
    %v1180 = vld [vmem:[#allocation6 + $0x1088] sm:$0xff]
    %v1181 = vld [vmem:[#allocation6 + $0x1090] sm:$0xff]
    %v1182 = vld [vmem:[#allocation6 + $0x1098] sm:$0xff]
    %v1183 = vld [vmem:[#allocation6 + $0x10a0] sm:$0xff]
    %v1184 = vld [vmem:[#allocation6 + $0x10a8] sm:$0xff]
    %v1185 = vld [vmem:[#allocation6 + $0x10b0] sm:$0xff]
    %v1186 = vld [vmem:[#allocation6 + $0x10b8] sm:$0xff]
    %v1187 = vld [vmem:[#allocation6 + $0x10c0] sm:$0xff]
    %v1188 = vld [vmem:[#allocation6 + $0x10c8] sm:$0xff]
    %v1189 = vld [vmem:[#allocation6 + $0x10d0] sm:$0xff]
    %v1190 = vld [vmem:[#allocation6 + $0x10d8] sm:$0xff]
    %v1191 = vld [vmem:[#allocation6 + $0x10e0] sm:$0xff]
    %v1192 = vld [vmem:[#allocation6 + $0x10e8] sm:$0xff]
    %v1193 = vld [vmem:[#allocation6 + $0x10f0] sm:$0xff]
    %v1194 = vld [vmem:[#allocation6 + $0x10f8] sm:$0xff]
    %v1195 = vld [vmem:[#allocation6 + $0x1100] sm:$0xff]
    %v1196 = vld [vmem:[#allocation6 + $0x1108] sm:$0xff]
    %v1197 = vld [vmem:[#allocation6 + $0x1110] sm:$0xff]
    %v1198 = vld [vmem:[#allocation6 + $0x1118] sm:$0xff]
    %v1199 = vld [vmem:[#allocation6 + $0x1120] sm:$0xff]
    %v1200 = vld [vmem:[#allocation6 + $0x1128] sm:$0xff]
    %v1201 = vld [vmem:[#allocation6 + $0x1130] sm:$0xff]
    %v1202 = vld [vmem:[#allocation6 + $0x1138] sm:$0xff]
    %v1203 = vld [vmem:[#allocation6 + $0x1140] sm:$0xff]
    %v1204 = vld [vmem:[#allocation6 + $0x1148] sm:$0xff]
    %v1205 = vld [vmem:[#allocation6 + $0x1150] sm:$0xff]
    %v1206 = vld [vmem:[#allocation6 + $0x1158] sm:$0xff]
    %v1207 = vld [vmem:[#allocation6 + $0x1160] sm:$0xff]
    %v1208 = vld [vmem:[#allocation6 + $0x1168] sm:$0xff]
    %v1209 = vld [vmem:[#allocation6 + $0x1170] sm:$0xff]
    %v1210 = vld [vmem:[#allocation6 + $0x1178] sm:$0xff]
    %v1211 = vld [vmem:[#allocation6 + $0x1180] sm:$0xff]
    %v1212 = vld [vmem:[#allocation6 + $0x1188] sm:$0xff]
    %v1213 = vld [vmem:[#allocation6 + $0x1190] sm:$0xff]
    %v1214 = vld [vmem:[#allocation6 + $0x1198] sm:$0xff]
    %v1215 = vld [vmem:[#allocation6 + $0x11a0] sm:$0xff]
    %v1216 = vld [vmem:[#allocation6 + $0x11a8] sm:$0xff]
    %v1217 = vld [vmem:[#allocation6 + $0x11b0] sm:$0xff]
    %v1218 = vld [vmem:[#allocation6 + $0x11b8] sm:$0xff]
    %v1219 = vld [vmem:[#allocation6 + $0x11c0] sm:$0xff]
    %v1220 = vld [vmem:[#allocation6 + $0x11c8] sm:$0xff]
    %v1221 = vld [vmem:[#allocation6 + $0x11d0] sm:$0xff]
    %v1222 = vld [vmem:[#allocation6 + $0x11d8] sm:$0xff]
    %v1223 = vld [vmem:[#allocation6 + $0x11e0] sm:$0xff]
    %v1224 = vld [vmem:[#allocation6 + $0x11e8] sm:$0xff]
    %v1225 = vld [vmem:[#allocation6 + $0x11f0] sm:$0xff]
    %v1226 = vld [vmem:[#allocation6 + $0x11f8] sm:$0xff]
    %v1227 = vld [vmem:[#allocation6 + $0x1200] sm:$0xff]
    %v1228 = vld [vmem:[#allocation6 + $0x1208] sm:$0xff]
    %v1229 = vld [vmem:[#allocation6 + $0x1210] sm:$0xff]
    %v1230 = vld [vmem:[#allocation6 + $0x1218] sm:$0xff]
    %v1231 = vld [vmem:[#allocation6 + $0x1220] sm:$0xff]
    %v1232 = vld [vmem:[#allocation6 + $0x1228] sm:$0xff]
    %v1233 = vld [vmem:[#allocation6 + $0x1230] sm:$0xff]
    %v1234 = vld [vmem:[#allocation6 + $0x1238] sm:$0xff]
    %v1235 = vld [vmem:[#allocation6 + $0x1240] sm:$0xff]
    %v1236 = vld [vmem:[#allocation6 + $0x1248] sm:$0xff]
    %v1237 = vld [vmem:[#allocation6 + $0x1250] sm:$0xff]
    %v1238 = vld [vmem:[#allocation6 + $0x1258] sm:$0xff]
    %v1239 = vld [vmem:[#allocation6 + $0x1260] sm:$0xff]
    %v1240 = vld [vmem:[#allocation6 + $0x1268] sm:$0xff]
    %v1241 = vld [vmem:[#allocation6 + $0x1270] sm:$0xff]
    %v1242 = vld [vmem:[#allocation6 + $0x1278] sm:$0xff]
    %v1243 = vld [vmem:[#allocation6 + $0x1280] sm:$0xff]
    %v1244 = vld [vmem:[#allocation6 + $0x1288] sm:$0xff]
    %v1245 = vld [vmem:[#allocation6 + $0x1290] sm:$0xff]
    %v1246 = vld [vmem:[#allocation6 + $0x1298] sm:$0xff]
    %v1247 = vld [vmem:[#allocation6 + $0x12a0] sm:$0xff]
    %v1248 = vld [vmem:[#allocation6 + $0x12a8] sm:$0xff]
    %v1249 = vld [vmem:[#allocation6 + $0x12b0] sm:$0xff]
    %v1250 = vld [vmem:[#allocation6 + $0x12b8] sm:$0xff]
    %v1251 = vld [vmem:[#allocation6 + $0x12c0] sm:$0xff]
    %v1252 = vld [vmem:[#allocation6 + $0x12c8] sm:$0xff]
    %v1253 = vld [vmem:[#allocation6 + $0x12d0] sm:$0xff]
    %v1254 = vld [vmem:[#allocation6 + $0x12d8] sm:$0xff]
    %v1255 = vld [vmem:[#allocation6 + $0x12e0] sm:$0xff]
    %v1256 = vld [vmem:[#allocation6 + $0x12e8] sm:$0xff]
    %v1257 = vld [vmem:[#allocation6 + $0x12f0] sm:$0xff]
    %v1258 = vld [vmem:[#allocation6 + $0x12f8] sm:$0xff]
    %v1259 = vld [vmem:[#allocation6 + $0x1300] sm:$0xff]
    %v1260 = vld [vmem:[#allocation6 + $0x1308] sm:$0xff]
    %v1261 = vld [vmem:[#allocation6 + $0x1310] sm:$0xff]
    %v1262 = vld [vmem:[#allocation6 + $0x1318] sm:$0xff]
    %v1263 = vld [vmem:[#allocation6 + $0x1320] sm:$0xff]
    %v1264 = vld [vmem:[#allocation6 + $0x1328] sm:$0xff]
    %v1265 = vld [vmem:[#allocation6 + $0x1330] sm:$0xff]
    %v1266 = vld [vmem:[#allocation6 + $0x1338] sm:$0xff]
    %v1267 = vld [vmem:[#allocation6 + $0x1340] sm:$0xff]
    %v1268 = vld [vmem:[#allocation6 + $0x1348] sm:$0xff]
    %v1269 = vld [vmem:[#allocation6 + $0x1350] sm:$0xff]
    %v1270 = vld [vmem:[#allocation6 + $0x1358] sm:$0xff]
    %v1271 = vld [vmem:[#allocation6 + $0x1360] sm:$0xff]
    %v1272 = vld [vmem:[#allocation6 + $0x1368] sm:$0xff]
    %v1273 = vld [vmem:[#allocation6 + $0x1370] sm:$0xff]
    %v1274 = vld [vmem:[#allocation6 + $0x1378] sm:$0xff]
    %v1275 = vld [vmem:[#allocation6 + $0x1380] sm:$0xff]
    %v1276 = vld [vmem:[#allocation6 + $0x1388] sm:$0xff]
    %v1277 = vld [vmem:[#allocation6 + $0x1390] sm:$0xff]
    %v1278 = vld [vmem:[#allocation6 + $0x1398] sm:$0xff]
    %v1279 = vld [vmem:[#allocation6 + $0x13a0] sm:$0xff]
    %v1280 = vld [vmem:[#allocation6 + $0x13a8] sm:$0xff]
    %v1281 = vld [vmem:[#allocation6 + $0x13b0] sm:$0xff]
    %v1282 = vld [vmem:[#allocation6 + $0x13b8] sm:$0xff]
    %v1283 = vld [vmem:[#allocation6 + $0x13c0] sm:$0xff]
    %v1284 = vld [vmem:[#allocation6 + $0x13c8] sm:$0xff]
    %v1285 = vld [vmem:[#allocation6 + $0x13d0] sm:$0xff]
    %v1286 = vld [vmem:[#allocation6 + $0x13d8] sm:$0xff]
    %v1287 = vld [vmem:[#allocation6 + $0x13e0] sm:$0xff]
    %v1288 = vld [vmem:[#allocation6 + $0x13e8] sm:$0xff]
    %v1289 = vld [vmem:[#allocation6 + $0x13f0] sm:$0xff]
    %v1290 = vld [vmem:[#allocation6 + $0x13f8] sm:$0xff]
    %v1291 = vld [vmem:[#allocation6 + $0x1400] sm:$0xff]
    %v1292 = vld [vmem:[#allocation6 + $0x1408] sm:$0xff]
    %v1293 = vld [vmem:[#allocation6 + $0x1410] sm:$0xff]
    %v1294 = vld [vmem:[#allocation6 + $0x1418] sm:$0xff]
    %v1295 = vld [vmem:[#allocation6 + $0x1420] sm:$0xff]
    %v1296 = vld [vmem:[#allocation6 + $0x1428] sm:$0xff]
    %v1297 = vld [vmem:[#allocation6 + $0x1430] sm:$0xff]
    %v1298 = vld [vmem:[#allocation6 + $0x1438] sm:$0xff]
    %v1299 = vld [vmem:[#allocation6 + $0x1440] sm:$0xff]
    %v1300 = vld [vmem:[#allocation6 + $0x1448] sm:$0xff]
    %v1301 = vld [vmem:[#allocation6 + $0x1450] sm:$0xff]
    %v1302 = vld [vmem:[#allocation6 + $0x1458] sm:$0xff]
    %v1303 = vld [vmem:[#allocation6 + $0x1460] sm:$0xff]
    %v1304 = vld [vmem:[#allocation6 + $0x1468] sm:$0xff]
    %v1305 = vld [vmem:[#allocation6 + $0x1470] sm:$0xff]
    %v1306 = vld [vmem:[#allocation6 + $0x1478] sm:$0xff]
    %v1307 = vld [vmem:[#allocation6 + $0x1480] sm:$0xff]
    %v1308 = vld [vmem:[#allocation6 + $0x1488] sm:$0xff]
    %v1309 = vld [vmem:[#allocation6 + $0x1490] sm:$0xff]
    %v1310 = vld [vmem:[#allocation6 + $0x1498] sm:$0xff]
    %v1311 = vld [vmem:[#allocation6 + $0x14a0] sm:$0xff]
    %v1312 = vld [vmem:[#allocation6 + $0x14a8] sm:$0xff]
    %v1313 = vld [vmem:[#allocation6 + $0x14b0] sm:$0xff]
    %v1314 = vld [vmem:[#allocation6 + $0x14b8] sm:$0xff]
    %v1315 = vld [vmem:[#allocation6 + $0x14c0] sm:$0xff]
    %v1316 = vld [vmem:[#allocation6 + $0x14c8] sm:$0xff]
    %v1317 = vld [vmem:[#allocation6 + $0x14d0] sm:$0xff]
    %v1318 = vld [vmem:[#allocation6 + $0x14d8] sm:$0xff]
    %v1319 = vld [vmem:[#allocation6 + $0x14e0] sm:$0xff]
    %v1320 = vld [vmem:[#allocation6 + $0x14e8] sm:$0xff]
    %v1321 = vld [vmem:[#allocation6 + $0x14f0] sm:$0xff]
    %v1322 = vld [vmem:[#allocation6 + $0x14f8] sm:$0xff]
    %v1323 = vld [vmem:[#allocation6 + $0x1500] sm:$0xff]
    %v1324 = vld [vmem:[#allocation6 + $0x1508] sm:$0xff]
    %v1325 = vld [vmem:[#allocation6 + $0x1510] sm:$0xff]
    %v1326 = vld [vmem:[#allocation6 + $0x1518] sm:$0xff]
    %v1327 = vld [vmem:[#allocation6 + $0x1520] sm:$0xff]
    %v1328 = vld [vmem:[#allocation6 + $0x1528] sm:$0xff]
    %v1329 = vld [vmem:[#allocation6 + $0x1530] sm:$0xff]
    %v1330 = vld [vmem:[#allocation6 + $0x1538] sm:$0xff]
    %v1331 = vld [vmem:[#allocation6 + $0x1540] sm:$0xff]
    %v1332 = vld [vmem:[#allocation6 + $0x1548] sm:$0xff]
    %v1333 = vld [vmem:[#allocation6 + $0x1550] sm:$0xff]
    %v1334 = vld [vmem:[#allocation6 + $0x1558] sm:$0xff]
    %v1335 = vld [vmem:[#allocation6 + $0x1560] sm:$0xff]
    %v1336 = vld [vmem:[#allocation6 + $0x1568] sm:$0xff]
    %v1337 = vld [vmem:[#allocation6 + $0x1570] sm:$0xff]
    %v1338 = vld [vmem:[#allocation6 + $0x1578] sm:$0xff]
    %v1339 = vld [vmem:[#allocation6 + $0x1580] sm:$0xff]
    %v1340 = vld [vmem:[#allocation6 + $0x1588] sm:$0xff]
    %v1341 = vld [vmem:[#allocation6 + $0x1590] sm:$0xff]
    %v1342 = vld [vmem:[#allocation6 + $0x1598] sm:$0xff]
    %v1343 = vld [vmem:[#allocation6 + $0x15a0] sm:$0xff]
    %v1344 = vld [vmem:[#allocation6 + $0x15a8] sm:$0xff]
    %v1345 = vld [vmem:[#allocation6 + $0x15b0] sm:$0xff]
    %v1346 = vld [vmem:[#allocation6 + $0x15b8] sm:$0xff]
    %v1347 = vld [vmem:[#allocation6 + $0x15c0] sm:$0xff]
    %v1348 = vld [vmem:[#allocation6 + $0x15c8] sm:$0xff]
    %v1349 = vld [vmem:[#allocation6 + $0x15d0] sm:$0xff]
    %v1350 = vld [vmem:[#allocation6 + $0x15d8] sm:$0xff]
    %v1351 = vld [vmem:[#allocation6 + $0x15e0] sm:$0xff]
    %v1352 = vld [vmem:[#allocation6 + $0x15e8] sm:$0xff]
    %v1353 = vld [vmem:[#allocation6 + $0x15f0] sm:$0xff]
    %v1354 = vld [vmem:[#allocation6 + $0x15f8] sm:$0xff]
    %v1355 = vld [vmem:[#allocation6 + $0x1600] sm:$0xff]
    %v1356 = vld [vmem:[#allocation6 + $0x1608] sm:$0xff]
    %v1357 = vld [vmem:[#allocation6 + $0x1610] sm:$0xff]
    %v1358 = vld [vmem:[#allocation6 + $0x1618] sm:$0xff]
    %v1359 = vld [vmem:[#allocation6 + $0x1620] sm:$0xff]
    %v1360 = vld [vmem:[#allocation6 + $0x1628] sm:$0xff]
    %v1361 = vld [vmem:[#allocation6 + $0x1630] sm:$0xff]
    %v1362 = vld [vmem:[#allocation6 + $0x1638] sm:$0xff]
    %v1363 = vld [vmem:[#allocation6 + $0x1640] sm:$0xff]
    %v1364 = vld [vmem:[#allocation6 + $0x1648] sm:$0xff]
    %v1365 = vld [vmem:[#allocation6 + $0x1650] sm:$0xff]
    %v1366 = vld [vmem:[#allocation6 + $0x1658] sm:$0xff]
    %v1367 = vld [vmem:[#allocation6 + $0x1660] sm:$0xff]
    %v1368 = vld [vmem:[#allocation6 + $0x1668] sm:$0xff]
    %v1369 = vld [vmem:[#allocation6 + $0x1670] sm:$0xff]
    %v1370 = vld [vmem:[#allocation6 + $0x1678] sm:$0xff]
    %v1371 = vld [vmem:[#allocation6 + $0x1680] sm:$0xff]
    %v1372 = vld [vmem:[#allocation6 + $0x1688] sm:$0xff]
    %v1373 = vld [vmem:[#allocation6 + $0x1690] sm:$0xff]
    %v1374 = vld [vmem:[#allocation6 + $0x1698] sm:$0xff]
    %v1375 = vld [vmem:[#allocation6 + $0x16a0] sm:$0xff]
    %v1376 = vld [vmem:[#allocation6 + $0x16a8] sm:$0xff]
    %v1377 = vld [vmem:[#allocation6 + $0x16b0] sm:$0xff]
    %v1378 = vld [vmem:[#allocation6 + $0x16b8] sm:$0xff]
    %v1379 = vld [vmem:[#allocation6 + $0x16c0] sm:$0xff]
    %v1380 = vld [vmem:[#allocation6 + $0x16c8] sm:$0xff]
    %v1381 = vld [vmem:[#allocation6 + $0x16d0] sm:$0xff]
    %v1382 = vld [vmem:[#allocation6 + $0x16d8] sm:$0xff]
    %v1383 = vld [vmem:[#allocation6 + $0x16e0] sm:$0xff]
    %v1384 = vld [vmem:[#allocation6 + $0x16e8] sm:$0xff]
    %v1385 = vld [vmem:[#allocation6 + $0x16f0] sm:$0xff]
    %v1386 = vld [vmem:[#allocation6 + $0x16f8] sm:$0xff]
    %v1387 = vld [vmem:[#allocation6 + $0x1700] sm:$0xff]
    %v1388 = vld [vmem:[#allocation6 + $0x1708] sm:$0xff]
    %v1389 = vld [vmem:[#allocation6 + $0x1710] sm:$0xff]
    %v1390 = vld [vmem:[#allocation6 + $0x1718] sm:$0xff]
    %v1391 = vld [vmem:[#allocation6 + $0x1720] sm:$0xff]
    %v1392 = vld [vmem:[#allocation6 + $0x1728] sm:$0xff]
    %v1393 = vld [vmem:[#allocation6 + $0x1730] sm:$0xff]
    %v1394 = vld [vmem:[#allocation6 + $0x1738] sm:$0xff]
    %v1395 = vld [vmem:[#allocation6 + $0x1740] sm:$0xff]
    %v1396 = vld [vmem:[#allocation6 + $0x1748] sm:$0xff]
    %v1397 = vld [vmem:[#allocation6 + $0x1750] sm:$0xff]
    %v1398 = vld [vmem:[#allocation6 + $0x1758] sm:$0xff]
    %v1399 = vld [vmem:[#allocation6 + $0x1760] sm:$0xff]
    %v1400 = vld [vmem:[#allocation6 + $0x1768] sm:$0xff]
    %v1401 = vld [vmem:[#allocation6 + $0x1770] sm:$0xff]
    %v1402 = vld [vmem:[#allocation6 + $0x1778] sm:$0xff]
    %v1403 = vld [vmem:[#allocation6 + $0x1780] sm:$0xff]
    %v1404 = vld [vmem:[#allocation6 + $0x1788] sm:$0xff]
    %v1405 = vld [vmem:[#allocation6 + $0x1790] sm:$0xff]
    %v1406 = vld [vmem:[#allocation6 + $0x1798] sm:$0xff]
    %v1407 = vld [vmem:[#allocation6 + $0x17a0] sm:$0xff]
    %v1408 = vld [vmem:[#allocation6 + $0x17a8] sm:$0xff]
    %v1409 = vld [vmem:[#allocation6 + $0x17b0] sm:$0xff]
    %v1410 = vld [vmem:[#allocation6 + $0x17b8] sm:$0xff]
    %v1411 = vld [vmem:[#allocation6 + $0x17c0] sm:$0xff]
    %v1412 = vld [vmem:[#allocation6 + $0x17c8] sm:$0xff]
    %v1413 = vld [vmem:[#allocation6 + $0x17d0] sm:$0xff]
    %v1414 = vld [vmem:[#allocation6 + $0x17d8] sm:$0xff]
    %v1415 = vld [vmem:[#allocation6 + $0x17e0] sm:$0xff]
    %v1416 = vld [vmem:[#allocation6 + $0x17e8] sm:$0xff]
    %v1417 = vld [vmem:[#allocation6 + $0x17f0] sm:$0xff]
    %v1418 = vld [vmem:[#allocation6 + $0x17f8] sm:$0xff]
    %v1419 = vld [vmem:[#allocation6 + $0x1800] sm:$0xff]
    %v1420 = vld [vmem:[#allocation6 + $0x1808] sm:$0xff]
    %v1421 = vld [vmem:[#allocation6 + $0x1810] sm:$0xff]
    %v1422 = vld [vmem:[#allocation6 + $0x1818] sm:$0xff]
    %v1423 = vld [vmem:[#allocation6 + $0x1820] sm:$0xff]
    %v1424 = vld [vmem:[#allocation6 + $0x1828] sm:$0xff]
    %v1425 = vld [vmem:[#allocation6 + $0x1830] sm:$0xff]
    %v1426 = vld [vmem:[#allocation6 + $0x1838] sm:$0xff]
    %v1427 = vld [vmem:[#allocation6 + $0x1840] sm:$0xff]
    %v1428 = vld [vmem:[#allocation6 + $0x1848] sm:$0xff]
    %v1429 = vld [vmem:[#allocation6 + $0x1850] sm:$0xff]
    %v1430 = vld [vmem:[#allocation6 + $0x1858] sm:$0xff]
    %v1431 = vld [vmem:[#allocation6 + $0x1860] sm:$0xff]
    %v1432 = vld [vmem:[#allocation6 + $0x1868] sm:$0xff]
    %v1433 = vld [vmem:[#allocation6 + $0x1870] sm:$0xff]
    %v1434 = vld [vmem:[#allocation6 + $0x1878] sm:$0xff]
    %v1435 = vld [vmem:[#allocation6 + $0x1880] sm:$0xff]
    %v1436 = vld [vmem:[#allocation6 + $0x1888] sm:$0xff]
    %v1437 = vld [vmem:[#allocation6 + $0x1890] sm:$0xff]
    %v1438 = vld [vmem:[#allocation6 + $0x1898] sm:$0xff]
    %v1439 = vld [vmem:[#allocation6 + $0x18a0] sm:$0xff]
    %v1440 = vld [vmem:[#allocation6 + $0x18a8] sm:$0xff]
    %v1441 = vld [vmem:[#allocation6 + $0x18b0] sm:$0xff]
    %v1442 = vld [vmem:[#allocation6 + $0x18b8] sm:$0xff]
    %v1443 = vld [vmem:[#allocation6 + $0x18c0] sm:$0xff]
    %v1444 = vld [vmem:[#allocation6 + $0x18c8] sm:$0xff]
    %v1445 = vld [vmem:[#allocation6 + $0x18d0] sm:$0xff]
    %v1446 = vld [vmem:[#allocation6 + $0x18d8] sm:$0xff]
    %v1447 = vld [vmem:[#allocation6 + $0x18e0] sm:$0xff]
    %v1448 = vld [vmem:[#allocation6 + $0x18e8] sm:$0xff]
    %v1449 = vld [vmem:[#allocation6 + $0x18f0] sm:$0xff]
    %v1450 = vld [vmem:[#allocation6 + $0x18f8] sm:$0xff]
    %v1451 = vld [vmem:[#allocation6 + $0x1900] sm:$0xff]
    %v1452 = vld [vmem:[#allocation6 + $0x1908] sm:$0xff]
    %v1453 = vld [vmem:[#allocation6 + $0x1910] sm:$0xff]
    %v1454 = vld [vmem:[#allocation6 + $0x1918] sm:$0xff]
    %v1455 = vld [vmem:[#allocation6 + $0x1920] sm:$0xff]
    %v1456 = vld [vmem:[#allocation6 + $0x1928] sm:$0xff]
    %v1457 = vld [vmem:[#allocation6 + $0x1930] sm:$0xff]
    %v1458 = vld [vmem:[#allocation6 + $0x1938] sm:$0xff]
    %v1459 = vld [vmem:[#allocation6 + $0x1940] sm:$0xff]
    %v1460 = vld [vmem:[#allocation6 + $0x1948] sm:$0xff]
    %v1461 = vld [vmem:[#allocation6 + $0x1950] sm:$0xff]
    %v1462 = vld [vmem:[#allocation6 + $0x1958] sm:$0xff]
    %v1463 = vld [vmem:[#allocation6 + $0x1960] sm:$0xff]
    %v1464 = vld [vmem:[#allocation6 + $0x1968] sm:$0xff]
    %v1465 = vld [vmem:[#allocation6 + $0x1970] sm:$0xff]
    %v1466 = vld [vmem:[#allocation6 + $0x1978] sm:$0xff]
    %v1467 = vld [vmem:[#allocation6 + $0x1980] sm:$0xff]
    %v1468 = vld [vmem:[#allocation6 + $0x1988] sm:$0xff]
    %v1469 = vld [vmem:[#allocation6 + $0x1990] sm:$0xff]
    %v1470 = vld [vmem:[#allocation6 + $0x1998] sm:$0xff]
    %v1471 = vld [vmem:[#allocation6 + $0x19a0] sm:$0xff]
    %v1472 = vld [vmem:[#allocation6 + $0x19a8] sm:$0xff]
    %v1473 = vld [vmem:[#allocation6 + $0x19b0] sm:$0xff]
    %v1474 = vld [vmem:[#allocation6 + $0x19b8] sm:$0xff]
    %v1475 = vld [vmem:[#allocation6 + $0x19c0] sm:$0xff]
    %v1476 = vld [vmem:[#allocation6 + $0x19c8] sm:$0xff]
    %v1477 = vld [vmem:[#allocation6 + $0x19d0] sm:$0xff]
    %v1478 = vld [vmem:[#allocation6 + $0x19d8] sm:$0xff]
    %v1479 = vld [vmem:[#allocation6 + $0x19e0] sm:$0xff]
    %v1480 = vld [vmem:[#allocation6 + $0x19e8] sm:$0xff]
    %v1481 = vld [vmem:[#allocation6 + $0x19f0] sm:$0xff]
    %v1482 = vld [vmem:[#allocation6 + $0x19f8] sm:$0xff]
    %v1483 = vld [vmem:[#allocation6 + $0x1a00] sm:$0xff]
    %v1484 = vld [vmem:[#allocation6 + $0x1a08] sm:$0xff]
    %v1485 = vld [vmem:[#allocation6 + $0x1a10] sm:$0xff]
    %v1486 = vld [vmem:[#allocation6 + $0x1a18] sm:$0xff]
    %v1487 = vld [vmem:[#allocation6 + $0x1a20] sm:$0xff]
    %v1488 = vld [vmem:[#allocation6 + $0x1a28] sm:$0xff]
    %v1489 = vld [vmem:[#allocation6 + $0x1a30] sm:$0xff]
    %v1490 = vld [vmem:[#allocation6 + $0x1a38] sm:$0xff]
    %v1491 = vld [vmem:[#allocation6 + $0x1a40] sm:$0xff]
    %v1492 = vld [vmem:[#allocation6 + $0x1a48] sm:$0xff]
    %v1493 = vld [vmem:[#allocation6 + $0x1a50] sm:$0xff]
    %v1494 = vld [vmem:[#allocation6 + $0x1a58] sm:$0xff]
    %v1495 = vld [vmem:[#allocation6 + $0x1a60] sm:$0xff]
    %v1496 = vld [vmem:[#allocation6 + $0x1a68] sm:$0xff]
    %v1497 = vld [vmem:[#allocation6 + $0x1a70] sm:$0xff]
    %v1498 = vld [vmem:[#allocation6 + $0x1a78] sm:$0xff]
    %v1499 = vld [vmem:[#allocation6 + $0x1a80] sm:$0xff]
    %v1500 = vld [vmem:[#allocation6 + $0x1a88] sm:$0xff]
    %v1501 = vld [vmem:[#allocation6 + $0x1a90] sm:$0xff]
    %v1502 = vld [vmem:[#allocation6 + $0x1a98] sm:$0xff]
    %v1503 = vld [vmem:[#allocation6 + $0x1aa0] sm:$0xff]
    %v1504 = vld [vmem:[#allocation6 + $0x1aa8] sm:$0xff]
    %v1505 = vld [vmem:[#allocation6 + $0x1ab0] sm:$0xff]
    %v1506 = vld [vmem:[#allocation6 + $0x1ab8] sm:$0xff]
    %v1507 = vld [vmem:[#allocation6 + $0x1ac0] sm:$0xff]
    %v1508 = vld [vmem:[#allocation6 + $0x1ac8] sm:$0xff]
    %v1509 = vld [vmem:[#allocation6 + $0x1ad0] sm:$0xff]
    %v1510 = vld [vmem:[#allocation6 + $0x1ad8] sm:$0xff]
    %v1511 = vld [vmem:[#allocation6 + $0x1ae0] sm:$0xff]
    %v1512 = vld [vmem:[#allocation6 + $0x1ae8] sm:$0xff]
    %v1513 = vld [vmem:[#allocation6 + $0x1af0] sm:$0xff]
    %v1514 = vld [vmem:[#allocation6 + $0x1af8] sm:$0xff]
    %v1515 = vld [vmem:[#allocation6 + $0x1b00] sm:$0xff]
    %v1516 = vld [vmem:[#allocation6 + $0x1b08] sm:$0xff]
    %v1517 = vld [vmem:[#allocation6 + $0x1b10] sm:$0xff]
    %v1518 = vld [vmem:[#allocation6 + $0x1b18] sm:$0xff]
    %v1519 = vld [vmem:[#allocation6 + $0x1b20] sm:$0xff]
    %v1520 = vld [vmem:[#allocation6 + $0x1b28] sm:$0xff]
    %v1521 = vld [vmem:[#allocation6 + $0x1b30] sm:$0xff]
    %v1522 = vld [vmem:[#allocation6 + $0x1b38] sm:$0xff]
    %v1523 = vld [vmem:[#allocation6 + $0x1b40] sm:$0xff]
    %v1524 = vld [vmem:[#allocation6 + $0x1b48] sm:$0xff]
    %v1525 = vld [vmem:[#allocation6 + $0x1b50] sm:$0xff]
    %v1526 = vld [vmem:[#allocation6 + $0x1b58] sm:$0xff]
    %v1527 = vld [vmem:[#allocation6 + $0x1b60] sm:$0xff]
    %v1528 = vld [vmem:[#allocation6 + $0x1b68] sm:$0xff]
    %v1529 = vld [vmem:[#allocation6 + $0x1b70] sm:$0xff]
    %v1530 = vld [vmem:[#allocation6 + $0x1b78] sm:$0xff]
    %v1531 = vld [vmem:[#allocation6 + $0x1b80] sm:$0xff]
    %v1532 = vld [vmem:[#allocation6 + $0x1b88] sm:$0xff]
    %v1533 = vld [vmem:[#allocation6 + $0x1b90] sm:$0xff]
    %v1534 = vld [vmem:[#allocation6 + $0x1b98] sm:$0xff]
    %v1535 = vld [vmem:[#allocation6 + $0x1ba0] sm:$0xff]
    %v1536 = vld [vmem:[#allocation6 + $0x1ba8] sm:$0xff]
    %v1537 = vld [vmem:[#allocation6 + $0x1bb0] sm:$0xff]
    %v1538 = vld [vmem:[#allocation6 + $0x1bb8] sm:$0xff]
    %v1539 = vld [vmem:[#allocation6 + $0x1bc0] sm:$0xff]
    %v1540 = vld [vmem:[#allocation6 + $0x1bc8] sm:$0xff]
    %v1541 = vld [vmem:[#allocation6 + $0x1bd0] sm:$0xff]
    %v1542 = vld [vmem:[#allocation6 + $0x1bd8] sm:$0xff]
    %v1543 = vld [vmem:[#allocation6 + $0x1be0] sm:$0xff]
    %v1544 = vld [vmem:[#allocation6 + $0x1be8] sm:$0xff]
    %v1545 = vld [vmem:[#allocation6 + $0x1bf0] sm:$0xff]
    %v1546 = vld [vmem:[#allocation6 + $0x1bf8] sm:$0xff]
    %v1547 = vld [vmem:[#allocation6 + $0x1c00] sm:$0xff]
    %v1548 = vld [vmem:[#allocation6 + $0x1c08] sm:$0xff]
    %v1549 = vld [vmem:[#allocation6 + $0x1c10] sm:$0xff]
    %v1550 = vld [vmem:[#allocation6 + $0x1c18] sm:$0xff]
    %v1551 = vld [vmem:[#allocation6 + $0x1c20] sm:$0xff]
    %v1552 = vld [vmem:[#allocation6 + $0x1c28] sm:$0xff]
    %v1553 = vld [vmem:[#allocation6 + $0x1c30] sm:$0xff]
    %v1554 = vld [vmem:[#allocation6 + $0x1c38] sm:$0xff]
    %v1555 = vld [vmem:[#allocation6 + $0x1c40] sm:$0xff]
    %v1556 = vld [vmem:[#allocation6 + $0x1c48] sm:$0xff]
    %v1557 = vld [vmem:[#allocation6 + $0x1c50] sm:$0xff]
    %v1558 = vld [vmem:[#allocation6 + $0x1c58] sm:$0xff]
    %v1559 = vld [vmem:[#allocation6 + $0x1c60] sm:$0xff]
    %v1560 = vld [vmem:[#allocation6 + $0x1c68] sm:$0xff]
    %v1561 = vld [vmem:[#allocation6 + $0x1c70] sm:$0xff]
    %v1562 = vld [vmem:[#allocation6 + $0x1c78] sm:$0xff]
    %v1563 = vld [vmem:[#allocation6 + $0x1c80] sm:$0xff]
    %v1564 = vld [vmem:[#allocation6 + $0x1c88] sm:$0xff]
    %v1565 = vld [vmem:[#allocation6 + $0x1c90] sm:$0xff]
    %v1566 = vld [vmem:[#allocation6 + $0x1c98] sm:$0xff]
    %v1567 = vld [vmem:[#allocation6 + $0x1ca0] sm:$0xff]
    %v1568 = vld [vmem:[#allocation6 + $0x1ca8] sm:$0xff]
    %v1569 = vld [vmem:[#allocation6 + $0x1cb0] sm:$0xff]
    %v1570 = vld [vmem:[#allocation6 + $0x1cb8] sm:$0xff]
    %v1571 = vld [vmem:[#allocation6 + $0x1cc0] sm:$0xff]
    %v1572 = vld [vmem:[#allocation6 + $0x1cc8] sm:$0xff]
    %v1573 = vld [vmem:[#allocation6 + $0x1cd0] sm:$0xff]
    %v1574 = vld [vmem:[#allocation6 + $0x1cd8] sm:$0xff]
    %v1575 = vld [vmem:[#allocation6 + $0x1ce0] sm:$0xff]
    %v1576 = vld [vmem:[#allocation6 + $0x1ce8] sm:$0xff]
    %v1577 = vld [vmem:[#allocation6 + $0x1cf0] sm:$0xff]
    %v1578 = vld [vmem:[#allocation6 + $0x1cf8] sm:$0xff]
    %v1579 = vld [vmem:[#allocation6 + $0x1d00] sm:$0xff]
    %v1580 = vld [vmem:[#allocation6 + $0x1d08] sm:$0xff]
    %v1581 = vld [vmem:[#allocation6 + $0x1d10] sm:$0xff]
    %v1582 = vld [vmem:[#allocation6 + $0x1d18] sm:$0xff]
    %v1583 = vld [vmem:[#allocation6 + $0x1d20] sm:$0xff]
    %v1584 = vld [vmem:[#allocation6 + $0x1d28] sm:$0xff]
    %v1585 = vld [vmem:[#allocation6 + $0x1d30] sm:$0xff]
    %v1586 = vld [vmem:[#allocation6 + $0x1d38] sm:$0xff]
    %v1587 = vld [vmem:[#allocation6 + $0x1d40] sm:$0xff]
    %v1588 = vld [vmem:[#allocation6 + $0x1d48] sm:$0xff]
    %v1589 = vld [vmem:[#allocation6 + $0x1d50] sm:$0xff]
    %v1590 = vld [vmem:[#allocation6 + $0x1d58] sm:$0xff]
    %v1591 = vld [vmem:[#allocation6 + $0x1d60] sm:$0xff]
    %v1592 = vld [vmem:[#allocation6 + $0x1d68] sm:$0xff]
    %v1593 = vld [vmem:[#allocation6 + $0x1d70] sm:$0xff]
    %v1594 = vld [vmem:[#allocation6 + $0x1d78] sm:$0xff]
    %v1595 = vld [vmem:[#allocation6 + $0x1d80] sm:$0xff]
    %v1596 = vld [vmem:[#allocation6 + $0x1d88] sm:$0xff]
    %v1597 = vld [vmem:[#allocation6 + $0x1d90] sm:$0xff]
    %v1598 = vld [vmem:[#allocation6 + $0x1d98] sm:$0xff]
    %v1599 = vld [vmem:[#allocation6 + $0x1da0] sm:$0xff]
    %v1600 = vld [vmem:[#allocation6 + $0x1da8] sm:$0xff]
    %v1601 = vld [vmem:[#allocation6 + $0x1db0] sm:$0xff]
    %v1602 = vld [vmem:[#allocation6 + $0x1db8] sm:$0xff]
    %v1603 = vld [vmem:[#allocation6 + $0x1dc0] sm:$0xff]
    %v1604 = vld [vmem:[#allocation6 + $0x1dc8] sm:$0xff]
    %v1605 = vld [vmem:[#allocation6 + $0x1dd0] sm:$0xff]
    %v1606 = vld [vmem:[#allocation6 + $0x1dd8] sm:$0xff]
    %v1607 = vld [vmem:[#allocation6 + $0x1de0] sm:$0xff]
    %v1608 = vld [vmem:[#allocation6 + $0x1de8] sm:$0xff]
    %v1609 = vld [vmem:[#allocation6 + $0x1df0] sm:$0xff]
    %v1610 = vld [vmem:[#allocation6 + $0x1df8] sm:$0xff]
    %v1611 = vld [vmem:[#allocation6 + $0x1e00] sm:$0xff]
    %v1612 = vld [vmem:[#allocation6 + $0x1e08] sm:$0xff]
    %v1613 = vld [vmem:[#allocation6 + $0x1e10] sm:$0xff]
    %v1614 = vld [vmem:[#allocation6 + $0x1e18] sm:$0xff]
    %v1615 = vld [vmem:[#allocation6 + $0x1e20] sm:$0xff]
    %v1616 = vld [vmem:[#allocation6 + $0x1e28] sm:$0xff]
    %v1617 = vld [vmem:[#allocation6 + $0x1e30] sm:$0xff]
    %v1618 = vld [vmem:[#allocation6 + $0x1e38] sm:$0xff]
    %v1619 = vld [vmem:[#allocation6 + $0x1e40] sm:$0xff]
    %v1620 = vld [vmem:[#allocation6 + $0x1e48] sm:$0xff]
    %v1621 = vld [vmem:[#allocation6 + $0x1e50] sm:$0xff]
    %v1622 = vld [vmem:[#allocation6 + $0x1e58] sm:$0xff]
    %v1623 = vld [vmem:[#allocation6 + $0x1e60] sm:$0xff]
    %v1624 = vld [vmem:[#allocation6 + $0x1e68] sm:$0xff]
    %v1625 = vld [vmem:[#allocation6 + $0x1e70] sm:$0xff]
    %v1626 = vld [vmem:[#allocation6 + $0x1e78] sm:$0xff]
    %v1627 = vld [vmem:[#allocation6 + $0x1e80] sm:$0xff]
    %v1628 = vld [vmem:[#allocation6 + $0x1e88] sm:$0xff]
    %v1629 = vld [vmem:[#allocation6 + $0x1e90] sm:$0xff]
    %v1630 = vld [vmem:[#allocation6 + $0x1e98] sm:$0xff]
    %v1631 = vld [vmem:[#allocation6 + $0x1ea0] sm:$0xff]
    %v1632 = vld [vmem:[#allocation6 + $0x1ea8] sm:$0xff]
    %v1633 = vld [vmem:[#allocation6 + $0x1eb0] sm:$0xff]
    %v1634 = vld [vmem:[#allocation6 + $0x1eb8] sm:$0xff]
    %v1635 = vld [vmem:[#allocation6 + $0x1ec0] sm:$0xff]
    %v1636 = vld [vmem:[#allocation6 + $0x1ec8] sm:$0xff]
    %v1637 = vld [vmem:[#allocation6 + $0x1ed0] sm:$0xff]
    %v1638 = vld [vmem:[#allocation6 + $0x1ed8] sm:$0xff]
    %v1639 = vld [vmem:[#allocation6 + $0x1ee0] sm:$0xff]
    %v1640 = vld [vmem:[#allocation6 + $0x1ee8] sm:$0xff]
    %v1641 = vld [vmem:[#allocation6 + $0x1ef0] sm:$0xff]
    %v1642 = vld [vmem:[#allocation6 + $0x1ef8] sm:$0xff]
    %v1643 = vld [vmem:[#allocation6 + $0x1f00] sm:$0xff]
    %v1644 = vld [vmem:[#allocation6 + $0x1f08] sm:$0xff]
    %v1645 = vld [vmem:[#allocation6 + $0x1f10] sm:$0xff]
    %v1646 = vld [vmem:[#allocation6 + $0x1f18] sm:$0xff]
    %v1647 = vld [vmem:[#allocation6 + $0x1f20] sm:$0xff]
    %v1648 = vld [vmem:[#allocation6 + $0x1f28] sm:$0xff]
    %v1649 = vld [vmem:[#allocation6 + $0x1f30] sm:$0xff]
    %v1650 = vld [vmem:[#allocation6 + $0x1f38] sm:$0xff]
    %v1651 = vld [vmem:[#allocation6 + $0x1f40] sm:$0xff]
    %v1652 = vld [vmem:[#allocation6 + $0x1f48] sm:$0xff]
    %v1653 = vld [vmem:[#allocation6 + $0x1f50] sm:$0xff]
    %v1654 = vld [vmem:[#allocation6 + $0x1f58] sm:$0xff]
    %v1655 = vld [vmem:[#allocation6 + $0x1f60] sm:$0xff]
    %v1656 = vld [vmem:[#allocation6 + $0x1f68] sm:$0xff]
    %v1657 = vld [vmem:[#allocation6 + $0x1f70] sm:$0xff]
    %v1658 = vld [vmem:[#allocation6 + $0x1f78] sm:$0xff]
    %v1659 = vld [vmem:[#allocation6 + $0x1f80] sm:$0xff]
    %v1660 = vld [vmem:[#allocation6 + $0x1f88] sm:$0xff]
    %v1661 = vld [vmem:[#allocation6 + $0x1f90] sm:$0xff]
    %v1662 = vld [vmem:[#allocation6 + $0x1f98] sm:$0xff]
    %v1663 = vld [vmem:[#allocation6 + $0x1fa0] sm:$0xff]
    %v1664 = vld [vmem:[#allocation6 + $0x1fa8] sm:$0xff]
    %v1665 = vld [vmem:[#allocation6 + $0x1fb0] sm:$0xff]
    %v1666 = vld [vmem:[#allocation6 + $0x1fb8] sm:$0xff]
    %v1667 = vld [vmem:[#allocation6 + $0x1fc0] sm:$0xff]
    %v1668 = vld [vmem:[#allocation6 + $0x1fc8] sm:$0xff]
    %v1669 = vld [vmem:[#allocation6 + $0x1fd0] sm:$0xff]
    %v1670 = vld [vmem:[#allocation6 + $0x1fd8] sm:$0xff]
    %v1671 = vld [vmem:[#allocation6 + $0x1fe0] sm:$0xff]
    %v1672 = vld [vmem:[#allocation6 + $0x1fe8] sm:$0xff]
    %v1673 = vld [vmem:[#allocation6 + $0x1ff0] sm:$0xff]
    %v1674 = vld [vmem:[#allocation6 + $0x1ff8] sm:$0xff]
    %v1675 = vld [vmem:[#allocation7] sm:$0xff]
    %v1676 = vld [vmem:[#allocation9] sm:$0xff]
    %v1677 = vld [vmem:[#allocation9 + $0x8] sm:$0xff]
    %v1678 = vld [vmem:[#allocation9 + $0x10] sm:$0xff]
    %v1679 = vld [vmem:[#allocation9 + $0x18] sm:$0xff]
    %v1680 = vld [vmem:[#allocation9 + $0x20] sm:$0xff]
    %v1681 = vld [vmem:[#allocation9 + $0x28] sm:$0xff]
    %v1682 = vld [vmem:[#allocation9 + $0x30] sm:$0xff]
    %v1683 = vld [vmem:[#allocation9 + $0x38] sm:$0xff]
    %v1684 = vld [vmem:[#allocation9 + $0x40] sm:$0xff]
    %v1685 = vld [vmem:[#allocation9 + $0x48] sm:$0xff]
    %v1686 = vld [vmem:[#allocation9 + $0x50] sm:$0xff]
    %v1687 = vld [vmem:[#allocation9 + $0x58] sm:$0xff]
    %v1688 = vld [vmem:[#allocation9 + $0x60] sm:$0xff]
    %v1689 = vld [vmem:[#allocation9 + $0x68] sm:$0xff]
    %v1690 = vld [vmem:[#allocation9 + $0x70] sm:$0xff]
    %v1691 = vld [vmem:[#allocation9 + $0x78] sm:$0xff]
    %v1692 = vld [vmem:[#allocation9 + $0x80] sm:$0xff]
    %v1693 = vld [vmem:[#allocation9 + $0x88] sm:$0xff]
    %v1694 = vld [vmem:[#allocation9 + $0x90] sm:$0xff]
    %v1695 = vld [vmem:[#allocation9 + $0x98] sm:$0xff]
    %v1696 = vld [vmem:[#allocation9 + $0xa0] sm:$0xff]
    %v1697 = vld [vmem:[#allocation9 + $0xa8] sm:$0xff]
    %v1698 = vld [vmem:[#allocation9 + $0xb0] sm:$0xff]
    %v1699 = vld [vmem:[#allocation9 + $0xb8] sm:$0xff]
    %v1700 = vld [vmem:[#allocation9 + $0xc0] sm:$0xff]
    %v1701 = vld [vmem:[#allocation9 + $0xc8] sm:$0xff]
    %v1702 = vld [vmem:[#allocation9 + $0xd0] sm:$0xff]
    %v1703 = vld [vmem:[#allocation9 + $0xd8] sm:$0xff]
    %v1704 = vld [vmem:[#allocation9 + $0xe0] sm:$0xff]
    %v1705 = vld [vmem:[#allocation9 + $0xe8] sm:$0xff]
    %v1706 = vld [vmem:[#allocation9 + $0xf0] sm:$0xff]
    %v1707 = vld [vmem:[#allocation9 + $0xf8] sm:$0xff]
    %v1708 = vld [vmem:[#allocation9 + $0x100] sm:$0xff]
    %v1709 = vld [vmem:[#allocation9 + $0x108] sm:$0xff]
    %v1710 = vld [vmem:[#allocation9 + $0x110] sm:$0xff]
    %v1711 = vld [vmem:[#allocation9 + $0x118] sm:$0xff]
    %v1712 = vld [vmem:[#allocation9 + $0x120] sm:$0xff]
    %v1713 = vld [vmem:[#allocation9 + $0x128] sm:$0xff]
    %v1714 = vld [vmem:[#allocation9 + $0x130] sm:$0xff]
    %v1715 = vld [vmem:[#allocation9 + $0x138] sm:$0xff]
    %v1716 = vld [vmem:[#allocation9 + $0x140] sm:$0xff]
    %v1717 = vld [vmem:[#allocation9 + $0x148] sm:$0xff]
    %v1718 = vld [vmem:[#allocation9 + $0x150] sm:$0xff]
    %v1719 = vld [vmem:[#allocation9 + $0x158] sm:$0xff]
    %v1720 = vld [vmem:[#allocation9 + $0x160] sm:$0xff]
    %v1721 = vld [vmem:[#allocation9 + $0x168] sm:$0xff]
    %v1722 = vld [vmem:[#allocation9 + $0x170] sm:$0xff]
    %v1723 = vld [vmem:[#allocation9 + $0x178] sm:$0xff]
    %v1724 = vld [vmem:[#allocation9 + $0x180] sm:$0xff]
    %v1725 = vld [vmem:[#allocation9 + $0x188] sm:$0xff]
    %v1726 = vld [vmem:[#allocation9 + $0x190] sm:$0xff]
    %v1727 = vld [vmem:[#allocation9 + $0x198] sm:$0xff]
    %v1728 = vld [vmem:[#allocation9 + $0x1a0] sm:$0xff]
    %v1729 = vld [vmem:[#allocation9 + $0x1a8] sm:$0xff]
    %v1730 = vld [vmem:[#allocation9 + $0x1b0] sm:$0xff]
    %v1731 = vld [vmem:[#allocation9 + $0x1b8] sm:$0xff]
    %v1732 = vld [vmem:[#allocation9 + $0x1c0] sm:$0xff]
    %v1733 = vld [vmem:[#allocation9 + $0x1c8] sm:$0xff]
    %v1734 = vld [vmem:[#allocation9 + $0x1d0] sm:$0xff]
    %v1735 = vld [vmem:[#allocation9 + $0x1d8] sm:$0xff]
    %v1736 = vld [vmem:[#allocation9 + $0x1e0] sm:$0xff]
    %v1737 = vld [vmem:[#allocation9 + $0x1e8] sm:$0xff]
    %v1738 = vld [vmem:[#allocation9 + $0x1f0] sm:$0xff]
    %v1739 = vld [vmem:[#allocation9 + $0x1f8] sm:$0xff]
    %v1740 = vld [vmem:[#allocation9 + $0x200] sm:$0xff]
    %v1741 = vld [vmem:[#allocation9 + $0x208] sm:$0xff]
    %v1742 = vld [vmem:[#allocation9 + $0x210] sm:$0xff]
    %v1743 = vld [vmem:[#allocation9 + $0x218] sm:$0xff]
    %v1744 = vld [vmem:[#allocation9 + $0x220] sm:$0xff]
    %v1745 = vld [vmem:[#allocation9 + $0x228] sm:$0xff]
    %v1746 = vld [vmem:[#allocation9 + $0x230] sm:$0xff]
    %v1747 = vld [vmem:[#allocation9 + $0x238] sm:$0xff]
    %v1748 = vld [vmem:[#allocation9 + $0x240] sm:$0xff]
    %v1749 = vld [vmem:[#allocation9 + $0x248] sm:$0xff]
    %v1750 = vld [vmem:[#allocation9 + $0x250] sm:$0xff]
    %v1751 = vld [vmem:[#allocation9 + $0x258] sm:$0xff]
    %v1752 = vld [vmem:[#allocation9 + $0x260] sm:$0xff]
    %v1753 = vld [vmem:[#allocation9 + $0x268] sm:$0xff]
    %v1754 = vld [vmem:[#allocation9 + $0x270] sm:$0xff]
    %v1755 = vld [vmem:[#allocation9 + $0x278] sm:$0xff]
    %v1756 = vld [vmem:[#allocation9 + $0x280] sm:$0xff]
    %v1757 = vld [vmem:[#allocation9 + $0x288] sm:$0xff]
    %v1758 = vld [vmem:[#allocation9 + $0x290] sm:$0xff]
    %v1759 = vld [vmem:[#allocation9 + $0x298] sm:$0xff]
    %v1760 = vld [vmem:[#allocation9 + $0x2a0] sm:$0xff]
    %v1761 = vld [vmem:[#allocation9 + $0x2a8] sm:$0xff]
    %v1762 = vld [vmem:[#allocation9 + $0x2b0] sm:$0xff]
    %v1763 = vld [vmem:[#allocation9 + $0x2b8] sm:$0xff]
    %v1764 = vld [vmem:[#allocation9 + $0x2c0] sm:$0xff]
    %v1765 = vld [vmem:[#allocation9 + $0x2c8] sm:$0xff]
    %v1766 = vld [vmem:[#allocation9 + $0x2d0] sm:$0xff]
    %v1767 = vld [vmem:[#allocation9 + $0x2d8] sm:$0xff]
    %v1768 = vld [vmem:[#allocation9 + $0x2e0] sm:$0xff]
    %v1769 = vld [vmem:[#allocation9 + $0x2e8] sm:$0xff]
    %v1770 = vld [vmem:[#allocation9 + $0x2f0] sm:$0xff]
    %v1771 = vld [vmem:[#allocation9 + $0x2f8] sm:$0xff]
    %v1772 = vld [vmem:[#allocation9 + $0x300] sm:$0xff]
    %v1773 = vld [vmem:[#allocation9 + $0x308] sm:$0xff]
    %v1774 = vld [vmem:[#allocation9 + $0x310] sm:$0xff]
    %v1775 = vld [vmem:[#allocation9 + $0x318] sm:$0xff]
    %v1776 = vld [vmem:[#allocation9 + $0x320] sm:$0xff]
    %v1777 = vld [vmem:[#allocation9 + $0x328] sm:$0xff]
    %v1778 = vld [vmem:[#allocation9 + $0x330] sm:$0xff]
    %v1779 = vld [vmem:[#allocation9 + $0x338] sm:$0xff]
    %v1780 = vld [vmem:[#allocation9 + $0x340] sm:$0xff]
    %v1781 = vld [vmem:[#allocation9 + $0x348] sm:$0xff]
    %v1782 = vld [vmem:[#allocation9 + $0x350] sm:$0xff]
    %v1783 = vld [vmem:[#allocation9 + $0x358] sm:$0xff]
    %v1784 = vld [vmem:[#allocation9 + $0x360] sm:$0xff]
    %v1785 = vld [vmem:[#allocation9 + $0x368] sm:$0xff]
    %v1786 = vld [vmem:[#allocation9 + $0x370] sm:$0xff]
    %v1787 = vld [vmem:[#allocation9 + $0x378] sm:$0xff]
    %v1788 = vld [vmem:[#allocation9 + $0x380] sm:$0xff]
    %v1789 = vld [vmem:[#allocation9 + $0x388] sm:$0xff]
    %v1790 = vld [vmem:[#allocation9 + $0x390] sm:$0xff]
    %v1791 = vld [vmem:[#allocation9 + $0x398] sm:$0xff]
    %v1792 = vld [vmem:[#allocation9 + $0x3a0] sm:$0xff]
    %v1793 = vld [vmem:[#allocation9 + $0x3a8] sm:$0xff]
    %v1794 = vld [vmem:[#allocation9 + $0x3b0] sm:$0xff]
    %v1795 = vld [vmem:[#allocation9 + $0x3b8] sm:$0xff]
    %v1796 = vld [vmem:[#allocation9 + $0x3c0] sm:$0xff]
    %v1797 = vld [vmem:[#allocation9 + $0x3c8] sm:$0xff]
    %v1798 = vld [vmem:[#allocation9 + $0x3d0] sm:$0xff]
    %v1799 = vld [vmem:[#allocation9 + $0x3d8] sm:$0xff]
    %v1800 = vld [vmem:[#allocation9 + $0x3e0] sm:$0xff]
    %v1801 = vld [vmem:[#allocation9 + $0x3e8] sm:$0xff]
    %v1802 = vld [vmem:[#allocation9 + $0x3f0] sm:$0xff]
    %v1803 = vld [vmem:[#allocation9 + $0x3f8] sm:$0xff]
    %v1804 = vld [vmem:[#allocation9 + $0x400] sm:$0xff]
    %v1805 = vld [vmem:[#allocation9 + $0x408] sm:$0xff]
    %v1806 = vld [vmem:[#allocation9 + $0x410] sm:$0xff]
    %v1807 = vld [vmem:[#allocation9 + $0x418] sm:$0xff]
    %v1808 = vld [vmem:[#allocation9 + $0x420] sm:$0xff]
    %v1809 = vld [vmem:[#allocation9 + $0x428] sm:$0xff]
    %v1810 = vld [vmem:[#allocation9 + $0x430] sm:$0xff]
    %v1811 = vld [vmem:[#allocation9 + $0x438] sm:$0xff]
    %v1812 = vld [vmem:[#allocation9 + $0x440] sm:$0xff]
    %v1813 = vld [vmem:[#allocation9 + $0x448] sm:$0xff]
    %v1814 = vld [vmem:[#allocation9 + $0x450] sm:$0xff]
    %v1815 = vld [vmem:[#allocation9 + $0x458] sm:$0xff]
    %v1816 = vld [vmem:[#allocation9 + $0x460] sm:$0xff]
    %v1817 = vld [vmem:[#allocation9 + $0x468] sm:$0xff]
    %v1818 = vld [vmem:[#allocation9 + $0x470] sm:$0xff]
    %v1819 = vld [vmem:[#allocation9 + $0x478] sm:$0xff]
    %v1820 = vld [vmem:[#allocation9 + $0x480] sm:$0xff]
    %v1821 = vld [vmem:[#allocation9 + $0x488] sm:$0xff]
    %v1822 = vld [vmem:[#allocation9 + $0x490] sm:$0xff]
    %v1823 = vld [vmem:[#allocation9 + $0x498] sm:$0xff]
    %v1824 = vld [vmem:[#allocation9 + $0x4a0] sm:$0xff]
    %v1825 = vld [vmem:[#allocation9 + $0x4a8] sm:$0xff]
    %v1826 = vld [vmem:[#allocation9 + $0x4b0] sm:$0xff]
    %v1827 = vld [vmem:[#allocation9 + $0x4b8] sm:$0xff]
    %v1828 = vld [vmem:[#allocation9 + $0x4c0] sm:$0xff]
    %v1829 = vld [vmem:[#allocation9 + $0x4c8] sm:$0xff]
    %v1830 = vld [vmem:[#allocation9 + $0x4d0] sm:$0xff]
    %v1831 = vld [vmem:[#allocation9 + $0x4d8] sm:$0xff]
    %v1832 = vld [vmem:[#allocation9 + $0x4e0] sm:$0xff]
    %v1833 = vld [vmem:[#allocation9 + $0x4e8] sm:$0xff]
    %v1834 = vld [vmem:[#allocation9 + $0x4f0] sm:$0xff]
    %v1835 = vld [vmem:[#allocation9 + $0x4f8] sm:$0xff]
    %v1836 = vld [vmem:[#allocation9 + $0x500] sm:$0xff]
    %v1837 = vld [vmem:[#allocation9 + $0x508] sm:$0xff]
    %v1838 = vld [vmem:[#allocation9 + $0x510] sm:$0xff]
    %v1839 = vld [vmem:[#allocation9 + $0x518] sm:$0xff]
    %v1840 = vld [vmem:[#allocation9 + $0x520] sm:$0xff]
    %v1841 = vld [vmem:[#allocation9 + $0x528] sm:$0xff]
    %v1842 = vld [vmem:[#allocation9 + $0x530] sm:$0xff]
    %v1843 = vld [vmem:[#allocation9 + $0x538] sm:$0xff]
    %v1844 = vld [vmem:[#allocation9 + $0x540] sm:$0xff]
    %v1845 = vld [vmem:[#allocation9 + $0x548] sm:$0xff]
    %v1846 = vld [vmem:[#allocation9 + $0x550] sm:$0xff]
    %v1847 = vld [vmem:[#allocation9 + $0x558] sm:$0xff]
    %v1848 = vld [vmem:[#allocation9 + $0x560] sm:$0xff]
    %v1849 = vld [vmem:[#allocation9 + $0x568] sm:$0xff]
    %v1850 = vld [vmem:[#allocation9 + $0x570] sm:$0xff]
    %v1851 = vld [vmem:[#allocation9 + $0x578] sm:$0xff]
    %v1852 = vld [vmem:[#allocation9 + $0x580] sm:$0xff]
    %v1853 = vld [vmem:[#allocation9 + $0x588] sm:$0xff]
    %v1854 = vld [vmem:[#allocation9 + $0x590] sm:$0xff]
    %v1855 = vld [vmem:[#allocation9 + $0x598] sm:$0xff]
    %v1856 = vld [vmem:[#allocation9 + $0x5a0] sm:$0xff]
    %v1857 = vld [vmem:[#allocation9 + $0x5a8] sm:$0xff]
    %v1858 = vld [vmem:[#allocation9 + $0x5b0] sm:$0xff]
    %v1859 = vld [vmem:[#allocation9 + $0x5b8] sm:$0xff]
    %v1860 = vld [vmem:[#allocation9 + $0x5c0] sm:$0xff]
    %v1861 = vld [vmem:[#allocation9 + $0x5c8] sm:$0xff]
    %v1862 = vld [vmem:[#allocation9 + $0x5d0] sm:$0xff]
    %v1863 = vld [vmem:[#allocation9 + $0x5d8] sm:$0xff]
    %v1864 = vld [vmem:[#allocation9 + $0x5e0] sm:$0xff]
    %v1865 = vld [vmem:[#allocation9 + $0x5e8] sm:$0xff]
    %v1866 = vld [vmem:[#allocation9 + $0x5f0] sm:$0xff]
    %v1867 = vld [vmem:[#allocation9 + $0x5f8] sm:$0xff]
    %v1868 = vld [vmem:[#allocation9 + $0x600] sm:$0xff]
    %v1869 = vld [vmem:[#allocation9 + $0x608] sm:$0xff]
    %v1870 = vld [vmem:[#allocation9 + $0x610] sm:$0xff]
    %v1871 = vld [vmem:[#allocation9 + $0x618] sm:$0xff]
    %v1872 = vld [vmem:[#allocation9 + $0x620] sm:$0xff]
    %v1873 = vld [vmem:[#allocation9 + $0x628] sm:$0xff]
    %v1874 = vld [vmem:[#allocation9 + $0x630] sm:$0xff]
    %v1875 = vld [vmem:[#allocation9 + $0x638] sm:$0xff]
    %v1876 = vld [vmem:[#allocation9 + $0x640] sm:$0xff]
    %v1877 = vld [vmem:[#allocation9 + $0x648] sm:$0xff]
    %v1878 = vld [vmem:[#allocation9 + $0x650] sm:$0xff]
    %v1879 = vld [vmem:[#allocation9 + $0x658] sm:$0xff]
    %v1880 = vld [vmem:[#allocation9 + $0x660] sm:$0xff]
    %v1881 = vld [vmem:[#allocation9 + $0x668] sm:$0xff]
    %v1882 = vld [vmem:[#allocation9 + $0x670] sm:$0xff]
    %v1883 = vld [vmem:[#allocation9 + $0x678] sm:$0xff]
    %v1884 = vld [vmem:[#allocation9 + $0x680] sm:$0xff]
    %v1885 = vld [vmem:[#allocation9 + $0x688] sm:$0xff]
    %v1886 = vld [vmem:[#allocation9 + $0x690] sm:$0xff]
    %v1887 = vld [vmem:[#allocation9 + $0x698] sm:$0xff]
    %v1888 = vld [vmem:[#allocation9 + $0x6a0] sm:$0xff]
    %v1889 = vld [vmem:[#allocation9 + $0x6a8] sm:$0xff]
    %v1890 = vld [vmem:[#allocation9 + $0x6b0] sm:$0xff]
    %v1891 = vld [vmem:[#allocation9 + $0x6b8] sm:$0xff]
    %v1892 = vld [vmem:[#allocation9 + $0x6c0] sm:$0xff]
    %v1893 = vld [vmem:[#allocation9 + $0x6c8] sm:$0xff]
    %v1894 = vld [vmem:[#allocation9 + $0x6d0] sm:$0xff]
    %v1895 = vld [vmem:[#allocation9 + $0x6d8] sm:$0xff]
    %v1896 = vld [vmem:[#allocation9 + $0x6e0] sm:$0xff]
    %v1897 = vld [vmem:[#allocation9 + $0x6e8] sm:$0xff]
    %v1898 = vld [vmem:[#allocation9 + $0x6f0] sm:$0xff]
    %v1899 = vld [vmem:[#allocation9 + $0x6f8] sm:$0xff]
    %v1900 = vld [vmem:[#allocation9 + $0x700] sm:$0xff]
    %v1901 = vld [vmem:[#allocation9 + $0x708] sm:$0xff]
    %v1902 = vld [vmem:[#allocation9 + $0x710] sm:$0xff]
    %v1903 = vld [vmem:[#allocation9 + $0x718] sm:$0xff]
    %v1904 = vld [vmem:[#allocation9 + $0x720] sm:$0xff]
    %v1905 = vld [vmem:[#allocation9 + $0x728] sm:$0xff]
    %v1906 = vld [vmem:[#allocation9 + $0x730] sm:$0xff]
    %v1907 = vld [vmem:[#allocation9 + $0x738] sm:$0xff]
    %v1908 = vld [vmem:[#allocation9 + $0x740] sm:$0xff]
    %v1909 = vld [vmem:[#allocation9 + $0x748] sm:$0xff]
    %v1910 = vld [vmem:[#allocation9 + $0x750] sm:$0xff]
    %v1911 = vld [vmem:[#allocation9 + $0x758] sm:$0xff]
    %v1912 = vld [vmem:[#allocation9 + $0x760] sm:$0xff]
    %v1913 = vld [vmem:[#allocation9 + $0x768] sm:$0xff]
    %v1914 = vld [vmem:[#allocation9 + $0x770] sm:$0xff]
    %v1915 = vld [vmem:[#allocation9 + $0x778] sm:$0xff]
    %v1916 = vld [vmem:[#allocation9 + $0x780] sm:$0xff]
    %v1917 = vld [vmem:[#allocation9 + $0x788] sm:$0xff]
    %v1918 = vld [vmem:[#allocation9 + $0x790] sm:$0xff]
    %v1919 = vld [vmem:[#allocation9 + $0x798] sm:$0xff]
    %v1920 = vld [vmem:[#allocation9 + $0x7a0] sm:$0xff]
    %v1921 = vld [vmem:[#allocation9 + $0x7a8] sm:$0xff]
    %v1922 = vld [vmem:[#allocation9 + $0x7b0] sm:$0xff]
    %v1923 = vld [vmem:[#allocation9 + $0x7b8] sm:$0xff]
    %v1924 = vld [vmem:[#allocation9 + $0x7c0] sm:$0xff]
    %v1925 = vld [vmem:[#allocation9 + $0x7c8] sm:$0xff]
    %v1926 = vld [vmem:[#allocation9 + $0x7d0] sm:$0xff]
    %v1927 = vld [vmem:[#allocation9 + $0x7d8] sm:$0xff]
    %v1928 = vld [vmem:[#allocation9 + $0x7e0] sm:$0xff]
    %v1929 = vld [vmem:[#allocation9 + $0x7e8] sm:$0xff]
    %v1930 = vld [vmem:[#allocation9 + $0x7f0] sm:$0xff]
    %v1931 = vld [vmem:[#allocation9 + $0x7f8] sm:$0xff]
    %v1932 = vld [vmem:[#allocation10] sm:$0xf]
    %v1933 = vunpack.c.l.bf16 %v649
    %v1934 = vunpack.c.h.bf16 %v649
    %v1935 = vunpack.c.l.bf16 %v650
    %v1936 = vunpack.c.h.bf16 %v650
    %v1941 = vlaneseq
    %v1942 = vshrl.u32 %v1941, 7
    %v1943 = vsub.s32 0, %v1942
    %v1944 = vrot.slane %v1933, %v1943
    %v1945 = vlaneseq
    %v1946 = vshrl.u32 %v1945, 7
    %v1947 = vsub.s32 2, %v1946
    %v1948 = vrot.slane %v1933, %v1947
    %v1949 = vlaneseq
    %v1950 = vshrl.u32 %v1949, 7
    %v1951 = vsub.s32 4, %v1950
    %v1952 = vrot.slane %v1933, %v1951
    %v1953 = vlaneseq
    %v1954 = vshrl.u32 %v1953, 7
    %v1955 = vsub.s32 6, %v1954
    %v1956 = vrot.slane %v1933, %v1955
    %v1957 = vlaneseq
    %v1958 = vshrl.u32 %v1957, 7
    %v1959 = vsub.s32 0, %v1958
    %v1960 = vrot.slane %v1934, %v1959
    %v1961 = vlaneseq
    %v1962 = vshrl.u32 %v1961, 7
    %v1963 = vsub.s32 2, %v1962
    %v1964 = vrot.slane %v1934, %v1963
    %v1965 = vlaneseq
    %v1966 = vshrl.u32 %v1965, 7
    %v1967 = vsub.s32 4, %v1966
    %v1968 = vrot.slane %v1934, %v1967
    %v1969 = vlaneseq
    %v1970 = vshrl.u32 %v1969, 7
    %v1971 = vsub.s32 6, %v1970
    %v1972 = vrot.slane %v1934, %v1971
    %v1973 = vlaneseq
    %v1974 = vshrl.u32 %v1973, 7
    %v1975 = vsub.s32 0, %v1974
    %v1976 = vrot.slane %v1935, %v1975
    %v1977 = vlaneseq
    %v1978 = vshrl.u32 %v1977, 7
    %v1979 = vsub.s32 2, %v1978
    %v1980 = vrot.slane %v1935, %v1979
    %v1981 = vlaneseq
    %v1982 = vshrl.u32 %v1981, 7
    %v1983 = vsub.s32 4, %v1982
    %v1984 = vrot.slane %v1935, %v1983
    %v1985 = vlaneseq
    %v1986 = vshrl.u32 %v1985, 7
    %v1987 = vsub.s32 6, %v1986
    %v1988 = vrot.slane %v1935, %v1987
    %v1989 = vlaneseq
    %v1990 = vshrl.u32 %v1989, 7
    %v1991 = vsub.s32 0, %v1990
    %v1992 = vrot.slane %v1936, %v1991
    %v1993 = vlaneseq
    %v1994 = vshrl.u32 %v1993, 7
    %v1995 = vsub.s32 2, %v1994
    %v1996 = vrot.slane %v1936, %v1995
    %v1997 = vlaneseq
    %v1998 = vshrl.u32 %v1997, 7
    %v1999 = vsub.s32 4, %v1998
    %v2000 = vrot.slane %v1936, %v1999
    %v2001 = vlaneseq
    %v2002 = vshrl.u32 %v2001, 7
    %v2003 = vsub.s32 6, %v2002
    %v2004 = vrot.slane %v1936, %v2003
    %v2021 = vlaneseq
    %v2022 = vshrl.u32 %v2021, 7
    %v2023 = vsub.s32 0, %v2022
    %v2024 = vrot.slane %v1944, %v2023
    %v2025 = vlaneseq
    %v2026 = vshrl.u32 %v2025, 7
    %v2027 = vsub.s32 0, %v2026
    %v2028 = vrot.slane %v1948, %v2027
    %v2029 = vlaneseq
    %v2030 = vshrl.u32 %v2029, 7
    %v2031 = vsub.s32 0, %v2030
    %v2032 = vrot.slane %v1952, %v2031
    %v2033 = vlaneseq
    %v2034 = vshrl.u32 %v2033, 7
    %v2035 = vsub.s32 0, %v2034
    %v2036 = vrot.slane %v1956, %v2035
    %v2037 = vlaneseq
    %v2038 = vshrl.u32 %v2037, 7
    %v2039 = vsub.s32 0, %v2038
    %v2040 = vrot.slane %v1960, %v2039
    %v2041 = vlaneseq
    %v2042 = vshrl.u32 %v2041, 7
    %v2043 = vsub.s32 0, %v2042
    %v2044 = vrot.slane %v1964, %v2043
    %v2045 = vlaneseq
    %v2046 = vshrl.u32 %v2045, 7
    %v2047 = vsub.s32 0, %v2046
    %v2048 = vrot.slane %v1968, %v2047
    %v2049 = vlaneseq
    %v2050 = vshrl.u32 %v2049, 7
    %v2051 = vsub.s32 0, %v2050
    %v2052 = vrot.slane %v1972, %v2051
    %v2053 = vlaneseq
    %v2054 = vshrl.u32 %v2053, 7
    %v2055 = vsub.s32 0, %v2054
    %v2056 = vrot.slane %v1976, %v2055
    %v2057 = vlaneseq
    %v2058 = vshrl.u32 %v2057, 7
    %v2059 = vsub.s32 0, %v2058
    %v2060 = vrot.slane %v1980, %v2059
    %v2061 = vlaneseq
    %v2062 = vshrl.u32 %v2061, 7
    %v2063 = vsub.s32 0, %v2062
    %v2064 = vrot.slane %v1984, %v2063
    %v2065 = vlaneseq
    %v2066 = vshrl.u32 %v2065, 7
    %v2067 = vsub.s32 0, %v2066
    %v2068 = vrot.slane %v1988, %v2067
    %v2069 = vlaneseq
    %v2070 = vshrl.u32 %v2069, 7
    %v2071 = vsub.s32 0, %v2070
    %v2072 = vrot.slane %v1992, %v2071
    %v2073 = vlaneseq
    %v2074 = vshrl.u32 %v2073, 7
    %v2075 = vsub.s32 0, %v2074
    %v2076 = vrot.slane %v1996, %v2075
    %v2077 = vlaneseq
    %v2078 = vshrl.u32 %v2077, 7
    %v2079 = vsub.s32 0, %v2078
    %v2080 = vrot.slane %v2000, %v2079
    %v2081 = vlaneseq
    %v2082 = vshrl.u32 %v2081, 7
    %v2083 = vsub.s32 0, %v2082
    %v2084 = vrot.slane %v2004, %v2083
    %v2089 = vunpack.c.l.b16 %v133
    %v2090 = vunpack.c.h.b16 %v133
    %v2091 = vunpack.c.l.b16 %v134
    %v2092 = vunpack.c.h.b16 %v134
    %v2093 = vunpack.c.l.b16 %v135
    %v2094 = vunpack.c.h.b16 %v135
    %v2095 = vunpack.c.l.b16 %v136
    %v2096 = vunpack.c.h.b16 %v136
    %v2097 = vpack.c.b16 %v2093, %v2089
    %v2098 = vpack.c.b16 %v2094, %v2090
    %v2099 = vpack.c.b16 %v2095, %v2091
    %v2100 = vpack.c.b16 %v2096, %v2092
    %v2617 = vunpack.c.l.b16 %v137
    %v2618 = vunpack.c.h.b16 %v137
    %v2619 = vunpack.c.l.b16 %v138
    %v2620 = vunpack.c.h.b16 %v138
    %v2621 = vunpack.c.l.b16 %v139
    %v2622 = vunpack.c.h.b16 %v139
    %v2623 = vunpack.c.l.b16 %v140
    %v2624 = vunpack.c.h.b16 %v140
    %v2625 = vunpack.c.l.b16 %v141
    %v2626 = vunpack.c.h.b16 %v141
    %v2627 = vunpack.c.l.b16 %v142
    %v2628 = vunpack.c.h.b16 %v142
    %v2629 = vunpack.c.l.b16 %v143
    %v2630 = vunpack.c.h.b16 %v143
    %v2631 = vunpack.c.l.b16 %v144
    %v2632 = vunpack.c.h.b16 %v144
    %v2633 = vunpack.c.l.b16 %v145
    %v2634 = vunpack.c.h.b16 %v145
    %v2635 = vunpack.c.l.b16 %v146
    %v2636 = vunpack.c.h.b16 %v146
    %v2637 = vunpack.c.l.b16 %v147
    %v2638 = vunpack.c.h.b16 %v147
    %v2639 = vunpack.c.l.b16 %v148
    %v2640 = vunpack.c.h.b16 %v148
    %v2641 = vunpack.c.l.b16 %v149
    %v2642 = vunpack.c.h.b16 %v149
    %v2643 = vunpack.c.l.b16 %v150
    %v2644 = vunpack.c.h.b16 %v150
    %v2645 = vunpack.c.l.b16 %v151
    %v2646 = vunpack.c.h.b16 %v151
    %v2647 = vunpack.c.l.b16 %v152
    %v2648 = vunpack.c.h.b16 %v152
    %v2649 = vunpack.c.l.b16 %v153
    %v2650 = vunpack.c.h.b16 %v153
    %v2651 = vunpack.c.l.b16 %v154
    %v2652 = vunpack.c.h.b16 %v154
    %v2653 = vunpack.c.l.b16 %v155
    %v2654 = vunpack.c.h.b16 %v155
    %v2655 = vunpack.c.l.b16 %v156
    %v2656 = vunpack.c.h.b16 %v156
    %v2657 = vunpack.c.l.b16 %v157
    %v2658 = vunpack.c.h.b16 %v157
    %v2659 = vunpack.c.l.b16 %v158
    %v2660 = vunpack.c.h.b16 %v158
    %v2661 = vunpack.c.l.b16 %v159
    %v2662 = vunpack.c.h.b16 %v159
    %v2663 = vunpack.c.l.b16 %v160
    %v2664 = vunpack.c.h.b16 %v160
    %v2665 = vunpack.c.l.b16 %v161
    %v2666 = vunpack.c.h.b16 %v161
    %v2667 = vunpack.c.l.b16 %v162
    %v2668 = vunpack.c.h.b16 %v162
    %v2669 = vunpack.c.l.b16 %v163
    %v2670 = vunpack.c.h.b16 %v163
    %v2671 = vunpack.c.l.b16 %v164
    %v2672 = vunpack.c.h.b16 %v164
    %v2673 = vunpack.c.l.b16 %v165
    %v2674 = vunpack.c.h.b16 %v165
    %v2675 = vunpack.c.l.b16 %v166
    %v2676 = vunpack.c.h.b16 %v166
    %v2677 = vunpack.c.l.b16 %v167
    %v2678 = vunpack.c.h.b16 %v167
    %v2679 = vunpack.c.l.b16 %v168
    %v2680 = vunpack.c.h.b16 %v168
    %v2681 = vunpack.c.l.b16 %v169
    %v2682 = vunpack.c.h.b16 %v169
    %v2683 = vunpack.c.l.b16 %v170
    %v2684 = vunpack.c.h.b16 %v170
    %v2685 = vunpack.c.l.b16 %v171
    %v2686 = vunpack.c.h.b16 %v171
    %v2687 = vunpack.c.l.b16 %v172
    %v2688 = vunpack.c.h.b16 %v172
    %v2689 = vunpack.c.l.b16 %v173
    %v2690 = vunpack.c.h.b16 %v173
    %v2691 = vunpack.c.l.b16 %v174
    %v2692 = vunpack.c.h.b16 %v174
    %v2693 = vunpack.c.l.b16 %v175
    %v2694 = vunpack.c.h.b16 %v175
    %v2695 = vunpack.c.l.b16 %v176
    %v2696 = vunpack.c.h.b16 %v176
    %v2697 = vunpack.c.l.b16 %v177
    %v2698 = vunpack.c.h.b16 %v177
    %v2699 = vunpack.c.l.b16 %v178
    %v2700 = vunpack.c.h.b16 %v178
    %v2701 = vunpack.c.l.b16 %v179
    %v2702 = vunpack.c.h.b16 %v179
    %v2703 = vunpack.c.l.b16 %v180
    %v2704 = vunpack.c.h.b16 %v180
    %v2705 = vunpack.c.l.b16 %v181
    %v2706 = vunpack.c.h.b16 %v181
    %v2707 = vunpack.c.l.b16 %v182
    %v2708 = vunpack.c.h.b16 %v182
    %v2709 = vunpack.c.l.b16 %v183
    %v2710 = vunpack.c.h.b16 %v183
    %v2711 = vunpack.c.l.b16 %v184
    %v2712 = vunpack.c.h.b16 %v184
    %v2713 = vunpack.c.l.b16 %v185
    %v2714 = vunpack.c.h.b16 %v185
    %v2715 = vunpack.c.l.b16 %v186
    %v2716 = vunpack.c.h.b16 %v186
    %v2717 = vunpack.c.l.b16 %v187
    %v2718 = vunpack.c.h.b16 %v187
    %v2719 = vunpack.c.l.b16 %v188
    %v2720 = vunpack.c.h.b16 %v188
    %v2721 = vunpack.c.l.b16 %v189
    %v2722 = vunpack.c.h.b16 %v189
    %v2723 = vunpack.c.l.b16 %v190
    %v2724 = vunpack.c.h.b16 %v190
    %v2725 = vunpack.c.l.b16 %v191
    %v2726 = vunpack.c.h.b16 %v191
    %v2727 = vunpack.c.l.b16 %v192
    %v2728 = vunpack.c.h.b16 %v192
    %v2729 = vunpack.c.l.b16 %v193
    %v2730 = vunpack.c.h.b16 %v193
    %v2731 = vunpack.c.l.b16 %v194
    %v2732 = vunpack.c.h.b16 %v194
    %v2733 = vunpack.c.l.b16 %v195
    %v2734 = vunpack.c.h.b16 %v195
    %v2735 = vunpack.c.l.b16 %v196
    %v2736 = vunpack.c.h.b16 %v196
    %v2737 = vunpack.c.l.b16 %v197
    %v2738 = vunpack.c.h.b16 %v197
    %v2739 = vunpack.c.l.b16 %v198
    %v2740 = vunpack.c.h.b16 %v198
    %v2741 = vunpack.c.l.b16 %v199
    %v2742 = vunpack.c.h.b16 %v199
    %v2743 = vunpack.c.l.b16 %v200
    %v2744 = vunpack.c.h.b16 %v200
    %v2745 = vunpack.c.l.b16 %v201
    %v2746 = vunpack.c.h.b16 %v201
    %v2747 = vunpack.c.l.b16 %v202
    %v2748 = vunpack.c.h.b16 %v202
    %v2749 = vunpack.c.l.b16 %v203
    %v2750 = vunpack.c.h.b16 %v203
    %v2751 = vunpack.c.l.b16 %v204
    %v2752 = vunpack.c.h.b16 %v204
    %v2753 = vunpack.c.l.b16 %v205
    %v2754 = vunpack.c.h.b16 %v205
    %v2755 = vunpack.c.l.b16 %v206
    %v2756 = vunpack.c.h.b16 %v206
    %v2757 = vunpack.c.l.b16 %v207
    %v2758 = vunpack.c.h.b16 %v207
    %v2759 = vunpack.c.l.b16 %v208
    %v2760 = vunpack.c.h.b16 %v208
    %v2761 = vunpack.c.l.b16 %v209
    %v2762 = vunpack.c.h.b16 %v209
    %v2763 = vunpack.c.l.b16 %v210
    %v2764 = vunpack.c.h.b16 %v210
    %v2765 = vunpack.c.l.b16 %v211
    %v2766 = vunpack.c.h.b16 %v211
    %v2767 = vunpack.c.l.b16 %v212
    %v2768 = vunpack.c.h.b16 %v212
    %v2769 = vunpack.c.l.b16 %v213
    %v2770 = vunpack.c.h.b16 %v213
    %v2771 = vunpack.c.l.b16 %v214
    %v2772 = vunpack.c.h.b16 %v214
    %v2773 = vunpack.c.l.b16 %v215
    %v2774 = vunpack.c.h.b16 %v215
    %v2775 = vunpack.c.l.b16 %v216
    %v2776 = vunpack.c.h.b16 %v216
    %v2777 = vunpack.c.l.b16 %v217
    %v2778 = vunpack.c.h.b16 %v217
    %v2779 = vunpack.c.l.b16 %v218
    %v2780 = vunpack.c.h.b16 %v218
    %v2781 = vunpack.c.l.b16 %v219
    %v2782 = vunpack.c.h.b16 %v219
    %v2783 = vunpack.c.l.b16 %v220
    %v2784 = vunpack.c.h.b16 %v220
    %v2785 = vunpack.c.l.b16 %v221
    %v2786 = vunpack.c.h.b16 %v221
    %v2787 = vunpack.c.l.b16 %v222
    %v2788 = vunpack.c.h.b16 %v222
    %v2789 = vunpack.c.l.b16 %v223
    %v2790 = vunpack.c.h.b16 %v223
    %v2791 = vunpack.c.l.b16 %v224
    %v2792 = vunpack.c.h.b16 %v224
    %v2793 = vunpack.c.l.b16 %v225
    %v2794 = vunpack.c.h.b16 %v225
    %v2795 = vunpack.c.l.b16 %v226
    %v2796 = vunpack.c.h.b16 %v226
    %v2797 = vunpack.c.l.b16 %v227
    %v2798 = vunpack.c.h.b16 %v227
    %v2799 = vunpack.c.l.b16 %v228
    %v2800 = vunpack.c.h.b16 %v228
    %v2801 = vunpack.c.l.b16 %v229
    %v2802 = vunpack.c.h.b16 %v229
    %v2803 = vunpack.c.l.b16 %v230
    %v2804 = vunpack.c.h.b16 %v230
    %v2805 = vunpack.c.l.b16 %v231
    %v2806 = vunpack.c.h.b16 %v231
    %v2807 = vunpack.c.l.b16 %v232
    %v2808 = vunpack.c.h.b16 %v232
    %v2809 = vunpack.c.l.b16 %v233
    %v2810 = vunpack.c.h.b16 %v233
    %v2811 = vunpack.c.l.b16 %v234
    %v2812 = vunpack.c.h.b16 %v234
    %v2813 = vunpack.c.l.b16 %v235
    %v2814 = vunpack.c.h.b16 %v235
    %v2815 = vunpack.c.l.b16 %v236
    %v2816 = vunpack.c.h.b16 %v236
    %v2817 = vunpack.c.l.b16 %v237
    %v2818 = vunpack.c.h.b16 %v237
    %v2819 = vunpack.c.l.b16 %v238
    %v2820 = vunpack.c.h.b16 %v238
    %v2821 = vunpack.c.l.b16 %v239
    %v2822 = vunpack.c.h.b16 %v239
    %v2823 = vunpack.c.l.b16 %v240
    %v2824 = vunpack.c.h.b16 %v240
    %v2825 = vunpack.c.l.b16 %v241
    %v2826 = vunpack.c.h.b16 %v241
    %v2827 = vunpack.c.l.b16 %v242
    %v2828 = vunpack.c.h.b16 %v242
    %v2829 = vunpack.c.l.b16 %v243
    %v2830 = vunpack.c.h.b16 %v243
    %v2831 = vunpack.c.l.b16 %v244
    %v2832 = vunpack.c.h.b16 %v244
    %v2833 = vunpack.c.l.b16 %v245
    %v2834 = vunpack.c.h.b16 %v245
    %v2835 = vunpack.c.l.b16 %v246
    %v2836 = vunpack.c.h.b16 %v246
    %v2837 = vunpack.c.l.b16 %v247
    %v2838 = vunpack.c.h.b16 %v247
    %v2839 = vunpack.c.l.b16 %v248
    %v2840 = vunpack.c.h.b16 %v248
    %v2841 = vunpack.c.l.b16 %v249
    %v2842 = vunpack.c.h.b16 %v249
    %v2843 = vunpack.c.l.b16 %v250
    %v2844 = vunpack.c.h.b16 %v250
    %v2845 = vunpack.c.l.b16 %v251
    %v2846 = vunpack.c.h.b16 %v251
    %v2847 = vunpack.c.l.b16 %v252
    %v2848 = vunpack.c.h.b16 %v252
    %v2849 = vunpack.c.l.b16 %v253
    %v2850 = vunpack.c.h.b16 %v253
    %v2851 = vunpack.c.l.b16 %v254
    %v2852 = vunpack.c.h.b16 %v254
    %v2853 = vunpack.c.l.b16 %v255
    %v2854 = vunpack.c.h.b16 %v255
    %v2855 = vunpack.c.l.b16 %v256
    %v2856 = vunpack.c.h.b16 %v256
    %v2857 = vunpack.c.l.b16 %v257
    %v2858 = vunpack.c.h.b16 %v257
    %v2859 = vunpack.c.l.b16 %v258
    %v2860 = vunpack.c.h.b16 %v258
    %v2861 = vunpack.c.l.b16 %v259
    %v2862 = vunpack.c.h.b16 %v259
    %v2863 = vunpack.c.l.b16 %v260
    %v2864 = vunpack.c.h.b16 %v260
    %v2865 = vunpack.c.l.b16 %v261
    %v2866 = vunpack.c.h.b16 %v261
    %v2867 = vunpack.c.l.b16 %v262
    %v2868 = vunpack.c.h.b16 %v262
    %v2869 = vunpack.c.l.b16 %v263
    %v2870 = vunpack.c.h.b16 %v263
    %v2871 = vunpack.c.l.b16 %v264
    %v2872 = vunpack.c.h.b16 %v264
    %v2873 = vunpack.c.l.b16 %v265
    %v2874 = vunpack.c.h.b16 %v265
    %v2875 = vunpack.c.l.b16 %v266
    %v2876 = vunpack.c.h.b16 %v266
    %v2877 = vunpack.c.l.b16 %v267
    %v2878 = vunpack.c.h.b16 %v267
    %v2879 = vunpack.c.l.b16 %v268
    %v2880 = vunpack.c.h.b16 %v268
    %v2881 = vunpack.c.l.b16 %v269
    %v2882 = vunpack.c.h.b16 %v269
    %v2883 = vunpack.c.l.b16 %v270
    %v2884 = vunpack.c.h.b16 %v270
    %v2885 = vunpack.c.l.b16 %v271
    %v2886 = vunpack.c.h.b16 %v271
    %v2887 = vunpack.c.l.b16 %v272
    %v2888 = vunpack.c.h.b16 %v272
    %v2889 = vunpack.c.l.b16 %v273
    %v2890 = vunpack.c.h.b16 %v273
    %v2891 = vunpack.c.l.b16 %v274
    %v2892 = vunpack.c.h.b16 %v274
    %v2893 = vunpack.c.l.b16 %v275
    %v2894 = vunpack.c.h.b16 %v275
    %v2895 = vunpack.c.l.b16 %v276
    %v2896 = vunpack.c.h.b16 %v276
    %v2897 = vunpack.c.l.b16 %v277
    %v2898 = vunpack.c.h.b16 %v277
    %v2899 = vunpack.c.l.b16 %v278
    %v2900 = vunpack.c.h.b16 %v278
    %v2901 = vunpack.c.l.b16 %v279
    %v2902 = vunpack.c.h.b16 %v279
    %v2903 = vunpack.c.l.b16 %v280
    %v2904 = vunpack.c.h.b16 %v280
    %v2905 = vunpack.c.l.b16 %v281
    %v2906 = vunpack.c.h.b16 %v281
    %v2907 = vunpack.c.l.b16 %v282
    %v2908 = vunpack.c.h.b16 %v282
    %v2909 = vunpack.c.l.b16 %v283
    %v2910 = vunpack.c.h.b16 %v283
    %v2911 = vunpack.c.l.b16 %v284
    %v2912 = vunpack.c.h.b16 %v284
    %v2913 = vunpack.c.l.b16 %v285
    %v2914 = vunpack.c.h.b16 %v285
    %v2915 = vunpack.c.l.b16 %v286
    %v2916 = vunpack.c.h.b16 %v286
    %v2917 = vunpack.c.l.b16 %v287
    %v2918 = vunpack.c.h.b16 %v287
    %v2919 = vunpack.c.l.b16 %v288
    %v2920 = vunpack.c.h.b16 %v288
    %v2921 = vunpack.c.l.b16 %v289
    %v2922 = vunpack.c.h.b16 %v289
    %v2923 = vunpack.c.l.b16 %v290
    %v2924 = vunpack.c.h.b16 %v290
    %v2925 = vunpack.c.l.b16 %v291
    %v2926 = vunpack.c.h.b16 %v291
    %v2927 = vunpack.c.l.b16 %v292
    %v2928 = vunpack.c.h.b16 %v292
    %v2929 = vunpack.c.l.b16 %v293
    %v2930 = vunpack.c.h.b16 %v293
    %v2931 = vunpack.c.l.b16 %v294
    %v2932 = vunpack.c.h.b16 %v294
    %v2933 = vunpack.c.l.b16 %v295
    %v2934 = vunpack.c.h.b16 %v295
    %v2935 = vunpack.c.l.b16 %v296
    %v2936 = vunpack.c.h.b16 %v296
    %v2937 = vunpack.c.l.b16 %v297
    %v2938 = vunpack.c.h.b16 %v297
    %v2939 = vunpack.c.l.b16 %v298
    %v2940 = vunpack.c.h.b16 %v298
    %v2941 = vunpack.c.l.b16 %v299
    %v2942 = vunpack.c.h.b16 %v299
    %v2943 = vunpack.c.l.b16 %v300
    %v2944 = vunpack.c.h.b16 %v300
    %v2945 = vunpack.c.l.b16 %v301
    %v2946 = vunpack.c.h.b16 %v301
    %v2947 = vunpack.c.l.b16 %v302
    %v2948 = vunpack.c.h.b16 %v302
    %v2949 = vunpack.c.l.b16 %v303
    %v2950 = vunpack.c.h.b16 %v303
    %v2951 = vunpack.c.l.b16 %v304
    %v2952 = vunpack.c.h.b16 %v304
    %v2953 = vunpack.c.l.b16 %v305
    %v2954 = vunpack.c.h.b16 %v305
    %v2955 = vunpack.c.l.b16 %v306
    %v2956 = vunpack.c.h.b16 %v306
    %v2957 = vunpack.c.l.b16 %v307
    %v2958 = vunpack.c.h.b16 %v307
    %v2959 = vunpack.c.l.b16 %v308
    %v2960 = vunpack.c.h.b16 %v308
    %v2961 = vunpack.c.l.b16 %v309
    %v2962 = vunpack.c.h.b16 %v309
    %v2963 = vunpack.c.l.b16 %v310
    %v2964 = vunpack.c.h.b16 %v310
    %v2965 = vunpack.c.l.b16 %v311
    %v2966 = vunpack.c.h.b16 %v311
    %v2967 = vunpack.c.l.b16 %v312
    %v2968 = vunpack.c.h.b16 %v312
    %v2969 = vunpack.c.l.b16 %v313
    %v2970 = vunpack.c.h.b16 %v313
    %v2971 = vunpack.c.l.b16 %v314
    %v2972 = vunpack.c.h.b16 %v314
    %v2973 = vunpack.c.l.b16 %v315
    %v2974 = vunpack.c.h.b16 %v315
    %v2975 = vunpack.c.l.b16 %v316
    %v2976 = vunpack.c.h.b16 %v316
    %v2977 = vunpack.c.l.b16 %v317
    %v2978 = vunpack.c.h.b16 %v317
    %v2979 = vunpack.c.l.b16 %v318
    %v2980 = vunpack.c.h.b16 %v318
    %v2981 = vunpack.c.l.b16 %v319
    %v2982 = vunpack.c.h.b16 %v319
    %v2983 = vunpack.c.l.b16 %v320
    %v2984 = vunpack.c.h.b16 %v320
    %v2985 = vunpack.c.l.b16 %v321
    %v2986 = vunpack.c.h.b16 %v321
    %v2987 = vunpack.c.l.b16 %v322
    %v2988 = vunpack.c.h.b16 %v322
    %v2989 = vunpack.c.l.b16 %v323
    %v2990 = vunpack.c.h.b16 %v323
    %v2991 = vunpack.c.l.b16 %v324
    %v2992 = vunpack.c.h.b16 %v324
    %v2993 = vunpack.c.l.b16 %v325
    %v2994 = vunpack.c.h.b16 %v325
    %v2995 = vunpack.c.l.b16 %v326
    %v2996 = vunpack.c.h.b16 %v326
    %v2997 = vunpack.c.l.b16 %v327
    %v2998 = vunpack.c.h.b16 %v327
    %v2999 = vunpack.c.l.b16 %v328
    %v3000 = vunpack.c.h.b16 %v328
    %v3001 = vunpack.c.l.b16 %v329
    %v3002 = vunpack.c.h.b16 %v329
    %v3003 = vunpack.c.l.b16 %v330
    %v3004 = vunpack.c.h.b16 %v330
    %v3005 = vunpack.c.l.b16 %v331
    %v3006 = vunpack.c.h.b16 %v331
    %v3007 = vunpack.c.l.b16 %v332
    %v3008 = vunpack.c.h.b16 %v332
    %v3009 = vunpack.c.l.b16 %v333
    %v3010 = vunpack.c.h.b16 %v333
    %v3011 = vunpack.c.l.b16 %v334
    %v3012 = vunpack.c.h.b16 %v334
    %v3013 = vunpack.c.l.b16 %v335
    %v3014 = vunpack.c.h.b16 %v335
    %v3015 = vunpack.c.l.b16 %v336
    %v3016 = vunpack.c.h.b16 %v336
    %v3017 = vunpack.c.l.b16 %v337
    %v3018 = vunpack.c.h.b16 %v337
    %v3019 = vunpack.c.l.b16 %v338
    %v3020 = vunpack.c.h.b16 %v338
    %v3021 = vunpack.c.l.b16 %v339
    %v3022 = vunpack.c.h.b16 %v339
    %v3023 = vunpack.c.l.b16 %v340
    %v3024 = vunpack.c.h.b16 %v340
    %v3025 = vunpack.c.l.b16 %v341
    %v3026 = vunpack.c.h.b16 %v341
    %v3027 = vunpack.c.l.b16 %v342
    %v3028 = vunpack.c.h.b16 %v342
    %v3029 = vunpack.c.l.b16 %v343
    %v3030 = vunpack.c.h.b16 %v343
    %v3031 = vunpack.c.l.b16 %v344
    %v3032 = vunpack.c.h.b16 %v344
    %v3033 = vunpack.c.l.b16 %v345
    %v3034 = vunpack.c.h.b16 %v345
    %v3035 = vunpack.c.l.b16 %v346
    %v3036 = vunpack.c.h.b16 %v346
    %v3037 = vunpack.c.l.b16 %v347
    %v3038 = vunpack.c.h.b16 %v347
    %v3039 = vunpack.c.l.b16 %v348
    %v3040 = vunpack.c.h.b16 %v348
    %v3041 = vunpack.c.l.b16 %v349
    %v3042 = vunpack.c.h.b16 %v349
    %v3043 = vunpack.c.l.b16 %v350
    %v3044 = vunpack.c.h.b16 %v350
    %v3045 = vunpack.c.l.b16 %v351
    %v3046 = vunpack.c.h.b16 %v351
    %v3047 = vunpack.c.l.b16 %v352
    %v3048 = vunpack.c.h.b16 %v352
    %v3049 = vunpack.c.l.b16 %v353
    %v3050 = vunpack.c.h.b16 %v353
    %v3051 = vunpack.c.l.b16 %v354
    %v3052 = vunpack.c.h.b16 %v354
    %v3053 = vunpack.c.l.b16 %v355
    %v3054 = vunpack.c.h.b16 %v355
    %v3055 = vunpack.c.l.b16 %v356
    %v3056 = vunpack.c.h.b16 %v356
    %v3057 = vunpack.c.l.b16 %v357
    %v3058 = vunpack.c.h.b16 %v357
    %v3059 = vunpack.c.l.b16 %v358
    %v3060 = vunpack.c.h.b16 %v358
    %v3061 = vunpack.c.l.b16 %v359
    %v3062 = vunpack.c.h.b16 %v359
    %v3063 = vunpack.c.l.b16 %v360
    %v3064 = vunpack.c.h.b16 %v360
    %v3065 = vunpack.c.l.b16 %v361
    %v3066 = vunpack.c.h.b16 %v361
    %v3067 = vunpack.c.l.b16 %v362
    %v3068 = vunpack.c.h.b16 %v362
    %v3069 = vunpack.c.l.b16 %v363
    %v3070 = vunpack.c.h.b16 %v363
    %v3071 = vunpack.c.l.b16 %v364
    %v3072 = vunpack.c.h.b16 %v364
    %v3073 = vunpack.c.l.b16 %v365
    %v3074 = vunpack.c.h.b16 %v365
    %v3075 = vunpack.c.l.b16 %v366
    %v3076 = vunpack.c.h.b16 %v366
    %v3077 = vunpack.c.l.b16 %v367
    %v3078 = vunpack.c.h.b16 %v367
    %v3079 = vunpack.c.l.b16 %v368
    %v3080 = vunpack.c.h.b16 %v368
    %v3081 = vunpack.c.l.b16 %v369
    %v3082 = vunpack.c.h.b16 %v369
    %v3083 = vunpack.c.l.b16 %v370
    %v3084 = vunpack.c.h.b16 %v370
    %v3085 = vunpack.c.l.b16 %v371
    %v3086 = vunpack.c.h.b16 %v371
    %v3087 = vunpack.c.l.b16 %v372
    %v3088 = vunpack.c.h.b16 %v372
    %v3089 = vunpack.c.l.b16 %v373
    %v3090 = vunpack.c.h.b16 %v373
    %v3091 = vunpack.c.l.b16 %v374
    %v3092 = vunpack.c.h.b16 %v374
    %v3093 = vunpack.c.l.b16 %v375
    %v3094 = vunpack.c.h.b16 %v375
    %v3095 = vunpack.c.l.b16 %v376
    %v3096 = vunpack.c.h.b16 %v376
    %v3097 = vunpack.c.l.b16 %v377
    %v3098 = vunpack.c.h.b16 %v377
    %v3099 = vunpack.c.l.b16 %v378
    %v3100 = vunpack.c.h.b16 %v378
    %v3101 = vunpack.c.l.b16 %v379
    %v3102 = vunpack.c.h.b16 %v379
    %v3103 = vunpack.c.l.b16 %v380
    %v3104 = vunpack.c.h.b16 %v380
    %v3105 = vunpack.c.l.b16 %v381
    %v3106 = vunpack.c.h.b16 %v381
    %v3107 = vunpack.c.l.b16 %v382
    %v3108 = vunpack.c.h.b16 %v382
    %v3109 = vunpack.c.l.b16 %v383
    %v3110 = vunpack.c.h.b16 %v383
    %v3111 = vunpack.c.l.b16 %v384
    %v3112 = vunpack.c.h.b16 %v384
    %v3113 = vunpack.c.l.b16 %v385
    %v3114 = vunpack.c.h.b16 %v385
    %v3115 = vunpack.c.l.b16 %v386
    %v3116 = vunpack.c.h.b16 %v386
    %v3117 = vunpack.c.l.b16 %v387
    %v3118 = vunpack.c.h.b16 %v387
    %v3119 = vunpack.c.l.b16 %v388
    %v3120 = vunpack.c.h.b16 %v388
    %v3121 = vunpack.c.l.b16 %v389
    %v3122 = vunpack.c.h.b16 %v389
    %v3123 = vunpack.c.l.b16 %v390
    %v3124 = vunpack.c.h.b16 %v390
    %v3125 = vunpack.c.l.b16 %v391
    %v3126 = vunpack.c.h.b16 %v391
    %v3127 = vunpack.c.l.b16 %v392
    %v3128 = vunpack.c.h.b16 %v392
    %v3129 = vunpack.c.l.b16 %v393
    %v3130 = vunpack.c.h.b16 %v393
    %v3131 = vunpack.c.l.b16 %v394
    %v3132 = vunpack.c.h.b16 %v394
    %v3133 = vunpack.c.l.b16 %v395
    %v3134 = vunpack.c.h.b16 %v395
    %v3135 = vunpack.c.l.b16 %v396
    %v3136 = vunpack.c.h.b16 %v396
    %v3137 = vunpack.c.l.b16 %v397
    %v3138 = vunpack.c.h.b16 %v397
    %v3139 = vunpack.c.l.b16 %v398
    %v3140 = vunpack.c.h.b16 %v398
    %v3141 = vunpack.c.l.b16 %v399
    %v3142 = vunpack.c.h.b16 %v399
    %v3143 = vunpack.c.l.b16 %v400
    %v3144 = vunpack.c.h.b16 %v400
    %v3145 = vunpack.c.l.b16 %v401
    %v3146 = vunpack.c.h.b16 %v401
    %v3147 = vunpack.c.l.b16 %v402
    %v3148 = vunpack.c.h.b16 %v402
    %v3149 = vunpack.c.l.b16 %v403
    %v3150 = vunpack.c.h.b16 %v403
    %v3151 = vunpack.c.l.b16 %v404
    %v3152 = vunpack.c.h.b16 %v404
    %v3153 = vunpack.c.l.b16 %v405
    %v3154 = vunpack.c.h.b16 %v405
    %v3155 = vunpack.c.l.b16 %v406
    %v3156 = vunpack.c.h.b16 %v406
    %v3157 = vunpack.c.l.b16 %v407
    %v3158 = vunpack.c.h.b16 %v407
    %v3159 = vunpack.c.l.b16 %v408
    %v3160 = vunpack.c.h.b16 %v408
    %v3161 = vunpack.c.l.b16 %v409
    %v3162 = vunpack.c.h.b16 %v409
    %v3163 = vunpack.c.l.b16 %v410
    %v3164 = vunpack.c.h.b16 %v410
    %v3165 = vunpack.c.l.b16 %v411
    %v3166 = vunpack.c.h.b16 %v411
    %v3167 = vunpack.c.l.b16 %v412
    %v3168 = vunpack.c.h.b16 %v412
    %v3169 = vunpack.c.l.b16 %v413
    %v3170 = vunpack.c.h.b16 %v413
    %v3171 = vunpack.c.l.b16 %v414
    %v3172 = vunpack.c.h.b16 %v414
    %v3173 = vunpack.c.l.b16 %v415
    %v3174 = vunpack.c.h.b16 %v415
    %v3175 = vunpack.c.l.b16 %v416
    %v3176 = vunpack.c.h.b16 %v416
    %v3177 = vunpack.c.l.b16 %v417
    %v3178 = vunpack.c.h.b16 %v417
    %v3179 = vunpack.c.l.b16 %v418
    %v3180 = vunpack.c.h.b16 %v418
    %v3181 = vunpack.c.l.b16 %v419
    %v3182 = vunpack.c.h.b16 %v419
    %v3183 = vunpack.c.l.b16 %v420
    %v3184 = vunpack.c.h.b16 %v420
    %v3185 = vunpack.c.l.b16 %v421
    %v3186 = vunpack.c.h.b16 %v421
    %v3187 = vunpack.c.l.b16 %v422
    %v3188 = vunpack.c.h.b16 %v422
    %v3189 = vunpack.c.l.b16 %v423
    %v3190 = vunpack.c.h.b16 %v423
    %v3191 = vunpack.c.l.b16 %v424
    %v3192 = vunpack.c.h.b16 %v424
    %v3193 = vunpack.c.l.b16 %v425
    %v3194 = vunpack.c.h.b16 %v425
    %v3195 = vunpack.c.l.b16 %v426
    %v3196 = vunpack.c.h.b16 %v426
    %v3197 = vunpack.c.l.b16 %v427
    %v3198 = vunpack.c.h.b16 %v427
    %v3199 = vunpack.c.l.b16 %v428
    %v3200 = vunpack.c.h.b16 %v428
    %v3201 = vunpack.c.l.b16 %v429
    %v3202 = vunpack.c.h.b16 %v429
    %v3203 = vunpack.c.l.b16 %v430
    %v3204 = vunpack.c.h.b16 %v430
    %v3205 = vunpack.c.l.b16 %v431
    %v3206 = vunpack.c.h.b16 %v431
    %v3207 = vunpack.c.l.b16 %v432
    %v3208 = vunpack.c.h.b16 %v432
    %v3209 = vunpack.c.l.b16 %v433
    %v3210 = vunpack.c.h.b16 %v433
    %v3211 = vunpack.c.l.b16 %v434
    %v3212 = vunpack.c.h.b16 %v434
    %v3213 = vunpack.c.l.b16 %v435
    %v3214 = vunpack.c.h.b16 %v435
    %v3215 = vunpack.c.l.b16 %v436
    %v3216 = vunpack.c.h.b16 %v436
    %v3217 = vunpack.c.l.b16 %v437
    %v3218 = vunpack.c.h.b16 %v437
    %v3219 = vunpack.c.l.b16 %v438
    %v3220 = vunpack.c.h.b16 %v438
    %v3221 = vunpack.c.l.b16 %v439
    %v3222 = vunpack.c.h.b16 %v439
    %v3223 = vunpack.c.l.b16 %v440
    %v3224 = vunpack.c.h.b16 %v440
    %v3225 = vunpack.c.l.b16 %v441
    %v3226 = vunpack.c.h.b16 %v441
    %v3227 = vunpack.c.l.b16 %v442
    %v3228 = vunpack.c.h.b16 %v442
    %v3229 = vunpack.c.l.b16 %v443
    %v3230 = vunpack.c.h.b16 %v443
    %v3231 = vunpack.c.l.b16 %v444
    %v3232 = vunpack.c.h.b16 %v444
    %v3233 = vunpack.c.l.b16 %v445
    %v3234 = vunpack.c.h.b16 %v445
    %v3235 = vunpack.c.l.b16 %v446
    %v3236 = vunpack.c.h.b16 %v446
    %v3237 = vunpack.c.l.b16 %v447
    %v3238 = vunpack.c.h.b16 %v447
    %v3239 = vunpack.c.l.b16 %v448
    %v3240 = vunpack.c.h.b16 %v448
    %v3241 = vunpack.c.l.b16 %v449
    %v3242 = vunpack.c.h.b16 %v449
    %v3243 = vunpack.c.l.b16 %v450
    %v3244 = vunpack.c.h.b16 %v450
    %v3245 = vunpack.c.l.b16 %v451
    %v3246 = vunpack.c.h.b16 %v451
    %v3247 = vunpack.c.l.b16 %v452
    %v3248 = vunpack.c.h.b16 %v452
    %v3249 = vunpack.c.l.b16 %v453
    %v3250 = vunpack.c.h.b16 %v453
    %v3251 = vunpack.c.l.b16 %v454
    %v3252 = vunpack.c.h.b16 %v454
    %v3253 = vunpack.c.l.b16 %v455
    %v3254 = vunpack.c.h.b16 %v455
    %v3255 = vunpack.c.l.b16 %v456
    %v3256 = vunpack.c.h.b16 %v456
    %v3257 = vunpack.c.l.b16 %v457
    %v3258 = vunpack.c.h.b16 %v457
    %v3259 = vunpack.c.l.b16 %v458
    %v3260 = vunpack.c.h.b16 %v458
    %v3261 = vunpack.c.l.b16 %v459
    %v3262 = vunpack.c.h.b16 %v459
    %v3263 = vunpack.c.l.b16 %v460
    %v3264 = vunpack.c.h.b16 %v460
    %v3265 = vunpack.c.l.b16 %v461
    %v3266 = vunpack.c.h.b16 %v461
    %v3267 = vunpack.c.l.b16 %v462
    %v3268 = vunpack.c.h.b16 %v462
    %v3269 = vunpack.c.l.b16 %v463
    %v3270 = vunpack.c.h.b16 %v463
    %v3271 = vunpack.c.l.b16 %v464
    %v3272 = vunpack.c.h.b16 %v464
    %v3273 = vunpack.c.l.b16 %v465
    %v3274 = vunpack.c.h.b16 %v465
    %v3275 = vunpack.c.l.b16 %v466
    %v3276 = vunpack.c.h.b16 %v466
    %v3277 = vunpack.c.l.b16 %v467
    %v3278 = vunpack.c.h.b16 %v467
    %v3279 = vunpack.c.l.b16 %v468
    %v3280 = vunpack.c.h.b16 %v468
    %v3281 = vunpack.c.l.b16 %v469
    %v3282 = vunpack.c.h.b16 %v469
    %v3283 = vunpack.c.l.b16 %v470
    %v3284 = vunpack.c.h.b16 %v470
    %v3285 = vunpack.c.l.b16 %v471
    %v3286 = vunpack.c.h.b16 %v471
    %v3287 = vunpack.c.l.b16 %v472
    %v3288 = vunpack.c.h.b16 %v472
    %v3289 = vunpack.c.l.b16 %v473
    %v3290 = vunpack.c.h.b16 %v473
    %v3291 = vunpack.c.l.b16 %v474
    %v3292 = vunpack.c.h.b16 %v474
    %v3293 = vunpack.c.l.b16 %v475
    %v3294 = vunpack.c.h.b16 %v475
    %v3295 = vunpack.c.l.b16 %v476
    %v3296 = vunpack.c.h.b16 %v476
    %v3297 = vunpack.c.l.b16 %v477
    %v3298 = vunpack.c.h.b16 %v477
    %v3299 = vunpack.c.l.b16 %v478
    %v3300 = vunpack.c.h.b16 %v478
    %v3301 = vunpack.c.l.b16 %v479
    %v3302 = vunpack.c.h.b16 %v479
    %v3303 = vunpack.c.l.b16 %v480
    %v3304 = vunpack.c.h.b16 %v480
    %v3305 = vunpack.c.l.b16 %v481
    %v3306 = vunpack.c.h.b16 %v481
    %v3307 = vunpack.c.l.b16 %v482
    %v3308 = vunpack.c.h.b16 %v482
    %v3309 = vunpack.c.l.b16 %v483
    %v3310 = vunpack.c.h.b16 %v483
    %v3311 = vunpack.c.l.b16 %v484
    %v3312 = vunpack.c.h.b16 %v484
    %v3313 = vunpack.c.l.b16 %v485
    %v3314 = vunpack.c.h.b16 %v485
    %v3315 = vunpack.c.l.b16 %v486
    %v3316 = vunpack.c.h.b16 %v486
    %v3317 = vunpack.c.l.b16 %v487
    %v3318 = vunpack.c.h.b16 %v487
    %v3319 = vunpack.c.l.b16 %v488
    %v3320 = vunpack.c.h.b16 %v488
    %v3321 = vunpack.c.l.b16 %v489
    %v3322 = vunpack.c.h.b16 %v489
    %v3323 = vunpack.c.l.b16 %v490
    %v3324 = vunpack.c.h.b16 %v490
    %v3325 = vunpack.c.l.b16 %v491
    %v3326 = vunpack.c.h.b16 %v491
    %v3327 = vunpack.c.l.b16 %v492
    %v3328 = vunpack.c.h.b16 %v492
    %v3329 = vunpack.c.l.b16 %v493
    %v3330 = vunpack.c.h.b16 %v493
    %v3331 = vunpack.c.l.b16 %v494
    %v3332 = vunpack.c.h.b16 %v494
    %v3333 = vunpack.c.l.b16 %v495
    %v3334 = vunpack.c.h.b16 %v495
    %v3335 = vunpack.c.l.b16 %v496
    %v3336 = vunpack.c.h.b16 %v496
    %v3337 = vunpack.c.l.b16 %v497
    %v3338 = vunpack.c.h.b16 %v497
    %v3339 = vunpack.c.l.b16 %v498
    %v3340 = vunpack.c.h.b16 %v498
    %v3341 = vunpack.c.l.b16 %v499
    %v3342 = vunpack.c.h.b16 %v499
    %v3343 = vunpack.c.l.b16 %v500
    %v3344 = vunpack.c.h.b16 %v500
    %v3345 = vunpack.c.l.b16 %v501
    %v3346 = vunpack.c.h.b16 %v501
    %v3347 = vunpack.c.l.b16 %v502
    %v3348 = vunpack.c.h.b16 %v502
    %v3349 = vunpack.c.l.b16 %v503
    %v3350 = vunpack.c.h.b16 %v503
    %v3351 = vunpack.c.l.b16 %v504
    %v3352 = vunpack.c.h.b16 %v504
    %v3353 = vunpack.c.l.b16 %v505
    %v3354 = vunpack.c.h.b16 %v505
    %v3355 = vunpack.c.l.b16 %v506
    %v3356 = vunpack.c.h.b16 %v506
    %v3357 = vunpack.c.l.b16 %v507
    %v3358 = vunpack.c.h.b16 %v507
    %v3359 = vunpack.c.l.b16 %v508
    %v3360 = vunpack.c.h.b16 %v508
    %v3361 = vunpack.c.l.b16 %v509
    %v3362 = vunpack.c.h.b16 %v509
    %v3363 = vunpack.c.l.b16 %v510
    %v3364 = vunpack.c.h.b16 %v510
    %v3365 = vunpack.c.l.b16 %v511
    %v3366 = vunpack.c.h.b16 %v511
    %v3367 = vunpack.c.l.b16 %v512
    %v3368 = vunpack.c.h.b16 %v512
    %v3369 = vunpack.c.l.b16 %v513
    %v3370 = vunpack.c.h.b16 %v513
    %v3371 = vunpack.c.l.b16 %v514
    %v3372 = vunpack.c.h.b16 %v514
    %v3373 = vunpack.c.l.b16 %v515
    %v3374 = vunpack.c.h.b16 %v515
    %v3375 = vunpack.c.l.b16 %v516
    %v3376 = vunpack.c.h.b16 %v516
    %v3377 = vunpack.c.l.b16 %v517
    %v3378 = vunpack.c.h.b16 %v517
    %v3379 = vunpack.c.l.b16 %v518
    %v3380 = vunpack.c.h.b16 %v518
    %v3381 = vunpack.c.l.b16 %v519
    %v3382 = vunpack.c.h.b16 %v519
    %v3383 = vunpack.c.l.b16 %v520
    %v3384 = vunpack.c.h.b16 %v520
    %v3385 = vunpack.c.l.b16 %v521
    %v3386 = vunpack.c.h.b16 %v521
    %v3387 = vunpack.c.l.b16 %v522
    %v3388 = vunpack.c.h.b16 %v522
    %v3389 = vunpack.c.l.b16 %v523
    %v3390 = vunpack.c.h.b16 %v523
    %v3391 = vunpack.c.l.b16 %v524
    %v3392 = vunpack.c.h.b16 %v524
    %v3393 = vunpack.c.l.b16 %v525
    %v3394 = vunpack.c.h.b16 %v525
    %v3395 = vunpack.c.l.b16 %v526
    %v3396 = vunpack.c.h.b16 %v526
    %v3397 = vunpack.c.l.b16 %v527
    %v3398 = vunpack.c.h.b16 %v527
    %v3399 = vunpack.c.l.b16 %v528
    %v3400 = vunpack.c.h.b16 %v528
    %v3401 = vunpack.c.l.b16 %v529
    %v3402 = vunpack.c.h.b16 %v529
    %v3403 = vunpack.c.l.b16 %v530
    %v3404 = vunpack.c.h.b16 %v530
    %v3405 = vunpack.c.l.b16 %v531
    %v3406 = vunpack.c.h.b16 %v531
    %v3407 = vunpack.c.l.b16 %v532
    %v3408 = vunpack.c.h.b16 %v532
    %v3409 = vunpack.c.l.b16 %v533
    %v3410 = vunpack.c.h.b16 %v533
    %v3411 = vunpack.c.l.b16 %v534
    %v3412 = vunpack.c.h.b16 %v534
    %v3413 = vunpack.c.l.b16 %v535
    %v3414 = vunpack.c.h.b16 %v535
    %v3415 = vunpack.c.l.b16 %v536
    %v3416 = vunpack.c.h.b16 %v536
    %v3417 = vunpack.c.l.b16 %v537
    %v3418 = vunpack.c.h.b16 %v537
    %v3419 = vunpack.c.l.b16 %v538
    %v3420 = vunpack.c.h.b16 %v538
    %v3421 = vunpack.c.l.b16 %v539
    %v3422 = vunpack.c.h.b16 %v539
    %v3423 = vunpack.c.l.b16 %v540
    %v3424 = vunpack.c.h.b16 %v540
    %v3425 = vunpack.c.l.b16 %v541
    %v3426 = vunpack.c.h.b16 %v541
    %v3427 = vunpack.c.l.b16 %v542
    %v3428 = vunpack.c.h.b16 %v542
    %v3429 = vunpack.c.l.b16 %v543
    %v3430 = vunpack.c.h.b16 %v543
    %v3431 = vunpack.c.l.b16 %v544
    %v3432 = vunpack.c.h.b16 %v544
    %v3433 = vunpack.c.l.b16 %v545
    %v3434 = vunpack.c.h.b16 %v545
    %v3435 = vunpack.c.l.b16 %v546
    %v3436 = vunpack.c.h.b16 %v546
    %v3437 = vunpack.c.l.b16 %v547
    %v3438 = vunpack.c.h.b16 %v547
    %v3439 = vunpack.c.l.b16 %v548
    %v3440 = vunpack.c.h.b16 %v548
    %v3441 = vunpack.c.l.b16 %v549
    %v3442 = vunpack.c.h.b16 %v549
    %v3443 = vunpack.c.l.b16 %v550
    %v3444 = vunpack.c.h.b16 %v550
    %v3445 = vunpack.c.l.b16 %v551
    %v3446 = vunpack.c.h.b16 %v551
    %v3447 = vunpack.c.l.b16 %v552
    %v3448 = vunpack.c.h.b16 %v552
    %v3449 = vunpack.c.l.b16 %v553
    %v3450 = vunpack.c.h.b16 %v553
    %v3451 = vunpack.c.l.b16 %v554
    %v3452 = vunpack.c.h.b16 %v554
    %v3453 = vunpack.c.l.b16 %v555
    %v3454 = vunpack.c.h.b16 %v555
    %v3455 = vunpack.c.l.b16 %v556
    %v3456 = vunpack.c.h.b16 %v556
    %v3457 = vunpack.c.l.b16 %v557
    %v3458 = vunpack.c.h.b16 %v557
    %v3459 = vunpack.c.l.b16 %v558
    %v3460 = vunpack.c.h.b16 %v558
    %v3461 = vunpack.c.l.b16 %v559
    %v3462 = vunpack.c.h.b16 %v559
    %v3463 = vunpack.c.l.b16 %v560
    %v3464 = vunpack.c.h.b16 %v560
    %v3465 = vunpack.c.l.b16 %v561
    %v3466 = vunpack.c.h.b16 %v561
    %v3467 = vunpack.c.l.b16 %v562
    %v3468 = vunpack.c.h.b16 %v562
    %v3469 = vunpack.c.l.b16 %v563
    %v3470 = vunpack.c.h.b16 %v563
    %v3471 = vunpack.c.l.b16 %v564
    %v3472 = vunpack.c.h.b16 %v564
    %v3473 = vunpack.c.l.b16 %v565
    %v3474 = vunpack.c.h.b16 %v565
    %v3475 = vunpack.c.l.b16 %v566
    %v3476 = vunpack.c.h.b16 %v566
    %v3477 = vunpack.c.l.b16 %v567
    %v3478 = vunpack.c.h.b16 %v567
    %v3479 = vunpack.c.l.b16 %v568
    %v3480 = vunpack.c.h.b16 %v568
    %v3481 = vunpack.c.l.b16 %v569
    %v3482 = vunpack.c.h.b16 %v569
    %v3483 = vunpack.c.l.b16 %v570
    %v3484 = vunpack.c.h.b16 %v570
    %v3485 = vunpack.c.l.b16 %v571
    %v3486 = vunpack.c.h.b16 %v571
    %v3487 = vunpack.c.l.b16 %v572
    %v3488 = vunpack.c.h.b16 %v572
    %v3489 = vunpack.c.l.b16 %v573
    %v3490 = vunpack.c.h.b16 %v573
    %v3491 = vunpack.c.l.b16 %v574
    %v3492 = vunpack.c.h.b16 %v574
    %v3493 = vunpack.c.l.b16 %v575
    %v3494 = vunpack.c.h.b16 %v575
    %v3495 = vunpack.c.l.b16 %v576
    %v3496 = vunpack.c.h.b16 %v576
    %v3497 = vunpack.c.l.b16 %v577
    %v3498 = vunpack.c.h.b16 %v577
    %v3499 = vunpack.c.l.b16 %v578
    %v3500 = vunpack.c.h.b16 %v578
    %v3501 = vunpack.c.l.b16 %v579
    %v3502 = vunpack.c.h.b16 %v579
    %v3503 = vunpack.c.l.b16 %v580
    %v3504 = vunpack.c.h.b16 %v580
    %v3505 = vunpack.c.l.b16 %v581
    %v3506 = vunpack.c.h.b16 %v581
    %v3507 = vunpack.c.l.b16 %v582
    %v3508 = vunpack.c.h.b16 %v582
    %v3509 = vunpack.c.l.b16 %v583
    %v3510 = vunpack.c.h.b16 %v583
    %v3511 = vunpack.c.l.b16 %v584
    %v3512 = vunpack.c.h.b16 %v584
    %v3513 = vunpack.c.l.b16 %v585
    %v3514 = vunpack.c.h.b16 %v585
    %v3515 = vunpack.c.l.b16 %v586
    %v3516 = vunpack.c.h.b16 %v586
    %v3517 = vunpack.c.l.b16 %v587
    %v3518 = vunpack.c.h.b16 %v587
    %v3519 = vunpack.c.l.b16 %v588
    %v3520 = vunpack.c.h.b16 %v588
    %v3521 = vunpack.c.l.b16 %v589
    %v3522 = vunpack.c.h.b16 %v589
    %v3523 = vunpack.c.l.b16 %v590
    %v3524 = vunpack.c.h.b16 %v590
    %v3525 = vunpack.c.l.b16 %v591
    %v3526 = vunpack.c.h.b16 %v591
    %v3527 = vunpack.c.l.b16 %v592
    %v3528 = vunpack.c.h.b16 %v592
    %v3529 = vunpack.c.l.b16 %v593
    %v3530 = vunpack.c.h.b16 %v593
    %v3531 = vunpack.c.l.b16 %v594
    %v3532 = vunpack.c.h.b16 %v594
    %v3533 = vunpack.c.l.b16 %v595
    %v3534 = vunpack.c.h.b16 %v595
    %v3535 = vunpack.c.l.b16 %v596
    %v3536 = vunpack.c.h.b16 %v596
    %v3537 = vunpack.c.l.b16 %v597
    %v3538 = vunpack.c.h.b16 %v597
    %v3539 = vunpack.c.l.b16 %v598
    %v3540 = vunpack.c.h.b16 %v598
    %v3541 = vunpack.c.l.b16 %v599
    %v3542 = vunpack.c.h.b16 %v599
    %v3543 = vunpack.c.l.b16 %v600
    %v3544 = vunpack.c.h.b16 %v600
    %v3545 = vunpack.c.l.b16 %v601
    %v3546 = vunpack.c.h.b16 %v601
    %v3547 = vunpack.c.l.b16 %v602
    %v3548 = vunpack.c.h.b16 %v602
    %v3549 = vunpack.c.l.b16 %v603
    %v3550 = vunpack.c.h.b16 %v603
    %v3551 = vunpack.c.l.b16 %v604
    %v3552 = vunpack.c.h.b16 %v604
    %v3553 = vunpack.c.l.b16 %v605
    %v3554 = vunpack.c.h.b16 %v605
    %v3555 = vunpack.c.l.b16 %v606
    %v3556 = vunpack.c.h.b16 %v606
    %v3557 = vunpack.c.l.b16 %v607
    %v3558 = vunpack.c.h.b16 %v607
    %v3559 = vunpack.c.l.b16 %v608
    %v3560 = vunpack.c.h.b16 %v608
    %v3561 = vunpack.c.l.b16 %v609
    %v3562 = vunpack.c.h.b16 %v609
    %v3563 = vunpack.c.l.b16 %v610
    %v3564 = vunpack.c.h.b16 %v610
    %v3565 = vunpack.c.l.b16 %v611
    %v3566 = vunpack.c.h.b16 %v611
    %v3567 = vunpack.c.l.b16 %v612
    %v3568 = vunpack.c.h.b16 %v612
    %v3569 = vunpack.c.l.b16 %v613
    %v3570 = vunpack.c.h.b16 %v613
    %v3571 = vunpack.c.l.b16 %v614
    %v3572 = vunpack.c.h.b16 %v614
    %v3573 = vunpack.c.l.b16 %v615
    %v3574 = vunpack.c.h.b16 %v615
    %v3575 = vunpack.c.l.b16 %v616
    %v3576 = vunpack.c.h.b16 %v616
    %v3577 = vunpack.c.l.b16 %v617
    %v3578 = vunpack.c.h.b16 %v617
    %v3579 = vunpack.c.l.b16 %v618
    %v3580 = vunpack.c.h.b16 %v618
    %v3581 = vunpack.c.l.b16 %v619
    %v3582 = vunpack.c.h.b16 %v619
    %v3583 = vunpack.c.l.b16 %v620
    %v3584 = vunpack.c.h.b16 %v620
    %v3585 = vunpack.c.l.b16 %v621
    %v3586 = vunpack.c.h.b16 %v621
    %v3587 = vunpack.c.l.b16 %v622
    %v3588 = vunpack.c.h.b16 %v622
    %v3589 = vunpack.c.l.b16 %v623
    %v3590 = vunpack.c.h.b16 %v623
    %v3591 = vunpack.c.l.b16 %v624
    %v3592 = vunpack.c.h.b16 %v624
    %v3593 = vunpack.c.l.b16 %v625
    %v3594 = vunpack.c.h.b16 %v625
    %v3595 = vunpack.c.l.b16 %v626
    %v3596 = vunpack.c.h.b16 %v626
    %v3597 = vunpack.c.l.b16 %v627
    %v3598 = vunpack.c.h.b16 %v627
    %v3599 = vunpack.c.l.b16 %v628
    %v3600 = vunpack.c.h.b16 %v628
    %v3601 = vunpack.c.l.b16 %v629
    %v3602 = vunpack.c.h.b16 %v629
    %v3603 = vunpack.c.l.b16 %v630
    %v3604 = vunpack.c.h.b16 %v630
    %v3605 = vunpack.c.l.b16 %v631
    %v3606 = vunpack.c.h.b16 %v631
    %v3607 = vunpack.c.l.b16 %v632
    %v3608 = vunpack.c.h.b16 %v632
    %v3609 = vunpack.c.l.b16 %v633
    %v3610 = vunpack.c.h.b16 %v633
    %v3611 = vunpack.c.l.b16 %v634
    %v3612 = vunpack.c.h.b16 %v634
    %v3613 = vunpack.c.l.b16 %v635
    %v3614 = vunpack.c.h.b16 %v635
    %v3615 = vunpack.c.l.b16 %v636
    %v3616 = vunpack.c.h.b16 %v636
    %v3617 = vunpack.c.l.b16 %v637
    %v3618 = vunpack.c.h.b16 %v637
    %v3619 = vunpack.c.l.b16 %v638
    %v3620 = vunpack.c.h.b16 %v638
    %v3621 = vunpack.c.l.b16 %v639
    %v3622 = vunpack.c.h.b16 %v639
    %v3623 = vunpack.c.l.b16 %v640
    %v3624 = vunpack.c.h.b16 %v640
    %v3625 = vunpack.c.l.b16 %v641
    %v3626 = vunpack.c.h.b16 %v641
    %v3627 = vunpack.c.l.b16 %v642
    %v3628 = vunpack.c.h.b16 %v642
    %v3629 = vunpack.c.l.b16 %v643
    %v3630 = vunpack.c.h.b16 %v643
    %v3631 = vunpack.c.l.b16 %v644
    %v3632 = vunpack.c.h.b16 %v644
    %v3633 = vunpack.c.l.b16 %v645
    %v3634 = vunpack.c.h.b16 %v645
    %v3635 = vunpack.c.l.b16 %v646
    %v3636 = vunpack.c.h.b16 %v646
    %v3637 = vunpack.c.l.b16 %v647
    %v3638 = vunpack.c.h.b16 %v647
    %v3639 = vunpack.c.l.b16 %v648
    %v3640 = vunpack.c.h.b16 %v648
    %v3641 = vpack.c.b16 %v2633, %v2617
    %v3642 = vpack.c.b16 %v2634, %v2618
    %v3643 = vpack.c.b16 %v2635, %v2619
    %v3644 = vpack.c.b16 %v2636, %v2620
    %v3645 = vpack.c.b16 %v2637, %v2621
    %v3646 = vpack.c.b16 %v2638, %v2622
    %v3647 = vpack.c.b16 %v2639, %v2623
    %v3648 = vpack.c.b16 %v2640, %v2624
    %v3649 = vpack.c.b16 %v2641, %v2625
    %v3650 = vpack.c.b16 %v2642, %v2626
    %v3651 = vpack.c.b16 %v2643, %v2627
    %v3652 = vpack.c.b16 %v2644, %v2628
    %v3653 = vpack.c.b16 %v2645, %v2629
    %v3654 = vpack.c.b16 %v2646, %v2630
    %v3655 = vpack.c.b16 %v2647, %v2631
    %v3656 = vpack.c.b16 %v2648, %v2632
    %v3657 = vpack.c.b16 %v2665, %v2649
    %v3658 = vpack.c.b16 %v2666, %v2650
    %v3659 = vpack.c.b16 %v2667, %v2651
    %v3660 = vpack.c.b16 %v2668, %v2652
    %v3661 = vpack.c.b16 %v2669, %v2653
    %v3662 = vpack.c.b16 %v2670, %v2654
    %v3663 = vpack.c.b16 %v2671, %v2655
    %v3664 = vpack.c.b16 %v2672, %v2656
    %v3665 = vpack.c.b16 %v2673, %v2657
    %v3666 = vpack.c.b16 %v2674, %v2658
    %v3667 = vpack.c.b16 %v2675, %v2659
    %v3668 = vpack.c.b16 %v2676, %v2660
    %v3669 = vpack.c.b16 %v2677, %v2661
    %v3670 = vpack.c.b16 %v2678, %v2662
    %v3671 = vpack.c.b16 %v2679, %v2663
    %v3672 = vpack.c.b16 %v2680, %v2664
    %v3673 = vpack.c.b16 %v2697, %v2681
    %v3674 = vpack.c.b16 %v2698, %v2682
    %v3675 = vpack.c.b16 %v2699, %v2683
    %v3676 = vpack.c.b16 %v2700, %v2684
    %v3677 = vpack.c.b16 %v2701, %v2685
    %v3678 = vpack.c.b16 %v2702, %v2686
    %v3679 = vpack.c.b16 %v2703, %v2687
    %v3680 = vpack.c.b16 %v2704, %v2688
    %v3681 = vpack.c.b16 %v2705, %v2689
    %v3682 = vpack.c.b16 %v2706, %v2690
    %v3683 = vpack.c.b16 %v2707, %v2691
    %v3684 = vpack.c.b16 %v2708, %v2692
    %v3685 = vpack.c.b16 %v2709, %v2693
    %v3686 = vpack.c.b16 %v2710, %v2694
    %v3687 = vpack.c.b16 %v2711, %v2695
    %v3688 = vpack.c.b16 %v2712, %v2696
    %v3689 = vpack.c.b16 %v2729, %v2713
    %v3690 = vpack.c.b16 %v2730, %v2714
    %v3691 = vpack.c.b16 %v2731, %v2715
    %v3692 = vpack.c.b16 %v2732, %v2716
    %v3693 = vpack.c.b16 %v2733, %v2717
    %v3694 = vpack.c.b16 %v2734, %v2718
    %v3695 = vpack.c.b16 %v2735, %v2719
    %v3696 = vpack.c.b16 %v2736, %v2720
    %v3697 = vpack.c.b16 %v2737, %v2721
    %v3698 = vpack.c.b16 %v2738, %v2722
    %v3699 = vpack.c.b16 %v2739, %v2723
    %v3700 = vpack.c.b16 %v2740, %v2724
    %v3701 = vpack.c.b16 %v2741, %v2725
    %v3702 = vpack.c.b16 %v2742, %v2726
    %v3703 = vpack.c.b16 %v2743, %v2727
    %v3704 = vpack.c.b16 %v2744, %v2728
    %v3705 = vpack.c.b16 %v2761, %v2745
    %v3706 = vpack.c.b16 %v2762, %v2746
    %v3707 = vpack.c.b16 %v2763, %v2747
    %v3708 = vpack.c.b16 %v2764, %v2748
    %v3709 = vpack.c.b16 %v2765, %v2749
    %v3710 = vpack.c.b16 %v2766, %v2750
    %v3711 = vpack.c.b16 %v2767, %v2751
    %v3712 = vpack.c.b16 %v2768, %v2752
    %v3713 = vpack.c.b16 %v2769, %v2753
    %v3714 = vpack.c.b16 %v2770, %v2754
    %v3715 = vpack.c.b16 %v2771, %v2755
    %v3716 = vpack.c.b16 %v2772, %v2756
    %v3717 = vpack.c.b16 %v2773, %v2757
    %v3718 = vpack.c.b16 %v2774, %v2758
    %v3719 = vpack.c.b16 %v2775, %v2759
    %v3720 = vpack.c.b16 %v2776, %v2760
    %v3721 = vpack.c.b16 %v2793, %v2777
    %v3722 = vpack.c.b16 %v2794, %v2778
    %v3723 = vpack.c.b16 %v2795, %v2779
    %v3724 = vpack.c.b16 %v2796, %v2780
    %v3725 = vpack.c.b16 %v2797, %v2781
    %v3726 = vpack.c.b16 %v2798, %v2782
    %v3727 = vpack.c.b16 %v2799, %v2783
    %v3728 = vpack.c.b16 %v2800, %v2784
    %v3729 = vpack.c.b16 %v2801, %v2785
    %v3730 = vpack.c.b16 %v2802, %v2786
    %v3731 = vpack.c.b16 %v2803, %v2787
    %v3732 = vpack.c.b16 %v2804, %v2788
    %v3733 = vpack.c.b16 %v2805, %v2789
    %v3734 = vpack.c.b16 %v2806, %v2790
    %v3735 = vpack.c.b16 %v2807, %v2791
    %v3736 = vpack.c.b16 %v2808, %v2792
    %v3737 = vpack.c.b16 %v2825, %v2809
    %v3738 = vpack.c.b16 %v2826, %v2810
    %v3739 = vpack.c.b16 %v2827, %v2811
    %v3740 = vpack.c.b16 %v2828, %v2812
    %v3741 = vpack.c.b16 %v2829, %v2813
    %v3742 = vpack.c.b16 %v2830, %v2814
    %v3743 = vpack.c.b16 %v2831, %v2815
    %v3744 = vpack.c.b16 %v2832, %v2816
    %v3745 = vpack.c.b16 %v2833, %v2817
    %v3746 = vpack.c.b16 %v2834, %v2818
    %v3747 = vpack.c.b16 %v2835, %v2819
    %v3748 = vpack.c.b16 %v2836, %v2820
    %v3749 = vpack.c.b16 %v2837, %v2821
    %v3750 = vpack.c.b16 %v2838, %v2822
    %v3751 = vpack.c.b16 %v2839, %v2823
    %v3752 = vpack.c.b16 %v2840, %v2824
    %v3753 = vpack.c.b16 %v2857, %v2841
    %v3754 = vpack.c.b16 %v2858, %v2842
    %v3755 = vpack.c.b16 %v2859, %v2843
    %v3756 = vpack.c.b16 %v2860, %v2844
    %v3757 = vpack.c.b16 %v2861, %v2845
    %v3758 = vpack.c.b16 %v2862, %v2846
    %v3759 = vpack.c.b16 %v2863, %v2847
    %v3760 = vpack.c.b16 %v2864, %v2848
    %v3761 = vpack.c.b16 %v2865, %v2849
    %v3762 = vpack.c.b16 %v2866, %v2850
    %v3763 = vpack.c.b16 %v2867, %v2851
    %v3764 = vpack.c.b16 %v2868, %v2852
    %v3765 = vpack.c.b16 %v2869, %v2853
    %v3766 = vpack.c.b16 %v2870, %v2854
    %v3767 = vpack.c.b16 %v2871, %v2855
    %v3768 = vpack.c.b16 %v2872, %v2856
    %v3769 = vpack.c.b16 %v2889, %v2873
    %v3770 = vpack.c.b16 %v2890, %v2874
    %v3771 = vpack.c.b16 %v2891, %v2875
    %v3772 = vpack.c.b16 %v2892, %v2876
    %v3773 = vpack.c.b16 %v2893, %v2877
    %v3774 = vpack.c.b16 %v2894, %v2878
    %v3775 = vpack.c.b16 %v2895, %v2879
    %v3776 = vpack.c.b16 %v2896, %v2880
    %v3777 = vpack.c.b16 %v2897, %v2881
    %v3778 = vpack.c.b16 %v2898, %v2882
    %v3779 = vpack.c.b16 %v2899, %v2883
    %v3780 = vpack.c.b16 %v2900, %v2884
    %v3781 = vpack.c.b16 %v2901, %v2885
    %v3782 = vpack.c.b16 %v2902, %v2886
    %v3783 = vpack.c.b16 %v2903, %v2887
    %v3784 = vpack.c.b16 %v2904, %v2888
    %v3785 = vpack.c.b16 %v2921, %v2905
    %v3786 = vpack.c.b16 %v2922, %v2906
    %v3787 = vpack.c.b16 %v2923, %v2907
    %v3788 = vpack.c.b16 %v2924, %v2908
    %v3789 = vpack.c.b16 %v2925, %v2909
    %v3790 = vpack.c.b16 %v2926, %v2910
    %v3791 = vpack.c.b16 %v2927, %v2911
    %v3792 = vpack.c.b16 %v2928, %v2912
    %v3793 = vpack.c.b16 %v2929, %v2913
    %v3794 = vpack.c.b16 %v2930, %v2914
    %v3795 = vpack.c.b16 %v2931, %v2915
    %v3796 = vpack.c.b16 %v2932, %v2916
    %v3797 = vpack.c.b16 %v2933, %v2917
    %v3798 = vpack.c.b16 %v2934, %v2918
    %v3799 = vpack.c.b16 %v2935, %v2919
    %v3800 = vpack.c.b16 %v2936, %v2920
    %v3801 = vpack.c.b16 %v2953, %v2937
    %v3802 = vpack.c.b16 %v2954, %v2938
    %v3803 = vpack.c.b16 %v2955, %v2939
    %v3804 = vpack.c.b16 %v2956, %v2940
    %v3805 = vpack.c.b16 %v2957, %v2941
    %v3806 = vpack.c.b16 %v2958, %v2942
    %v3807 = vpack.c.b16 %v2959, %v2943
    %v3808 = vpack.c.b16 %v2960, %v2944
    %v3809 = vpack.c.b16 %v2961, %v2945
    %v3810 = vpack.c.b16 %v2962, %v2946
    %v3811 = vpack.c.b16 %v2963, %v2947
    %v3812 = vpack.c.b16 %v2964, %v2948
    %v3813 = vpack.c.b16 %v2965, %v2949
    %v3814 = vpack.c.b16 %v2966, %v2950
    %v3815 = vpack.c.b16 %v2967, %v2951
    %v3816 = vpack.c.b16 %v2968, %v2952
    %v3817 = vpack.c.b16 %v2985, %v2969
    %v3818 = vpack.c.b16 %v2986, %v2970
    %v3819 = vpack.c.b16 %v2987, %v2971
    %v3820 = vpack.c.b16 %v2988, %v2972
    %v3821 = vpack.c.b16 %v2989, %v2973
    %v3822 = vpack.c.b16 %v2990, %v2974
    %v3823 = vpack.c.b16 %v2991, %v2975
    %v3824 = vpack.c.b16 %v2992, %v2976
    %v3825 = vpack.c.b16 %v2993, %v2977
    %v3826 = vpack.c.b16 %v2994, %v2978
    %v3827 = vpack.c.b16 %v2995, %v2979
    %v3828 = vpack.c.b16 %v2996, %v2980
    %v3829 = vpack.c.b16 %v2997, %v2981
    %v3830 = vpack.c.b16 %v2998, %v2982
    %v3831 = vpack.c.b16 %v2999, %v2983
    %v3832 = vpack.c.b16 %v3000, %v2984
    %v3833 = vpack.c.b16 %v3017, %v3001
    %v3834 = vpack.c.b16 %v3018, %v3002
    %v3835 = vpack.c.b16 %v3019, %v3003
    %v3836 = vpack.c.b16 %v3020, %v3004
    %v3837 = vpack.c.b16 %v3021, %v3005
    %v3838 = vpack.c.b16 %v3022, %v3006
    %v3839 = vpack.c.b16 %v3023, %v3007
    %v3840 = vpack.c.b16 %v3024, %v3008
    %v3841 = vpack.c.b16 %v3025, %v3009
    %v3842 = vpack.c.b16 %v3026, %v3010
    %v3843 = vpack.c.b16 %v3027, %v3011
    %v3844 = vpack.c.b16 %v3028, %v3012
    %v3845 = vpack.c.b16 %v3029, %v3013
    %v3846 = vpack.c.b16 %v3030, %v3014
    %v3847 = vpack.c.b16 %v3031, %v3015
    %v3848 = vpack.c.b16 %v3032, %v3016
    %v3849 = vpack.c.b16 %v3049, %v3033
    %v3850 = vpack.c.b16 %v3050, %v3034
    %v3851 = vpack.c.b16 %v3051, %v3035
    %v3852 = vpack.c.b16 %v3052, %v3036
    %v3853 = vpack.c.b16 %v3053, %v3037
    %v3854 = vpack.c.b16 %v3054, %v3038
    %v3855 = vpack.c.b16 %v3055, %v3039
    %v3856 = vpack.c.b16 %v3056, %v3040
    %v3857 = vpack.c.b16 %v3057, %v3041
    %v3858 = vpack.c.b16 %v3058, %v3042
    %v3859 = vpack.c.b16 %v3059, %v3043
    %v3860 = vpack.c.b16 %v3060, %v3044
    %v3861 = vpack.c.b16 %v3061, %v3045
    %v3862 = vpack.c.b16 %v3062, %v3046
    %v3863 = vpack.c.b16 %v3063, %v3047
    %v3864 = vpack.c.b16 %v3064, %v3048
    %v3865 = vpack.c.b16 %v3081, %v3065
    %v3866 = vpack.c.b16 %v3082, %v3066
    %v3867 = vpack.c.b16 %v3083, %v3067
    %v3868 = vpack.c.b16 %v3084, %v3068
    %v3869 = vpack.c.b16 %v3085, %v3069
    %v3870 = vpack.c.b16 %v3086, %v3070
    %v3871 = vpack.c.b16 %v3087, %v3071
    %v3872 = vpack.c.b16 %v3088, %v3072
    %v3873 = vpack.c.b16 %v3089, %v3073
    %v3874 = vpack.c.b16 %v3090, %v3074
    %v3875 = vpack.c.b16 %v3091, %v3075
    %v3876 = vpack.c.b16 %v3092, %v3076
    %v3877 = vpack.c.b16 %v3093, %v3077
    %v3878 = vpack.c.b16 %v3094, %v3078
    %v3879 = vpack.c.b16 %v3095, %v3079
    %v3880 = vpack.c.b16 %v3096, %v3080
    %v3881 = vpack.c.b16 %v3113, %v3097
    %v3882 = vpack.c.b16 %v3114, %v3098
    %v3883 = vpack.c.b16 %v3115, %v3099
    %v3884 = vpack.c.b16 %v3116, %v3100
    %v3885 = vpack.c.b16 %v3117, %v3101
    %v3886 = vpack.c.b16 %v3118, %v3102
    %v3887 = vpack.c.b16 %v3119, %v3103
    %v3888 = vpack.c.b16 %v3120, %v3104
    %v3889 = vpack.c.b16 %v3121, %v3105
    %v3890 = vpack.c.b16 %v3122, %v3106
    %v3891 = vpack.c.b16 %v3123, %v3107
    %v3892 = vpack.c.b16 %v3124, %v3108
    %v3893 = vpack.c.b16 %v3125, %v3109
    %v3894 = vpack.c.b16 %v3126, %v3110
    %v3895 = vpack.c.b16 %v3127, %v3111
    %v3896 = vpack.c.b16 %v3128, %v3112
    %v3897 = vpack.c.b16 %v3145, %v3129
    %v3898 = vpack.c.b16 %v3146, %v3130
    %v3899 = vpack.c.b16 %v3147, %v3131
    %v3900 = vpack.c.b16 %v3148, %v3132
    %v3901 = vpack.c.b16 %v3149, %v3133
    %v3902 = vpack.c.b16 %v3150, %v3134
    %v3903 = vpack.c.b16 %v3151, %v3135
    %v3904 = vpack.c.b16 %v3152, %v3136
    %v3905 = vpack.c.b16 %v3153, %v3137
    %v3906 = vpack.c.b16 %v3154, %v3138
    %v3907 = vpack.c.b16 %v3155, %v3139
    %v3908 = vpack.c.b16 %v3156, %v3140
    %v3909 = vpack.c.b16 %v3157, %v3141
    %v3910 = vpack.c.b16 %v3158, %v3142
    %v3911 = vpack.c.b16 %v3159, %v3143
    %v3912 = vpack.c.b16 %v3160, %v3144
    %v3913 = vpack.c.b16 %v3177, %v3161
    %v3914 = vpack.c.b16 %v3178, %v3162
    %v3915 = vpack.c.b16 %v3179, %v3163
    %v3916 = vpack.c.b16 %v3180, %v3164
    %v3917 = vpack.c.b16 %v3181, %v3165
    %v3918 = vpack.c.b16 %v3182, %v3166
    %v3919 = vpack.c.b16 %v3183, %v3167
    %v3920 = vpack.c.b16 %v3184, %v3168
    %v3921 = vpack.c.b16 %v3185, %v3169
    %v3922 = vpack.c.b16 %v3186, %v3170
    %v3923 = vpack.c.b16 %v3187, %v3171
    %v3924 = vpack.c.b16 %v3188, %v3172
    %v3925 = vpack.c.b16 %v3189, %v3173
    %v3926 = vpack.c.b16 %v3190, %v3174
    %v3927 = vpack.c.b16 %v3191, %v3175
    %v3928 = vpack.c.b16 %v3192, %v3176
    %v3929 = vpack.c.b16 %v3209, %v3193
    %v3930 = vpack.c.b16 %v3210, %v3194
    %v3931 = vpack.c.b16 %v3211, %v3195
    %v3932 = vpack.c.b16 %v3212, %v3196
    %v3933 = vpack.c.b16 %v3213, %v3197
    %v3934 = vpack.c.b16 %v3214, %v3198
    %v3935 = vpack.c.b16 %v3215, %v3199
    %v3936 = vpack.c.b16 %v3216, %v3200
    %v3937 = vpack.c.b16 %v3217, %v3201
    %v3938 = vpack.c.b16 %v3218, %v3202
    %v3939 = vpack.c.b16 %v3219, %v3203
    %v3940 = vpack.c.b16 %v3220, %v3204
    %v3941 = vpack.c.b16 %v3221, %v3205
    %v3942 = vpack.c.b16 %v3222, %v3206
    %v3943 = vpack.c.b16 %v3223, %v3207
    %v3944 = vpack.c.b16 %v3224, %v3208
    %v3945 = vpack.c.b16 %v3241, %v3225
    %v3946 = vpack.c.b16 %v3242, %v3226
    %v3947 = vpack.c.b16 %v3243, %v3227
    %v3948 = vpack.c.b16 %v3244, %v3228
    %v3949 = vpack.c.b16 %v3245, %v3229
    %v3950 = vpack.c.b16 %v3246, %v3230
    %v3951 = vpack.c.b16 %v3247, %v3231
    %v3952 = vpack.c.b16 %v3248, %v3232
    %v3953 = vpack.c.b16 %v3249, %v3233
    %v3954 = vpack.c.b16 %v3250, %v3234
    %v3955 = vpack.c.b16 %v3251, %v3235
    %v3956 = vpack.c.b16 %v3252, %v3236
    %v3957 = vpack.c.b16 %v3253, %v3237
    %v3958 = vpack.c.b16 %v3254, %v3238
    %v3959 = vpack.c.b16 %v3255, %v3239
    %v3960 = vpack.c.b16 %v3256, %v3240
    %v3961 = vpack.c.b16 %v3273, %v3257
    %v3962 = vpack.c.b16 %v3274, %v3258
    %v3963 = vpack.c.b16 %v3275, %v3259
    %v3964 = vpack.c.b16 %v3276, %v3260
    %v3965 = vpack.c.b16 %v3277, %v3261
    %v3966 = vpack.c.b16 %v3278, %v3262
    %v3967 = vpack.c.b16 %v3279, %v3263
    %v3968 = vpack.c.b16 %v3280, %v3264
    %v3969 = vpack.c.b16 %v3281, %v3265
    %v3970 = vpack.c.b16 %v3282, %v3266
    %v3971 = vpack.c.b16 %v3283, %v3267
    %v3972 = vpack.c.b16 %v3284, %v3268
    %v3973 = vpack.c.b16 %v3285, %v3269
    %v3974 = vpack.c.b16 %v3286, %v3270
    %v3975 = vpack.c.b16 %v3287, %v3271
    %v3976 = vpack.c.b16 %v3288, %v3272
    %v3977 = vpack.c.b16 %v3305, %v3289
    %v3978 = vpack.c.b16 %v3306, %v3290
    %v3979 = vpack.c.b16 %v3307, %v3291
    %v3980 = vpack.c.b16 %v3308, %v3292
    %v3981 = vpack.c.b16 %v3309, %v3293
    %v3982 = vpack.c.b16 %v3310, %v3294
    %v3983 = vpack.c.b16 %v3311, %v3295
    %v3984 = vpack.c.b16 %v3312, %v3296
    %v3985 = vpack.c.b16 %v3313, %v3297
    %v3986 = vpack.c.b16 %v3314, %v3298
    %v3987 = vpack.c.b16 %v3315, %v3299
    %v3988 = vpack.c.b16 %v3316, %v3300
    %v3989 = vpack.c.b16 %v3317, %v3301
    %v3990 = vpack.c.b16 %v3318, %v3302
    %v3991 = vpack.c.b16 %v3319, %v3303
    %v3992 = vpack.c.b16 %v3320, %v3304
    %v3993 = vpack.c.b16 %v3337, %v3321
    %v3994 = vpack.c.b16 %v3338, %v3322
    %v3995 = vpack.c.b16 %v3339, %v3323
    %v3996 = vpack.c.b16 %v3340, %v3324
    %v3997 = vpack.c.b16 %v3341, %v3325
    %v3998 = vpack.c.b16 %v3342, %v3326
    %v3999 = vpack.c.b16 %v3343, %v3327
    %v4000 = vpack.c.b16 %v3344, %v3328
    %v4001 = vpack.c.b16 %v3345, %v3329
    %v4002 = vpack.c.b16 %v3346, %v3330
    %v4003 = vpack.c.b16 %v3347, %v3331
    %v4004 = vpack.c.b16 %v3348, %v3332
    %v4005 = vpack.c.b16 %v3349, %v3333
    %v4006 = vpack.c.b16 %v3350, %v3334
    %v4007 = vpack.c.b16 %v3351, %v3335
    %v4008 = vpack.c.b16 %v3352, %v3336
    %v4009 = vpack.c.b16 %v3369, %v3353
    %v4010 = vpack.c.b16 %v3370, %v3354
    %v4011 = vpack.c.b16 %v3371, %v3355
    %v4012 = vpack.c.b16 %v3372, %v3356
    %v4013 = vpack.c.b16 %v3373, %v3357
    %v4014 = vpack.c.b16 %v3374, %v3358
    %v4015 = vpack.c.b16 %v3375, %v3359
    %v4016 = vpack.c.b16 %v3376, %v3360
    %v4017 = vpack.c.b16 %v3377, %v3361
    %v4018 = vpack.c.b16 %v3378, %v3362
    %v4019 = vpack.c.b16 %v3379, %v3363
    %v4020 = vpack.c.b16 %v3380, %v3364
    %v4021 = vpack.c.b16 %v3381, %v3365
    %v4022 = vpack.c.b16 %v3382, %v3366
    %v4023 = vpack.c.b16 %v3383, %v3367
    %v4024 = vpack.c.b16 %v3384, %v3368
    %v4025 = vpack.c.b16 %v3401, %v3385
    %v4026 = vpack.c.b16 %v3402, %v3386
    %v4027 = vpack.c.b16 %v3403, %v3387
    %v4028 = vpack.c.b16 %v3404, %v3388
    %v4029 = vpack.c.b16 %v3405, %v3389
    %v4030 = vpack.c.b16 %v3406, %v3390
    %v4031 = vpack.c.b16 %v3407, %v3391
    %v4032 = vpack.c.b16 %v3408, %v3392
    %v4033 = vpack.c.b16 %v3409, %v3393
    %v4034 = vpack.c.b16 %v3410, %v3394
    %v4035 = vpack.c.b16 %v3411, %v3395
    %v4036 = vpack.c.b16 %v3412, %v3396
    %v4037 = vpack.c.b16 %v3413, %v3397
    %v4038 = vpack.c.b16 %v3414, %v3398
    %v4039 = vpack.c.b16 %v3415, %v3399
    %v4040 = vpack.c.b16 %v3416, %v3400
    %v4041 = vpack.c.b16 %v3433, %v3417
    %v4042 = vpack.c.b16 %v3434, %v3418
    %v4043 = vpack.c.b16 %v3435, %v3419
    %v4044 = vpack.c.b16 %v3436, %v3420
    %v4045 = vpack.c.b16 %v3437, %v3421
    %v4046 = vpack.c.b16 %v3438, %v3422
    %v4047 = vpack.c.b16 %v3439, %v3423
    %v4048 = vpack.c.b16 %v3440, %v3424
    %v4049 = vpack.c.b16 %v3441, %v3425
    %v4050 = vpack.c.b16 %v3442, %v3426
    %v4051 = vpack.c.b16 %v3443, %v3427
    %v4052 = vpack.c.b16 %v3444, %v3428
    %v4053 = vpack.c.b16 %v3445, %v3429
    %v4054 = vpack.c.b16 %v3446, %v3430
    %v4055 = vpack.c.b16 %v3447, %v3431
    %v4056 = vpack.c.b16 %v3448, %v3432
    %v4057 = vpack.c.b16 %v3465, %v3449
    %v4058 = vpack.c.b16 %v3466, %v3450
    %v4059 = vpack.c.b16 %v3467, %v3451
    %v4060 = vpack.c.b16 %v3468, %v3452
    %v4061 = vpack.c.b16 %v3469, %v3453
    %v4062 = vpack.c.b16 %v3470, %v3454
    %v4063 = vpack.c.b16 %v3471, %v3455
    %v4064 = vpack.c.b16 %v3472, %v3456
    %v4065 = vpack.c.b16 %v3473, %v3457
    %v4066 = vpack.c.b16 %v3474, %v3458
    %v4067 = vpack.c.b16 %v3475, %v3459
    %v4068 = vpack.c.b16 %v3476, %v3460
    %v4069 = vpack.c.b16 %v3477, %v3461
    %v4070 = vpack.c.b16 %v3478, %v3462
    %v4071 = vpack.c.b16 %v3479, %v3463
    %v4072 = vpack.c.b16 %v3480, %v3464
    %v4073 = vpack.c.b16 %v3497, %v3481
    %v4074 = vpack.c.b16 %v3498, %v3482
    %v4075 = vpack.c.b16 %v3499, %v3483
    %v4076 = vpack.c.b16 %v3500, %v3484
    %v4077 = vpack.c.b16 %v3501, %v3485
    %v4078 = vpack.c.b16 %v3502, %v3486
    %v4079 = vpack.c.b16 %v3503, %v3487
    %v4080 = vpack.c.b16 %v3504, %v3488
    %v4081 = vpack.c.b16 %v3505, %v3489
    %v4082 = vpack.c.b16 %v3506, %v3490
    %v4083 = vpack.c.b16 %v3507, %v3491
    %v4084 = vpack.c.b16 %v3508, %v3492
    %v4085 = vpack.c.b16 %v3509, %v3493
    %v4086 = vpack.c.b16 %v3510, %v3494
    %v4087 = vpack.c.b16 %v3511, %v3495
    %v4088 = vpack.c.b16 %v3512, %v3496
    %v4089 = vpack.c.b16 %v3529, %v3513
    %v4090 = vpack.c.b16 %v3530, %v3514
    %v4091 = vpack.c.b16 %v3531, %v3515
    %v4092 = vpack.c.b16 %v3532, %v3516
    %v4093 = vpack.c.b16 %v3533, %v3517
    %v4094 = vpack.c.b16 %v3534, %v3518
    %v4095 = vpack.c.b16 %v3535, %v3519
    %v4096 = vpack.c.b16 %v3536, %v3520
    %v4097 = vpack.c.b16 %v3537, %v3521
    %v4098 = vpack.c.b16 %v3538, %v3522
    %v4099 = vpack.c.b16 %v3539, %v3523
    %v4100 = vpack.c.b16 %v3540, %v3524
    %v4101 = vpack.c.b16 %v3541, %v3525
    %v4102 = vpack.c.b16 %v3542, %v3526
    %v4103 = vpack.c.b16 %v3543, %v3527
    %v4104 = vpack.c.b16 %v3544, %v3528
    %v4105 = vpack.c.b16 %v3561, %v3545
    %v4106 = vpack.c.b16 %v3562, %v3546
    %v4107 = vpack.c.b16 %v3563, %v3547
    %v4108 = vpack.c.b16 %v3564, %v3548
    %v4109 = vpack.c.b16 %v3565, %v3549
    %v4110 = vpack.c.b16 %v3566, %v3550
    %v4111 = vpack.c.b16 %v3567, %v3551
    %v4112 = vpack.c.b16 %v3568, %v3552
    %v4113 = vpack.c.b16 %v3569, %v3553
    %v4114 = vpack.c.b16 %v3570, %v3554
    %v4115 = vpack.c.b16 %v3571, %v3555
    %v4116 = vpack.c.b16 %v3572, %v3556
    %v4117 = vpack.c.b16 %v3573, %v3557
    %v4118 = vpack.c.b16 %v3574, %v3558
    %v4119 = vpack.c.b16 %v3575, %v3559
    %v4120 = vpack.c.b16 %v3576, %v3560
    %v4121 = vpack.c.b16 %v3593, %v3577
    %v4122 = vpack.c.b16 %v3594, %v3578
    %v4123 = vpack.c.b16 %v3595, %v3579
    %v4124 = vpack.c.b16 %v3596, %v3580
    %v4125 = vpack.c.b16 %v3597, %v3581
    %v4126 = vpack.c.b16 %v3598, %v3582
    %v4127 = vpack.c.b16 %v3599, %v3583
    %v4128 = vpack.c.b16 %v3600, %v3584
    %v4129 = vpack.c.b16 %v3601, %v3585
    %v4130 = vpack.c.b16 %v3602, %v3586
    %v4131 = vpack.c.b16 %v3603, %v3587
    %v4132 = vpack.c.b16 %v3604, %v3588
    %v4133 = vpack.c.b16 %v3605, %v3589
    %v4134 = vpack.c.b16 %v3606, %v3590
    %v4135 = vpack.c.b16 %v3607, %v3591
    %v4136 = vpack.c.b16 %v3608, %v3592
    %v4137 = vpack.c.b16 %v3625, %v3609
    %v4138 = vpack.c.b16 %v3626, %v3610
    %v4139 = vpack.c.b16 %v3627, %v3611
    %v4140 = vpack.c.b16 %v3628, %v3612
    %v4141 = vpack.c.b16 %v3629, %v3613
    %v4142 = vpack.c.b16 %v3630, %v3614
    %v4143 = vpack.c.b16 %v3631, %v3615
    %v4144 = vpack.c.b16 %v3632, %v3616
    %v4145 = vpack.c.b16 %v3633, %v3617
    %v4146 = vpack.c.b16 %v3634, %v3618
    %v4147 = vpack.c.b16 %v3635, %v3619
    %v4148 = vpack.c.b16 %v3636, %v3620
    %v4149 = vpack.c.b16 %v3637, %v3621
    %v4150 = vpack.c.b16 %v3638, %v3622
    %v4151 = vpack.c.b16 %v3639, %v3623
    %v4152 = vpack.c.b16 %v3640, %v3624
    %4665 = vmatprep.subr.bf16.mxu0 %v3754
    %4666 = vmatpush1.bf16.msra.mxu0 %v3753
    %4667 = vmatprep.subr.bf16.mxu0 %v3738
    %4668 = vmatpush1.bf16.msra.mxu0 %v3737
    %4669 = vmatprep.subr.bf16.mxu0 %v3722
    %4670 = vmatpush1.bf16.msra.mxu0 %v3721
    %4671 = vmatprep.subr.bf16.mxu0 %v3706
    %4672 = vmatpush1.bf16.msra.mxu0 %v3705
    %4673 = vmatprep.subr.bf16.mxu0 %v3690
    %4674 = vmatpush1.bf16.msra.mxu0 %v3689
    %4675 = vmatprep.subr.bf16.mxu0 %v3674
    %4676 = vmatpush1.bf16.msra.mxu0 %v3673
    %4677 = vmatprep.subr.bf16.mxu0 %v3658
    %4678 = vmatpush1.bf16.msra.mxu0 %v3657
    %4679 = vmatprep.subr.bf16.mxu0 %v3642
    %4680 = vmatpush1.bf16.msra.mxu0 %v3641
    %4681 = vmatprep.subr.bf16.mxu0 %v3882
    %4682 = vmatpush2.bf16.msra.mxu0 %v3881
    %4683 = vmatprep.subr.bf16.mxu0 %v3866
    %4684 = vmatpush2.bf16.msra.mxu0 %v3865
    %4685 = vmatprep.subr.bf16.mxu0 %v3850
    %4686 = vmatpush2.bf16.msra.mxu0 %v3849
    %4687 = vmatprep.subr.bf16.mxu0 %v3834
    %4688 = vmatpush2.bf16.msra.mxu0 %v3833
    %4689 = vmatprep.subr.bf16.mxu0 %v3818
    %4690 = vmatpush2.bf16.msra.mxu0 %v3817
    %4691 = vmatprep.subr.bf16.mxu0 %v3802
    %4692 = vmatpush2.bf16.msra.mxu0 %v3801
    %4693 = vmatprep.subr.bf16.mxu0 %v3786
    %4694 = vmatpush2.bf16.msra.mxu0 %v3785
    %4695 = vmatprep.subr.bf16.mxu0 %v3770
    %4696 = vmatpush2.bf16.msra.mxu0 %v3769
    %4697 = vmatprep.mubr.bf16.mxu0 %v2098
    %4698 = vmatmul.mubr.bf16.gmra.mxu0 %v2097
    %v4699 = vpop.f32.mrf.mxu0
    %v4700 = vadd.f32 %v2024, %v4699
    %v4701 = vpop.f32.mrf.mxu0
    %v4702 = vadd.f32 %v2028, %v4701
    %v4703 = vpop.f32.mrf.mxu0
    %v4704 = vadd.f32 %v2024, %v4703
    %v4705 = vpop.f32.mrf.mxu0
    %v4706 = vadd.f32 %v2028, %v4705
    %4707 = vdwg.mxu0
    %4708 = vmatprep.subr.bf16.mxu0 %v4010
    %4709 = vmatpush1.bf16.msra.mxu0 %v4009
    %4710 = vmatprep.subr.bf16.mxu0 %v3994
    %4711 = vmatpush1.bf16.msra.mxu0 %v3993
    %4712 = vmatprep.subr.bf16.mxu0 %v3978
    %4713 = vmatpush1.bf16.msra.mxu0 %v3977
    %4714 = vmatprep.subr.bf16.mxu0 %v3962
    %4715 = vmatpush1.bf16.msra.mxu0 %v3961
    %4716 = vmatprep.subr.bf16.mxu0 %v3946
    %4717 = vmatpush1.bf16.msra.mxu0 %v3945
    %4718 = vmatprep.subr.bf16.mxu0 %v3930
    %4719 = vmatpush1.bf16.msra.mxu0 %v3929
    %4720 = vmatprep.subr.bf16.mxu0 %v3914
    %4721 = vmatpush1.bf16.msra.mxu0 %v3913
    %4722 = vmatprep.subr.bf16.mxu0 %v3898
    %4723 = vmatpush1.bf16.msra.mxu0 %v3897
    %4724 = vmatprep.subr.bf16.mxu0 %v4138
    %4725 = vmatpush2.bf16.msra.mxu0 %v4137
    %4726 = vmatprep.subr.bf16.mxu0 %v4122
    %4727 = vmatpush2.bf16.msra.mxu0 %v4121
    %4728 = vmatprep.subr.bf16.mxu0 %v4106
    %4729 = vmatpush2.bf16.msra.mxu0 %v4105
    %4730 = vmatprep.subr.bf16.mxu0 %v4090
    %4731 = vmatpush2.bf16.msra.mxu0 %v4089
    %4732 = vmatprep.subr.bf16.mxu0 %v4074
    %4733 = vmatpush2.bf16.msra.mxu0 %v4073
    %4734 = vmatprep.subr.bf16.mxu0 %v4058
    %4735 = vmatpush2.bf16.msra.mxu0 %v4057
    %4736 = vmatprep.subr.bf16.mxu0 %v4042
    %4737 = vmatpush2.bf16.msra.mxu0 %v4041
    %4738 = vmatprep.subr.bf16.mxu0 %v4026
    %4739 = vmatpush2.bf16.msra.mxu0 %v4025
    %4740 = vmatprep.mubr.bf16.mxu0 %v2100
    %4741 = vmatmul.mubr.bf16.gmra.mxu0 %v2099
    %v4742 = vpop.f32.mrf.mxu0
    %v4743 = vadd.f32 %v4700, %v4742
    %v4744 = vpop.f32.mrf.mxu0
    %v4745 = vadd.f32 %v4702, %v4744
    %v4746 = vpop.f32.mrf.mxu0
    %v4747 = vadd.f32 %v4704, %v4746
    %v4748 = vpop.f32.mrf.mxu0
    %v4749 = vadd.f32 %v4706, %v4748
    %4750 = vdwg.mxu0
    %4751 = vmatprep.subr.bf16.mxu0 %v3756
    %4752 = vmatpush1.bf16.msra.mxu0 %v3755
    %4753 = vmatprep.subr.bf16.mxu0 %v3740
    %4754 = vmatpush1.bf16.msra.mxu0 %v3739
    %4755 = vmatprep.subr.bf16.mxu0 %v3724
    %4756 = vmatpush1.bf16.msra.mxu0 %v3723
    %4757 = vmatprep.subr.bf16.mxu0 %v3708
    %4758 = vmatpush1.bf16.msra.mxu0 %v3707
    %4759 = vmatprep.subr.bf16.mxu0 %v3692
    %4760 = vmatpush1.bf16.msra.mxu0 %v3691
    %4761 = vmatprep.subr.bf16.mxu0 %v3676
    %4762 = vmatpush1.bf16.msra.mxu0 %v3675
    %4763 = vmatprep.subr.bf16.mxu0 %v3660
    %4764 = vmatpush1.bf16.msra.mxu0 %v3659
    %4765 = vmatprep.subr.bf16.mxu0 %v3644
    %4766 = vmatpush1.bf16.msra.mxu0 %v3643
    %4767 = vmatprep.subr.bf16.mxu0 %v3884
    %4768 = vmatpush2.bf16.msra.mxu0 %v3883
    %4769 = vmatprep.subr.bf16.mxu0 %v3868
    %4770 = vmatpush2.bf16.msra.mxu0 %v3867
    %4771 = vmatprep.subr.bf16.mxu0 %v3852
    %4772 = vmatpush2.bf16.msra.mxu0 %v3851
    %4773 = vmatprep.subr.bf16.mxu0 %v3836
    %4774 = vmatpush2.bf16.msra.mxu0 %v3835
    %4775 = vmatprep.subr.bf16.mxu0 %v3820
    %4776 = vmatpush2.bf16.msra.mxu0 %v3819
    %4777 = vmatprep.subr.bf16.mxu0 %v3804
    %4778 = vmatpush2.bf16.msra.mxu0 %v3803
    %4779 = vmatprep.subr.bf16.mxu0 %v3788
    %4780 = vmatpush2.bf16.msra.mxu0 %v3787
    %4781 = vmatprep.subr.bf16.mxu0 %v3772
    %4782 = vmatpush2.bf16.msra.mxu0 %v3771
    %4783 = vmatprep.mubr.bf16.mxu0 %v2098
    %4784 = vmatmul.mubr.bf16.gmra.mxu0 %v2097
    %v4785 = vpop.f32.mrf.mxu0
    %v4786 = vadd.f32 %v2032, %v4785
    %v4787 = vpop.f32.mrf.mxu0
    %v4788 = vadd.f32 %v2036, %v4787
    %v4789 = vpop.f32.mrf.mxu0
    %v4790 = vadd.f32 %v2032, %v4789
    %v4791 = vpop.f32.mrf.mxu0
    %v4792 = vadd.f32 %v2036, %v4791
    %4793 = vdwg.mxu0
    %4794 = vmatprep.subr.bf16.mxu0 %v4012
    %4795 = vmatpush1.bf16.msra.mxu0 %v4011
    %4796 = vmatprep.subr.bf16.mxu0 %v3996
    %4797 = vmatpush1.bf16.msra.mxu0 %v3995
    %4798 = vmatprep.subr.bf16.mxu0 %v3980
    %4799 = vmatpush1.bf16.msra.mxu0 %v3979
    %4800 = vmatprep.subr.bf16.mxu0 %v3964
    %4801 = vmatpush1.bf16.msra.mxu0 %v3963
    %4802 = vmatprep.subr.bf16.mxu0 %v3948
    %4803 = vmatpush1.bf16.msra.mxu0 %v3947
    %4804 = vmatprep.subr.bf16.mxu0 %v3932
    %4805 = vmatpush1.bf16.msra.mxu0 %v3931
    %4806 = vmatprep.subr.bf16.mxu0 %v3916
    %4807 = vmatpush1.bf16.msra.mxu0 %v3915
    %4808 = vmatprep.subr.bf16.mxu0 %v3900
    %4809 = vmatpush1.bf16.msra.mxu0 %v3899
    %4810 = vmatprep.subr.bf16.mxu0 %v4140
    %4811 = vmatpush2.bf16.msra.mxu0 %v4139
    %4812 = vmatprep.subr.bf16.mxu0 %v4124
    %4813 = vmatpush2.bf16.msra.mxu0 %v4123
    %4814 = vmatprep.subr.bf16.mxu0 %v4108
    %4815 = vmatpush2.bf16.msra.mxu0 %v4107
    %4816 = vmatprep.subr.bf16.mxu0 %v4092
    %4817 = vmatpush2.bf16.msra.mxu0 %v4091
    %4818 = vmatprep.subr.bf16.mxu0 %v4076
    %4819 = vmatpush2.bf16.msra.mxu0 %v4075
    %4820 = vmatprep.subr.bf16.mxu0 %v4060
    %4821 = vmatpush2.bf16.msra.mxu0 %v4059
    %4822 = vmatprep.subr.bf16.mxu0 %v4044
    %4823 = vmatpush2.bf16.msra.mxu0 %v4043
    %4824 = vmatprep.subr.bf16.mxu0 %v4028
    %4825 = vmatpush2.bf16.msra.mxu0 %v4027
    %4826 = vmatprep.mubr.bf16.mxu0 %v2100
    %4827 = vmatmul.mubr.bf16.gmra.mxu0 %v2099
    %v4828 = vpop.f32.mrf.mxu0
    %v4829 = vadd.f32 %v4786, %v4828
    %v4830 = vpop.f32.mrf.mxu0
    %v4831 = vadd.f32 %v4788, %v4830
    %v4832 = vpop.f32.mrf.mxu0
    %v4833 = vadd.f32 %v4790, %v4832
    %v4834 = vpop.f32.mrf.mxu0
    %v4835 = vadd.f32 %v4792, %v4834
    %4836 = vdwg.mxu0
    %4837 = vmatprep.subr.bf16.mxu0 %v3758
    %4838 = vmatpush1.bf16.msra.mxu0 %v3757
    %4839 = vmatprep.subr.bf16.mxu0 %v3742
    %4840 = vmatpush1.bf16.msra.mxu0 %v3741
    %4841 = vmatprep.subr.bf16.mxu0 %v3726
    %4842 = vmatpush1.bf16.msra.mxu0 %v3725
    %4843 = vmatprep.subr.bf16.mxu0 %v3710
    %4844 = vmatpush1.bf16.msra.mxu0 %v3709
    %4845 = vmatprep.subr.bf16.mxu0 %v3694
    %4846 = vmatpush1.bf16.msra.mxu0 %v3693
    %4847 = vmatprep.subr.bf16.mxu0 %v3678
    %4848 = vmatpush1.bf16.msra.mxu0 %v3677
    %4849 = vmatprep.subr.bf16.mxu0 %v3662
    %4850 = vmatpush1.bf16.msra.mxu0 %v3661
    %4851 = vmatprep.subr.bf16.mxu0 %v3646
    %4852 = vmatpush1.bf16.msra.mxu0 %v3645
    %4853 = vmatprep.subr.bf16.mxu0 %v3886
    %4854 = vmatpush2.bf16.msra.mxu0 %v3885
    %4855 = vmatprep.subr.bf16.mxu0 %v3870
    %4856 = vmatpush2.bf16.msra.mxu0 %v3869
    %4857 = vmatprep.subr.bf16.mxu0 %v3854
    %4858 = vmatpush2.bf16.msra.mxu0 %v3853
    %4859 = vmatprep.subr.bf16.mxu0 %v3838
    %4860 = vmatpush2.bf16.msra.mxu0 %v3837
    %4861 = vmatprep.subr.bf16.mxu0 %v3822
    %4862 = vmatpush2.bf16.msra.mxu0 %v3821
    %4863 = vmatprep.subr.bf16.mxu0 %v3806
    %4864 = vmatpush2.bf16.msra.mxu0 %v3805
    %4865 = vmatprep.subr.bf16.mxu0 %v3790
    %4866 = vmatpush2.bf16.msra.mxu0 %v3789
    %4867 = vmatprep.subr.bf16.mxu0 %v3774
    %4868 = vmatpush2.bf16.msra.mxu0 %v3773
    %4869 = vmatprep.mubr.bf16.mxu0 %v2098
    %4870 = vmatmul.mubr.bf16.gmra.mxu0 %v2097
    %v4871 = vpop.f32.mrf.mxu0
    %v4872 = vadd.f32 %v2040, %v4871
    %v4873 = vpop.f32.mrf.mxu0
    %v4874 = vadd.f32 %v2044, %v4873
    %v4875 = vpop.f32.mrf.mxu0
    %v4876 = vadd.f32 %v2040, %v4875
    %v4877 = vpop.f32.mrf.mxu0
    %v4878 = vadd.f32 %v2044, %v4877
    %4879 = vdwg.mxu0
    %4880 = vmatprep.subr.bf16.mxu0 %v4014
    %4881 = vmatpush1.bf16.msra.mxu0 %v4013
    %4882 = vmatprep.subr.bf16.mxu0 %v3998
    %4883 = vmatpush1.bf16.msra.mxu0 %v3997
    %4884 = vmatprep.subr.bf16.mxu0 %v3982
    %4885 = vmatpush1.bf16.msra.mxu0 %v3981
    %4886 = vmatprep.subr.bf16.mxu0 %v3966
    %4887 = vmatpush1.bf16.msra.mxu0 %v3965
    %4888 = vmatprep.subr.bf16.mxu0 %v3950
    %4889 = vmatpush1.bf16.msra.mxu0 %v3949
    %4890 = vmatprep.subr.bf16.mxu0 %v3934
    %4891 = vmatpush1.bf16.msra.mxu0 %v3933
    %4892 = vmatprep.subr.bf16.mxu0 %v3918
    %4893 = vmatpush1.bf16.msra.mxu0 %v3917
    %4894 = vmatprep.subr.bf16.mxu0 %v3902
    %4895 = vmatpush1.bf16.msra.mxu0 %v3901
    %4896 = vmatprep.subr.bf16.mxu0 %v4142
    %4897 = vmatpush2.bf16.msra.mxu0 %v4141
    %4898 = vmatprep.subr.bf16.mxu0 %v4126
    %4899 = vmatpush2.bf16.msra.mxu0 %v4125
    %4900 = vmatprep.subr.bf16.mxu0 %v4110
    %4901 = vmatpush2.bf16.msra.mxu0 %v4109
    %4902 = vmatprep.subr.bf16.mxu0 %v4094
    %4903 = vmatpush2.bf16.msra.mxu0 %v4093
    %4904 = vmatprep.subr.bf16.mxu0 %v4078
    %4905 = vmatpush2.bf16.msra.mxu0 %v4077
    %4906 = vmatprep.subr.bf16.mxu0 %v4062
    %4907 = vmatpush2.bf16.msra.mxu0 %v4061
    %4908 = vmatprep.subr.bf16.mxu0 %v4046
    %4909 = vmatpush2.bf16.msra.mxu0 %v4045
    %4910 = vmatprep.subr.bf16.mxu0 %v4030
    %4911 = vmatpush2.bf16.msra.mxu0 %v4029
    %4912 = vmatprep.mubr.bf16.mxu0 %v2100
    %4913 = vmatmul.mubr.bf16.gmra.mxu0 %v2099
    %v4914 = vpop.f32.mrf.mxu0
    %v4915 = vadd.f32 %v4872, %v4914
    %v4916 = vpop.f32.mrf.mxu0
    %v4917 = vadd.f32 %v4874, %v4916
    %v4918 = vpop.f32.mrf.mxu0
    %v4919 = vadd.f32 %v4876, %v4918
    %v4920 = vpop.f32.mrf.mxu0
    %v4921 = vadd.f32 %v4878, %v4920
    %4922 = vdwg.mxu0
    %4923 = vmatprep.subr.bf16.mxu0 %v3760
    %4924 = vmatpush1.bf16.msra.mxu0 %v3759
    %4925 = vmatprep.subr.bf16.mxu0 %v3744
    %4926 = vmatpush1.bf16.msra.mxu0 %v3743
    %4927 = vmatprep.subr.bf16.mxu0 %v3728
    %4928 = vmatpush1.bf16.msra.mxu0 %v3727
    %4929 = vmatprep.subr.bf16.mxu0 %v3712
    %4930 = vmatpush1.bf16.msra.mxu0 %v3711
    %4931 = vmatprep.subr.bf16.mxu0 %v3696
    %4932 = vmatpush1.bf16.msra.mxu0 %v3695
    %4933 = vmatprep.subr.bf16.mxu0 %v3680
    %4934 = vmatpush1.bf16.msra.mxu0 %v3679
    %4935 = vmatprep.subr.bf16.mxu0 %v3664
    %4936 = vmatpush1.bf16.msra.mxu0 %v3663
    %4937 = vmatprep.subr.bf16.mxu0 %v3648
    %4938 = vmatpush1.bf16.msra.mxu0 %v3647
    %4939 = vmatprep.subr.bf16.mxu0 %v3888
    %4940 = vmatpush2.bf16.msra.mxu0 %v3887
    %4941 = vmatprep.subr.bf16.mxu0 %v3872
    %4942 = vmatpush2.bf16.msra.mxu0 %v3871
    %4943 = vmatprep.subr.bf16.mxu0 %v3856
    %4944 = vmatpush2.bf16.msra.mxu0 %v3855
    %4945 = vmatprep.subr.bf16.mxu0 %v3840
    %4946 = vmatpush2.bf16.msra.mxu0 %v3839
    %4947 = vmatprep.subr.bf16.mxu0 %v3824
    %4948 = vmatpush2.bf16.msra.mxu0 %v3823
    %4949 = vmatprep.subr.bf16.mxu0 %v3808
    %4950 = vmatpush2.bf16.msra.mxu0 %v3807
    %4951 = vmatprep.subr.bf16.mxu0 %v3792
    %4952 = vmatpush2.bf16.msra.mxu0 %v3791
    %4953 = vmatprep.subr.bf16.mxu0 %v3776
    %4954 = vmatpush2.bf16.msra.mxu0 %v3775
    %4955 = vmatprep.mubr.bf16.mxu0 %v2098
    %4956 = vmatmul.mubr.bf16.gmra.mxu0 %v2097
    %v4957 = vpop.f32.mrf.mxu0
    %v4958 = vadd.f32 %v2048, %v4957
    %v4959 = vpop.f32.mrf.mxu0
    %v4960 = vadd.f32 %v2052, %v4959
    %v4961 = vpop.f32.mrf.mxu0
    %v4962 = vadd.f32 %v2048, %v4961
    %v4963 = vpop.f32.mrf.mxu0
    %v4964 = vadd.f32 %v2052, %v4963
    %4965 = vdwg.mxu0
    %4966 = vmatprep.subr.bf16.mxu0 %v4016
    %4967 = vmatpush1.bf16.msra.mxu0 %v4015
    %4968 = vmatprep.subr.bf16.mxu0 %v4000
    %4969 = vmatpush1.bf16.msra.mxu0 %v3999
    %4970 = vmatprep.subr.bf16.mxu0 %v3984
    %4971 = vmatpush1.bf16.msra.mxu0 %v3983
    %4972 = vmatprep.subr.bf16.mxu0 %v3968
    %4973 = vmatpush1.bf16.msra.mxu0 %v3967
    %4974 = vmatprep.subr.bf16.mxu0 %v3952
    %4975 = vmatpush1.bf16.msra.mxu0 %v3951
    %4976 = vmatprep.subr.bf16.mxu0 %v3936
    %4977 = vmatpush1.bf16.msra.mxu0 %v3935
    %4978 = vmatprep.subr.bf16.mxu0 %v3920
    %4979 = vmatpush1.bf16.msra.mxu0 %v3919
    %4980 = vmatprep.subr.bf16.mxu0 %v3904
    %4981 = vmatpush1.bf16.msra.mxu0 %v3903
    %4982 = vmatprep.subr.bf16.mxu0 %v4144
    %4983 = vmatpush2.bf16.msra.mxu0 %v4143
    %4984 = vmatprep.subr.bf16.mxu0 %v4128
    %4985 = vmatpush2.bf16.msra.mxu0 %v4127
    %4986 = vmatprep.subr.bf16.mxu0 %v4112
    %4987 = vmatpush2.bf16.msra.mxu0 %v4111
    %4988 = vmatprep.subr.bf16.mxu0 %v4096
    %4989 = vmatpush2.bf16.msra.mxu0 %v4095
    %4990 = vmatprep.subr.bf16.mxu0 %v4080
    %4991 = vmatpush2.bf16.msra.mxu0 %v4079
    %4992 = vmatprep.subr.bf16.mxu0 %v4064
    %4993 = vmatpush2.bf16.msra.mxu0 %v4063
    %4994 = vmatprep.subr.bf16.mxu0 %v4048
    %4995 = vmatpush2.bf16.msra.mxu0 %v4047
    %4996 = vmatprep.subr.bf16.mxu0 %v4032
    %4997 = vmatpush2.bf16.msra.mxu0 %v4031
    %4998 = vmatprep.mubr.bf16.mxu0 %v2100
    %4999 = vmatmul.mubr.bf16.gmra.mxu0 %v2099
    %v5000 = vpop.f32.mrf.mxu0
    %v5001 = vadd.f32 %v4958, %v5000
    %v5002 = vpop.f32.mrf.mxu0
    %v5003 = vadd.f32 %v4960, %v5002
    %v5004 = vpop.f32.mrf.mxu0
    %v5005 = vadd.f32 %v4962, %v5004
    %v5006 = vpop.f32.mrf.mxu0
    %v5007 = vadd.f32 %v4964, %v5006
    %5008 = vdwg.mxu0
    %5009 = vmatprep.subr.bf16.mxu0 %v3762
    %5010 = vmatpush1.bf16.msra.mxu0 %v3761
    %5011 = vmatprep.subr.bf16.mxu0 %v3746
    %5012 = vmatpush1.bf16.msra.mxu0 %v3745
    %5013 = vmatprep.subr.bf16.mxu0 %v3730
    %5014 = vmatpush1.bf16.msra.mxu0 %v3729
    %5015 = vmatprep.subr.bf16.mxu0 %v3714
    %5016 = vmatpush1.bf16.msra.mxu0 %v3713
    %5017 = vmatprep.subr.bf16.mxu0 %v3698
    %5018 = vmatpush1.bf16.msra.mxu0 %v3697
    %5019 = vmatprep.subr.bf16.mxu0 %v3682
    %5020 = vmatpush1.bf16.msra.mxu0 %v3681
    %5021 = vmatprep.subr.bf16.mxu0 %v3666
    %5022 = vmatpush1.bf16.msra.mxu0 %v3665
    %5023 = vmatprep.subr.bf16.mxu0 %v3650
    %5024 = vmatpush1.bf16.msra.mxu0 %v3649
    %5025 = vmatprep.subr.bf16.mxu0 %v3890
    %5026 = vmatpush2.bf16.msra.mxu0 %v3889
    %5027 = vmatprep.subr.bf16.mxu0 %v3874
    %5028 = vmatpush2.bf16.msra.mxu0 %v3873
    %5029 = vmatprep.subr.bf16.mxu0 %v3858
    %5030 = vmatpush2.bf16.msra.mxu0 %v3857
    %5031 = vmatprep.subr.bf16.mxu0 %v3842
    %5032 = vmatpush2.bf16.msra.mxu0 %v3841
    %5033 = vmatprep.subr.bf16.mxu0 %v3826
    %5034 = vmatpush2.bf16.msra.mxu0 %v3825
    %5035 = vmatprep.subr.bf16.mxu0 %v3810
    %5036 = vmatpush2.bf16.msra.mxu0 %v3809
    %5037 = vmatprep.subr.bf16.mxu0 %v3794
    %5038 = vmatpush2.bf16.msra.mxu0 %v3793
    %5039 = vmatprep.subr.bf16.mxu0 %v3778
    %5040 = vmatpush2.bf16.msra.mxu0 %v3777
    %5041 = vmatprep.mubr.bf16.mxu0 %v2098
    %5042 = vmatmul.mubr.bf16.gmra.mxu0 %v2097
    %v5043 = vpop.f32.mrf.mxu0
    %v5044 = vadd.f32 %v2056, %v5043
    %v5045 = vpop.f32.mrf.mxu0
    %v5046 = vadd.f32 %v2060, %v5045
    %v5047 = vpop.f32.mrf.mxu0
    %v5048 = vadd.f32 %v2056, %v5047
    %v5049 = vpop.f32.mrf.mxu0
    %v5050 = vadd.f32 %v2060, %v5049
    %5051 = vdwg.mxu0
    %5052 = vmatprep.subr.bf16.mxu0 %v4018
    %5053 = vmatpush1.bf16.msra.mxu0 %v4017
    %5054 = vmatprep.subr.bf16.mxu0 %v4002
    %5055 = vmatpush1.bf16.msra.mxu0 %v4001
    %5056 = vmatprep.subr.bf16.mxu0 %v3986
    %5057 = vmatpush1.bf16.msra.mxu0 %v3985
    %5058 = vmatprep.subr.bf16.mxu0 %v3970
    %5059 = vmatpush1.bf16.msra.mxu0 %v3969
    %5060 = vmatprep.subr.bf16.mxu0 %v3954
    %5061 = vmatpush1.bf16.msra.mxu0 %v3953
    %5062 = vmatprep.subr.bf16.mxu0 %v3938
    %5063 = vmatpush1.bf16.msra.mxu0 %v3937
    %5064 = vmatprep.subr.bf16.mxu0 %v3922
    %5065 = vmatpush1.bf16.msra.mxu0 %v3921
    %5066 = vmatprep.subr.bf16.mxu0 %v3906
    %5067 = vmatpush1.bf16.msra.mxu0 %v3905
    %5068 = vmatprep.subr.bf16.mxu0 %v4146
    %5069 = vmatpush2.bf16.msra.mxu0 %v4145
    %5070 = vmatprep.subr.bf16.mxu0 %v4130
    %5071 = vmatpush2.bf16.msra.mxu0 %v4129
    %5072 = vmatprep.subr.bf16.mxu0 %v4114
    %5073 = vmatpush2.bf16.msra.mxu0 %v4113
    %5074 = vmatprep.subr.bf16.mxu0 %v4098
    %5075 = vmatpush2.bf16.msra.mxu0 %v4097
    %5076 = vmatprep.subr.bf16.mxu0 %v4082
    %5077 = vmatpush2.bf16.msra.mxu0 %v4081
    %5078 = vmatprep.subr.bf16.mxu0 %v4066
    %5079 = vmatpush2.bf16.msra.mxu0 %v4065
    %5080 = vmatprep.subr.bf16.mxu0 %v4050
    %5081 = vmatpush2.bf16.msra.mxu0 %v4049
    %5082 = vmatprep.subr.bf16.mxu0 %v4034
    %5083 = vmatpush2.bf16.msra.mxu0 %v4033
    %5084 = vmatprep.mubr.bf16.mxu0 %v2100
    %5085 = vmatmul.mubr.bf16.gmra.mxu0 %v2099
    %v5086 = vpop.f32.mrf.mxu0
    %v5087 = vadd.f32 %v5044, %v5086
    %v5088 = vpop.f32.mrf.mxu0
    %v5089 = vadd.f32 %v5046, %v5088
    %v5090 = vpop.f32.mrf.mxu0
    %v5091 = vadd.f32 %v5048, %v5090
    %v5092 = vpop.f32.mrf.mxu0
    %v5093 = vadd.f32 %v5050, %v5092
    %5094 = vdwg.mxu0
    %5095 = vmatprep.subr.bf16.mxu0 %v3764
    %5096 = vmatpush1.bf16.msra.mxu0 %v3763
    %5097 = vmatprep.subr.bf16.mxu0 %v3748
    %5098 = vmatpush1.bf16.msra.mxu0 %v3747
    %5099 = vmatprep.subr.bf16.mxu0 %v3732
    %5100 = vmatpush1.bf16.msra.mxu0 %v3731
    %5101 = vmatprep.subr.bf16.mxu0 %v3716
    %5102 = vmatpush1.bf16.msra.mxu0 %v3715
    %5103 = vmatprep.subr.bf16.mxu0 %v3700
    %5104 = vmatpush1.bf16.msra.mxu0 %v3699
    %5105 = vmatprep.subr.bf16.mxu0 %v3684
    %5106 = vmatpush1.bf16.msra.mxu0 %v3683
    %5107 = vmatprep.subr.bf16.mxu0 %v3668
    %5108 = vmatpush1.bf16.msra.mxu0 %v3667
    %5109 = vmatprep.subr.bf16.mxu0 %v3652
    %5110 = vmatpush1.bf16.msra.mxu0 %v3651
    %5111 = vmatprep.subr.bf16.mxu0 %v3892
    %5112 = vmatpush2.bf16.msra.mxu0 %v3891
    %5113 = vmatprep.subr.bf16.mxu0 %v3876
    %5114 = vmatpush2.bf16.msra.mxu0 %v3875
    %5115 = vmatprep.subr.bf16.mxu0 %v3860
    %5116 = vmatpush2.bf16.msra.mxu0 %v3859
    %5117 = vmatprep.subr.bf16.mxu0 %v3844
    %5118 = vmatpush2.bf16.msra.mxu0 %v3843
    %5119 = vmatprep.subr.bf16.mxu0 %v3828
    %5120 = vmatpush2.bf16.msra.mxu0 %v3827
    %5121 = vmatprep.subr.bf16.mxu0 %v3812
    %5122 = vmatpush2.bf16.msra.mxu0 %v3811
    %5123 = vmatprep.subr.bf16.mxu0 %v3796
    %5124 = vmatpush2.bf16.msra.mxu0 %v3795
    %5125 = vmatprep.subr.bf16.mxu0 %v3780
    %5126 = vmatpush2.bf16.msra.mxu0 %v3779
    %5127 = vmatprep.mubr.bf16.mxu0 %v2098
    %5128 = vmatmul.mubr.bf16.gmra.mxu0 %v2097
    %v5129 = vpop.f32.mrf.mxu0
    %v5130 = vadd.f32 %v2064, %v5129
    %v5131 = vpop.f32.mrf.mxu0
    %v5132 = vadd.f32 %v2068, %v5131
    %v5133 = vpop.f32.mrf.mxu0
    %v5134 = vadd.f32 %v2064, %v5133
    %v5135 = vpop.f32.mrf.mxu0
    %v5136 = vadd.f32 %v2068, %v5135
    %5137 = vdwg.mxu0
    %5138 = vmatprep.subr.bf16.mxu0 %v4020
    %5139 = vmatpush1.bf16.msra.mxu0 %v4019
    %5140 = vmatprep.subr.bf16.mxu0 %v4004
    %5141 = vmatpush1.bf16.msra.mxu0 %v4003
    %5142 = vmatprep.subr.bf16.mxu0 %v3988
    %5143 = vmatpush1.bf16.msra.mxu0 %v3987
    %5144 = vmatprep.subr.bf16.mxu0 %v3972
    %5145 = vmatpush1.bf16.msra.mxu0 %v3971
    %5146 = vmatprep.subr.bf16.mxu0 %v3956
    %5147 = vmatpush1.bf16.msra.mxu0 %v3955
    %5148 = vmatprep.subr.bf16.mxu0 %v3940
    %5149 = vmatpush1.bf16.msra.mxu0 %v3939
    %5150 = vmatprep.subr.bf16.mxu0 %v3924
    %5151 = vmatpush1.bf16.msra.mxu0 %v3923
    %5152 = vmatprep.subr.bf16.mxu0 %v3908
    %5153 = vmatpush1.bf16.msra.mxu0 %v3907
    %5154 = vmatprep.subr.bf16.mxu0 %v4148
    %5155 = vmatpush2.bf16.msra.mxu0 %v4147
    %5156 = vmatprep.subr.bf16.mxu0 %v4132
    %5157 = vmatpush2.bf16.msra.mxu0 %v4131
    %5158 = vmatprep.subr.bf16.mxu0 %v4116
    %5159 = vmatpush2.bf16.msra.mxu0 %v4115
    %5160 = vmatprep.subr.bf16.mxu0 %v4100
    %5161 = vmatpush2.bf16.msra.mxu0 %v4099
    %5162 = vmatprep.subr.bf16.mxu0 %v4084
    %5163 = vmatpush2.bf16.msra.mxu0 %v4083
    %5164 = vmatprep.subr.bf16.mxu0 %v4068
    %5165 = vmatpush2.bf16.msra.mxu0 %v4067
    %5166 = vmatprep.subr.bf16.mxu0 %v4052
    %5167 = vmatpush2.bf16.msra.mxu0 %v4051
    %5168 = vmatprep.subr.bf16.mxu0 %v4036
    %5169 = vmatpush2.bf16.msra.mxu0 %v4035
    %5170 = vmatprep.mubr.bf16.mxu0 %v2100
    %5171 = vmatmul.mubr.bf16.gmra.mxu0 %v2099
    %v5172 = vpop.f32.mrf.mxu0
    %v5173 = vadd.f32 %v5130, %v5172
    %v5174 = vpop.f32.mrf.mxu0
    %v5175 = vadd.f32 %v5132, %v5174
    %v5176 = vpop.f32.mrf.mxu0
    %v5177 = vadd.f32 %v5134, %v5176
    %v5178 = vpop.f32.mrf.mxu0
    %v5179 = vadd.f32 %v5136, %v5178
    %5180 = vdwg.mxu0
    %5181 = vmatprep.subr.bf16.mxu0 %v3766
    %5182 = vmatpush1.bf16.msra.mxu0 %v3765
    %5183 = vmatprep.subr.bf16.mxu0 %v3750
    %5184 = vmatpush1.bf16.msra.mxu0 %v3749
    %5185 = vmatprep.subr.bf16.mxu0 %v3734
    %5186 = vmatpush1.bf16.msra.mxu0 %v3733
    %5187 = vmatprep.subr.bf16.mxu0 %v3718
    %5188 = vmatpush1.bf16.msra.mxu0 %v3717
    %5189 = vmatprep.subr.bf16.mxu0 %v3702
    %5190 = vmatpush1.bf16.msra.mxu0 %v3701
    %5191 = vmatprep.subr.bf16.mxu0 %v3686
    %5192 = vmatpush1.bf16.msra.mxu0 %v3685
    %5193 = vmatprep.subr.bf16.mxu0 %v3670
    %5194 = vmatpush1.bf16.msra.mxu0 %v3669
    %5195 = vmatprep.subr.bf16.mxu0 %v3654
    %5196 = vmatpush1.bf16.msra.mxu0 %v3653
    %5197 = vmatprep.subr.bf16.mxu0 %v3894
    %5198 = vmatpush2.bf16.msra.mxu0 %v3893
    %5199 = vmatprep.subr.bf16.mxu0 %v3878
    %5200 = vmatpush2.bf16.msra.mxu0 %v3877
    %5201 = vmatprep.subr.bf16.mxu0 %v3862
    %5202 = vmatpush2.bf16.msra.mxu0 %v3861
    %5203 = vmatprep.subr.bf16.mxu0 %v3846
    %5204 = vmatpush2.bf16.msra.mxu0 %v3845
    %5205 = vmatprep.subr.bf16.mxu0 %v3830
    %5206 = vmatpush2.bf16.msra.mxu0 %v3829
    %5207 = vmatprep.subr.bf16.mxu0 %v3814
    %5208 = vmatpush2.bf16.msra.mxu0 %v3813
    %5209 = vmatprep.subr.bf16.mxu0 %v3798
    %5210 = vmatpush2.bf16.msra.mxu0 %v3797
    %5211 = vmatprep.subr.bf16.mxu0 %v3782
    %5212 = vmatpush2.bf16.msra.mxu0 %v3781
    %5213 = vmatprep.mubr.bf16.mxu0 %v2098
    %5214 = vmatmul.mubr.bf16.gmra.mxu0 %v2097
    %v5215 = vpop.f32.mrf.mxu0
    %v5216 = vadd.f32 %v2072, %v5215
    %v5217 = vpop.f32.mrf.mxu0
    %v5218 = vadd.f32 %v2076, %v5217
    %v5219 = vpop.f32.mrf.mxu0
    %v5220 = vadd.f32 %v2072, %v5219
    %v5221 = vpop.f32.mrf.mxu0
    %v5222 = vadd.f32 %v2076, %v5221
    %5223 = vdwg.mxu0
    %5224 = vmatprep.subr.bf16.mxu0 %v4022
    %5225 = vmatpush1.bf16.msra.mxu0 %v4021
    %5226 = vmatprep.subr.bf16.mxu0 %v4006
    %5227 = vmatpush1.bf16.msra.mxu0 %v4005
    %5228 = vmatprep.subr.bf16.mxu0 %v3990
    %5229 = vmatpush1.bf16.msra.mxu0 %v3989
    %5230 = vmatprep.subr.bf16.mxu0 %v3974
    %5231 = vmatpush1.bf16.msra.mxu0 %v3973
    %5232 = vmatprep.subr.bf16.mxu0 %v3958
    %5233 = vmatpush1.bf16.msra.mxu0 %v3957
    %5234 = vmatprep.subr.bf16.mxu0 %v3942
    %5235 = vmatpush1.bf16.msra.mxu0 %v3941
    %5236 = vmatprep.subr.bf16.mxu0 %v3926
    %5237 = vmatpush1.bf16.msra.mxu0 %v3925
    %5238 = vmatprep.subr.bf16.mxu0 %v3910
    %5239 = vmatpush1.bf16.msra.mxu0 %v3909
    %5240 = vmatprep.subr.bf16.mxu0 %v4150
    %5241 = vmatpush2.bf16.msra.mxu0 %v4149
    %5242 = vmatprep.subr.bf16.mxu0 %v4134
    %5243 = vmatpush2.bf16.msra.mxu0 %v4133
    %5244 = vmatprep.subr.bf16.mxu0 %v4118
    %5245 = vmatpush2.bf16.msra.mxu0 %v4117
    %5246 = vmatprep.subr.bf16.mxu0 %v4102
    %5247 = vmatpush2.bf16.msra.mxu0 %v4101
    %5248 = vmatprep.subr.bf16.mxu0 %v4086
    %5249 = vmatpush2.bf16.msra.mxu0 %v4085
    %5250 = vmatprep.subr.bf16.mxu0 %v4070
    %5251 = vmatpush2.bf16.msra.mxu0 %v4069
    %5252 = vmatprep.subr.bf16.mxu0 %v4054
    %5253 = vmatpush2.bf16.msra.mxu0 %v4053
    %5254 = vmatprep.subr.bf16.mxu0 %v4038
    %5255 = vmatpush2.bf16.msra.mxu0 %v4037
    %5256 = vmatprep.mubr.bf16.mxu0 %v2100
    %5257 = vmatmul.mubr.bf16.gmra.mxu0 %v2099
    %v5258 = vpop.f32.mrf.mxu0
    %v5259 = vadd.f32 %v5216, %v5258
    %v5260 = vpop.f32.mrf.mxu0
    %v5261 = vadd.f32 %v5218, %v5260
    %v5262 = vpop.f32.mrf.mxu0
    %v5263 = vadd.f32 %v5220, %v5262
    %v5264 = vpop.f32.mrf.mxu0
    %v5265 = vadd.f32 %v5222, %v5264
    %5266 = vdwg.mxu0
    %5267 = vmatprep.subr.bf16.mxu0 %v3768
    %5268 = vmatpush1.bf16.msra.mxu0 %v3767
    %5269 = vmatprep.subr.bf16.mxu0 %v3752
    %5270 = vmatpush1.bf16.msra.mxu0 %v3751
    %5271 = vmatprep.subr.bf16.mxu0 %v3736
    %5272 = vmatpush1.bf16.msra.mxu0 %v3735
    %5273 = vmatprep.subr.bf16.mxu0 %v3720
    %5274 = vmatpush1.bf16.msra.mxu0 %v3719
    %5275 = vmatprep.subr.bf16.mxu0 %v3704
    %5276 = vmatpush1.bf16.msra.mxu0 %v3703
    %5277 = vmatprep.subr.bf16.mxu0 %v3688
    %5278 = vmatpush1.bf16.msra.mxu0 %v3687
    %5279 = vmatprep.subr.bf16.mxu0 %v3672
    %5280 = vmatpush1.bf16.msra.mxu0 %v3671
    %5281 = vmatprep.subr.bf16.mxu0 %v3656
    %5282 = vmatpush1.bf16.msra.mxu0 %v3655
    %5283 = vmatprep.subr.bf16.mxu0 %v3896
    %5284 = vmatpush2.bf16.msra.mxu0 %v3895
    %5285 = vmatprep.subr.bf16.mxu0 %v3880
    %5286 = vmatpush2.bf16.msra.mxu0 %v3879
    %5287 = vmatprep.subr.bf16.mxu0 %v3864
    %5288 = vmatpush2.bf16.msra.mxu0 %v3863
    %5289 = vmatprep.subr.bf16.mxu0 %v3848
    %5290 = vmatpush2.bf16.msra.mxu0 %v3847
    %5291 = vmatprep.subr.bf16.mxu0 %v3832
    %5292 = vmatpush2.bf16.msra.mxu0 %v3831
    %5293 = vmatprep.subr.bf16.mxu0 %v3816
    %5294 = vmatpush2.bf16.msra.mxu0 %v3815
    %5295 = vmatprep.subr.bf16.mxu0 %v3800
    %5296 = vmatpush2.bf16.msra.mxu0 %v3799
    %5297 = vmatprep.subr.bf16.mxu0 %v3784
    %5298 = vmatpush2.bf16.msra.mxu0 %v3783
    %5299 = vmatprep.mubr.bf16.mxu0 %v2098
    %5300 = vmatmul.mubr.bf16.gmra.mxu0 %v2097
    %v5301 = vpop.f32.mrf.mxu0
    %v5302 = vadd.f32 %v2080, %v5301
    %v5303 = vpop.f32.mrf.mxu0
    %v5304 = vadd.f32 %v2084, %v5303
    %v5305 = vpop.f32.mrf.mxu0
    %v5306 = vadd.f32 %v2080, %v5305
    %v5307 = vpop.f32.mrf.mxu0
    %v5308 = vadd.f32 %v2084, %v5307
    %5309 = vdwg.mxu0
    %5310 = vmatprep.subr.bf16.mxu0 %v4024
    %5311 = vmatpush1.bf16.msra.mxu0 %v4023
    %5312 = vmatprep.subr.bf16.mxu0 %v4008
    %5313 = vmatpush1.bf16.msra.mxu0 %v4007
    %5314 = vmatprep.subr.bf16.mxu0 %v3992
    %5315 = vmatpush1.bf16.msra.mxu0 %v3991
    %5316 = vmatprep.subr.bf16.mxu0 %v3976
    %5317 = vmatpush1.bf16.msra.mxu0 %v3975
    %5318 = vmatprep.subr.bf16.mxu0 %v3960
    %5319 = vmatpush1.bf16.msra.mxu0 %v3959
    %5320 = vmatprep.subr.bf16.mxu0 %v3944
    %5321 = vmatpush1.bf16.msra.mxu0 %v3943
    %5322 = vmatprep.subr.bf16.mxu0 %v3928
    %5323 = vmatpush1.bf16.msra.mxu0 %v3927
    %5324 = vmatprep.subr.bf16.mxu0 %v3912
    %5325 = vmatpush1.bf16.msra.mxu0 %v3911
    %5326 = vmatprep.subr.bf16.mxu0 %v4152
    %5327 = vmatpush2.bf16.msra.mxu0 %v4151
    %5328 = vmatprep.subr.bf16.mxu0 %v4136
    %5329 = vmatpush2.bf16.msra.mxu0 %v4135
    %5330 = vmatprep.subr.bf16.mxu0 %v4120
    %5331 = vmatpush2.bf16.msra.mxu0 %v4119
    %5332 = vmatprep.subr.bf16.mxu0 %v4104
    %5333 = vmatpush2.bf16.msra.mxu0 %v4103
    %5334 = vmatprep.subr.bf16.mxu0 %v4088
    %5335 = vmatpush2.bf16.msra.mxu0 %v4087
    %5336 = vmatprep.subr.bf16.mxu0 %v4072
    %5337 = vmatpush2.bf16.msra.mxu0 %v4071
    %5338 = vmatprep.subr.bf16.mxu0 %v4056
    %5339 = vmatpush2.bf16.msra.mxu0 %v4055
    %5340 = vmatprep.subr.bf16.mxu0 %v4040
    %5341 = vmatpush2.bf16.msra.mxu0 %v4039
    %5342 = vmatprep.mubr.bf16.mxu0 %v2100
    %5343 = vmatmul.mubr.bf16.gmra.mxu0 %v2099
    %v5344 = vpop.f32.mrf.mxu0
    %v5345 = vadd.f32 %v5302, %v5344
    %v5346 = vpop.f32.mrf.mxu0
    %v5347 = vadd.f32 %v5304, %v5346
    %v5348 = vpop.f32.mrf.mxu0
    %v5349 = vadd.f32 %v5306, %v5348
    %v5350 = vpop.f32.mrf.mxu0
    %v5351 = vadd.f32 %v5308, %v5350
    %5352 = vdwg.mxu0
    %vm5353 = vcmp.gt.f32.partialorder %v4743, 0.0
    %vm5354 = vcmp.gt.f32.partialorder %v4745, 0.0
    %vm5355 = vcmp.gt.f32.partialorder %v4829, 0.0
    %vm5356 = vcmp.gt.f32.partialorder %v4831, 0.0
    %vm5357 = vcmp.gt.f32.partialorder %v4915, 0.0
    %vm5358 = vcmp.gt.f32.partialorder %v4917, 0.0
    %vm5359 = vcmp.gt.f32.partialorder %v5001, 0.0
    %vm5360 = vcmp.gt.f32.partialorder %v5003, 0.0
    %vm5361 = vcmp.gt.f32.partialorder %v5087, 0.0
    %vm5362 = vcmp.gt.f32.partialorder %v5089, 0.0
    %vm5363 = vcmp.gt.f32.partialorder %v5173, 0.0
    %vm5364 = vcmp.gt.f32.partialorder %v5175, 0.0
    %vm5365 = vcmp.gt.f32.partialorder %v5259, 0.0
    %vm5366 = vcmp.gt.f32.partialorder %v5261, 0.0
    %vm5367 = vcmp.gt.f32.partialorder %v5345, 0.0
    %vm5368 = vcmp.gt.f32.partialorder %v5347, 0.0
    %vm5369 = vcmp.gt.f32.partialorder %v4747, 0.0
    %vm5370 = vcmp.gt.f32.partialorder %v4749, 0.0
    %vm5371 = vcmp.gt.f32.partialorder %v4833, 0.0
    %vm5372 = vcmp.gt.f32.partialorder %v4835, 0.0
    %vm5373 = vcmp.gt.f32.partialorder %v4919, 0.0
    %vm5374 = vcmp.gt.f32.partialorder %v4921, 0.0
    %vm5375 = vcmp.gt.f32.partialorder %v5005, 0.0
    %vm5376 = vcmp.gt.f32.partialorder %v5007, 0.0
    %vm5377 = vcmp.gt.f32.partialorder %v5091, 0.0
    %vm5378 = vcmp.gt.f32.partialorder %v5093, 0.0
    %vm5379 = vcmp.gt.f32.partialorder %v5177, 0.0
    %vm5380 = vcmp.gt.f32.partialorder %v5179, 0.0
    %vm5381 = vcmp.gt.f32.partialorder %v5263, 0.0
    %vm5382 = vcmp.gt.f32.partialorder %v5265, 0.0
    %vm5383 = vcmp.gt.f32.partialorder %v5349, 0.0
    %vm5384 = vcmp.gt.f32.partialorder %v5351, 0.0
    %v5385 = vmul.f32 %v4743, 0.01
    %v5386 = vmul.f32 %v4745, 0.01
    %v5387 = vmul.f32 %v4829, 0.01
    %v5388 = vmul.f32 %v4831, 0.01
    %v5389 = vmul.f32 %v4915, 0.01
    %v5390 = vmul.f32 %v4917, 0.01
    %v5391 = vmul.f32 %v5001, 0.01
    %v5392 = vmul.f32 %v5003, 0.01
    %v5393 = vmul.f32 %v5087, 0.01
    %v5394 = vmul.f32 %v5089, 0.01
    %v5395 = vmul.f32 %v5173, 0.01
    %v5396 = vmul.f32 %v5175, 0.01
    %v5397 = vmul.f32 %v5259, 0.01
    %v5398 = vmul.f32 %v5261, 0.01
    %v5399 = vmul.f32 %v5345, 0.01
    %v5400 = vmul.f32 %v5347, 0.01
    %v5401 = vmul.f32 %v4747, 0.01
    %v5402 = vmul.f32 %v4749, 0.01
    %v5403 = vmul.f32 %v4833, 0.01
    %v5404 = vmul.f32 %v4835, 0.01
    %v5405 = vmul.f32 %v4919, 0.01
    %v5406 = vmul.f32 %v4921, 0.01
    %v5407 = vmul.f32 %v5005, 0.01
    %v5408 = vmul.f32 %v5007, 0.01
    %v5409 = vmul.f32 %v5091, 0.01
    %v5410 = vmul.f32 %v5093, 0.01
    %v5411 = vmul.f32 %v5177, 0.01
    %v5412 = vmul.f32 %v5179, 0.01
    %v5413 = vmul.f32 %v5263, 0.01
    %v5414 = vmul.f32 %v5265, 0.01
    %v5415 = vmul.f32 %v5349, 0.01
    %v5416 = vmul.f32 %v5351, 0.01
    %v5417 = vsel %vm5353, %v4743, %v5385
    %v5418 = vsel %vm5354, %v4745, %v5386
    %v5419 = vsel %vm5355, %v4829, %v5387
    %v5420 = vsel %vm5356, %v4831, %v5388
    %v5421 = vsel %vm5357, %v4915, %v5389
    %v5422 = vsel %vm5358, %v4917, %v5390
    %v5423 = vsel %vm5359, %v5001, %v5391
    %v5424 = vsel %vm5360, %v5003, %v5392
    %v5425 = vsel %vm5361, %v5087, %v5393
    %v5426 = vsel %vm5362, %v5089, %v5394
    %v5427 = vsel %vm5363, %v5173, %v5395
    %v5428 = vsel %vm5364, %v5175, %v5396
    %v5429 = vsel %vm5365, %v5259, %v5397
    %v5430 = vsel %vm5366, %v5261, %v5398
    %v5431 = vsel %vm5367, %v5345, %v5399
    %v5432 = vsel %vm5368, %v5347, %v5400
    %v5433 = vsel %vm5369, %v4747, %v5401
    %v5434 = vsel %vm5370, %v4749, %v5402
    %v5435 = vsel %vm5371, %v4833, %v5403
    %v5436 = vsel %vm5372, %v4835, %v5404
    %v5437 = vsel %vm5373, %v4919, %v5405
    %v5438 = vsel %vm5374, %v4921, %v5406
    %v5439 = vsel %vm5375, %v5005, %v5407
    %v5440 = vsel %vm5376, %v5007, %v5408
    %v5441 = vsel %vm5377, %v5091, %v5409
    %v5442 = vsel %vm5378, %v5093, %v5410
    %v5443 = vsel %vm5379, %v5177, %v5411
    %v5444 = vsel %vm5380, %v5179, %v5412
    %v5445 = vsel %vm5381, %v5263, %v5413
    %v5446 = vsel %vm5382, %v5265, %v5414
    %v5447 = vsel %vm5383, %v5349, %v5415
    %v5448 = vsel %vm5384, %v5351, %v5416
    %v5449 = vpack.c.bf16 %v5433, %v5417
    %v5450 = vpack.c.bf16 %v5434, %v5418
    %v5451 = vpack.c.bf16 %v5435, %v5419
    %v5452 = vpack.c.bf16 %v5436, %v5420
    %v5453 = vpack.c.bf16 %v5437, %v5421
    %v5454 = vpack.c.bf16 %v5438, %v5422
    %v5455 = vpack.c.bf16 %v5439, %v5423
    %v5456 = vpack.c.bf16 %v5440, %v5424
    %v5457 = vpack.c.bf16 %v5441, %v5425
    %v5458 = vpack.c.bf16 %v5442, %v5426
    %v5459 = vpack.c.bf16 %v5443, %v5427
    %v5460 = vpack.c.bf16 %v5444, %v5428
    %v5461 = vpack.c.bf16 %v5445, %v5429
    %v5462 = vpack.c.bf16 %v5446, %v5430
    %v5463 = vpack.c.bf16 %v5447, %v5431
    %v5464 = vpack.c.bf16 %v5448, %v5432
    %v5465 = vunpack.c.l.bf16 %v1675
    %v5466 = vunpack.c.h.bf16 %v1675
    %v5469 = vlaneseq
    %v5470 = vshrl.u32 %v5469, 7
    %v5471 = vsub.s32 0, %v5470
    %v5472 = vrot.slane %v5465, %v5471
    %v5473 = vlaneseq
    %v5474 = vshrl.u32 %v5473, 7
    %v5475 = vsub.s32 2, %v5474
    %v5476 = vrot.slane %v5465, %v5475
    %v5477 = vlaneseq
    %v5478 = vshrl.u32 %v5477, 7
    %v5479 = vsub.s32 4, %v5478
    %v5480 = vrot.slane %v5465, %v5479
    %v5481 = vlaneseq
    %v5482 = vshrl.u32 %v5481, 7
    %v5483 = vsub.s32 6, %v5482
    %v5484 = vrot.slane %v5465, %v5483
    %v5485 = vlaneseq
    %v5486 = vshrl.u32 %v5485, 7
    %v5487 = vsub.s32 0, %v5486
    %v5488 = vrot.slane %v5466, %v5487
    %v5489 = vlaneseq
    %v5490 = vshrl.u32 %v5489, 7
    %v5491 = vsub.s32 2, %v5490
    %v5492 = vrot.slane %v5466, %v5491
    %v5493 = vlaneseq
    %v5494 = vshrl.u32 %v5493, 7
    %v5495 = vsub.s32 4, %v5494
    %v5496 = vrot.slane %v5466, %v5495
    %v5497 = vlaneseq
    %v5498 = vshrl.u32 %v5497, 7
    %v5499 = vsub.s32 6, %v5498
    %v5500 = vrot.slane %v5466, %v5499
    %v5509 = vlaneseq
    %v5510 = vshrl.u32 %v5509, 7
    %v5511 = vsub.s32 0, %v5510
    %v5512 = vrot.slane %v5472, %v5511
    %v5513 = vlaneseq
    %v5514 = vshrl.u32 %v5513, 7
    %v5515 = vsub.s32 0, %v5514
    %v5516 = vrot.slane %v5476, %v5515
    %v5517 = vlaneseq
    %v5518 = vshrl.u32 %v5517, 7
    %v5519 = vsub.s32 0, %v5518
    %v5520 = vrot.slane %v5480, %v5519
    %v5521 = vlaneseq
    %v5522 = vshrl.u32 %v5521, 7
    %v5523 = vsub.s32 0, %v5522
    %v5524 = vrot.slane %v5484, %v5523
    %v5525 = vlaneseq
    %v5526 = vshrl.u32 %v5525, 7
    %v5527 = vsub.s32 0, %v5526
    %v5528 = vrot.slane %v5488, %v5527
    %v5529 = vlaneseq
    %v5530 = vshrl.u32 %v5529, 7
    %v5531 = vsub.s32 0, %v5530
    %v5532 = vrot.slane %v5492, %v5531
    %v5533 = vlaneseq
    %v5534 = vshrl.u32 %v5533, 7
    %v5535 = vsub.s32 0, %v5534
    %v5536 = vrot.slane %v5496, %v5535
    %v5537 = vlaneseq
    %v5538 = vshrl.u32 %v5537, 7
    %v5539 = vsub.s32 0, %v5538
    %v5540 = vrot.slane %v5500, %v5539
    %v6565 = vunpack.c.l.b16 %v651
    %v6566 = vunpack.c.h.b16 %v651
    %v6567 = vunpack.c.l.b16 %v652
    %v6568 = vunpack.c.h.b16 %v652
    %v6569 = vunpack.c.l.b16 %v653
    %v6570 = vunpack.c.h.b16 %v653
    %v6571 = vunpack.c.l.b16 %v654
    %v6572 = vunpack.c.h.b16 %v654
    %v6573 = vunpack.c.l.b16 %v655
    %v6574 = vunpack.c.h.b16 %v655
    %v6575 = vunpack.c.l.b16 %v656
    %v6576 = vunpack.c.h.b16 %v656
    %v6577 = vunpack.c.l.b16 %v657
    %v6578 = vunpack.c.h.b16 %v657
    %v6579 = vunpack.c.l.b16 %v658
    %v6580 = vunpack.c.h.b16 %v658
    %v6581 = vunpack.c.l.b16 %v659
    %v6582 = vunpack.c.h.b16 %v659
    %v6583 = vunpack.c.l.b16 %v660
    %v6584 = vunpack.c.h.b16 %v660
    %v6585 = vunpack.c.l.b16 %v661
    %v6586 = vunpack.c.h.b16 %v661
    %v6587 = vunpack.c.l.b16 %v662
    %v6588 = vunpack.c.h.b16 %v662
    %v6589 = vunpack.c.l.b16 %v663
    %v6590 = vunpack.c.h.b16 %v663
    %v6591 = vunpack.c.l.b16 %v664
    %v6592 = vunpack.c.h.b16 %v664
    %v6593 = vunpack.c.l.b16 %v665
    %v6594 = vunpack.c.h.b16 %v665
    %v6595 = vunpack.c.l.b16 %v666
    %v6596 = vunpack.c.h.b16 %v666
    %v6597 = vunpack.c.l.b16 %v667
    %v6598 = vunpack.c.h.b16 %v667
    %v6599 = vunpack.c.l.b16 %v668
    %v6600 = vunpack.c.h.b16 %v668
    %v6601 = vunpack.c.l.b16 %v669
    %v6602 = vunpack.c.h.b16 %v669
    %v6603 = vunpack.c.l.b16 %v670
    %v6604 = vunpack.c.h.b16 %v670
    %v6605 = vunpack.c.l.b16 %v671
    %v6606 = vunpack.c.h.b16 %v671
    %v6607 = vunpack.c.l.b16 %v672
    %v6608 = vunpack.c.h.b16 %v672
    %v6609 = vunpack.c.l.b16 %v673
    %v6610 = vunpack.c.h.b16 %v673
    %v6611 = vunpack.c.l.b16 %v674
    %v6612 = vunpack.c.h.b16 %v674
    %v6613 = vunpack.c.l.b16 %v675
    %v6614 = vunpack.c.h.b16 %v675
    %v6615 = vunpack.c.l.b16 %v676
    %v6616 = vunpack.c.h.b16 %v676
    %v6617 = vunpack.c.l.b16 %v677
    %v6618 = vunpack.c.h.b16 %v677
    %v6619 = vunpack.c.l.b16 %v678
    %v6620 = vunpack.c.h.b16 %v678
    %v6621 = vunpack.c.l.b16 %v679
    %v6622 = vunpack.c.h.b16 %v679
    %v6623 = vunpack.c.l.b16 %v680
    %v6624 = vunpack.c.h.b16 %v680
    %v6625 = vunpack.c.l.b16 %v681
    %v6626 = vunpack.c.h.b16 %v681
    %v6627 = vunpack.c.l.b16 %v682
    %v6628 = vunpack.c.h.b16 %v682
    %v6629 = vunpack.c.l.b16 %v683
    %v6630 = vunpack.c.h.b16 %v683
    %v6631 = vunpack.c.l.b16 %v684
    %v6632 = vunpack.c.h.b16 %v684
    %v6633 = vunpack.c.l.b16 %v685
    %v6634 = vunpack.c.h.b16 %v685
    %v6635 = vunpack.c.l.b16 %v686
    %v6636 = vunpack.c.h.b16 %v686
    %v6637 = vunpack.c.l.b16 %v687
    %v6638 = vunpack.c.h.b16 %v687
    %v6639 = vunpack.c.l.b16 %v688
    %v6640 = vunpack.c.h.b16 %v688
    %v6641 = vunpack.c.l.b16 %v689
    %v6642 = vunpack.c.h.b16 %v689
    %v6643 = vunpack.c.l.b16 %v690
    %v6644 = vunpack.c.h.b16 %v690
    %v6645 = vunpack.c.l.b16 %v691
    %v6646 = vunpack.c.h.b16 %v691
    %v6647 = vunpack.c.l.b16 %v692
    %v6648 = vunpack.c.h.b16 %v692
    %v6649 = vunpack.c.l.b16 %v693
    %v6650 = vunpack.c.h.b16 %v693
    %v6651 = vunpack.c.l.b16 %v694
    %v6652 = vunpack.c.h.b16 %v694
    %v6653 = vunpack.c.l.b16 %v695
    %v6654 = vunpack.c.h.b16 %v695
    %v6655 = vunpack.c.l.b16 %v696
    %v6656 = vunpack.c.h.b16 %v696
    %v6657 = vunpack.c.l.b16 %v697
    %v6658 = vunpack.c.h.b16 %v697
    %v6659 = vunpack.c.l.b16 %v698
    %v6660 = vunpack.c.h.b16 %v698
    %v6661 = vunpack.c.l.b16 %v699
    %v6662 = vunpack.c.h.b16 %v699
    %v6663 = vunpack.c.l.b16 %v700
    %v6664 = vunpack.c.h.b16 %v700
    %v6665 = vunpack.c.l.b16 %v701
    %v6666 = vunpack.c.h.b16 %v701
    %v6667 = vunpack.c.l.b16 %v702
    %v6668 = vunpack.c.h.b16 %v702
    %v6669 = vunpack.c.l.b16 %v703
    %v6670 = vunpack.c.h.b16 %v703
    %v6671 = vunpack.c.l.b16 %v704
    %v6672 = vunpack.c.h.b16 %v704
    %v6673 = vunpack.c.l.b16 %v705
    %v6674 = vunpack.c.h.b16 %v705
    %v6675 = vunpack.c.l.b16 %v706
    %v6676 = vunpack.c.h.b16 %v706
    %v6677 = vunpack.c.l.b16 %v707
    %v6678 = vunpack.c.h.b16 %v707
    %v6679 = vunpack.c.l.b16 %v708
    %v6680 = vunpack.c.h.b16 %v708
    %v6681 = vunpack.c.l.b16 %v709
    %v6682 = vunpack.c.h.b16 %v709
    %v6683 = vunpack.c.l.b16 %v710
    %v6684 = vunpack.c.h.b16 %v710
    %v6685 = vunpack.c.l.b16 %v711
    %v6686 = vunpack.c.h.b16 %v711
    %v6687 = vunpack.c.l.b16 %v712
    %v6688 = vunpack.c.h.b16 %v712
    %v6689 = vunpack.c.l.b16 %v713
    %v6690 = vunpack.c.h.b16 %v713
    %v6691 = vunpack.c.l.b16 %v714
    %v6692 = vunpack.c.h.b16 %v714
    %v6693 = vunpack.c.l.b16 %v715
    %v6694 = vunpack.c.h.b16 %v715
    %v6695 = vunpack.c.l.b16 %v716
    %v6696 = vunpack.c.h.b16 %v716
    %v6697 = vunpack.c.l.b16 %v717
    %v6698 = vunpack.c.h.b16 %v717
    %v6699 = vunpack.c.l.b16 %v718
    %v6700 = vunpack.c.h.b16 %v718
    %v6701 = vunpack.c.l.b16 %v719
    %v6702 = vunpack.c.h.b16 %v719
    %v6703 = vunpack.c.l.b16 %v720
    %v6704 = vunpack.c.h.b16 %v720
    %v6705 = vunpack.c.l.b16 %v721
    %v6706 = vunpack.c.h.b16 %v721
    %v6707 = vunpack.c.l.b16 %v722
    %v6708 = vunpack.c.h.b16 %v722
    %v6709 = vunpack.c.l.b16 %v723
    %v6710 = vunpack.c.h.b16 %v723
    %v6711 = vunpack.c.l.b16 %v724
    %v6712 = vunpack.c.h.b16 %v724
    %v6713 = vunpack.c.l.b16 %v725
    %v6714 = vunpack.c.h.b16 %v725
    %v6715 = vunpack.c.l.b16 %v726
    %v6716 = vunpack.c.h.b16 %v726
    %v6717 = vunpack.c.l.b16 %v727
    %v6718 = vunpack.c.h.b16 %v727
    %v6719 = vunpack.c.l.b16 %v728
    %v6720 = vunpack.c.h.b16 %v728
    %v6721 = vunpack.c.l.b16 %v729
    %v6722 = vunpack.c.h.b16 %v729
    %v6723 = vunpack.c.l.b16 %v730
    %v6724 = vunpack.c.h.b16 %v730
    %v6725 = vunpack.c.l.b16 %v731
    %v6726 = vunpack.c.h.b16 %v731
    %v6727 = vunpack.c.l.b16 %v732
    %v6728 = vunpack.c.h.b16 %v732
    %v6729 = vunpack.c.l.b16 %v733
    %v6730 = vunpack.c.h.b16 %v733
    %v6731 = vunpack.c.l.b16 %v734
    %v6732 = vunpack.c.h.b16 %v734
    %v6733 = vunpack.c.l.b16 %v735
    %v6734 = vunpack.c.h.b16 %v735
    %v6735 = vunpack.c.l.b16 %v736
    %v6736 = vunpack.c.h.b16 %v736
    %v6737 = vunpack.c.l.b16 %v737
    %v6738 = vunpack.c.h.b16 %v737
    %v6739 = vunpack.c.l.b16 %v738
    %v6740 = vunpack.c.h.b16 %v738
    %v6741 = vunpack.c.l.b16 %v739
    %v6742 = vunpack.c.h.b16 %v739
    %v6743 = vunpack.c.l.b16 %v740
    %v6744 = vunpack.c.h.b16 %v740
    %v6745 = vunpack.c.l.b16 %v741
    %v6746 = vunpack.c.h.b16 %v741
    %v6747 = vunpack.c.l.b16 %v742
    %v6748 = vunpack.c.h.b16 %v742
    %v6749 = vunpack.c.l.b16 %v743
    %v6750 = vunpack.c.h.b16 %v743
    %v6751 = vunpack.c.l.b16 %v744
    %v6752 = vunpack.c.h.b16 %v744
    %v6753 = vunpack.c.l.b16 %v745
    %v6754 = vunpack.c.h.b16 %v745
    %v6755 = vunpack.c.l.b16 %v746
    %v6756 = vunpack.c.h.b16 %v746
    %v6757 = vunpack.c.l.b16 %v747
    %v6758 = vunpack.c.h.b16 %v747
    %v6759 = vunpack.c.l.b16 %v748
    %v6760 = vunpack.c.h.b16 %v748
    %v6761 = vunpack.c.l.b16 %v749
    %v6762 = vunpack.c.h.b16 %v749
    %v6763 = vunpack.c.l.b16 %v750
    %v6764 = vunpack.c.h.b16 %v750
    %v6765 = vunpack.c.l.b16 %v751
    %v6766 = vunpack.c.h.b16 %v751
    %v6767 = vunpack.c.l.b16 %v752
    %v6768 = vunpack.c.h.b16 %v752
    %v6769 = vunpack.c.l.b16 %v753
    %v6770 = vunpack.c.h.b16 %v753
    %v6771 = vunpack.c.l.b16 %v754
    %v6772 = vunpack.c.h.b16 %v754
    %v6773 = vunpack.c.l.b16 %v755
    %v6774 = vunpack.c.h.b16 %v755
    %v6775 = vunpack.c.l.b16 %v756
    %v6776 = vunpack.c.h.b16 %v756
    %v6777 = vunpack.c.l.b16 %v757
    %v6778 = vunpack.c.h.b16 %v757
    %v6779 = vunpack.c.l.b16 %v758
    %v6780 = vunpack.c.h.b16 %v758
    %v6781 = vunpack.c.l.b16 %v759
    %v6782 = vunpack.c.h.b16 %v759
    %v6783 = vunpack.c.l.b16 %v760
    %v6784 = vunpack.c.h.b16 %v760
    %v6785 = vunpack.c.l.b16 %v761
    %v6786 = vunpack.c.h.b16 %v761
    %v6787 = vunpack.c.l.b16 %v762
    %v6788 = vunpack.c.h.b16 %v762
    %v6789 = vunpack.c.l.b16 %v763
    %v6790 = vunpack.c.h.b16 %v763
    %v6791 = vunpack.c.l.b16 %v764
    %v6792 = vunpack.c.h.b16 %v764
    %v6793 = vunpack.c.l.b16 %v765
    %v6794 = vunpack.c.h.b16 %v765
    %v6795 = vunpack.c.l.b16 %v766
    %v6796 = vunpack.c.h.b16 %v766
    %v6797 = vunpack.c.l.b16 %v767
    %v6798 = vunpack.c.h.b16 %v767
    %v6799 = vunpack.c.l.b16 %v768
    %v6800 = vunpack.c.h.b16 %v768
    %v6801 = vunpack.c.l.b16 %v769
    %v6802 = vunpack.c.h.b16 %v769
    %v6803 = vunpack.c.l.b16 %v770
    %v6804 = vunpack.c.h.b16 %v770
    %v6805 = vunpack.c.l.b16 %v771
    %v6806 = vunpack.c.h.b16 %v771
    %v6807 = vunpack.c.l.b16 %v772
    %v6808 = vunpack.c.h.b16 %v772
    %v6809 = vunpack.c.l.b16 %v773
    %v6810 = vunpack.c.h.b16 %v773
    %v6811 = vunpack.c.l.b16 %v774
    %v6812 = vunpack.c.h.b16 %v774
    %v6813 = vunpack.c.l.b16 %v775
    %v6814 = vunpack.c.h.b16 %v775
    %v6815 = vunpack.c.l.b16 %v776
    %v6816 = vunpack.c.h.b16 %v776
    %v6817 = vunpack.c.l.b16 %v777
    %v6818 = vunpack.c.h.b16 %v777
    %v6819 = vunpack.c.l.b16 %v778
    %v6820 = vunpack.c.h.b16 %v778
    %v6821 = vunpack.c.l.b16 %v779
    %v6822 = vunpack.c.h.b16 %v779
    %v6823 = vunpack.c.l.b16 %v780
    %v6824 = vunpack.c.h.b16 %v780
    %v6825 = vunpack.c.l.b16 %v781
    %v6826 = vunpack.c.h.b16 %v781
    %v6827 = vunpack.c.l.b16 %v782
    %v6828 = vunpack.c.h.b16 %v782
    %v6829 = vunpack.c.l.b16 %v783
    %v6830 = vunpack.c.h.b16 %v783
    %v6831 = vunpack.c.l.b16 %v784
    %v6832 = vunpack.c.h.b16 %v784
    %v6833 = vunpack.c.l.b16 %v785
    %v6834 = vunpack.c.h.b16 %v785
    %v6835 = vunpack.c.l.b16 %v786
    %v6836 = vunpack.c.h.b16 %v786
    %v6837 = vunpack.c.l.b16 %v787
    %v6838 = vunpack.c.h.b16 %v787
    %v6839 = vunpack.c.l.b16 %v788
    %v6840 = vunpack.c.h.b16 %v788
    %v6841 = vunpack.c.l.b16 %v789
    %v6842 = vunpack.c.h.b16 %v789
    %v6843 = vunpack.c.l.b16 %v790
    %v6844 = vunpack.c.h.b16 %v790
    %v6845 = vunpack.c.l.b16 %v791
    %v6846 = vunpack.c.h.b16 %v791
    %v6847 = vunpack.c.l.b16 %v792
    %v6848 = vunpack.c.h.b16 %v792
    %v6849 = vunpack.c.l.b16 %v793
    %v6850 = vunpack.c.h.b16 %v793
    %v6851 = vunpack.c.l.b16 %v794
    %v6852 = vunpack.c.h.b16 %v794
    %v6853 = vunpack.c.l.b16 %v795
    %v6854 = vunpack.c.h.b16 %v795
    %v6855 = vunpack.c.l.b16 %v796
    %v6856 = vunpack.c.h.b16 %v796
    %v6857 = vunpack.c.l.b16 %v797
    %v6858 = vunpack.c.h.b16 %v797
    %v6859 = vunpack.c.l.b16 %v798
    %v6860 = vunpack.c.h.b16 %v798
    %v6861 = vunpack.c.l.b16 %v799
    %v6862 = vunpack.c.h.b16 %v799
    %v6863 = vunpack.c.l.b16 %v800
    %v6864 = vunpack.c.h.b16 %v800
    %v6865 = vunpack.c.l.b16 %v801
    %v6866 = vunpack.c.h.b16 %v801
    %v6867 = vunpack.c.l.b16 %v802
    %v6868 = vunpack.c.h.b16 %v802
    %v6869 = vunpack.c.l.b16 %v803
    %v6870 = vunpack.c.h.b16 %v803
    %v6871 = vunpack.c.l.b16 %v804
    %v6872 = vunpack.c.h.b16 %v804
    %v6873 = vunpack.c.l.b16 %v805
    %v6874 = vunpack.c.h.b16 %v805
    %v6875 = vunpack.c.l.b16 %v806
    %v6876 = vunpack.c.h.b16 %v806
    %v6877 = vunpack.c.l.b16 %v807
    %v6878 = vunpack.c.h.b16 %v807
    %v6879 = vunpack.c.l.b16 %v808
    %v6880 = vunpack.c.h.b16 %v808
    %v6881 = vunpack.c.l.b16 %v809
    %v6882 = vunpack.c.h.b16 %v809
    %v6883 = vunpack.c.l.b16 %v810
    %v6884 = vunpack.c.h.b16 %v810
    %v6885 = vunpack.c.l.b16 %v811
    %v6886 = vunpack.c.h.b16 %v811
    %v6887 = vunpack.c.l.b16 %v812
    %v6888 = vunpack.c.h.b16 %v812
    %v6889 = vunpack.c.l.b16 %v813
    %v6890 = vunpack.c.h.b16 %v813
    %v6891 = vunpack.c.l.b16 %v814
    %v6892 = vunpack.c.h.b16 %v814
    %v6893 = vunpack.c.l.b16 %v815
    %v6894 = vunpack.c.h.b16 %v815
    %v6895 = vunpack.c.l.b16 %v816
    %v6896 = vunpack.c.h.b16 %v816
    %v6897 = vunpack.c.l.b16 %v817
    %v6898 = vunpack.c.h.b16 %v817
    %v6899 = vunpack.c.l.b16 %v818
    %v6900 = vunpack.c.h.b16 %v818
    %v6901 = vunpack.c.l.b16 %v819
    %v6902 = vunpack.c.h.b16 %v819
    %v6903 = vunpack.c.l.b16 %v820
    %v6904 = vunpack.c.h.b16 %v820
    %v6905 = vunpack.c.l.b16 %v821
    %v6906 = vunpack.c.h.b16 %v821
    %v6907 = vunpack.c.l.b16 %v822
    %v6908 = vunpack.c.h.b16 %v822
    %v6909 = vunpack.c.l.b16 %v823
    %v6910 = vunpack.c.h.b16 %v823
    %v6911 = vunpack.c.l.b16 %v824
    %v6912 = vunpack.c.h.b16 %v824
    %v6913 = vunpack.c.l.b16 %v825
    %v6914 = vunpack.c.h.b16 %v825
    %v6915 = vunpack.c.l.b16 %v826
    %v6916 = vunpack.c.h.b16 %v826
    %v6917 = vunpack.c.l.b16 %v827
    %v6918 = vunpack.c.h.b16 %v827
    %v6919 = vunpack.c.l.b16 %v828
    %v6920 = vunpack.c.h.b16 %v828
    %v6921 = vunpack.c.l.b16 %v829
    %v6922 = vunpack.c.h.b16 %v829
    %v6923 = vunpack.c.l.b16 %v830
    %v6924 = vunpack.c.h.b16 %v830
    %v6925 = vunpack.c.l.b16 %v831
    %v6926 = vunpack.c.h.b16 %v831
    %v6927 = vunpack.c.l.b16 %v832
    %v6928 = vunpack.c.h.b16 %v832
    %v6929 = vunpack.c.l.b16 %v833
    %v6930 = vunpack.c.h.b16 %v833
    %v6931 = vunpack.c.l.b16 %v834
    %v6932 = vunpack.c.h.b16 %v834
    %v6933 = vunpack.c.l.b16 %v835
    %v6934 = vunpack.c.h.b16 %v835
    %v6935 = vunpack.c.l.b16 %v836
    %v6936 = vunpack.c.h.b16 %v836
    %v6937 = vunpack.c.l.b16 %v837
    %v6938 = vunpack.c.h.b16 %v837
    %v6939 = vunpack.c.l.b16 %v838
    %v6940 = vunpack.c.h.b16 %v838
    %v6941 = vunpack.c.l.b16 %v839
    %v6942 = vunpack.c.h.b16 %v839
    %v6943 = vunpack.c.l.b16 %v840
    %v6944 = vunpack.c.h.b16 %v840
    %v6945 = vunpack.c.l.b16 %v841
    %v6946 = vunpack.c.h.b16 %v841
    %v6947 = vunpack.c.l.b16 %v842
    %v6948 = vunpack.c.h.b16 %v842
    %v6949 = vunpack.c.l.b16 %v843
    %v6950 = vunpack.c.h.b16 %v843
    %v6951 = vunpack.c.l.b16 %v844
    %v6952 = vunpack.c.h.b16 %v844
    %v6953 = vunpack.c.l.b16 %v845
    %v6954 = vunpack.c.h.b16 %v845
    %v6955 = vunpack.c.l.b16 %v846
    %v6956 = vunpack.c.h.b16 %v846
    %v6957 = vunpack.c.l.b16 %v847
    %v6958 = vunpack.c.h.b16 %v847
    %v6959 = vunpack.c.l.b16 %v848
    %v6960 = vunpack.c.h.b16 %v848
    %v6961 = vunpack.c.l.b16 %v849
    %v6962 = vunpack.c.h.b16 %v849
    %v6963 = vunpack.c.l.b16 %v850
    %v6964 = vunpack.c.h.b16 %v850
    %v6965 = vunpack.c.l.b16 %v851
    %v6966 = vunpack.c.h.b16 %v851
    %v6967 = vunpack.c.l.b16 %v852
    %v6968 = vunpack.c.h.b16 %v852
    %v6969 = vunpack.c.l.b16 %v853
    %v6970 = vunpack.c.h.b16 %v853
    %v6971 = vunpack.c.l.b16 %v854
    %v6972 = vunpack.c.h.b16 %v854
    %v6973 = vunpack.c.l.b16 %v855
    %v6974 = vunpack.c.h.b16 %v855
    %v6975 = vunpack.c.l.b16 %v856
    %v6976 = vunpack.c.h.b16 %v856
    %v6977 = vunpack.c.l.b16 %v857
    %v6978 = vunpack.c.h.b16 %v857
    %v6979 = vunpack.c.l.b16 %v858
    %v6980 = vunpack.c.h.b16 %v858
    %v6981 = vunpack.c.l.b16 %v859
    %v6982 = vunpack.c.h.b16 %v859
    %v6983 = vunpack.c.l.b16 %v860
    %v6984 = vunpack.c.h.b16 %v860
    %v6985 = vunpack.c.l.b16 %v861
    %v6986 = vunpack.c.h.b16 %v861
    %v6987 = vunpack.c.l.b16 %v862
    %v6988 = vunpack.c.h.b16 %v862
    %v6989 = vunpack.c.l.b16 %v863
    %v6990 = vunpack.c.h.b16 %v863
    %v6991 = vunpack.c.l.b16 %v864
    %v6992 = vunpack.c.h.b16 %v864
    %v6993 = vunpack.c.l.b16 %v865
    %v6994 = vunpack.c.h.b16 %v865
    %v6995 = vunpack.c.l.b16 %v866
    %v6996 = vunpack.c.h.b16 %v866
    %v6997 = vunpack.c.l.b16 %v867
    %v6998 = vunpack.c.h.b16 %v867
    %v6999 = vunpack.c.l.b16 %v868
    %v7000 = vunpack.c.h.b16 %v868
    %v7001 = vunpack.c.l.b16 %v869
    %v7002 = vunpack.c.h.b16 %v869
    %v7003 = vunpack.c.l.b16 %v870
    %v7004 = vunpack.c.h.b16 %v870
    %v7005 = vunpack.c.l.b16 %v871
    %v7006 = vunpack.c.h.b16 %v871
    %v7007 = vunpack.c.l.b16 %v872
    %v7008 = vunpack.c.h.b16 %v872
    %v7009 = vunpack.c.l.b16 %v873
    %v7010 = vunpack.c.h.b16 %v873
    %v7011 = vunpack.c.l.b16 %v874
    %v7012 = vunpack.c.h.b16 %v874
    %v7013 = vunpack.c.l.b16 %v875
    %v7014 = vunpack.c.h.b16 %v875
    %v7015 = vunpack.c.l.b16 %v876
    %v7016 = vunpack.c.h.b16 %v876
    %v7017 = vunpack.c.l.b16 %v877
    %v7018 = vunpack.c.h.b16 %v877
    %v7019 = vunpack.c.l.b16 %v878
    %v7020 = vunpack.c.h.b16 %v878
    %v7021 = vunpack.c.l.b16 %v879
    %v7022 = vunpack.c.h.b16 %v879
    %v7023 = vunpack.c.l.b16 %v880
    %v7024 = vunpack.c.h.b16 %v880
    %v7025 = vunpack.c.l.b16 %v881
    %v7026 = vunpack.c.h.b16 %v881
    %v7027 = vunpack.c.l.b16 %v882
    %v7028 = vunpack.c.h.b16 %v882
    %v7029 = vunpack.c.l.b16 %v883
    %v7030 = vunpack.c.h.b16 %v883
    %v7031 = vunpack.c.l.b16 %v884
    %v7032 = vunpack.c.h.b16 %v884
    %v7033 = vunpack.c.l.b16 %v885
    %v7034 = vunpack.c.h.b16 %v885
    %v7035 = vunpack.c.l.b16 %v886
    %v7036 = vunpack.c.h.b16 %v886
    %v7037 = vunpack.c.l.b16 %v887
    %v7038 = vunpack.c.h.b16 %v887
    %v7039 = vunpack.c.l.b16 %v888
    %v7040 = vunpack.c.h.b16 %v888
    %v7041 = vunpack.c.l.b16 %v889
    %v7042 = vunpack.c.h.b16 %v889
    %v7043 = vunpack.c.l.b16 %v890
    %v7044 = vunpack.c.h.b16 %v890
    %v7045 = vunpack.c.l.b16 %v891
    %v7046 = vunpack.c.h.b16 %v891
    %v7047 = vunpack.c.l.b16 %v892
    %v7048 = vunpack.c.h.b16 %v892
    %v7049 = vunpack.c.l.b16 %v893
    %v7050 = vunpack.c.h.b16 %v893
    %v7051 = vunpack.c.l.b16 %v894
    %v7052 = vunpack.c.h.b16 %v894
    %v7053 = vunpack.c.l.b16 %v895
    %v7054 = vunpack.c.h.b16 %v895
    %v7055 = vunpack.c.l.b16 %v896
    %v7056 = vunpack.c.h.b16 %v896
    %v7057 = vunpack.c.l.b16 %v897
    %v7058 = vunpack.c.h.b16 %v897
    %v7059 = vunpack.c.l.b16 %v898
    %v7060 = vunpack.c.h.b16 %v898
    %v7061 = vunpack.c.l.b16 %v899
    %v7062 = vunpack.c.h.b16 %v899
    %v7063 = vunpack.c.l.b16 %v900
    %v7064 = vunpack.c.h.b16 %v900
    %v7065 = vunpack.c.l.b16 %v901
    %v7066 = vunpack.c.h.b16 %v901
    %v7067 = vunpack.c.l.b16 %v902
    %v7068 = vunpack.c.h.b16 %v902
    %v7069 = vunpack.c.l.b16 %v903
    %v7070 = vunpack.c.h.b16 %v903
    %v7071 = vunpack.c.l.b16 %v904
    %v7072 = vunpack.c.h.b16 %v904
    %v7073 = vunpack.c.l.b16 %v905
    %v7074 = vunpack.c.h.b16 %v905
    %v7075 = vunpack.c.l.b16 %v906
    %v7076 = vunpack.c.h.b16 %v906
    %v7077 = vunpack.c.l.b16 %v907
    %v7078 = vunpack.c.h.b16 %v907
    %v7079 = vunpack.c.l.b16 %v908
    %v7080 = vunpack.c.h.b16 %v908
    %v7081 = vunpack.c.l.b16 %v909
    %v7082 = vunpack.c.h.b16 %v909
    %v7083 = vunpack.c.l.b16 %v910
    %v7084 = vunpack.c.h.b16 %v910
    %v7085 = vunpack.c.l.b16 %v911
    %v7086 = vunpack.c.h.b16 %v911
    %v7087 = vunpack.c.l.b16 %v912
    %v7088 = vunpack.c.h.b16 %v912
    %v7089 = vunpack.c.l.b16 %v913
    %v7090 = vunpack.c.h.b16 %v913
    %v7091 = vunpack.c.l.b16 %v914
    %v7092 = vunpack.c.h.b16 %v914
    %v7093 = vunpack.c.l.b16 %v915
    %v7094 = vunpack.c.h.b16 %v915
    %v7095 = vunpack.c.l.b16 %v916
    %v7096 = vunpack.c.h.b16 %v916
    %v7097 = vunpack.c.l.b16 %v917
    %v7098 = vunpack.c.h.b16 %v917
    %v7099 = vunpack.c.l.b16 %v918
    %v7100 = vunpack.c.h.b16 %v918
    %v7101 = vunpack.c.l.b16 %v919
    %v7102 = vunpack.c.h.b16 %v919
    %v7103 = vunpack.c.l.b16 %v920
    %v7104 = vunpack.c.h.b16 %v920
    %v7105 = vunpack.c.l.b16 %v921
    %v7106 = vunpack.c.h.b16 %v921
    %v7107 = vunpack.c.l.b16 %v922
    %v7108 = vunpack.c.h.b16 %v922
    %v7109 = vunpack.c.l.b16 %v923
    %v7110 = vunpack.c.h.b16 %v923
    %v7111 = vunpack.c.l.b16 %v924
    %v7112 = vunpack.c.h.b16 %v924
    %v7113 = vunpack.c.l.b16 %v925
    %v7114 = vunpack.c.h.b16 %v925
    %v7115 = vunpack.c.l.b16 %v926
    %v7116 = vunpack.c.h.b16 %v926
    %v7117 = vunpack.c.l.b16 %v927
    %v7118 = vunpack.c.h.b16 %v927
    %v7119 = vunpack.c.l.b16 %v928
    %v7120 = vunpack.c.h.b16 %v928
    %v7121 = vunpack.c.l.b16 %v929
    %v7122 = vunpack.c.h.b16 %v929
    %v7123 = vunpack.c.l.b16 %v930
    %v7124 = vunpack.c.h.b16 %v930
    %v7125 = vunpack.c.l.b16 %v931
    %v7126 = vunpack.c.h.b16 %v931
    %v7127 = vunpack.c.l.b16 %v932
    %v7128 = vunpack.c.h.b16 %v932
    %v7129 = vunpack.c.l.b16 %v933
    %v7130 = vunpack.c.h.b16 %v933
    %v7131 = vunpack.c.l.b16 %v934
    %v7132 = vunpack.c.h.b16 %v934
    %v7133 = vunpack.c.l.b16 %v935
    %v7134 = vunpack.c.h.b16 %v935
    %v7135 = vunpack.c.l.b16 %v936
    %v7136 = vunpack.c.h.b16 %v936
    %v7137 = vunpack.c.l.b16 %v937
    %v7138 = vunpack.c.h.b16 %v937
    %v7139 = vunpack.c.l.b16 %v938
    %v7140 = vunpack.c.h.b16 %v938
    %v7141 = vunpack.c.l.b16 %v939
    %v7142 = vunpack.c.h.b16 %v939
    %v7143 = vunpack.c.l.b16 %v940
    %v7144 = vunpack.c.h.b16 %v940
    %v7145 = vunpack.c.l.b16 %v941
    %v7146 = vunpack.c.h.b16 %v941
    %v7147 = vunpack.c.l.b16 %v942
    %v7148 = vunpack.c.h.b16 %v942
    %v7149 = vunpack.c.l.b16 %v943
    %v7150 = vunpack.c.h.b16 %v943
    %v7151 = vunpack.c.l.b16 %v944
    %v7152 = vunpack.c.h.b16 %v944
    %v7153 = vunpack.c.l.b16 %v945
    %v7154 = vunpack.c.h.b16 %v945
    %v7155 = vunpack.c.l.b16 %v946
    %v7156 = vunpack.c.h.b16 %v946
    %v7157 = vunpack.c.l.b16 %v947
    %v7158 = vunpack.c.h.b16 %v947
    %v7159 = vunpack.c.l.b16 %v948
    %v7160 = vunpack.c.h.b16 %v948
    %v7161 = vunpack.c.l.b16 %v949
    %v7162 = vunpack.c.h.b16 %v949
    %v7163 = vunpack.c.l.b16 %v950
    %v7164 = vunpack.c.h.b16 %v950
    %v7165 = vunpack.c.l.b16 %v951
    %v7166 = vunpack.c.h.b16 %v951
    %v7167 = vunpack.c.l.b16 %v952
    %v7168 = vunpack.c.h.b16 %v952
    %v7169 = vunpack.c.l.b16 %v953
    %v7170 = vunpack.c.h.b16 %v953
    %v7171 = vunpack.c.l.b16 %v954
    %v7172 = vunpack.c.h.b16 %v954
    %v7173 = vunpack.c.l.b16 %v955
    %v7174 = vunpack.c.h.b16 %v955
    %v7175 = vunpack.c.l.b16 %v956
    %v7176 = vunpack.c.h.b16 %v956
    %v7177 = vunpack.c.l.b16 %v957
    %v7178 = vunpack.c.h.b16 %v957
    %v7179 = vunpack.c.l.b16 %v958
    %v7180 = vunpack.c.h.b16 %v958
    %v7181 = vunpack.c.l.b16 %v959
    %v7182 = vunpack.c.h.b16 %v959
    %v7183 = vunpack.c.l.b16 %v960
    %v7184 = vunpack.c.h.b16 %v960
    %v7185 = vunpack.c.l.b16 %v961
    %v7186 = vunpack.c.h.b16 %v961
    %v7187 = vunpack.c.l.b16 %v962
    %v7188 = vunpack.c.h.b16 %v962
    %v7189 = vunpack.c.l.b16 %v963
    %v7190 = vunpack.c.h.b16 %v963
    %v7191 = vunpack.c.l.b16 %v964
    %v7192 = vunpack.c.h.b16 %v964
    %v7193 = vunpack.c.l.b16 %v965
    %v7194 = vunpack.c.h.b16 %v965
    %v7195 = vunpack.c.l.b16 %v966
    %v7196 = vunpack.c.h.b16 %v966
    %v7197 = vunpack.c.l.b16 %v967
    %v7198 = vunpack.c.h.b16 %v967
    %v7199 = vunpack.c.l.b16 %v968
    %v7200 = vunpack.c.h.b16 %v968
    %v7201 = vunpack.c.l.b16 %v969
    %v7202 = vunpack.c.h.b16 %v969
    %v7203 = vunpack.c.l.b16 %v970
    %v7204 = vunpack.c.h.b16 %v970
    %v7205 = vunpack.c.l.b16 %v971
    %v7206 = vunpack.c.h.b16 %v971
    %v7207 = vunpack.c.l.b16 %v972
    %v7208 = vunpack.c.h.b16 %v972
    %v7209 = vunpack.c.l.b16 %v973
    %v7210 = vunpack.c.h.b16 %v973
    %v7211 = vunpack.c.l.b16 %v974
    %v7212 = vunpack.c.h.b16 %v974
    %v7213 = vunpack.c.l.b16 %v975
    %v7214 = vunpack.c.h.b16 %v975
    %v7215 = vunpack.c.l.b16 %v976
    %v7216 = vunpack.c.h.b16 %v976
    %v7217 = vunpack.c.l.b16 %v977
    %v7218 = vunpack.c.h.b16 %v977
    %v7219 = vunpack.c.l.b16 %v978
    %v7220 = vunpack.c.h.b16 %v978
    %v7221 = vunpack.c.l.b16 %v979
    %v7222 = vunpack.c.h.b16 %v979
    %v7223 = vunpack.c.l.b16 %v980
    %v7224 = vunpack.c.h.b16 %v980
    %v7225 = vunpack.c.l.b16 %v981
    %v7226 = vunpack.c.h.b16 %v981
    %v7227 = vunpack.c.l.b16 %v982
    %v7228 = vunpack.c.h.b16 %v982
    %v7229 = vunpack.c.l.b16 %v983
    %v7230 = vunpack.c.h.b16 %v983
    %v7231 = vunpack.c.l.b16 %v984
    %v7232 = vunpack.c.h.b16 %v984
    %v7233 = vunpack.c.l.b16 %v985
    %v7234 = vunpack.c.h.b16 %v985
    %v7235 = vunpack.c.l.b16 %v986
    %v7236 = vunpack.c.h.b16 %v986
    %v7237 = vunpack.c.l.b16 %v987
    %v7238 = vunpack.c.h.b16 %v987
    %v7239 = vunpack.c.l.b16 %v988
    %v7240 = vunpack.c.h.b16 %v988
    %v7241 = vunpack.c.l.b16 %v989
    %v7242 = vunpack.c.h.b16 %v989
    %v7243 = vunpack.c.l.b16 %v990
    %v7244 = vunpack.c.h.b16 %v990
    %v7245 = vunpack.c.l.b16 %v991
    %v7246 = vunpack.c.h.b16 %v991
    %v7247 = vunpack.c.l.b16 %v992
    %v7248 = vunpack.c.h.b16 %v992
    %v7249 = vunpack.c.l.b16 %v993
    %v7250 = vunpack.c.h.b16 %v993
    %v7251 = vunpack.c.l.b16 %v994
    %v7252 = vunpack.c.h.b16 %v994
    %v7253 = vunpack.c.l.b16 %v995
    %v7254 = vunpack.c.h.b16 %v995
    %v7255 = vunpack.c.l.b16 %v996
    %v7256 = vunpack.c.h.b16 %v996
    %v7257 = vunpack.c.l.b16 %v997
    %v7258 = vunpack.c.h.b16 %v997
    %v7259 = vunpack.c.l.b16 %v998
    %v7260 = vunpack.c.h.b16 %v998
    %v7261 = vunpack.c.l.b16 %v999
    %v7262 = vunpack.c.h.b16 %v999
    %v7263 = vunpack.c.l.b16 %v1000
    %v7264 = vunpack.c.h.b16 %v1000
    %v7265 = vunpack.c.l.b16 %v1001
    %v7266 = vunpack.c.h.b16 %v1001
    %v7267 = vunpack.c.l.b16 %v1002
    %v7268 = vunpack.c.h.b16 %v1002
    %v7269 = vunpack.c.l.b16 %v1003
    %v7270 = vunpack.c.h.b16 %v1003
    %v7271 = vunpack.c.l.b16 %v1004
    %v7272 = vunpack.c.h.b16 %v1004
    %v7273 = vunpack.c.l.b16 %v1005
    %v7274 = vunpack.c.h.b16 %v1005
    %v7275 = vunpack.c.l.b16 %v1006
    %v7276 = vunpack.c.h.b16 %v1006
    %v7277 = vunpack.c.l.b16 %v1007
    %v7278 = vunpack.c.h.b16 %v1007
    %v7279 = vunpack.c.l.b16 %v1008
    %v7280 = vunpack.c.h.b16 %v1008
    %v7281 = vunpack.c.l.b16 %v1009
    %v7282 = vunpack.c.h.b16 %v1009
    %v7283 = vunpack.c.l.b16 %v1010
    %v7284 = vunpack.c.h.b16 %v1010
    %v7285 = vunpack.c.l.b16 %v1011
    %v7286 = vunpack.c.h.b16 %v1011
    %v7287 = vunpack.c.l.b16 %v1012
    %v7288 = vunpack.c.h.b16 %v1012
    %v7289 = vunpack.c.l.b16 %v1013
    %v7290 = vunpack.c.h.b16 %v1013
    %v7291 = vunpack.c.l.b16 %v1014
    %v7292 = vunpack.c.h.b16 %v1014
    %v7293 = vunpack.c.l.b16 %v1015
    %v7294 = vunpack.c.h.b16 %v1015
    %v7295 = vunpack.c.l.b16 %v1016
    %v7296 = vunpack.c.h.b16 %v1016
    %v7297 = vunpack.c.l.b16 %v1017
    %v7298 = vunpack.c.h.b16 %v1017
    %v7299 = vunpack.c.l.b16 %v1018
    %v7300 = vunpack.c.h.b16 %v1018
    %v7301 = vunpack.c.l.b16 %v1019
    %v7302 = vunpack.c.h.b16 %v1019
    %v7303 = vunpack.c.l.b16 %v1020
    %v7304 = vunpack.c.h.b16 %v1020
    %v7305 = vunpack.c.l.b16 %v1021
    %v7306 = vunpack.c.h.b16 %v1021
    %v7307 = vunpack.c.l.b16 %v1022
    %v7308 = vunpack.c.h.b16 %v1022
    %v7309 = vunpack.c.l.b16 %v1023
    %v7310 = vunpack.c.h.b16 %v1023
    %v7311 = vunpack.c.l.b16 %v1024
    %v7312 = vunpack.c.h.b16 %v1024
    %v7313 = vunpack.c.l.b16 %v1025
    %v7314 = vunpack.c.h.b16 %v1025
    %v7315 = vunpack.c.l.b16 %v1026
    %v7316 = vunpack.c.h.b16 %v1026
    %v7317 = vunpack.c.l.b16 %v1027
    %v7318 = vunpack.c.h.b16 %v1027
    %v7319 = vunpack.c.l.b16 %v1028
    %v7320 = vunpack.c.h.b16 %v1028
    %v7321 = vunpack.c.l.b16 %v1029
    %v7322 = vunpack.c.h.b16 %v1029
    %v7323 = vunpack.c.l.b16 %v1030
    %v7324 = vunpack.c.h.b16 %v1030
    %v7325 = vunpack.c.l.b16 %v1031
    %v7326 = vunpack.c.h.b16 %v1031
    %v7327 = vunpack.c.l.b16 %v1032
    %v7328 = vunpack.c.h.b16 %v1032
    %v7329 = vunpack.c.l.b16 %v1033
    %v7330 = vunpack.c.h.b16 %v1033
    %v7331 = vunpack.c.l.b16 %v1034
    %v7332 = vunpack.c.h.b16 %v1034
    %v7333 = vunpack.c.l.b16 %v1035
    %v7334 = vunpack.c.h.b16 %v1035
    %v7335 = vunpack.c.l.b16 %v1036
    %v7336 = vunpack.c.h.b16 %v1036
    %v7337 = vunpack.c.l.b16 %v1037
    %v7338 = vunpack.c.h.b16 %v1037
    %v7339 = vunpack.c.l.b16 %v1038
    %v7340 = vunpack.c.h.b16 %v1038
    %v7341 = vunpack.c.l.b16 %v1039
    %v7342 = vunpack.c.h.b16 %v1039
    %v7343 = vunpack.c.l.b16 %v1040
    %v7344 = vunpack.c.h.b16 %v1040
    %v7345 = vunpack.c.l.b16 %v1041
    %v7346 = vunpack.c.h.b16 %v1041
    %v7347 = vunpack.c.l.b16 %v1042
    %v7348 = vunpack.c.h.b16 %v1042
    %v7349 = vunpack.c.l.b16 %v1043
    %v7350 = vunpack.c.h.b16 %v1043
    %v7351 = vunpack.c.l.b16 %v1044
    %v7352 = vunpack.c.h.b16 %v1044
    %v7353 = vunpack.c.l.b16 %v1045
    %v7354 = vunpack.c.h.b16 %v1045
    %v7355 = vunpack.c.l.b16 %v1046
    %v7356 = vunpack.c.h.b16 %v1046
    %v7357 = vunpack.c.l.b16 %v1047
    %v7358 = vunpack.c.h.b16 %v1047
    %v7359 = vunpack.c.l.b16 %v1048
    %v7360 = vunpack.c.h.b16 %v1048
    %v7361 = vunpack.c.l.b16 %v1049
    %v7362 = vunpack.c.h.b16 %v1049
    %v7363 = vunpack.c.l.b16 %v1050
    %v7364 = vunpack.c.h.b16 %v1050
    %v7365 = vunpack.c.l.b16 %v1051
    %v7366 = vunpack.c.h.b16 %v1051
    %v7367 = vunpack.c.l.b16 %v1052
    %v7368 = vunpack.c.h.b16 %v1052
    %v7369 = vunpack.c.l.b16 %v1053
    %v7370 = vunpack.c.h.b16 %v1053
    %v7371 = vunpack.c.l.b16 %v1054
    %v7372 = vunpack.c.h.b16 %v1054
    %v7373 = vunpack.c.l.b16 %v1055
    %v7374 = vunpack.c.h.b16 %v1055
    %v7375 = vunpack.c.l.b16 %v1056
    %v7376 = vunpack.c.h.b16 %v1056
    %v7377 = vunpack.c.l.b16 %v1057
    %v7378 = vunpack.c.h.b16 %v1057
    %v7379 = vunpack.c.l.b16 %v1058
    %v7380 = vunpack.c.h.b16 %v1058
    %v7381 = vunpack.c.l.b16 %v1059
    %v7382 = vunpack.c.h.b16 %v1059
    %v7383 = vunpack.c.l.b16 %v1060
    %v7384 = vunpack.c.h.b16 %v1060
    %v7385 = vunpack.c.l.b16 %v1061
    %v7386 = vunpack.c.h.b16 %v1061
    %v7387 = vunpack.c.l.b16 %v1062
    %v7388 = vunpack.c.h.b16 %v1062
    %v7389 = vunpack.c.l.b16 %v1063
    %v7390 = vunpack.c.h.b16 %v1063
    %v7391 = vunpack.c.l.b16 %v1064
    %v7392 = vunpack.c.h.b16 %v1064
    %v7393 = vunpack.c.l.b16 %v1065
    %v7394 = vunpack.c.h.b16 %v1065
    %v7395 = vunpack.c.l.b16 %v1066
    %v7396 = vunpack.c.h.b16 %v1066
    %v7397 = vunpack.c.l.b16 %v1067
    %v7398 = vunpack.c.h.b16 %v1067
    %v7399 = vunpack.c.l.b16 %v1068
    %v7400 = vunpack.c.h.b16 %v1068
    %v7401 = vunpack.c.l.b16 %v1069
    %v7402 = vunpack.c.h.b16 %v1069
    %v7403 = vunpack.c.l.b16 %v1070
    %v7404 = vunpack.c.h.b16 %v1070
    %v7405 = vunpack.c.l.b16 %v1071
    %v7406 = vunpack.c.h.b16 %v1071
    %v7407 = vunpack.c.l.b16 %v1072
    %v7408 = vunpack.c.h.b16 %v1072
    %v7409 = vunpack.c.l.b16 %v1073
    %v7410 = vunpack.c.h.b16 %v1073
    %v7411 = vunpack.c.l.b16 %v1074
    %v7412 = vunpack.c.h.b16 %v1074
    %v7413 = vunpack.c.l.b16 %v1075
    %v7414 = vunpack.c.h.b16 %v1075
    %v7415 = vunpack.c.l.b16 %v1076
    %v7416 = vunpack.c.h.b16 %v1076
    %v7417 = vunpack.c.l.b16 %v1077
    %v7418 = vunpack.c.h.b16 %v1077
    %v7419 = vunpack.c.l.b16 %v1078
    %v7420 = vunpack.c.h.b16 %v1078
    %v7421 = vunpack.c.l.b16 %v1079
    %v7422 = vunpack.c.h.b16 %v1079
    %v7423 = vunpack.c.l.b16 %v1080
    %v7424 = vunpack.c.h.b16 %v1080
    %v7425 = vunpack.c.l.b16 %v1081
    %v7426 = vunpack.c.h.b16 %v1081
    %v7427 = vunpack.c.l.b16 %v1082
    %v7428 = vunpack.c.h.b16 %v1082
    %v7429 = vunpack.c.l.b16 %v1083
    %v7430 = vunpack.c.h.b16 %v1083
    %v7431 = vunpack.c.l.b16 %v1084
    %v7432 = vunpack.c.h.b16 %v1084
    %v7433 = vunpack.c.l.b16 %v1085
    %v7434 = vunpack.c.h.b16 %v1085
    %v7435 = vunpack.c.l.b16 %v1086
    %v7436 = vunpack.c.h.b16 %v1086
    %v7437 = vunpack.c.l.b16 %v1087
    %v7438 = vunpack.c.h.b16 %v1087
    %v7439 = vunpack.c.l.b16 %v1088
    %v7440 = vunpack.c.h.b16 %v1088
    %v7441 = vunpack.c.l.b16 %v1089
    %v7442 = vunpack.c.h.b16 %v1089
    %v7443 = vunpack.c.l.b16 %v1090
    %v7444 = vunpack.c.h.b16 %v1090
    %v7445 = vunpack.c.l.b16 %v1091
    %v7446 = vunpack.c.h.b16 %v1091
    %v7447 = vunpack.c.l.b16 %v1092
    %v7448 = vunpack.c.h.b16 %v1092
    %v7449 = vunpack.c.l.b16 %v1093
    %v7450 = vunpack.c.h.b16 %v1093
    %v7451 = vunpack.c.l.b16 %v1094
    %v7452 = vunpack.c.h.b16 %v1094
    %v7453 = vunpack.c.l.b16 %v1095
    %v7454 = vunpack.c.h.b16 %v1095
    %v7455 = vunpack.c.l.b16 %v1096
    %v7456 = vunpack.c.h.b16 %v1096
    %v7457 = vunpack.c.l.b16 %v1097
    %v7458 = vunpack.c.h.b16 %v1097
    %v7459 = vunpack.c.l.b16 %v1098
    %v7460 = vunpack.c.h.b16 %v1098
    %v7461 = vunpack.c.l.b16 %v1099
    %v7462 = vunpack.c.h.b16 %v1099
    %v7463 = vunpack.c.l.b16 %v1100
    %v7464 = vunpack.c.h.b16 %v1100
    %v7465 = vunpack.c.l.b16 %v1101
    %v7466 = vunpack.c.h.b16 %v1101
    %v7467 = vunpack.c.l.b16 %v1102
    %v7468 = vunpack.c.h.b16 %v1102
    %v7469 = vunpack.c.l.b16 %v1103
    %v7470 = vunpack.c.h.b16 %v1103
    %v7471 = vunpack.c.l.b16 %v1104
    %v7472 = vunpack.c.h.b16 %v1104
    %v7473 = vunpack.c.l.b16 %v1105
    %v7474 = vunpack.c.h.b16 %v1105
    %v7475 = vunpack.c.l.b16 %v1106
    %v7476 = vunpack.c.h.b16 %v1106
    %v7477 = vunpack.c.l.b16 %v1107
    %v7478 = vunpack.c.h.b16 %v1107
    %v7479 = vunpack.c.l.b16 %v1108
    %v7480 = vunpack.c.h.b16 %v1108
    %v7481 = vunpack.c.l.b16 %v1109
    %v7482 = vunpack.c.h.b16 %v1109
    %v7483 = vunpack.c.l.b16 %v1110
    %v7484 = vunpack.c.h.b16 %v1110
    %v7485 = vunpack.c.l.b16 %v1111
    %v7486 = vunpack.c.h.b16 %v1111
    %v7487 = vunpack.c.l.b16 %v1112
    %v7488 = vunpack.c.h.b16 %v1112
    %v7489 = vunpack.c.l.b16 %v1113
    %v7490 = vunpack.c.h.b16 %v1113
    %v7491 = vunpack.c.l.b16 %v1114
    %v7492 = vunpack.c.h.b16 %v1114
    %v7493 = vunpack.c.l.b16 %v1115
    %v7494 = vunpack.c.h.b16 %v1115
    %v7495 = vunpack.c.l.b16 %v1116
    %v7496 = vunpack.c.h.b16 %v1116
    %v7497 = vunpack.c.l.b16 %v1117
    %v7498 = vunpack.c.h.b16 %v1117
    %v7499 = vunpack.c.l.b16 %v1118
    %v7500 = vunpack.c.h.b16 %v1118
    %v7501 = vunpack.c.l.b16 %v1119
    %v7502 = vunpack.c.h.b16 %v1119
    %v7503 = vunpack.c.l.b16 %v1120
    %v7504 = vunpack.c.h.b16 %v1120
    %v7505 = vunpack.c.l.b16 %v1121
    %v7506 = vunpack.c.h.b16 %v1121
    %v7507 = vunpack.c.l.b16 %v1122
    %v7508 = vunpack.c.h.b16 %v1122
    %v7509 = vunpack.c.l.b16 %v1123
    %v7510 = vunpack.c.h.b16 %v1123
    %v7511 = vunpack.c.l.b16 %v1124
    %v7512 = vunpack.c.h.b16 %v1124
    %v7513 = vunpack.c.l.b16 %v1125
    %v7514 = vunpack.c.h.b16 %v1125
    %v7515 = vunpack.c.l.b16 %v1126
    %v7516 = vunpack.c.h.b16 %v1126
    %v7517 = vunpack.c.l.b16 %v1127
    %v7518 = vunpack.c.h.b16 %v1127
    %v7519 = vunpack.c.l.b16 %v1128
    %v7520 = vunpack.c.h.b16 %v1128
    %v7521 = vunpack.c.l.b16 %v1129
    %v7522 = vunpack.c.h.b16 %v1129
    %v7523 = vunpack.c.l.b16 %v1130
    %v7524 = vunpack.c.h.b16 %v1130
    %v7525 = vunpack.c.l.b16 %v1131
    %v7526 = vunpack.c.h.b16 %v1131
    %v7527 = vunpack.c.l.b16 %v1132
    %v7528 = vunpack.c.h.b16 %v1132
    %v7529 = vunpack.c.l.b16 %v1133
    %v7530 = vunpack.c.h.b16 %v1133
    %v7531 = vunpack.c.l.b16 %v1134
    %v7532 = vunpack.c.h.b16 %v1134
    %v7533 = vunpack.c.l.b16 %v1135
    %v7534 = vunpack.c.h.b16 %v1135
    %v7535 = vunpack.c.l.b16 %v1136
    %v7536 = vunpack.c.h.b16 %v1136
    %v7537 = vunpack.c.l.b16 %v1137
    %v7538 = vunpack.c.h.b16 %v1137
    %v7539 = vunpack.c.l.b16 %v1138
    %v7540 = vunpack.c.h.b16 %v1138
    %v7541 = vunpack.c.l.b16 %v1139
    %v7542 = vunpack.c.h.b16 %v1139
    %v7543 = vunpack.c.l.b16 %v1140
    %v7544 = vunpack.c.h.b16 %v1140
    %v7545 = vunpack.c.l.b16 %v1141
    %v7546 = vunpack.c.h.b16 %v1141
    %v7547 = vunpack.c.l.b16 %v1142
    %v7548 = vunpack.c.h.b16 %v1142
    %v7549 = vunpack.c.l.b16 %v1143
    %v7550 = vunpack.c.h.b16 %v1143
    %v7551 = vunpack.c.l.b16 %v1144
    %v7552 = vunpack.c.h.b16 %v1144
    %v7553 = vunpack.c.l.b16 %v1145
    %v7554 = vunpack.c.h.b16 %v1145
    %v7555 = vunpack.c.l.b16 %v1146
    %v7556 = vunpack.c.h.b16 %v1146
    %v7557 = vunpack.c.l.b16 %v1147
    %v7558 = vunpack.c.h.b16 %v1147
    %v7559 = vunpack.c.l.b16 %v1148
    %v7560 = vunpack.c.h.b16 %v1148
    %v7561 = vunpack.c.l.b16 %v1149
    %v7562 = vunpack.c.h.b16 %v1149
    %v7563 = vunpack.c.l.b16 %v1150
    %v7564 = vunpack.c.h.b16 %v1150
    %v7565 = vunpack.c.l.b16 %v1151
    %v7566 = vunpack.c.h.b16 %v1151
    %v7567 = vunpack.c.l.b16 %v1152
    %v7568 = vunpack.c.h.b16 %v1152
    %v7569 = vunpack.c.l.b16 %v1153
    %v7570 = vunpack.c.h.b16 %v1153
    %v7571 = vunpack.c.l.b16 %v1154
    %v7572 = vunpack.c.h.b16 %v1154
    %v7573 = vunpack.c.l.b16 %v1155
    %v7574 = vunpack.c.h.b16 %v1155
    %v7575 = vunpack.c.l.b16 %v1156
    %v7576 = vunpack.c.h.b16 %v1156
    %v7577 = vunpack.c.l.b16 %v1157
    %v7578 = vunpack.c.h.b16 %v1157
    %v7579 = vunpack.c.l.b16 %v1158
    %v7580 = vunpack.c.h.b16 %v1158
    %v7581 = vunpack.c.l.b16 %v1159
    %v7582 = vunpack.c.h.b16 %v1159
    %v7583 = vunpack.c.l.b16 %v1160
    %v7584 = vunpack.c.h.b16 %v1160
    %v7585 = vunpack.c.l.b16 %v1161
    %v7586 = vunpack.c.h.b16 %v1161
    %v7587 = vunpack.c.l.b16 %v1162
    %v7588 = vunpack.c.h.b16 %v1162
    %v7589 = vunpack.c.l.b16 %v1163
    %v7590 = vunpack.c.h.b16 %v1163
    %v7591 = vunpack.c.l.b16 %v1164
    %v7592 = vunpack.c.h.b16 %v1164
    %v7593 = vunpack.c.l.b16 %v1165
    %v7594 = vunpack.c.h.b16 %v1165
    %v7595 = vunpack.c.l.b16 %v1166
    %v7596 = vunpack.c.h.b16 %v1166
    %v7597 = vunpack.c.l.b16 %v1167
    %v7598 = vunpack.c.h.b16 %v1167
    %v7599 = vunpack.c.l.b16 %v1168
    %v7600 = vunpack.c.h.b16 %v1168
    %v7601 = vunpack.c.l.b16 %v1169
    %v7602 = vunpack.c.h.b16 %v1169
    %v7603 = vunpack.c.l.b16 %v1170
    %v7604 = vunpack.c.h.b16 %v1170
    %v7605 = vunpack.c.l.b16 %v1171
    %v7606 = vunpack.c.h.b16 %v1171
    %v7607 = vunpack.c.l.b16 %v1172
    %v7608 = vunpack.c.h.b16 %v1172
    %v7609 = vunpack.c.l.b16 %v1173
    %v7610 = vunpack.c.h.b16 %v1173
    %v7611 = vunpack.c.l.b16 %v1174
    %v7612 = vunpack.c.h.b16 %v1174
    %v7613 = vunpack.c.l.b16 %v1175
    %v7614 = vunpack.c.h.b16 %v1175
    %v7615 = vunpack.c.l.b16 %v1176
    %v7616 = vunpack.c.h.b16 %v1176
    %v7617 = vunpack.c.l.b16 %v1177
    %v7618 = vunpack.c.h.b16 %v1177
    %v7619 = vunpack.c.l.b16 %v1178
    %v7620 = vunpack.c.h.b16 %v1178
    %v7621 = vunpack.c.l.b16 %v1179
    %v7622 = vunpack.c.h.b16 %v1179
    %v7623 = vunpack.c.l.b16 %v1180
    %v7624 = vunpack.c.h.b16 %v1180
    %v7625 = vunpack.c.l.b16 %v1181
    %v7626 = vunpack.c.h.b16 %v1181
    %v7627 = vunpack.c.l.b16 %v1182
    %v7628 = vunpack.c.h.b16 %v1182
    %v7629 = vunpack.c.l.b16 %v1183
    %v7630 = vunpack.c.h.b16 %v1183
    %v7631 = vunpack.c.l.b16 %v1184
    %v7632 = vunpack.c.h.b16 %v1184
    %v7633 = vunpack.c.l.b16 %v1185
    %v7634 = vunpack.c.h.b16 %v1185
    %v7635 = vunpack.c.l.b16 %v1186
    %v7636 = vunpack.c.h.b16 %v1186
    %v7637 = vunpack.c.l.b16 %v1187
    %v7638 = vunpack.c.h.b16 %v1187
    %v7639 = vunpack.c.l.b16 %v1188
    %v7640 = vunpack.c.h.b16 %v1188
    %v7641 = vunpack.c.l.b16 %v1189
    %v7642 = vunpack.c.h.b16 %v1189
    %v7643 = vunpack.c.l.b16 %v1190
    %v7644 = vunpack.c.h.b16 %v1190
    %v7645 = vunpack.c.l.b16 %v1191
    %v7646 = vunpack.c.h.b16 %v1191
    %v7647 = vunpack.c.l.b16 %v1192
    %v7648 = vunpack.c.h.b16 %v1192
    %v7649 = vunpack.c.l.b16 %v1193
    %v7650 = vunpack.c.h.b16 %v1193
    %v7651 = vunpack.c.l.b16 %v1194
    %v7652 = vunpack.c.h.b16 %v1194
    %v7653 = vunpack.c.l.b16 %v1195
    %v7654 = vunpack.c.h.b16 %v1195
    %v7655 = vunpack.c.l.b16 %v1196
    %v7656 = vunpack.c.h.b16 %v1196
    %v7657 = vunpack.c.l.b16 %v1197
    %v7658 = vunpack.c.h.b16 %v1197
    %v7659 = vunpack.c.l.b16 %v1198
    %v7660 = vunpack.c.h.b16 %v1198
    %v7661 = vunpack.c.l.b16 %v1199
    %v7662 = vunpack.c.h.b16 %v1199
    %v7663 = vunpack.c.l.b16 %v1200
    %v7664 = vunpack.c.h.b16 %v1200
    %v7665 = vunpack.c.l.b16 %v1201
    %v7666 = vunpack.c.h.b16 %v1201
    %v7667 = vunpack.c.l.b16 %v1202
    %v7668 = vunpack.c.h.b16 %v1202
    %v7669 = vunpack.c.l.b16 %v1203
    %v7670 = vunpack.c.h.b16 %v1203
    %v7671 = vunpack.c.l.b16 %v1204
    %v7672 = vunpack.c.h.b16 %v1204
    %v7673 = vunpack.c.l.b16 %v1205
    %v7674 = vunpack.c.h.b16 %v1205
    %v7675 = vunpack.c.l.b16 %v1206
    %v7676 = vunpack.c.h.b16 %v1206
    %v7677 = vunpack.c.l.b16 %v1207
    %v7678 = vunpack.c.h.b16 %v1207
    %v7679 = vunpack.c.l.b16 %v1208
    %v7680 = vunpack.c.h.b16 %v1208
    %v7681 = vunpack.c.l.b16 %v1209
    %v7682 = vunpack.c.h.b16 %v1209
    %v7683 = vunpack.c.l.b16 %v1210
    %v7684 = vunpack.c.h.b16 %v1210
    %v7685 = vunpack.c.l.b16 %v1211
    %v7686 = vunpack.c.h.b16 %v1211
    %v7687 = vunpack.c.l.b16 %v1212
    %v7688 = vunpack.c.h.b16 %v1212
    %v7689 = vunpack.c.l.b16 %v1213
    %v7690 = vunpack.c.h.b16 %v1213
    %v7691 = vunpack.c.l.b16 %v1214
    %v7692 = vunpack.c.h.b16 %v1214
    %v7693 = vunpack.c.l.b16 %v1215
    %v7694 = vunpack.c.h.b16 %v1215
    %v7695 = vunpack.c.l.b16 %v1216
    %v7696 = vunpack.c.h.b16 %v1216
    %v7697 = vunpack.c.l.b16 %v1217
    %v7698 = vunpack.c.h.b16 %v1217
    %v7699 = vunpack.c.l.b16 %v1218
    %v7700 = vunpack.c.h.b16 %v1218
    %v7701 = vunpack.c.l.b16 %v1219
    %v7702 = vunpack.c.h.b16 %v1219
    %v7703 = vunpack.c.l.b16 %v1220
    %v7704 = vunpack.c.h.b16 %v1220
    %v7705 = vunpack.c.l.b16 %v1221
    %v7706 = vunpack.c.h.b16 %v1221
    %v7707 = vunpack.c.l.b16 %v1222
    %v7708 = vunpack.c.h.b16 %v1222
    %v7709 = vunpack.c.l.b16 %v1223
    %v7710 = vunpack.c.h.b16 %v1223
    %v7711 = vunpack.c.l.b16 %v1224
    %v7712 = vunpack.c.h.b16 %v1224
    %v7713 = vunpack.c.l.b16 %v1225
    %v7714 = vunpack.c.h.b16 %v1225
    %v7715 = vunpack.c.l.b16 %v1226
    %v7716 = vunpack.c.h.b16 %v1226
    %v7717 = vunpack.c.l.b16 %v1227
    %v7718 = vunpack.c.h.b16 %v1227
    %v7719 = vunpack.c.l.b16 %v1228
    %v7720 = vunpack.c.h.b16 %v1228
    %v7721 = vunpack.c.l.b16 %v1229
    %v7722 = vunpack.c.h.b16 %v1229
    %v7723 = vunpack.c.l.b16 %v1230
    %v7724 = vunpack.c.h.b16 %v1230
    %v7725 = vunpack.c.l.b16 %v1231
    %v7726 = vunpack.c.h.b16 %v1231
    %v7727 = vunpack.c.l.b16 %v1232
    %v7728 = vunpack.c.h.b16 %v1232
    %v7729 = vunpack.c.l.b16 %v1233
    %v7730 = vunpack.c.h.b16 %v1233
    %v7731 = vunpack.c.l.b16 %v1234
    %v7732 = vunpack.c.h.b16 %v1234
    %v7733 = vunpack.c.l.b16 %v1235
    %v7734 = vunpack.c.h.b16 %v1235
    %v7735 = vunpack.c.l.b16 %v1236
    %v7736 = vunpack.c.h.b16 %v1236
    %v7737 = vunpack.c.l.b16 %v1237
    %v7738 = vunpack.c.h.b16 %v1237
    %v7739 = vunpack.c.l.b16 %v1238
    %v7740 = vunpack.c.h.b16 %v1238
    %v7741 = vunpack.c.l.b16 %v1239
    %v7742 = vunpack.c.h.b16 %v1239
    %v7743 = vunpack.c.l.b16 %v1240
    %v7744 = vunpack.c.h.b16 %v1240
    %v7745 = vunpack.c.l.b16 %v1241
    %v7746 = vunpack.c.h.b16 %v1241
    %v7747 = vunpack.c.l.b16 %v1242
    %v7748 = vunpack.c.h.b16 %v1242
    %v7749 = vunpack.c.l.b16 %v1243
    %v7750 = vunpack.c.h.b16 %v1243
    %v7751 = vunpack.c.l.b16 %v1244
    %v7752 = vunpack.c.h.b16 %v1244
    %v7753 = vunpack.c.l.b16 %v1245
    %v7754 = vunpack.c.h.b16 %v1245
    %v7755 = vunpack.c.l.b16 %v1246
    %v7756 = vunpack.c.h.b16 %v1246
    %v7757 = vunpack.c.l.b16 %v1247
    %v7758 = vunpack.c.h.b16 %v1247
    %v7759 = vunpack.c.l.b16 %v1248
    %v7760 = vunpack.c.h.b16 %v1248
    %v7761 = vunpack.c.l.b16 %v1249
    %v7762 = vunpack.c.h.b16 %v1249
    %v7763 = vunpack.c.l.b16 %v1250
    %v7764 = vunpack.c.h.b16 %v1250
    %v7765 = vunpack.c.l.b16 %v1251
    %v7766 = vunpack.c.h.b16 %v1251
    %v7767 = vunpack.c.l.b16 %v1252
    %v7768 = vunpack.c.h.b16 %v1252
    %v7769 = vunpack.c.l.b16 %v1253
    %v7770 = vunpack.c.h.b16 %v1253
    %v7771 = vunpack.c.l.b16 %v1254
    %v7772 = vunpack.c.h.b16 %v1254
    %v7773 = vunpack.c.l.b16 %v1255
    %v7774 = vunpack.c.h.b16 %v1255
    %v7775 = vunpack.c.l.b16 %v1256
    %v7776 = vunpack.c.h.b16 %v1256
    %v7777 = vunpack.c.l.b16 %v1257
    %v7778 = vunpack.c.h.b16 %v1257
    %v7779 = vunpack.c.l.b16 %v1258
    %v7780 = vunpack.c.h.b16 %v1258
    %v7781 = vunpack.c.l.b16 %v1259
    %v7782 = vunpack.c.h.b16 %v1259
    %v7783 = vunpack.c.l.b16 %v1260
    %v7784 = vunpack.c.h.b16 %v1260
    %v7785 = vunpack.c.l.b16 %v1261
    %v7786 = vunpack.c.h.b16 %v1261
    %v7787 = vunpack.c.l.b16 %v1262
    %v7788 = vunpack.c.h.b16 %v1262
    %v7789 = vunpack.c.l.b16 %v1263
    %v7790 = vunpack.c.h.b16 %v1263
    %v7791 = vunpack.c.l.b16 %v1264
    %v7792 = vunpack.c.h.b16 %v1264
    %v7793 = vunpack.c.l.b16 %v1265
    %v7794 = vunpack.c.h.b16 %v1265
    %v7795 = vunpack.c.l.b16 %v1266
    %v7796 = vunpack.c.h.b16 %v1266
    %v7797 = vunpack.c.l.b16 %v1267
    %v7798 = vunpack.c.h.b16 %v1267
    %v7799 = vunpack.c.l.b16 %v1268
    %v7800 = vunpack.c.h.b16 %v1268
    %v7801 = vunpack.c.l.b16 %v1269
    %v7802 = vunpack.c.h.b16 %v1269
    %v7803 = vunpack.c.l.b16 %v1270
    %v7804 = vunpack.c.h.b16 %v1270
    %v7805 = vunpack.c.l.b16 %v1271
    %v7806 = vunpack.c.h.b16 %v1271
    %v7807 = vunpack.c.l.b16 %v1272
    %v7808 = vunpack.c.h.b16 %v1272
    %v7809 = vunpack.c.l.b16 %v1273
    %v7810 = vunpack.c.h.b16 %v1273
    %v7811 = vunpack.c.l.b16 %v1274
    %v7812 = vunpack.c.h.b16 %v1274
    %v7813 = vunpack.c.l.b16 %v1275
    %v7814 = vunpack.c.h.b16 %v1275
    %v7815 = vunpack.c.l.b16 %v1276
    %v7816 = vunpack.c.h.b16 %v1276
    %v7817 = vunpack.c.l.b16 %v1277
    %v7818 = vunpack.c.h.b16 %v1277
    %v7819 = vunpack.c.l.b16 %v1278
    %v7820 = vunpack.c.h.b16 %v1278
    %v7821 = vunpack.c.l.b16 %v1279
    %v7822 = vunpack.c.h.b16 %v1279
    %v7823 = vunpack.c.l.b16 %v1280
    %v7824 = vunpack.c.h.b16 %v1280
    %v7825 = vunpack.c.l.b16 %v1281
    %v7826 = vunpack.c.h.b16 %v1281
    %v7827 = vunpack.c.l.b16 %v1282
    %v7828 = vunpack.c.h.b16 %v1282
    %v7829 = vunpack.c.l.b16 %v1283
    %v7830 = vunpack.c.h.b16 %v1283
    %v7831 = vunpack.c.l.b16 %v1284
    %v7832 = vunpack.c.h.b16 %v1284
    %v7833 = vunpack.c.l.b16 %v1285
    %v7834 = vunpack.c.h.b16 %v1285
    %v7835 = vunpack.c.l.b16 %v1286
    %v7836 = vunpack.c.h.b16 %v1286
    %v7837 = vunpack.c.l.b16 %v1287
    %v7838 = vunpack.c.h.b16 %v1287
    %v7839 = vunpack.c.l.b16 %v1288
    %v7840 = vunpack.c.h.b16 %v1288
    %v7841 = vunpack.c.l.b16 %v1289
    %v7842 = vunpack.c.h.b16 %v1289
    %v7843 = vunpack.c.l.b16 %v1290
    %v7844 = vunpack.c.h.b16 %v1290
    %v7845 = vunpack.c.l.b16 %v1291
    %v7846 = vunpack.c.h.b16 %v1291
    %v7847 = vunpack.c.l.b16 %v1292
    %v7848 = vunpack.c.h.b16 %v1292
    %v7849 = vunpack.c.l.b16 %v1293
    %v7850 = vunpack.c.h.b16 %v1293
    %v7851 = vunpack.c.l.b16 %v1294
    %v7852 = vunpack.c.h.b16 %v1294
    %v7853 = vunpack.c.l.b16 %v1295
    %v7854 = vunpack.c.h.b16 %v1295
    %v7855 = vunpack.c.l.b16 %v1296
    %v7856 = vunpack.c.h.b16 %v1296
    %v7857 = vunpack.c.l.b16 %v1297
    %v7858 = vunpack.c.h.b16 %v1297
    %v7859 = vunpack.c.l.b16 %v1298
    %v7860 = vunpack.c.h.b16 %v1298
    %v7861 = vunpack.c.l.b16 %v1299
    %v7862 = vunpack.c.h.b16 %v1299
    %v7863 = vunpack.c.l.b16 %v1300
    %v7864 = vunpack.c.h.b16 %v1300
    %v7865 = vunpack.c.l.b16 %v1301
    %v7866 = vunpack.c.h.b16 %v1301
    %v7867 = vunpack.c.l.b16 %v1302
    %v7868 = vunpack.c.h.b16 %v1302
    %v7869 = vunpack.c.l.b16 %v1303
    %v7870 = vunpack.c.h.b16 %v1303
    %v7871 = vunpack.c.l.b16 %v1304
    %v7872 = vunpack.c.h.b16 %v1304
    %v7873 = vunpack.c.l.b16 %v1305
    %v7874 = vunpack.c.h.b16 %v1305
    %v7875 = vunpack.c.l.b16 %v1306
    %v7876 = vunpack.c.h.b16 %v1306
    %v7877 = vunpack.c.l.b16 %v1307
    %v7878 = vunpack.c.h.b16 %v1307
    %v7879 = vunpack.c.l.b16 %v1308
    %v7880 = vunpack.c.h.b16 %v1308
    %v7881 = vunpack.c.l.b16 %v1309
    %v7882 = vunpack.c.h.b16 %v1309
    %v7883 = vunpack.c.l.b16 %v1310
    %v7884 = vunpack.c.h.b16 %v1310
    %v7885 = vunpack.c.l.b16 %v1311
    %v7886 = vunpack.c.h.b16 %v1311
    %v7887 = vunpack.c.l.b16 %v1312
    %v7888 = vunpack.c.h.b16 %v1312
    %v7889 = vunpack.c.l.b16 %v1313
    %v7890 = vunpack.c.h.b16 %v1313
    %v7891 = vunpack.c.l.b16 %v1314
    %v7892 = vunpack.c.h.b16 %v1314
    %v7893 = vunpack.c.l.b16 %v1315
    %v7894 = vunpack.c.h.b16 %v1315
    %v7895 = vunpack.c.l.b16 %v1316
    %v7896 = vunpack.c.h.b16 %v1316
    %v7897 = vunpack.c.l.b16 %v1317
    %v7898 = vunpack.c.h.b16 %v1317
    %v7899 = vunpack.c.l.b16 %v1318
    %v7900 = vunpack.c.h.b16 %v1318
    %v7901 = vunpack.c.l.b16 %v1319
    %v7902 = vunpack.c.h.b16 %v1319
    %v7903 = vunpack.c.l.b16 %v1320
    %v7904 = vunpack.c.h.b16 %v1320
    %v7905 = vunpack.c.l.b16 %v1321
    %v7906 = vunpack.c.h.b16 %v1321
    %v7907 = vunpack.c.l.b16 %v1322
    %v7908 = vunpack.c.h.b16 %v1322
    %v7909 = vunpack.c.l.b16 %v1323
    %v7910 = vunpack.c.h.b16 %v1323
    %v7911 = vunpack.c.l.b16 %v1324
    %v7912 = vunpack.c.h.b16 %v1324
    %v7913 = vunpack.c.l.b16 %v1325
    %v7914 = vunpack.c.h.b16 %v1325
    %v7915 = vunpack.c.l.b16 %v1326
    %v7916 = vunpack.c.h.b16 %v1326
    %v7917 = vunpack.c.l.b16 %v1327
    %v7918 = vunpack.c.h.b16 %v1327
    %v7919 = vunpack.c.l.b16 %v1328
    %v7920 = vunpack.c.h.b16 %v1328
    %v7921 = vunpack.c.l.b16 %v1329
    %v7922 = vunpack.c.h.b16 %v1329
    %v7923 = vunpack.c.l.b16 %v1330
    %v7924 = vunpack.c.h.b16 %v1330
    %v7925 = vunpack.c.l.b16 %v1331
    %v7926 = vunpack.c.h.b16 %v1331
    %v7927 = vunpack.c.l.b16 %v1332
    %v7928 = vunpack.c.h.b16 %v1332
    %v7929 = vunpack.c.l.b16 %v1333
    %v7930 = vunpack.c.h.b16 %v1333
    %v7931 = vunpack.c.l.b16 %v1334
    %v7932 = vunpack.c.h.b16 %v1334
    %v7933 = vunpack.c.l.b16 %v1335
    %v7934 = vunpack.c.h.b16 %v1335
    %v7935 = vunpack.c.l.b16 %v1336
    %v7936 = vunpack.c.h.b16 %v1336
    %v7937 = vunpack.c.l.b16 %v1337
    %v7938 = vunpack.c.h.b16 %v1337
    %v7939 = vunpack.c.l.b16 %v1338
    %v7940 = vunpack.c.h.b16 %v1338
    %v7941 = vunpack.c.l.b16 %v1339
    %v7942 = vunpack.c.h.b16 %v1339
    %v7943 = vunpack.c.l.b16 %v1340
    %v7944 = vunpack.c.h.b16 %v1340
    %v7945 = vunpack.c.l.b16 %v1341
    %v7946 = vunpack.c.h.b16 %v1341
    %v7947 = vunpack.c.l.b16 %v1342
    %v7948 = vunpack.c.h.b16 %v1342
    %v7949 = vunpack.c.l.b16 %v1343
    %v7950 = vunpack.c.h.b16 %v1343
    %v7951 = vunpack.c.l.b16 %v1344
    %v7952 = vunpack.c.h.b16 %v1344
    %v7953 = vunpack.c.l.b16 %v1345
    %v7954 = vunpack.c.h.b16 %v1345
    %v7955 = vunpack.c.l.b16 %v1346
    %v7956 = vunpack.c.h.b16 %v1346
    %v7957 = vunpack.c.l.b16 %v1347
    %v7958 = vunpack.c.h.b16 %v1347
    %v7959 = vunpack.c.l.b16 %v1348
    %v7960 = vunpack.c.h.b16 %v1348
    %v7961 = vunpack.c.l.b16 %v1349
    %v7962 = vunpack.c.h.b16 %v1349
    %v7963 = vunpack.c.l.b16 %v1350
    %v7964 = vunpack.c.h.b16 %v1350
    %v7965 = vunpack.c.l.b16 %v1351
    %v7966 = vunpack.c.h.b16 %v1351
    %v7967 = vunpack.c.l.b16 %v1352
    %v7968 = vunpack.c.h.b16 %v1352
    %v7969 = vunpack.c.l.b16 %v1353
    %v7970 = vunpack.c.h.b16 %v1353
    %v7971 = vunpack.c.l.b16 %v1354
    %v7972 = vunpack.c.h.b16 %v1354
    %v7973 = vunpack.c.l.b16 %v1355
    %v7974 = vunpack.c.h.b16 %v1355
    %v7975 = vunpack.c.l.b16 %v1356
    %v7976 = vunpack.c.h.b16 %v1356
    %v7977 = vunpack.c.l.b16 %v1357
    %v7978 = vunpack.c.h.b16 %v1357
    %v7979 = vunpack.c.l.b16 %v1358
    %v7980 = vunpack.c.h.b16 %v1358
    %v7981 = vunpack.c.l.b16 %v1359
    %v7982 = vunpack.c.h.b16 %v1359
    %v7983 = vunpack.c.l.b16 %v1360
    %v7984 = vunpack.c.h.b16 %v1360
    %v7985 = vunpack.c.l.b16 %v1361
    %v7986 = vunpack.c.h.b16 %v1361
    %v7987 = vunpack.c.l.b16 %v1362
    %v7988 = vunpack.c.h.b16 %v1362
    %v7989 = vunpack.c.l.b16 %v1363
    %v7990 = vunpack.c.h.b16 %v1363
    %v7991 = vunpack.c.l.b16 %v1364
    %v7992 = vunpack.c.h.b16 %v1364
    %v7993 = vunpack.c.l.b16 %v1365
    %v7994 = vunpack.c.h.b16 %v1365
    %v7995 = vunpack.c.l.b16 %v1366
    %v7996 = vunpack.c.h.b16 %v1366
    %v7997 = vunpack.c.l.b16 %v1367
    %v7998 = vunpack.c.h.b16 %v1367
    %v7999 = vunpack.c.l.b16 %v1368
    %v8000 = vunpack.c.h.b16 %v1368
    %v8001 = vunpack.c.l.b16 %v1369
    %v8002 = vunpack.c.h.b16 %v1369
    %v8003 = vunpack.c.l.b16 %v1370
    %v8004 = vunpack.c.h.b16 %v1370
    %v8005 = vunpack.c.l.b16 %v1371
    %v8006 = vunpack.c.h.b16 %v1371
    %v8007 = vunpack.c.l.b16 %v1372
    %v8008 = vunpack.c.h.b16 %v1372
    %v8009 = vunpack.c.l.b16 %v1373
    %v8010 = vunpack.c.h.b16 %v1373
    %v8011 = vunpack.c.l.b16 %v1374
    %v8012 = vunpack.c.h.b16 %v1374
    %v8013 = vunpack.c.l.b16 %v1375
    %v8014 = vunpack.c.h.b16 %v1375
    %v8015 = vunpack.c.l.b16 %v1376
    %v8016 = vunpack.c.h.b16 %v1376
    %v8017 = vunpack.c.l.b16 %v1377
    %v8018 = vunpack.c.h.b16 %v1377
    %v8019 = vunpack.c.l.b16 %v1378
    %v8020 = vunpack.c.h.b16 %v1378
    %v8021 = vunpack.c.l.b16 %v1379
    %v8022 = vunpack.c.h.b16 %v1379
    %v8023 = vunpack.c.l.b16 %v1380
    %v8024 = vunpack.c.h.b16 %v1380
    %v8025 = vunpack.c.l.b16 %v1381
    %v8026 = vunpack.c.h.b16 %v1381
    %v8027 = vunpack.c.l.b16 %v1382
    %v8028 = vunpack.c.h.b16 %v1382
    %v8029 = vunpack.c.l.b16 %v1383
    %v8030 = vunpack.c.h.b16 %v1383
    %v8031 = vunpack.c.l.b16 %v1384
    %v8032 = vunpack.c.h.b16 %v1384
    %v8033 = vunpack.c.l.b16 %v1385
    %v8034 = vunpack.c.h.b16 %v1385
    %v8035 = vunpack.c.l.b16 %v1386
    %v8036 = vunpack.c.h.b16 %v1386
    %v8037 = vunpack.c.l.b16 %v1387
    %v8038 = vunpack.c.h.b16 %v1387
    %v8039 = vunpack.c.l.b16 %v1388
    %v8040 = vunpack.c.h.b16 %v1388
    %v8041 = vunpack.c.l.b16 %v1389
    %v8042 = vunpack.c.h.b16 %v1389
    %v8043 = vunpack.c.l.b16 %v1390
    %v8044 = vunpack.c.h.b16 %v1390
    %v8045 = vunpack.c.l.b16 %v1391
    %v8046 = vunpack.c.h.b16 %v1391
    %v8047 = vunpack.c.l.b16 %v1392
    %v8048 = vunpack.c.h.b16 %v1392
    %v8049 = vunpack.c.l.b16 %v1393
    %v8050 = vunpack.c.h.b16 %v1393
    %v8051 = vunpack.c.l.b16 %v1394
    %v8052 = vunpack.c.h.b16 %v1394
    %v8053 = vunpack.c.l.b16 %v1395
    %v8054 = vunpack.c.h.b16 %v1395
    %v8055 = vunpack.c.l.b16 %v1396
    %v8056 = vunpack.c.h.b16 %v1396
    %v8057 = vunpack.c.l.b16 %v1397
    %v8058 = vunpack.c.h.b16 %v1397
    %v8059 = vunpack.c.l.b16 %v1398
    %v8060 = vunpack.c.h.b16 %v1398
    %v8061 = vunpack.c.l.b16 %v1399
    %v8062 = vunpack.c.h.b16 %v1399
    %v8063 = vunpack.c.l.b16 %v1400
    %v8064 = vunpack.c.h.b16 %v1400
    %v8065 = vunpack.c.l.b16 %v1401
    %v8066 = vunpack.c.h.b16 %v1401
    %v8067 = vunpack.c.l.b16 %v1402
    %v8068 = vunpack.c.h.b16 %v1402
    %v8069 = vunpack.c.l.b16 %v1403
    %v8070 = vunpack.c.h.b16 %v1403
    %v8071 = vunpack.c.l.b16 %v1404
    %v8072 = vunpack.c.h.b16 %v1404
    %v8073 = vunpack.c.l.b16 %v1405
    %v8074 = vunpack.c.h.b16 %v1405
    %v8075 = vunpack.c.l.b16 %v1406
    %v8076 = vunpack.c.h.b16 %v1406
    %v8077 = vunpack.c.l.b16 %v1407
    %v8078 = vunpack.c.h.b16 %v1407
    %v8079 = vunpack.c.l.b16 %v1408
    %v8080 = vunpack.c.h.b16 %v1408
    %v8081 = vunpack.c.l.b16 %v1409
    %v8082 = vunpack.c.h.b16 %v1409
    %v8083 = vunpack.c.l.b16 %v1410
    %v8084 = vunpack.c.h.b16 %v1410
    %v8085 = vunpack.c.l.b16 %v1411
    %v8086 = vunpack.c.h.b16 %v1411
    %v8087 = vunpack.c.l.b16 %v1412
    %v8088 = vunpack.c.h.b16 %v1412
    %v8089 = vunpack.c.l.b16 %v1413
    %v8090 = vunpack.c.h.b16 %v1413
    %v8091 = vunpack.c.l.b16 %v1414
    %v8092 = vunpack.c.h.b16 %v1414
    %v8093 = vunpack.c.l.b16 %v1415
    %v8094 = vunpack.c.h.b16 %v1415
    %v8095 = vunpack.c.l.b16 %v1416
    %v8096 = vunpack.c.h.b16 %v1416
    %v8097 = vunpack.c.l.b16 %v1417
    %v8098 = vunpack.c.h.b16 %v1417
    %v8099 = vunpack.c.l.b16 %v1418
    %v8100 = vunpack.c.h.b16 %v1418
    %v8101 = vunpack.c.l.b16 %v1419
    %v8102 = vunpack.c.h.b16 %v1419
    %v8103 = vunpack.c.l.b16 %v1420
    %v8104 = vunpack.c.h.b16 %v1420
    %v8105 = vunpack.c.l.b16 %v1421
    %v8106 = vunpack.c.h.b16 %v1421
    %v8107 = vunpack.c.l.b16 %v1422
    %v8108 = vunpack.c.h.b16 %v1422
    %v8109 = vunpack.c.l.b16 %v1423
    %v8110 = vunpack.c.h.b16 %v1423
    %v8111 = vunpack.c.l.b16 %v1424
    %v8112 = vunpack.c.h.b16 %v1424
    %v8113 = vunpack.c.l.b16 %v1425
    %v8114 = vunpack.c.h.b16 %v1425
    %v8115 = vunpack.c.l.b16 %v1426
    %v8116 = vunpack.c.h.b16 %v1426
    %v8117 = vunpack.c.l.b16 %v1427
    %v8118 = vunpack.c.h.b16 %v1427
    %v8119 = vunpack.c.l.b16 %v1428
    %v8120 = vunpack.c.h.b16 %v1428
    %v8121 = vunpack.c.l.b16 %v1429
    %v8122 = vunpack.c.h.b16 %v1429
    %v8123 = vunpack.c.l.b16 %v1430
    %v8124 = vunpack.c.h.b16 %v1430
    %v8125 = vunpack.c.l.b16 %v1431
    %v8126 = vunpack.c.h.b16 %v1431
    %v8127 = vunpack.c.l.b16 %v1432
    %v8128 = vunpack.c.h.b16 %v1432
    %v8129 = vunpack.c.l.b16 %v1433
    %v8130 = vunpack.c.h.b16 %v1433
    %v8131 = vunpack.c.l.b16 %v1434
    %v8132 = vunpack.c.h.b16 %v1434
    %v8133 = vunpack.c.l.b16 %v1435
    %v8134 = vunpack.c.h.b16 %v1435
    %v8135 = vunpack.c.l.b16 %v1436
    %v8136 = vunpack.c.h.b16 %v1436
    %v8137 = vunpack.c.l.b16 %v1437
    %v8138 = vunpack.c.h.b16 %v1437
    %v8139 = vunpack.c.l.b16 %v1438
    %v8140 = vunpack.c.h.b16 %v1438
    %v8141 = vunpack.c.l.b16 %v1439
    %v8142 = vunpack.c.h.b16 %v1439
    %v8143 = vunpack.c.l.b16 %v1440
    %v8144 = vunpack.c.h.b16 %v1440
    %v8145 = vunpack.c.l.b16 %v1441
    %v8146 = vunpack.c.h.b16 %v1441
    %v8147 = vunpack.c.l.b16 %v1442
    %v8148 = vunpack.c.h.b16 %v1442
    %v8149 = vunpack.c.l.b16 %v1443
    %v8150 = vunpack.c.h.b16 %v1443
    %v8151 = vunpack.c.l.b16 %v1444
    %v8152 = vunpack.c.h.b16 %v1444
    %v8153 = vunpack.c.l.b16 %v1445
    %v8154 = vunpack.c.h.b16 %v1445
    %v8155 = vunpack.c.l.b16 %v1446
    %v8156 = vunpack.c.h.b16 %v1446
    %v8157 = vunpack.c.l.b16 %v1447
    %v8158 = vunpack.c.h.b16 %v1447
    %v8159 = vunpack.c.l.b16 %v1448
    %v8160 = vunpack.c.h.b16 %v1448
    %v8161 = vunpack.c.l.b16 %v1449
    %v8162 = vunpack.c.h.b16 %v1449
    %v8163 = vunpack.c.l.b16 %v1450
    %v8164 = vunpack.c.h.b16 %v1450
    %v8165 = vunpack.c.l.b16 %v1451
    %v8166 = vunpack.c.h.b16 %v1451
    %v8167 = vunpack.c.l.b16 %v1452
    %v8168 = vunpack.c.h.b16 %v1452
    %v8169 = vunpack.c.l.b16 %v1453
    %v8170 = vunpack.c.h.b16 %v1453
    %v8171 = vunpack.c.l.b16 %v1454
    %v8172 = vunpack.c.h.b16 %v1454
    %v8173 = vunpack.c.l.b16 %v1455
    %v8174 = vunpack.c.h.b16 %v1455
    %v8175 = vunpack.c.l.b16 %v1456
    %v8176 = vunpack.c.h.b16 %v1456
    %v8177 = vunpack.c.l.b16 %v1457
    %v8178 = vunpack.c.h.b16 %v1457
    %v8179 = vunpack.c.l.b16 %v1458
    %v8180 = vunpack.c.h.b16 %v1458
    %v8181 = vunpack.c.l.b16 %v1459
    %v8182 = vunpack.c.h.b16 %v1459
    %v8183 = vunpack.c.l.b16 %v1460
    %v8184 = vunpack.c.h.b16 %v1460
    %v8185 = vunpack.c.l.b16 %v1461
    %v8186 = vunpack.c.h.b16 %v1461
    %v8187 = vunpack.c.l.b16 %v1462
    %v8188 = vunpack.c.h.b16 %v1462
    %v8189 = vunpack.c.l.b16 %v1463
    %v8190 = vunpack.c.h.b16 %v1463
    %v8191 = vunpack.c.l.b16 %v1464
    %v8192 = vunpack.c.h.b16 %v1464
    %v8193 = vunpack.c.l.b16 %v1465
    %v8194 = vunpack.c.h.b16 %v1465
    %v8195 = vunpack.c.l.b16 %v1466
    %v8196 = vunpack.c.h.b16 %v1466
    %v8197 = vunpack.c.l.b16 %v1467
    %v8198 = vunpack.c.h.b16 %v1467
    %v8199 = vunpack.c.l.b16 %v1468
    %v8200 = vunpack.c.h.b16 %v1468
    %v8201 = vunpack.c.l.b16 %v1469
    %v8202 = vunpack.c.h.b16 %v1469
    %v8203 = vunpack.c.l.b16 %v1470
    %v8204 = vunpack.c.h.b16 %v1470
    %v8205 = vunpack.c.l.b16 %v1471
    %v8206 = vunpack.c.h.b16 %v1471
    %v8207 = vunpack.c.l.b16 %v1472
    %v8208 = vunpack.c.h.b16 %v1472
    %v8209 = vunpack.c.l.b16 %v1473
    %v8210 = vunpack.c.h.b16 %v1473
    %v8211 = vunpack.c.l.b16 %v1474
    %v8212 = vunpack.c.h.b16 %v1474
    %v8213 = vunpack.c.l.b16 %v1475
    %v8214 = vunpack.c.h.b16 %v1475
    %v8215 = vunpack.c.l.b16 %v1476
    %v8216 = vunpack.c.h.b16 %v1476
    %v8217 = vunpack.c.l.b16 %v1477
    %v8218 = vunpack.c.h.b16 %v1477
    %v8219 = vunpack.c.l.b16 %v1478
    %v8220 = vunpack.c.h.b16 %v1478
    %v8221 = vunpack.c.l.b16 %v1479
    %v8222 = vunpack.c.h.b16 %v1479
    %v8223 = vunpack.c.l.b16 %v1480
    %v8224 = vunpack.c.h.b16 %v1480
    %v8225 = vunpack.c.l.b16 %v1481
    %v8226 = vunpack.c.h.b16 %v1481
    %v8227 = vunpack.c.l.b16 %v1482
    %v8228 = vunpack.c.h.b16 %v1482
    %v8229 = vunpack.c.l.b16 %v1483
    %v8230 = vunpack.c.h.b16 %v1483
    %v8231 = vunpack.c.l.b16 %v1484
    %v8232 = vunpack.c.h.b16 %v1484
    %v8233 = vunpack.c.l.b16 %v1485
    %v8234 = vunpack.c.h.b16 %v1485
    %v8235 = vunpack.c.l.b16 %v1486
    %v8236 = vunpack.c.h.b16 %v1486
    %v8237 = vunpack.c.l.b16 %v1487
    %v8238 = vunpack.c.h.b16 %v1487
    %v8239 = vunpack.c.l.b16 %v1488
    %v8240 = vunpack.c.h.b16 %v1488
    %v8241 = vunpack.c.l.b16 %v1489
    %v8242 = vunpack.c.h.b16 %v1489
    %v8243 = vunpack.c.l.b16 %v1490
    %v8244 = vunpack.c.h.b16 %v1490
    %v8245 = vunpack.c.l.b16 %v1491
    %v8246 = vunpack.c.h.b16 %v1491
    %v8247 = vunpack.c.l.b16 %v1492
    %v8248 = vunpack.c.h.b16 %v1492
    %v8249 = vunpack.c.l.b16 %v1493
    %v8250 = vunpack.c.h.b16 %v1493
    %v8251 = vunpack.c.l.b16 %v1494
    %v8252 = vunpack.c.h.b16 %v1494
    %v8253 = vunpack.c.l.b16 %v1495
    %v8254 = vunpack.c.h.b16 %v1495
    %v8255 = vunpack.c.l.b16 %v1496
    %v8256 = vunpack.c.h.b16 %v1496
    %v8257 = vunpack.c.l.b16 %v1497
    %v8258 = vunpack.c.h.b16 %v1497
    %v8259 = vunpack.c.l.b16 %v1498
    %v8260 = vunpack.c.h.b16 %v1498
    %v8261 = vunpack.c.l.b16 %v1499
    %v8262 = vunpack.c.h.b16 %v1499
    %v8263 = vunpack.c.l.b16 %v1500
    %v8264 = vunpack.c.h.b16 %v1500
    %v8265 = vunpack.c.l.b16 %v1501
    %v8266 = vunpack.c.h.b16 %v1501
    %v8267 = vunpack.c.l.b16 %v1502
    %v8268 = vunpack.c.h.b16 %v1502
    %v8269 = vunpack.c.l.b16 %v1503
    %v8270 = vunpack.c.h.b16 %v1503
    %v8271 = vunpack.c.l.b16 %v1504
    %v8272 = vunpack.c.h.b16 %v1504
    %v8273 = vunpack.c.l.b16 %v1505
    %v8274 = vunpack.c.h.b16 %v1505
    %v8275 = vunpack.c.l.b16 %v1506
    %v8276 = vunpack.c.h.b16 %v1506
    %v8277 = vunpack.c.l.b16 %v1507
    %v8278 = vunpack.c.h.b16 %v1507
    %v8279 = vunpack.c.l.b16 %v1508
    %v8280 = vunpack.c.h.b16 %v1508
    %v8281 = vunpack.c.l.b16 %v1509
    %v8282 = vunpack.c.h.b16 %v1509
    %v8283 = vunpack.c.l.b16 %v1510
    %v8284 = vunpack.c.h.b16 %v1510
    %v8285 = vunpack.c.l.b16 %v1511
    %v8286 = vunpack.c.h.b16 %v1511
    %v8287 = vunpack.c.l.b16 %v1512
    %v8288 = vunpack.c.h.b16 %v1512
    %v8289 = vunpack.c.l.b16 %v1513
    %v8290 = vunpack.c.h.b16 %v1513
    %v8291 = vunpack.c.l.b16 %v1514
    %v8292 = vunpack.c.h.b16 %v1514
    %v8293 = vunpack.c.l.b16 %v1515
    %v8294 = vunpack.c.h.b16 %v1515
    %v8295 = vunpack.c.l.b16 %v1516
    %v8296 = vunpack.c.h.b16 %v1516
    %v8297 = vunpack.c.l.b16 %v1517
    %v8298 = vunpack.c.h.b16 %v1517
    %v8299 = vunpack.c.l.b16 %v1518
    %v8300 = vunpack.c.h.b16 %v1518
    %v8301 = vunpack.c.l.b16 %v1519
    %v8302 = vunpack.c.h.b16 %v1519
    %v8303 = vunpack.c.l.b16 %v1520
    %v8304 = vunpack.c.h.b16 %v1520
    %v8305 = vunpack.c.l.b16 %v1521
    %v8306 = vunpack.c.h.b16 %v1521
    %v8307 = vunpack.c.l.b16 %v1522
    %v8308 = vunpack.c.h.b16 %v1522
    %v8309 = vunpack.c.l.b16 %v1523
    %v8310 = vunpack.c.h.b16 %v1523
    %v8311 = vunpack.c.l.b16 %v1524
    %v8312 = vunpack.c.h.b16 %v1524
    %v8313 = vunpack.c.l.b16 %v1525
    %v8314 = vunpack.c.h.b16 %v1525
    %v8315 = vunpack.c.l.b16 %v1526
    %v8316 = vunpack.c.h.b16 %v1526
    %v8317 = vunpack.c.l.b16 %v1527
    %v8318 = vunpack.c.h.b16 %v1527
    %v8319 = vunpack.c.l.b16 %v1528
    %v8320 = vunpack.c.h.b16 %v1528
    %v8321 = vunpack.c.l.b16 %v1529
    %v8322 = vunpack.c.h.b16 %v1529
    %v8323 = vunpack.c.l.b16 %v1530
    %v8324 = vunpack.c.h.b16 %v1530
    %v8325 = vunpack.c.l.b16 %v1531
    %v8326 = vunpack.c.h.b16 %v1531
    %v8327 = vunpack.c.l.b16 %v1532
    %v8328 = vunpack.c.h.b16 %v1532
    %v8329 = vunpack.c.l.b16 %v1533
    %v8330 = vunpack.c.h.b16 %v1533
    %v8331 = vunpack.c.l.b16 %v1534
    %v8332 = vunpack.c.h.b16 %v1534
    %v8333 = vunpack.c.l.b16 %v1535
    %v8334 = vunpack.c.h.b16 %v1535
    %v8335 = vunpack.c.l.b16 %v1536
    %v8336 = vunpack.c.h.b16 %v1536
    %v8337 = vunpack.c.l.b16 %v1537
    %v8338 = vunpack.c.h.b16 %v1537
    %v8339 = vunpack.c.l.b16 %v1538
    %v8340 = vunpack.c.h.b16 %v1538
    %v8341 = vunpack.c.l.b16 %v1539
    %v8342 = vunpack.c.h.b16 %v1539
    %v8343 = vunpack.c.l.b16 %v1540
    %v8344 = vunpack.c.h.b16 %v1540
    %v8345 = vunpack.c.l.b16 %v1541
    %v8346 = vunpack.c.h.b16 %v1541
    %v8347 = vunpack.c.l.b16 %v1542
    %v8348 = vunpack.c.h.b16 %v1542
    %v8349 = vunpack.c.l.b16 %v1543
    %v8350 = vunpack.c.h.b16 %v1543
    %v8351 = vunpack.c.l.b16 %v1544
    %v8352 = vunpack.c.h.b16 %v1544
    %v8353 = vunpack.c.l.b16 %v1545
    %v8354 = vunpack.c.h.b16 %v1545
    %v8355 = vunpack.c.l.b16 %v1546
    %v8356 = vunpack.c.h.b16 %v1546
    %v8357 = vunpack.c.l.b16 %v1547
    %v8358 = vunpack.c.h.b16 %v1547
    %v8359 = vunpack.c.l.b16 %v1548
    %v8360 = vunpack.c.h.b16 %v1548
    %v8361 = vunpack.c.l.b16 %v1549
    %v8362 = vunpack.c.h.b16 %v1549
    %v8363 = vunpack.c.l.b16 %v1550
    %v8364 = vunpack.c.h.b16 %v1550
    %v8365 = vunpack.c.l.b16 %v1551
    %v8366 = vunpack.c.h.b16 %v1551
    %v8367 = vunpack.c.l.b16 %v1552
    %v8368 = vunpack.c.h.b16 %v1552
    %v8369 = vunpack.c.l.b16 %v1553
    %v8370 = vunpack.c.h.b16 %v1553
    %v8371 = vunpack.c.l.b16 %v1554
    %v8372 = vunpack.c.h.b16 %v1554
    %v8373 = vunpack.c.l.b16 %v1555
    %v8374 = vunpack.c.h.b16 %v1555
    %v8375 = vunpack.c.l.b16 %v1556
    %v8376 = vunpack.c.h.b16 %v1556
    %v8377 = vunpack.c.l.b16 %v1557
    %v8378 = vunpack.c.h.b16 %v1557
    %v8379 = vunpack.c.l.b16 %v1558
    %v8380 = vunpack.c.h.b16 %v1558
    %v8381 = vunpack.c.l.b16 %v1559
    %v8382 = vunpack.c.h.b16 %v1559
    %v8383 = vunpack.c.l.b16 %v1560
    %v8384 = vunpack.c.h.b16 %v1560
    %v8385 = vunpack.c.l.b16 %v1561
    %v8386 = vunpack.c.h.b16 %v1561
    %v8387 = vunpack.c.l.b16 %v1562
    %v8388 = vunpack.c.h.b16 %v1562
    %v8389 = vunpack.c.l.b16 %v1563
    %v8390 = vunpack.c.h.b16 %v1563
    %v8391 = vunpack.c.l.b16 %v1564
    %v8392 = vunpack.c.h.b16 %v1564
    %v8393 = vunpack.c.l.b16 %v1565
    %v8394 = vunpack.c.h.b16 %v1565
    %v8395 = vunpack.c.l.b16 %v1566
    %v8396 = vunpack.c.h.b16 %v1566
    %v8397 = vunpack.c.l.b16 %v1567
    %v8398 = vunpack.c.h.b16 %v1567
    %v8399 = vunpack.c.l.b16 %v1568
    %v8400 = vunpack.c.h.b16 %v1568
    %v8401 = vunpack.c.l.b16 %v1569
    %v8402 = vunpack.c.h.b16 %v1569
    %v8403 = vunpack.c.l.b16 %v1570
    %v8404 = vunpack.c.h.b16 %v1570
    %v8405 = vunpack.c.l.b16 %v1571
    %v8406 = vunpack.c.h.b16 %v1571
    %v8407 = vunpack.c.l.b16 %v1572
    %v8408 = vunpack.c.h.b16 %v1572
    %v8409 = vunpack.c.l.b16 %v1573
    %v8410 = vunpack.c.h.b16 %v1573
    %v8411 = vunpack.c.l.b16 %v1574
    %v8412 = vunpack.c.h.b16 %v1574
    %v8413 = vunpack.c.l.b16 %v1575
    %v8414 = vunpack.c.h.b16 %v1575
    %v8415 = vunpack.c.l.b16 %v1576
    %v8416 = vunpack.c.h.b16 %v1576
    %v8417 = vunpack.c.l.b16 %v1577
    %v8418 = vunpack.c.h.b16 %v1577
    %v8419 = vunpack.c.l.b16 %v1578
    %v8420 = vunpack.c.h.b16 %v1578
    %v8421 = vunpack.c.l.b16 %v1579
    %v8422 = vunpack.c.h.b16 %v1579
    %v8423 = vunpack.c.l.b16 %v1580
    %v8424 = vunpack.c.h.b16 %v1580
    %v8425 = vunpack.c.l.b16 %v1581
    %v8426 = vunpack.c.h.b16 %v1581
    %v8427 = vunpack.c.l.b16 %v1582
    %v8428 = vunpack.c.h.b16 %v1582
    %v8429 = vunpack.c.l.b16 %v1583
    %v8430 = vunpack.c.h.b16 %v1583
    %v8431 = vunpack.c.l.b16 %v1584
    %v8432 = vunpack.c.h.b16 %v1584
    %v8433 = vunpack.c.l.b16 %v1585
    %v8434 = vunpack.c.h.b16 %v1585
    %v8435 = vunpack.c.l.b16 %v1586
    %v8436 = vunpack.c.h.b16 %v1586
    %v8437 = vunpack.c.l.b16 %v1587
    %v8438 = vunpack.c.h.b16 %v1587
    %v8439 = vunpack.c.l.b16 %v1588
    %v8440 = vunpack.c.h.b16 %v1588
    %v8441 = vunpack.c.l.b16 %v1589
    %v8442 = vunpack.c.h.b16 %v1589
    %v8443 = vunpack.c.l.b16 %v1590
    %v8444 = vunpack.c.h.b16 %v1590
    %v8445 = vunpack.c.l.b16 %v1591
    %v8446 = vunpack.c.h.b16 %v1591
    %v8447 = vunpack.c.l.b16 %v1592
    %v8448 = vunpack.c.h.b16 %v1592
    %v8449 = vunpack.c.l.b16 %v1593
    %v8450 = vunpack.c.h.b16 %v1593
    %v8451 = vunpack.c.l.b16 %v1594
    %v8452 = vunpack.c.h.b16 %v1594
    %v8453 = vunpack.c.l.b16 %v1595
    %v8454 = vunpack.c.h.b16 %v1595
    %v8455 = vunpack.c.l.b16 %v1596
    %v8456 = vunpack.c.h.b16 %v1596
    %v8457 = vunpack.c.l.b16 %v1597
    %v8458 = vunpack.c.h.b16 %v1597
    %v8459 = vunpack.c.l.b16 %v1598
    %v8460 = vunpack.c.h.b16 %v1598
    %v8461 = vunpack.c.l.b16 %v1599
    %v8462 = vunpack.c.h.b16 %v1599
    %v8463 = vunpack.c.l.b16 %v1600
    %v8464 = vunpack.c.h.b16 %v1600
    %v8465 = vunpack.c.l.b16 %v1601
    %v8466 = vunpack.c.h.b16 %v1601
    %v8467 = vunpack.c.l.b16 %v1602
    %v8468 = vunpack.c.h.b16 %v1602
    %v8469 = vunpack.c.l.b16 %v1603
    %v8470 = vunpack.c.h.b16 %v1603
    %v8471 = vunpack.c.l.b16 %v1604
    %v8472 = vunpack.c.h.b16 %v1604
    %v8473 = vunpack.c.l.b16 %v1605
    %v8474 = vunpack.c.h.b16 %v1605
    %v8475 = vunpack.c.l.b16 %v1606
    %v8476 = vunpack.c.h.b16 %v1606
    %v8477 = vunpack.c.l.b16 %v1607
    %v8478 = vunpack.c.h.b16 %v1607
    %v8479 = vunpack.c.l.b16 %v1608
    %v8480 = vunpack.c.h.b16 %v1608
    %v8481 = vunpack.c.l.b16 %v1609
    %v8482 = vunpack.c.h.b16 %v1609
    %v8483 = vunpack.c.l.b16 %v1610
    %v8484 = vunpack.c.h.b16 %v1610
    %v8485 = vunpack.c.l.b16 %v1611
    %v8486 = vunpack.c.h.b16 %v1611
    %v8487 = vunpack.c.l.b16 %v1612
    %v8488 = vunpack.c.h.b16 %v1612
    %v8489 = vunpack.c.l.b16 %v1613
    %v8490 = vunpack.c.h.b16 %v1613
    %v8491 = vunpack.c.l.b16 %v1614
    %v8492 = vunpack.c.h.b16 %v1614
    %v8493 = vunpack.c.l.b16 %v1615
    %v8494 = vunpack.c.h.b16 %v1615
    %v8495 = vunpack.c.l.b16 %v1616
    %v8496 = vunpack.c.h.b16 %v1616
    %v8497 = vunpack.c.l.b16 %v1617
    %v8498 = vunpack.c.h.b16 %v1617
    %v8499 = vunpack.c.l.b16 %v1618
    %v8500 = vunpack.c.h.b16 %v1618
    %v8501 = vunpack.c.l.b16 %v1619
    %v8502 = vunpack.c.h.b16 %v1619
    %v8503 = vunpack.c.l.b16 %v1620
    %v8504 = vunpack.c.h.b16 %v1620
    %v8505 = vunpack.c.l.b16 %v1621
    %v8506 = vunpack.c.h.b16 %v1621
    %v8507 = vunpack.c.l.b16 %v1622
    %v8508 = vunpack.c.h.b16 %v1622
    %v8509 = vunpack.c.l.b16 %v1623
    %v8510 = vunpack.c.h.b16 %v1623
    %v8511 = vunpack.c.l.b16 %v1624
    %v8512 = vunpack.c.h.b16 %v1624
    %v8513 = vunpack.c.l.b16 %v1625
    %v8514 = vunpack.c.h.b16 %v1625
    %v8515 = vunpack.c.l.b16 %v1626
    %v8516 = vunpack.c.h.b16 %v1626
    %v8517 = vunpack.c.l.b16 %v1627
    %v8518 = vunpack.c.h.b16 %v1627
    %v8519 = vunpack.c.l.b16 %v1628
    %v8520 = vunpack.c.h.b16 %v1628
    %v8521 = vunpack.c.l.b16 %v1629
    %v8522 = vunpack.c.h.b16 %v1629
    %v8523 = vunpack.c.l.b16 %v1630
    %v8524 = vunpack.c.h.b16 %v1630
    %v8525 = vunpack.c.l.b16 %v1631
    %v8526 = vunpack.c.h.b16 %v1631
    %v8527 = vunpack.c.l.b16 %v1632
    %v8528 = vunpack.c.h.b16 %v1632
    %v8529 = vunpack.c.l.b16 %v1633
    %v8530 = vunpack.c.h.b16 %v1633
    %v8531 = vunpack.c.l.b16 %v1634
    %v8532 = vunpack.c.h.b16 %v1634
    %v8533 = vunpack.c.l.b16 %v1635
    %v8534 = vunpack.c.h.b16 %v1635
    %v8535 = vunpack.c.l.b16 %v1636
    %v8536 = vunpack.c.h.b16 %v1636
    %v8537 = vunpack.c.l.b16 %v1637
    %v8538 = vunpack.c.h.b16 %v1637
    %v8539 = vunpack.c.l.b16 %v1638
    %v8540 = vunpack.c.h.b16 %v1638
    %v8541 = vunpack.c.l.b16 %v1639
    %v8542 = vunpack.c.h.b16 %v1639
    %v8543 = vunpack.c.l.b16 %v1640
    %v8544 = vunpack.c.h.b16 %v1640
    %v8545 = vunpack.c.l.b16 %v1641
    %v8546 = vunpack.c.h.b16 %v1641
    %v8547 = vunpack.c.l.b16 %v1642
    %v8548 = vunpack.c.h.b16 %v1642
    %v8549 = vunpack.c.l.b16 %v1643
    %v8550 = vunpack.c.h.b16 %v1643
    %v8551 = vunpack.c.l.b16 %v1644
    %v8552 = vunpack.c.h.b16 %v1644
    %v8553 = vunpack.c.l.b16 %v1645
    %v8554 = vunpack.c.h.b16 %v1645
    %v8555 = vunpack.c.l.b16 %v1646
    %v8556 = vunpack.c.h.b16 %v1646
    %v8557 = vunpack.c.l.b16 %v1647
    %v8558 = vunpack.c.h.b16 %v1647
    %v8559 = vunpack.c.l.b16 %v1648
    %v8560 = vunpack.c.h.b16 %v1648
    %v8561 = vunpack.c.l.b16 %v1649
    %v8562 = vunpack.c.h.b16 %v1649
    %v8563 = vunpack.c.l.b16 %v1650
    %v8564 = vunpack.c.h.b16 %v1650
    %v8565 = vunpack.c.l.b16 %v1651
    %v8566 = vunpack.c.h.b16 %v1651
    %v8567 = vunpack.c.l.b16 %v1652
    %v8568 = vunpack.c.h.b16 %v1652
    %v8569 = vunpack.c.l.b16 %v1653
    %v8570 = vunpack.c.h.b16 %v1653
    %v8571 = vunpack.c.l.b16 %v1654
    %v8572 = vunpack.c.h.b16 %v1654
    %v8573 = vunpack.c.l.b16 %v1655
    %v8574 = vunpack.c.h.b16 %v1655
    %v8575 = vunpack.c.l.b16 %v1656
    %v8576 = vunpack.c.h.b16 %v1656
    %v8577 = vunpack.c.l.b16 %v1657
    %v8578 = vunpack.c.h.b16 %v1657
    %v8579 = vunpack.c.l.b16 %v1658
    %v8580 = vunpack.c.h.b16 %v1658
    %v8581 = vunpack.c.l.b16 %v1659
    %v8582 = vunpack.c.h.b16 %v1659
    %v8583 = vunpack.c.l.b16 %v1660
    %v8584 = vunpack.c.h.b16 %v1660
    %v8585 = vunpack.c.l.b16 %v1661
    %v8586 = vunpack.c.h.b16 %v1661
    %v8587 = vunpack.c.l.b16 %v1662
    %v8588 = vunpack.c.h.b16 %v1662
    %v8589 = vunpack.c.l.b16 %v1663
    %v8590 = vunpack.c.h.b16 %v1663
    %v8591 = vunpack.c.l.b16 %v1664
    %v8592 = vunpack.c.h.b16 %v1664
    %v8593 = vunpack.c.l.b16 %v1665
    %v8594 = vunpack.c.h.b16 %v1665
    %v8595 = vunpack.c.l.b16 %v1666
    %v8596 = vunpack.c.h.b16 %v1666
    %v8597 = vunpack.c.l.b16 %v1667
    %v8598 = vunpack.c.h.b16 %v1667
    %v8599 = vunpack.c.l.b16 %v1668
    %v8600 = vunpack.c.h.b16 %v1668
    %v8601 = vunpack.c.l.b16 %v1669
    %v8602 = vunpack.c.h.b16 %v1669
    %v8603 = vunpack.c.l.b16 %v1670
    %v8604 = vunpack.c.h.b16 %v1670
    %v8605 = vunpack.c.l.b16 %v1671
    %v8606 = vunpack.c.h.b16 %v1671
    %v8607 = vunpack.c.l.b16 %v1672
    %v8608 = vunpack.c.h.b16 %v1672
    %v8609 = vunpack.c.l.b16 %v1673
    %v8610 = vunpack.c.h.b16 %v1673
    %v8611 = vunpack.c.l.b16 %v1674
    %v8612 = vunpack.c.h.b16 %v1674
    %v8613 = vpack.c.b16 %v6573, %v6565
    %v8614 = vpack.c.b16 %v6574, %v6566
    %v8615 = vpack.c.b16 %v6575, %v6567
    %v8616 = vpack.c.b16 %v6576, %v6568
    %v8617 = vpack.c.b16 %v6577, %v6569
    %v8618 = vpack.c.b16 %v6578, %v6570
    %v8619 = vpack.c.b16 %v6579, %v6571
    %v8620 = vpack.c.b16 %v6580, %v6572
    %v8621 = vpack.c.b16 %v6589, %v6581
    %v8622 = vpack.c.b16 %v6590, %v6582
    %v8623 = vpack.c.b16 %v6591, %v6583
    %v8624 = vpack.c.b16 %v6592, %v6584
    %v8625 = vpack.c.b16 %v6593, %v6585
    %v8626 = vpack.c.b16 %v6594, %v6586
    %v8627 = vpack.c.b16 %v6595, %v6587
    %v8628 = vpack.c.b16 %v6596, %v6588
    %v8629 = vpack.c.b16 %v6605, %v6597
    %v8630 = vpack.c.b16 %v6606, %v6598
    %v8631 = vpack.c.b16 %v6607, %v6599
    %v8632 = vpack.c.b16 %v6608, %v6600
    %v8633 = vpack.c.b16 %v6609, %v6601
    %v8634 = vpack.c.b16 %v6610, %v6602
    %v8635 = vpack.c.b16 %v6611, %v6603
    %v8636 = vpack.c.b16 %v6612, %v6604
    %v8637 = vpack.c.b16 %v6621, %v6613
    %v8638 = vpack.c.b16 %v6622, %v6614
    %v8639 = vpack.c.b16 %v6623, %v6615
    %v8640 = vpack.c.b16 %v6624, %v6616
    %v8641 = vpack.c.b16 %v6625, %v6617
    %v8642 = vpack.c.b16 %v6626, %v6618
    %v8643 = vpack.c.b16 %v6627, %v6619
    %v8644 = vpack.c.b16 %v6628, %v6620
    %v8645 = vpack.c.b16 %v6637, %v6629
    %v8646 = vpack.c.b16 %v6638, %v6630
    %v8647 = vpack.c.b16 %v6639, %v6631
    %v8648 = vpack.c.b16 %v6640, %v6632
    %v8649 = vpack.c.b16 %v6641, %v6633
    %v8650 = vpack.c.b16 %v6642, %v6634
    %v8651 = vpack.c.b16 %v6643, %v6635
    %v8652 = vpack.c.b16 %v6644, %v6636
    %v8653 = vpack.c.b16 %v6653, %v6645
    %v8654 = vpack.c.b16 %v6654, %v6646
    %v8655 = vpack.c.b16 %v6655, %v6647
    %v8656 = vpack.c.b16 %v6656, %v6648
    %v8657 = vpack.c.b16 %v6657, %v6649
    %v8658 = vpack.c.b16 %v6658, %v6650
    %v8659 = vpack.c.b16 %v6659, %v6651
    %v8660 = vpack.c.b16 %v6660, %v6652
    %v8661 = vpack.c.b16 %v6669, %v6661
    %v8662 = vpack.c.b16 %v6670, %v6662
    %v8663 = vpack.c.b16 %v6671, %v6663
    %v8664 = vpack.c.b16 %v6672, %v6664
    %v8665 = vpack.c.b16 %v6673, %v6665
    %v8666 = vpack.c.b16 %v6674, %v6666
    %v8667 = vpack.c.b16 %v6675, %v6667
    %v8668 = vpack.c.b16 %v6676, %v6668
    %v8669 = vpack.c.b16 %v6685, %v6677
    %v8670 = vpack.c.b16 %v6686, %v6678
    %v8671 = vpack.c.b16 %v6687, %v6679
    %v8672 = vpack.c.b16 %v6688, %v6680
    %v8673 = vpack.c.b16 %v6689, %v6681
    %v8674 = vpack.c.b16 %v6690, %v6682
    %v8675 = vpack.c.b16 %v6691, %v6683
    %v8676 = vpack.c.b16 %v6692, %v6684
    %v8677 = vpack.c.b16 %v6701, %v6693
    %v8678 = vpack.c.b16 %v6702, %v6694
    %v8679 = vpack.c.b16 %v6703, %v6695
    %v8680 = vpack.c.b16 %v6704, %v6696
    %v8681 = vpack.c.b16 %v6705, %v6697
    %v8682 = vpack.c.b16 %v6706, %v6698
    %v8683 = vpack.c.b16 %v6707, %v6699
    %v8684 = vpack.c.b16 %v6708, %v6700
    %v8685 = vpack.c.b16 %v6717, %v6709
    %v8686 = vpack.c.b16 %v6718, %v6710
    %v8687 = vpack.c.b16 %v6719, %v6711
    %v8688 = vpack.c.b16 %v6720, %v6712
    %v8689 = vpack.c.b16 %v6721, %v6713
    %v8690 = vpack.c.b16 %v6722, %v6714
    %v8691 = vpack.c.b16 %v6723, %v6715
    %v8692 = vpack.c.b16 %v6724, %v6716
    %v8693 = vpack.c.b16 %v6733, %v6725
    %v8694 = vpack.c.b16 %v6734, %v6726
    %v8695 = vpack.c.b16 %v6735, %v6727
    %v8696 = vpack.c.b16 %v6736, %v6728
    %v8697 = vpack.c.b16 %v6737, %v6729
    %v8698 = vpack.c.b16 %v6738, %v6730
    %v8699 = vpack.c.b16 %v6739, %v6731
    %v8700 = vpack.c.b16 %v6740, %v6732
    %v8701 = vpack.c.b16 %v6749, %v6741
    %v8702 = vpack.c.b16 %v6750, %v6742
    %v8703 = vpack.c.b16 %v6751, %v6743
    %v8704 = vpack.c.b16 %v6752, %v6744
    %v8705 = vpack.c.b16 %v6753, %v6745
    %v8706 = vpack.c.b16 %v6754, %v6746
    %v8707 = vpack.c.b16 %v6755, %v6747
    %v8708 = vpack.c.b16 %v6756, %v6748
    %v8709 = vpack.c.b16 %v6765, %v6757
    %v8710 = vpack.c.b16 %v6766, %v6758
    %v8711 = vpack.c.b16 %v6767, %v6759
    %v8712 = vpack.c.b16 %v6768, %v6760
    %v8713 = vpack.c.b16 %v6769, %v6761
    %v8714 = vpack.c.b16 %v6770, %v6762
    %v8715 = vpack.c.b16 %v6771, %v6763
    %v8716 = vpack.c.b16 %v6772, %v6764
    %v8717 = vpack.c.b16 %v6781, %v6773
    %v8718 = vpack.c.b16 %v6782, %v6774
    %v8719 = vpack.c.b16 %v6783, %v6775
    %v8720 = vpack.c.b16 %v6784, %v6776
    %v8721 = vpack.c.b16 %v6785, %v6777
    %v8722 = vpack.c.b16 %v6786, %v6778
    %v8723 = vpack.c.b16 %v6787, %v6779
    %v8724 = vpack.c.b16 %v6788, %v6780
    %v8725 = vpack.c.b16 %v6797, %v6789
    %v8726 = vpack.c.b16 %v6798, %v6790
    %v8727 = vpack.c.b16 %v6799, %v6791
    %v8728 = vpack.c.b16 %v6800, %v6792
    %v8729 = vpack.c.b16 %v6801, %v6793
    %v8730 = vpack.c.b16 %v6802, %v6794
    %v8731 = vpack.c.b16 %v6803, %v6795
    %v8732 = vpack.c.b16 %v6804, %v6796
    %v8733 = vpack.c.b16 %v6813, %v6805
    %v8734 = vpack.c.b16 %v6814, %v6806
    %v8735 = vpack.c.b16 %v6815, %v6807
    %v8736 = vpack.c.b16 %v6816, %v6808
    %v8737 = vpack.c.b16 %v6817, %v6809
    %v8738 = vpack.c.b16 %v6818, %v6810
    %v8739 = vpack.c.b16 %v6819, %v6811
    %v8740 = vpack.c.b16 %v6820, %v6812
    %v8741 = vpack.c.b16 %v6829, %v6821
    %v8742 = vpack.c.b16 %v6830, %v6822
    %v8743 = vpack.c.b16 %v6831, %v6823
    %v8744 = vpack.c.b16 %v6832, %v6824
    %v8745 = vpack.c.b16 %v6833, %v6825
    %v8746 = vpack.c.b16 %v6834, %v6826
    %v8747 = vpack.c.b16 %v6835, %v6827
    %v8748 = vpack.c.b16 %v6836, %v6828
    %v8749 = vpack.c.b16 %v6845, %v6837
    %v8750 = vpack.c.b16 %v6846, %v6838
    %v8751 = vpack.c.b16 %v6847, %v6839
    %v8752 = vpack.c.b16 %v6848, %v6840
    %v8753 = vpack.c.b16 %v6849, %v6841
    %v8754 = vpack.c.b16 %v6850, %v6842
    %v8755 = vpack.c.b16 %v6851, %v6843
    %v8756 = vpack.c.b16 %v6852, %v6844
    %v8757 = vpack.c.b16 %v6861, %v6853
    %v8758 = vpack.c.b16 %v6862, %v6854
    %v8759 = vpack.c.b16 %v6863, %v6855
    %v8760 = vpack.c.b16 %v6864, %v6856
    %v8761 = vpack.c.b16 %v6865, %v6857
    %v8762 = vpack.c.b16 %v6866, %v6858
    %v8763 = vpack.c.b16 %v6867, %v6859
    %v8764 = vpack.c.b16 %v6868, %v6860
    %v8765 = vpack.c.b16 %v6877, %v6869
    %v8766 = vpack.c.b16 %v6878, %v6870
    %v8767 = vpack.c.b16 %v6879, %v6871
    %v8768 = vpack.c.b16 %v6880, %v6872
    %v8769 = vpack.c.b16 %v6881, %v6873
    %v8770 = vpack.c.b16 %v6882, %v6874
    %v8771 = vpack.c.b16 %v6883, %v6875
    %v8772 = vpack.c.b16 %v6884, %v6876
    %v8773 = vpack.c.b16 %v6893, %v6885
    %v8774 = vpack.c.b16 %v6894, %v6886
    %v8775 = vpack.c.b16 %v6895, %v6887
    %v8776 = vpack.c.b16 %v6896, %v6888
    %v8777 = vpack.c.b16 %v6897, %v6889
    %v8778 = vpack.c.b16 %v6898, %v6890
    %v8779 = vpack.c.b16 %v6899, %v6891
    %v8780 = vpack.c.b16 %v6900, %v6892
    %v8781 = vpack.c.b16 %v6909, %v6901
    %v8782 = vpack.c.b16 %v6910, %v6902
    %v8783 = vpack.c.b16 %v6911, %v6903
    %v8784 = vpack.c.b16 %v6912, %v6904
    %v8785 = vpack.c.b16 %v6913, %v6905
    %v8786 = vpack.c.b16 %v6914, %v6906
    %v8787 = vpack.c.b16 %v6915, %v6907
    %v8788 = vpack.c.b16 %v6916, %v6908
    %v8789 = vpack.c.b16 %v6925, %v6917
    %v8790 = vpack.c.b16 %v6926, %v6918
    %v8791 = vpack.c.b16 %v6927, %v6919
    %v8792 = vpack.c.b16 %v6928, %v6920
    %v8793 = vpack.c.b16 %v6929, %v6921
    %v8794 = vpack.c.b16 %v6930, %v6922
    %v8795 = vpack.c.b16 %v6931, %v6923
    %v8796 = vpack.c.b16 %v6932, %v6924
    %v8797 = vpack.c.b16 %v6941, %v6933
    %v8798 = vpack.c.b16 %v6942, %v6934
    %v8799 = vpack.c.b16 %v6943, %v6935
    %v8800 = vpack.c.b16 %v6944, %v6936
    %v8801 = vpack.c.b16 %v6945, %v6937
    %v8802 = vpack.c.b16 %v6946, %v6938
    %v8803 = vpack.c.b16 %v6947, %v6939
    %v8804 = vpack.c.b16 %v6948, %v6940
    %v8805 = vpack.c.b16 %v6957, %v6949
    %v8806 = vpack.c.b16 %v6958, %v6950
    %v8807 = vpack.c.b16 %v6959, %v6951
    %v8808 = vpack.c.b16 %v6960, %v6952
    %v8809 = vpack.c.b16 %v6961, %v6953
    %v8810 = vpack.c.b16 %v6962, %v6954
    %v8811 = vpack.c.b16 %v6963, %v6955
    %v8812 = vpack.c.b16 %v6964, %v6956
    %v8813 = vpack.c.b16 %v6973, %v6965
    %v8814 = vpack.c.b16 %v6974, %v6966
    %v8815 = vpack.c.b16 %v6975, %v6967
    %v8816 = vpack.c.b16 %v6976, %v6968
    %v8817 = vpack.c.b16 %v6977, %v6969
    %v8818 = vpack.c.b16 %v6978, %v6970
    %v8819 = vpack.c.b16 %v6979, %v6971
    %v8820 = vpack.c.b16 %v6980, %v6972
    %v8821 = vpack.c.b16 %v6989, %v6981
    %v8822 = vpack.c.b16 %v6990, %v6982
    %v8823 = vpack.c.b16 %v6991, %v6983
    %v8824 = vpack.c.b16 %v6992, %v6984
    %v8825 = vpack.c.b16 %v6993, %v6985
    %v8826 = vpack.c.b16 %v6994, %v6986
    %v8827 = vpack.c.b16 %v6995, %v6987
    %v8828 = vpack.c.b16 %v6996, %v6988
    %v8829 = vpack.c.b16 %v7005, %v6997
    %v8830 = vpack.c.b16 %v7006, %v6998
    %v8831 = vpack.c.b16 %v7007, %v6999
    %v8832 = vpack.c.b16 %v7008, %v7000
    %v8833 = vpack.c.b16 %v7009, %v7001
    %v8834 = vpack.c.b16 %v7010, %v7002
    %v8835 = vpack.c.b16 %v7011, %v7003
    %v8836 = vpack.c.b16 %v7012, %v7004
    %v8837 = vpack.c.b16 %v7021, %v7013
    %v8838 = vpack.c.b16 %v7022, %v7014
    %v8839 = vpack.c.b16 %v7023, %v7015
    %v8840 = vpack.c.b16 %v7024, %v7016
    %v8841 = vpack.c.b16 %v7025, %v7017
    %v8842 = vpack.c.b16 %v7026, %v7018
    %v8843 = vpack.c.b16 %v7027, %v7019
    %v8844 = vpack.c.b16 %v7028, %v7020
    %v8845 = vpack.c.b16 %v7037, %v7029
    %v8846 = vpack.c.b16 %v7038, %v7030
    %v8847 = vpack.c.b16 %v7039, %v7031
    %v8848 = vpack.c.b16 %v7040, %v7032
    %v8849 = vpack.c.b16 %v7041, %v7033
    %v8850 = vpack.c.b16 %v7042, %v7034
    %v8851 = vpack.c.b16 %v7043, %v7035
    %v8852 = vpack.c.b16 %v7044, %v7036
    %v8853 = vpack.c.b16 %v7053, %v7045
    %v8854 = vpack.c.b16 %v7054, %v7046
    %v8855 = vpack.c.b16 %v7055, %v7047
    %v8856 = vpack.c.b16 %v7056, %v7048
    %v8857 = vpack.c.b16 %v7057, %v7049
    %v8858 = vpack.c.b16 %v7058, %v7050
    %v8859 = vpack.c.b16 %v7059, %v7051
    %v8860 = vpack.c.b16 %v7060, %v7052
    %v8861 = vpack.c.b16 %v7069, %v7061
    %v8862 = vpack.c.b16 %v7070, %v7062
    %v8863 = vpack.c.b16 %v7071, %v7063
    %v8864 = vpack.c.b16 %v7072, %v7064
    %v8865 = vpack.c.b16 %v7073, %v7065
    %v8866 = vpack.c.b16 %v7074, %v7066
    %v8867 = vpack.c.b16 %v7075, %v7067
    %v8868 = vpack.c.b16 %v7076, %v7068
    %v8869 = vpack.c.b16 %v7085, %v7077
    %v8870 = vpack.c.b16 %v7086, %v7078
    %v8871 = vpack.c.b16 %v7087, %v7079
    %v8872 = vpack.c.b16 %v7088, %v7080
    %v8873 = vpack.c.b16 %v7089, %v7081
    %v8874 = vpack.c.b16 %v7090, %v7082
    %v8875 = vpack.c.b16 %v7091, %v7083
    %v8876 = vpack.c.b16 %v7092, %v7084
    %v8877 = vpack.c.b16 %v7101, %v7093
    %v8878 = vpack.c.b16 %v7102, %v7094
    %v8879 = vpack.c.b16 %v7103, %v7095
    %v8880 = vpack.c.b16 %v7104, %v7096
    %v8881 = vpack.c.b16 %v7105, %v7097
    %v8882 = vpack.c.b16 %v7106, %v7098
    %v8883 = vpack.c.b16 %v7107, %v7099
    %v8884 = vpack.c.b16 %v7108, %v7100
    %v8885 = vpack.c.b16 %v7117, %v7109
    %v8886 = vpack.c.b16 %v7118, %v7110
    %v8887 = vpack.c.b16 %v7119, %v7111
    %v8888 = vpack.c.b16 %v7120, %v7112
    %v8889 = vpack.c.b16 %v7121, %v7113
    %v8890 = vpack.c.b16 %v7122, %v7114
    %v8891 = vpack.c.b16 %v7123, %v7115
    %v8892 = vpack.c.b16 %v7124, %v7116
    %v8893 = vpack.c.b16 %v7133, %v7125
    %v8894 = vpack.c.b16 %v7134, %v7126
    %v8895 = vpack.c.b16 %v7135, %v7127
    %v8896 = vpack.c.b16 %v7136, %v7128
    %v8897 = vpack.c.b16 %v7137, %v7129
    %v8898 = vpack.c.b16 %v7138, %v7130
    %v8899 = vpack.c.b16 %v7139, %v7131
    %v8900 = vpack.c.b16 %v7140, %v7132
    %v8901 = vpack.c.b16 %v7149, %v7141
    %v8902 = vpack.c.b16 %v7150, %v7142
    %v8903 = vpack.c.b16 %v7151, %v7143
    %v8904 = vpack.c.b16 %v7152, %v7144
    %v8905 = vpack.c.b16 %v7153, %v7145
    %v8906 = vpack.c.b16 %v7154, %v7146
    %v8907 = vpack.c.b16 %v7155, %v7147
    %v8908 = vpack.c.b16 %v7156, %v7148
    %v8909 = vpack.c.b16 %v7165, %v7157
    %v8910 = vpack.c.b16 %v7166, %v7158
    %v8911 = vpack.c.b16 %v7167, %v7159
    %v8912 = vpack.c.b16 %v7168, %v7160
    %v8913 = vpack.c.b16 %v7169, %v7161
    %v8914 = vpack.c.b16 %v7170, %v7162
    %v8915 = vpack.c.b16 %v7171, %v7163
    %v8916 = vpack.c.b16 %v7172, %v7164
    %v8917 = vpack.c.b16 %v7181, %v7173
    %v8918 = vpack.c.b16 %v7182, %v7174
    %v8919 = vpack.c.b16 %v7183, %v7175
    %v8920 = vpack.c.b16 %v7184, %v7176
    %v8921 = vpack.c.b16 %v7185, %v7177
    %v8922 = vpack.c.b16 %v7186, %v7178
    %v8923 = vpack.c.b16 %v7187, %v7179
    %v8924 = vpack.c.b16 %v7188, %v7180
    %v8925 = vpack.c.b16 %v7197, %v7189
    %v8926 = vpack.c.b16 %v7198, %v7190
    %v8927 = vpack.c.b16 %v7199, %v7191
    %v8928 = vpack.c.b16 %v7200, %v7192
    %v8929 = vpack.c.b16 %v7201, %v7193
    %v8930 = vpack.c.b16 %v7202, %v7194
    %v8931 = vpack.c.b16 %v7203, %v7195
    %v8932 = vpack.c.b16 %v7204, %v7196
    %v8933 = vpack.c.b16 %v7213, %v7205
    %v8934 = vpack.c.b16 %v7214, %v7206
    %v8935 = vpack.c.b16 %v7215, %v7207
    %v8936 = vpack.c.b16 %v7216, %v7208
    %v8937 = vpack.c.b16 %v7217, %v7209
    %v8938 = vpack.c.b16 %v7218, %v7210
    %v8939 = vpack.c.b16 %v7219, %v7211
    %v8940 = vpack.c.b16 %v7220, %v7212
    %v8941 = vpack.c.b16 %v7229, %v7221
    %v8942 = vpack.c.b16 %v7230, %v7222
    %v8943 = vpack.c.b16 %v7231, %v7223
    %v8944 = vpack.c.b16 %v7232, %v7224
    %v8945 = vpack.c.b16 %v7233, %v7225
    %v8946 = vpack.c.b16 %v7234, %v7226
    %v8947 = vpack.c.b16 %v7235, %v7227
    %v8948 = vpack.c.b16 %v7236, %v7228
    %v8949 = vpack.c.b16 %v7245, %v7237
    %v8950 = vpack.c.b16 %v7246, %v7238
    %v8951 = vpack.c.b16 %v7247, %v7239
    %v8952 = vpack.c.b16 %v7248, %v7240
    %v8953 = vpack.c.b16 %v7249, %v7241
    %v8954 = vpack.c.b16 %v7250, %v7242
    %v8955 = vpack.c.b16 %v7251, %v7243
    %v8956 = vpack.c.b16 %v7252, %v7244
    %v8957 = vpack.c.b16 %v7261, %v7253
    %v8958 = vpack.c.b16 %v7262, %v7254
    %v8959 = vpack.c.b16 %v7263, %v7255
    %v8960 = vpack.c.b16 %v7264, %v7256
    %v8961 = vpack.c.b16 %v7265, %v7257
    %v8962 = vpack.c.b16 %v7266, %v7258
    %v8963 = vpack.c.b16 %v7267, %v7259
    %v8964 = vpack.c.b16 %v7268, %v7260
    %v8965 = vpack.c.b16 %v7277, %v7269
    %v8966 = vpack.c.b16 %v7278, %v7270
    %v8967 = vpack.c.b16 %v7279, %v7271
    %v8968 = vpack.c.b16 %v7280, %v7272
    %v8969 = vpack.c.b16 %v7281, %v7273
    %v8970 = vpack.c.b16 %v7282, %v7274
    %v8971 = vpack.c.b16 %v7283, %v7275
    %v8972 = vpack.c.b16 %v7284, %v7276
    %v8973 = vpack.c.b16 %v7293, %v7285
    %v8974 = vpack.c.b16 %v7294, %v7286
    %v8975 = vpack.c.b16 %v7295, %v7287
    %v8976 = vpack.c.b16 %v7296, %v7288
    %v8977 = vpack.c.b16 %v7297, %v7289
    %v8978 = vpack.c.b16 %v7298, %v7290
    %v8979 = vpack.c.b16 %v7299, %v7291
    %v8980 = vpack.c.b16 %v7300, %v7292
    %v8981 = vpack.c.b16 %v7309, %v7301
    %v8982 = vpack.c.b16 %v7310, %v7302
    %v8983 = vpack.c.b16 %v7311, %v7303
    %v8984 = vpack.c.b16 %v7312, %v7304
    %v8985 = vpack.c.b16 %v7313, %v7305
    %v8986 = vpack.c.b16 %v7314, %v7306
    %v8987 = vpack.c.b16 %v7315, %v7307
    %v8988 = vpack.c.b16 %v7316, %v7308
    %v8989 = vpack.c.b16 %v7325, %v7317
    %v8990 = vpack.c.b16 %v7326, %v7318
    %v8991 = vpack.c.b16 %v7327, %v7319
    %v8992 = vpack.c.b16 %v7328, %v7320
    %v8993 = vpack.c.b16 %v7329, %v7321
    %v8994 = vpack.c.b16 %v7330, %v7322
    %v8995 = vpack.c.b16 %v7331, %v7323
    %v8996 = vpack.c.b16 %v7332, %v7324
    %v8997 = vpack.c.b16 %v7341, %v7333
    %v8998 = vpack.c.b16 %v7342, %v7334
    %v8999 = vpack.c.b16 %v7343, %v7335
    %v9000 = vpack.c.b16 %v7344, %v7336
    %v9001 = vpack.c.b16 %v7345, %v7337
    %v9002 = vpack.c.b16 %v7346, %v7338
    %v9003 = vpack.c.b16 %v7347, %v7339
    %v9004 = vpack.c.b16 %v7348, %v7340
    %v9005 = vpack.c.b16 %v7357, %v7349
    %v9006 = vpack.c.b16 %v7358, %v7350
    %v9007 = vpack.c.b16 %v7359, %v7351
    %v9008 = vpack.c.b16 %v7360, %v7352
    %v9009 = vpack.c.b16 %v7361, %v7353
    %v9010 = vpack.c.b16 %v7362, %v7354
    %v9011 = vpack.c.b16 %v7363, %v7355
    %v9012 = vpack.c.b16 %v7364, %v7356
    %v9013 = vpack.c.b16 %v7373, %v7365
    %v9014 = vpack.c.b16 %v7374, %v7366
    %v9015 = vpack.c.b16 %v7375, %v7367
    %v9016 = vpack.c.b16 %v7376, %v7368
    %v9017 = vpack.c.b16 %v7377, %v7369
    %v9018 = vpack.c.b16 %v7378, %v7370
    %v9019 = vpack.c.b16 %v7379, %v7371
    %v9020 = vpack.c.b16 %v7380, %v7372
    %v9021 = vpack.c.b16 %v7389, %v7381
    %v9022 = vpack.c.b16 %v7390, %v7382
    %v9023 = vpack.c.b16 %v7391, %v7383
    %v9024 = vpack.c.b16 %v7392, %v7384
    %v9025 = vpack.c.b16 %v7393, %v7385
    %v9026 = vpack.c.b16 %v7394, %v7386
    %v9027 = vpack.c.b16 %v7395, %v7387
    %v9028 = vpack.c.b16 %v7396, %v7388
    %v9029 = vpack.c.b16 %v7405, %v7397
    %v9030 = vpack.c.b16 %v7406, %v7398
    %v9031 = vpack.c.b16 %v7407, %v7399
    %v9032 = vpack.c.b16 %v7408, %v7400
    %v9033 = vpack.c.b16 %v7409, %v7401
    %v9034 = vpack.c.b16 %v7410, %v7402
    %v9035 = vpack.c.b16 %v7411, %v7403
    %v9036 = vpack.c.b16 %v7412, %v7404
    %v9037 = vpack.c.b16 %v7421, %v7413
    %v9038 = vpack.c.b16 %v7422, %v7414
    %v9039 = vpack.c.b16 %v7423, %v7415
    %v9040 = vpack.c.b16 %v7424, %v7416
    %v9041 = vpack.c.b16 %v7425, %v7417
    %v9042 = vpack.c.b16 %v7426, %v7418
    %v9043 = vpack.c.b16 %v7427, %v7419
    %v9044 = vpack.c.b16 %v7428, %v7420
    %v9045 = vpack.c.b16 %v7437, %v7429
    %v9046 = vpack.c.b16 %v7438, %v7430
    %v9047 = vpack.c.b16 %v7439, %v7431
    %v9048 = vpack.c.b16 %v7440, %v7432
    %v9049 = vpack.c.b16 %v7441, %v7433
    %v9050 = vpack.c.b16 %v7442, %v7434
    %v9051 = vpack.c.b16 %v7443, %v7435
    %v9052 = vpack.c.b16 %v7444, %v7436
    %v9053 = vpack.c.b16 %v7453, %v7445
    %v9054 = vpack.c.b16 %v7454, %v7446
    %v9055 = vpack.c.b16 %v7455, %v7447
    %v9056 = vpack.c.b16 %v7456, %v7448
    %v9057 = vpack.c.b16 %v7457, %v7449
    %v9058 = vpack.c.b16 %v7458, %v7450
    %v9059 = vpack.c.b16 %v7459, %v7451
    %v9060 = vpack.c.b16 %v7460, %v7452
    %v9061 = vpack.c.b16 %v7469, %v7461
    %v9062 = vpack.c.b16 %v7470, %v7462
    %v9063 = vpack.c.b16 %v7471, %v7463
    %v9064 = vpack.c.b16 %v7472, %v7464
    %v9065 = vpack.c.b16 %v7473, %v7465
    %v9066 = vpack.c.b16 %v7474, %v7466
    %v9067 = vpack.c.b16 %v7475, %v7467
    %v9068 = vpack.c.b16 %v7476, %v7468
    %v9069 = vpack.c.b16 %v7485, %v7477
    %v9070 = vpack.c.b16 %v7486, %v7478
    %v9071 = vpack.c.b16 %v7487, %v7479
    %v9072 = vpack.c.b16 %v7488, %v7480
    %v9073 = vpack.c.b16 %v7489, %v7481
    %v9074 = vpack.c.b16 %v7490, %v7482
    %v9075 = vpack.c.b16 %v7491, %v7483
    %v9076 = vpack.c.b16 %v7492, %v7484
    %v9077 = vpack.c.b16 %v7501, %v7493
    %v9078 = vpack.c.b16 %v7502, %v7494
    %v9079 = vpack.c.b16 %v7503, %v7495
    %v9080 = vpack.c.b16 %v7504, %v7496
    %v9081 = vpack.c.b16 %v7505, %v7497
    %v9082 = vpack.c.b16 %v7506, %v7498
    %v9083 = vpack.c.b16 %v7507, %v7499
    %v9084 = vpack.c.b16 %v7508, %v7500
    %v9085 = vpack.c.b16 %v7517, %v7509
    %v9086 = vpack.c.b16 %v7518, %v7510
    %v9087 = vpack.c.b16 %v7519, %v7511
    %v9088 = vpack.c.b16 %v7520, %v7512
    %v9089 = vpack.c.b16 %v7521, %v7513
    %v9090 = vpack.c.b16 %v7522, %v7514
    %v9091 = vpack.c.b16 %v7523, %v7515
    %v9092 = vpack.c.b16 %v7524, %v7516
    %v9093 = vpack.c.b16 %v7533, %v7525
    %v9094 = vpack.c.b16 %v7534, %v7526
    %v9095 = vpack.c.b16 %v7535, %v7527
    %v9096 = vpack.c.b16 %v7536, %v7528
    %v9097 = vpack.c.b16 %v7537, %v7529
    %v9098 = vpack.c.b16 %v7538, %v7530
    %v9099 = vpack.c.b16 %v7539, %v7531
    %v9100 = vpack.c.b16 %v7540, %v7532
    %v9101 = vpack.c.b16 %v7549, %v7541
    %v9102 = vpack.c.b16 %v7550, %v7542
    %v9103 = vpack.c.b16 %v7551, %v7543
    %v9104 = vpack.c.b16 %v7552, %v7544
    %v9105 = vpack.c.b16 %v7553, %v7545
    %v9106 = vpack.c.b16 %v7554, %v7546
    %v9107 = vpack.c.b16 %v7555, %v7547
    %v9108 = vpack.c.b16 %v7556, %v7548
    %v9109 = vpack.c.b16 %v7565, %v7557
    %v9110 = vpack.c.b16 %v7566, %v7558
    %v9111 = vpack.c.b16 %v7567, %v7559
    %v9112 = vpack.c.b16 %v7568, %v7560
    %v9113 = vpack.c.b16 %v7569, %v7561
    %v9114 = vpack.c.b16 %v7570, %v7562
    %v9115 = vpack.c.b16 %v7571, %v7563
    %v9116 = vpack.c.b16 %v7572, %v7564
    %v9117 = vpack.c.b16 %v7581, %v7573
    %v9118 = vpack.c.b16 %v7582, %v7574
    %v9119 = vpack.c.b16 %v7583, %v7575
    %v9120 = vpack.c.b16 %v7584, %v7576
    %v9121 = vpack.c.b16 %v7585, %v7577
    %v9122 = vpack.c.b16 %v7586, %v7578
    %v9123 = vpack.c.b16 %v7587, %v7579
    %v9124 = vpack.c.b16 %v7588, %v7580
    %v9125 = vpack.c.b16 %v7597, %v7589
    %v9126 = vpack.c.b16 %v7598, %v7590
    %v9127 = vpack.c.b16 %v7599, %v7591
    %v9128 = vpack.c.b16 %v7600, %v7592
    %v9129 = vpack.c.b16 %v7601, %v7593
    %v9130 = vpack.c.b16 %v7602, %v7594
    %v9131 = vpack.c.b16 %v7603, %v7595
    %v9132 = vpack.c.b16 %v7604, %v7596
    %v9133 = vpack.c.b16 %v7613, %v7605
    %v9134 = vpack.c.b16 %v7614, %v7606
    %v9135 = vpack.c.b16 %v7615, %v7607
    %v9136 = vpack.c.b16 %v7616, %v7608
    %v9137 = vpack.c.b16 %v7617, %v7609
    %v9138 = vpack.c.b16 %v7618, %v7610
    %v9139 = vpack.c.b16 %v7619, %v7611
    %v9140 = vpack.c.b16 %v7620, %v7612
    %v9141 = vpack.c.b16 %v7629, %v7621
    %v9142 = vpack.c.b16 %v7630, %v7622
    %v9143 = vpack.c.b16 %v7631, %v7623
    %v9144 = vpack.c.b16 %v7632, %v7624
    %v9145 = vpack.c.b16 %v7633, %v7625
    %v9146 = vpack.c.b16 %v7634, %v7626
    %v9147 = vpack.c.b16 %v7635, %v7627
    %v9148 = vpack.c.b16 %v7636, %v7628
    %v9149 = vpack.c.b16 %v7645, %v7637
    %v9150 = vpack.c.b16 %v7646, %v7638
    %v9151 = vpack.c.b16 %v7647, %v7639
    %v9152 = vpack.c.b16 %v7648, %v7640
    %v9153 = vpack.c.b16 %v7649, %v7641
    %v9154 = vpack.c.b16 %v7650, %v7642
    %v9155 = vpack.c.b16 %v7651, %v7643
    %v9156 = vpack.c.b16 %v7652, %v7644
    %v9157 = vpack.c.b16 %v7661, %v7653
    %v9158 = vpack.c.b16 %v7662, %v7654
    %v9159 = vpack.c.b16 %v7663, %v7655
    %v9160 = vpack.c.b16 %v7664, %v7656
    %v9161 = vpack.c.b16 %v7665, %v7657
    %v9162 = vpack.c.b16 %v7666, %v7658
    %v9163 = vpack.c.b16 %v7667, %v7659
    %v9164 = vpack.c.b16 %v7668, %v7660
    %v9165 = vpack.c.b16 %v7677, %v7669
    %v9166 = vpack.c.b16 %v7678, %v7670
    %v9167 = vpack.c.b16 %v7679, %v7671
    %v9168 = vpack.c.b16 %v7680, %v7672
    %v9169 = vpack.c.b16 %v7681, %v7673
    %v9170 = vpack.c.b16 %v7682, %v7674
    %v9171 = vpack.c.b16 %v7683, %v7675
    %v9172 = vpack.c.b16 %v7684, %v7676
    %v9173 = vpack.c.b16 %v7693, %v7685
    %v9174 = vpack.c.b16 %v7694, %v7686
    %v9175 = vpack.c.b16 %v7695, %v7687
    %v9176 = vpack.c.b16 %v7696, %v7688
    %v9177 = vpack.c.b16 %v7697, %v7689
    %v9178 = vpack.c.b16 %v7698, %v7690
    %v9179 = vpack.c.b16 %v7699, %v7691
    %v9180 = vpack.c.b16 %v7700, %v7692
    %v9181 = vpack.c.b16 %v7709, %v7701
    %v9182 = vpack.c.b16 %v7710, %v7702
    %v9183 = vpack.c.b16 %v7711, %v7703
    %v9184 = vpack.c.b16 %v7712, %v7704
    %v9185 = vpack.c.b16 %v7713, %v7705
    %v9186 = vpack.c.b16 %v7714, %v7706
    %v9187 = vpack.c.b16 %v7715, %v7707
    %v9188 = vpack.c.b16 %v7716, %v7708
    %v9189 = vpack.c.b16 %v7725, %v7717
    %v9190 = vpack.c.b16 %v7726, %v7718
    %v9191 = vpack.c.b16 %v7727, %v7719
    %v9192 = vpack.c.b16 %v7728, %v7720
    %v9193 = vpack.c.b16 %v7729, %v7721
    %v9194 = vpack.c.b16 %v7730, %v7722
    %v9195 = vpack.c.b16 %v7731, %v7723
    %v9196 = vpack.c.b16 %v7732, %v7724
    %v9197 = vpack.c.b16 %v7741, %v7733
    %v9198 = vpack.c.b16 %v7742, %v7734
    %v9199 = vpack.c.b16 %v7743, %v7735
    %v9200 = vpack.c.b16 %v7744, %v7736
    %v9201 = vpack.c.b16 %v7745, %v7737
    %v9202 = vpack.c.b16 %v7746, %v7738
    %v9203 = vpack.c.b16 %v7747, %v7739
    %v9204 = vpack.c.b16 %v7748, %v7740
    %v9205 = vpack.c.b16 %v7757, %v7749
    %v9206 = vpack.c.b16 %v7758, %v7750
    %v9207 = vpack.c.b16 %v7759, %v7751
    %v9208 = vpack.c.b16 %v7760, %v7752
    %v9209 = vpack.c.b16 %v7761, %v7753
    %v9210 = vpack.c.b16 %v7762, %v7754
    %v9211 = vpack.c.b16 %v7763, %v7755
    %v9212 = vpack.c.b16 %v7764, %v7756
    %v9213 = vpack.c.b16 %v7773, %v7765
    %v9214 = vpack.c.b16 %v7774, %v7766
    %v9215 = vpack.c.b16 %v7775, %v7767
    %v9216 = vpack.c.b16 %v7776, %v7768
    %v9217 = vpack.c.b16 %v7777, %v7769
    %v9218 = vpack.c.b16 %v7778, %v7770
    %v9219 = vpack.c.b16 %v7779, %v7771
    %v9220 = vpack.c.b16 %v7780, %v7772
    %v9221 = vpack.c.b16 %v7789, %v7781
    %v9222 = vpack.c.b16 %v7790, %v7782
    %v9223 = vpack.c.b16 %v7791, %v7783
    %v9224 = vpack.c.b16 %v7792, %v7784
    %v9225 = vpack.c.b16 %v7793, %v7785
    %v9226 = vpack.c.b16 %v7794, %v7786
    %v9227 = vpack.c.b16 %v7795, %v7787
    %v9228 = vpack.c.b16 %v7796, %v7788
    %v9229 = vpack.c.b16 %v7805, %v7797
    %v9230 = vpack.c.b16 %v7806, %v7798
    %v9231 = vpack.c.b16 %v7807, %v7799
    %v9232 = vpack.c.b16 %v7808, %v7800
    %v9233 = vpack.c.b16 %v7809, %v7801
    %v9234 = vpack.c.b16 %v7810, %v7802
    %v9235 = vpack.c.b16 %v7811, %v7803
    %v9236 = vpack.c.b16 %v7812, %v7804
    %v9237 = vpack.c.b16 %v7821, %v7813
    %v9238 = vpack.c.b16 %v7822, %v7814
    %v9239 = vpack.c.b16 %v7823, %v7815
    %v9240 = vpack.c.b16 %v7824, %v7816
    %v9241 = vpack.c.b16 %v7825, %v7817
    %v9242 = vpack.c.b16 %v7826, %v7818
    %v9243 = vpack.c.b16 %v7827, %v7819
    %v9244 = vpack.c.b16 %v7828, %v7820
    %v9245 = vpack.c.b16 %v7837, %v7829
    %v9246 = vpack.c.b16 %v7838, %v7830
    %v9247 = vpack.c.b16 %v7839, %v7831
    %v9248 = vpack.c.b16 %v7840, %v7832
    %v9249 = vpack.c.b16 %v7841, %v7833
    %v9250 = vpack.c.b16 %v7842, %v7834
    %v9251 = vpack.c.b16 %v7843, %v7835
    %v9252 = vpack.c.b16 %v7844, %v7836
    %v9253 = vpack.c.b16 %v7853, %v7845
    %v9254 = vpack.c.b16 %v7854, %v7846
    %v9255 = vpack.c.b16 %v7855, %v7847
    %v9256 = vpack.c.b16 %v7856, %v7848
    %v9257 = vpack.c.b16 %v7857, %v7849
    %v9258 = vpack.c.b16 %v7858, %v7850
    %v9259 = vpack.c.b16 %v7859, %v7851
    %v9260 = vpack.c.b16 %v7860, %v7852
    %v9261 = vpack.c.b16 %v7869, %v7861
    %v9262 = vpack.c.b16 %v7870, %v7862
    %v9263 = vpack.c.b16 %v7871, %v7863
    %v9264 = vpack.c.b16 %v7872, %v7864
    %v9265 = vpack.c.b16 %v7873, %v7865
    %v9266 = vpack.c.b16 %v7874, %v7866
    %v9267 = vpack.c.b16 %v7875, %v7867
    %v9268 = vpack.c.b16 %v7876, %v7868
    %v9269 = vpack.c.b16 %v7885, %v7877
    %v9270 = vpack.c.b16 %v7886, %v7878
    %v9271 = vpack.c.b16 %v7887, %v7879
    %v9272 = vpack.c.b16 %v7888, %v7880
    %v9273 = vpack.c.b16 %v7889, %v7881
    %v9274 = vpack.c.b16 %v7890, %v7882
    %v9275 = vpack.c.b16 %v7891, %v7883
    %v9276 = vpack.c.b16 %v7892, %v7884
    %v9277 = vpack.c.b16 %v7901, %v7893
    %v9278 = vpack.c.b16 %v7902, %v7894
    %v9279 = vpack.c.b16 %v7903, %v7895
    %v9280 = vpack.c.b16 %v7904, %v7896
    %v9281 = vpack.c.b16 %v7905, %v7897
    %v9282 = vpack.c.b16 %v7906, %v7898
    %v9283 = vpack.c.b16 %v7907, %v7899
    %v9284 = vpack.c.b16 %v7908, %v7900
    %v9285 = vpack.c.b16 %v7917, %v7909
    %v9286 = vpack.c.b16 %v7918, %v7910
    %v9287 = vpack.c.b16 %v7919, %v7911
    %v9288 = vpack.c.b16 %v7920, %v7912
    %v9289 = vpack.c.b16 %v7921, %v7913
    %v9290 = vpack.c.b16 %v7922, %v7914
    %v9291 = vpack.c.b16 %v7923, %v7915
    %v9292 = vpack.c.b16 %v7924, %v7916
    %v9293 = vpack.c.b16 %v7933, %v7925
    %v9294 = vpack.c.b16 %v7934, %v7926
    %v9295 = vpack.c.b16 %v7935, %v7927
    %v9296 = vpack.c.b16 %v7936, %v7928
    %v9297 = vpack.c.b16 %v7937, %v7929
    %v9298 = vpack.c.b16 %v7938, %v7930
    %v9299 = vpack.c.b16 %v7939, %v7931
    %v9300 = vpack.c.b16 %v7940, %v7932
    %v9301 = vpack.c.b16 %v7949, %v7941
    %v9302 = vpack.c.b16 %v7950, %v7942
    %v9303 = vpack.c.b16 %v7951, %v7943
    %v9304 = vpack.c.b16 %v7952, %v7944
    %v9305 = vpack.c.b16 %v7953, %v7945
    %v9306 = vpack.c.b16 %v7954, %v7946
    %v9307 = vpack.c.b16 %v7955, %v7947
    %v9308 = vpack.c.b16 %v7956, %v7948
    %v9309 = vpack.c.b16 %v7965, %v7957
    %v9310 = vpack.c.b16 %v7966, %v7958
    %v9311 = vpack.c.b16 %v7967, %v7959
    %v9312 = vpack.c.b16 %v7968, %v7960
    %v9313 = vpack.c.b16 %v7969, %v7961
    %v9314 = vpack.c.b16 %v7970, %v7962
    %v9315 = vpack.c.b16 %v7971, %v7963
    %v9316 = vpack.c.b16 %v7972, %v7964
    %v9317 = vpack.c.b16 %v7981, %v7973
    %v9318 = vpack.c.b16 %v7982, %v7974
    %v9319 = vpack.c.b16 %v7983, %v7975
    %v9320 = vpack.c.b16 %v7984, %v7976
    %v9321 = vpack.c.b16 %v7985, %v7977
    %v9322 = vpack.c.b16 %v7986, %v7978
    %v9323 = vpack.c.b16 %v7987, %v7979
    %v9324 = vpack.c.b16 %v7988, %v7980
    %v9325 = vpack.c.b16 %v7997, %v7989
    %v9326 = vpack.c.b16 %v7998, %v7990
    %v9327 = vpack.c.b16 %v7999, %v7991
    %v9328 = vpack.c.b16 %v8000, %v7992
    %v9329 = vpack.c.b16 %v8001, %v7993
    %v9330 = vpack.c.b16 %v8002, %v7994
    %v9331 = vpack.c.b16 %v8003, %v7995
    %v9332 = vpack.c.b16 %v8004, %v7996
    %v9333 = vpack.c.b16 %v8013, %v8005
    %v9334 = vpack.c.b16 %v8014, %v8006
    %v9335 = vpack.c.b16 %v8015, %v8007
    %v9336 = vpack.c.b16 %v8016, %v8008
    %v9337 = vpack.c.b16 %v8017, %v8009
    %v9338 = vpack.c.b16 %v8018, %v8010
    %v9339 = vpack.c.b16 %v8019, %v8011
    %v9340 = vpack.c.b16 %v8020, %v8012
    %v9341 = vpack.c.b16 %v8029, %v8021
    %v9342 = vpack.c.b16 %v8030, %v8022
    %v9343 = vpack.c.b16 %v8031, %v8023
    %v9344 = vpack.c.b16 %v8032, %v8024
    %v9345 = vpack.c.b16 %v8033, %v8025
    %v9346 = vpack.c.b16 %v8034, %v8026
    %v9347 = vpack.c.b16 %v8035, %v8027
    %v9348 = vpack.c.b16 %v8036, %v8028
    %v9349 = vpack.c.b16 %v8045, %v8037
    %v9350 = vpack.c.b16 %v8046, %v8038
    %v9351 = vpack.c.b16 %v8047, %v8039
    %v9352 = vpack.c.b16 %v8048, %v8040
    %v9353 = vpack.c.b16 %v8049, %v8041
    %v9354 = vpack.c.b16 %v8050, %v8042
    %v9355 = vpack.c.b16 %v8051, %v8043
    %v9356 = vpack.c.b16 %v8052, %v8044
    %v9357 = vpack.c.b16 %v8061, %v8053
    %v9358 = vpack.c.b16 %v8062, %v8054
    %v9359 = vpack.c.b16 %v8063, %v8055
    %v9360 = vpack.c.b16 %v8064, %v8056
    %v9361 = vpack.c.b16 %v8065, %v8057
    %v9362 = vpack.c.b16 %v8066, %v8058
    %v9363 = vpack.c.b16 %v8067, %v8059
    %v9364 = vpack.c.b16 %v8068, %v8060
    %v9365 = vpack.c.b16 %v8077, %v8069
    %v9366 = vpack.c.b16 %v8078, %v8070
    %v9367 = vpack.c.b16 %v8079, %v8071
    %v9368 = vpack.c.b16 %v8080, %v8072
    %v9369 = vpack.c.b16 %v8081, %v8073
    %v9370 = vpack.c.b16 %v8082, %v8074
    %v9371 = vpack.c.b16 %v8083, %v8075
    %v9372 = vpack.c.b16 %v8084, %v8076
    %v9373 = vpack.c.b16 %v8093, %v8085
    %v9374 = vpack.c.b16 %v8094, %v8086
    %v9375 = vpack.c.b16 %v8095, %v8087
    %v9376 = vpack.c.b16 %v8096, %v8088
    %v9377 = vpack.c.b16 %v8097, %v8089
    %v9378 = vpack.c.b16 %v8098, %v8090
    %v9379 = vpack.c.b16 %v8099, %v8091
    %v9380 = vpack.c.b16 %v8100, %v8092
    %v9381 = vpack.c.b16 %v8109, %v8101
    %v9382 = vpack.c.b16 %v8110, %v8102
    %v9383 = vpack.c.b16 %v8111, %v8103
    %v9384 = vpack.c.b16 %v8112, %v8104
    %v9385 = vpack.c.b16 %v8113, %v8105
    %v9386 = vpack.c.b16 %v8114, %v8106
    %v9387 = vpack.c.b16 %v8115, %v8107
    %v9388 = vpack.c.b16 %v8116, %v8108
    %v9389 = vpack.c.b16 %v8125, %v8117
    %v9390 = vpack.c.b16 %v8126, %v8118
    %v9391 = vpack.c.b16 %v8127, %v8119
    %v9392 = vpack.c.b16 %v8128, %v8120
    %v9393 = vpack.c.b16 %v8129, %v8121
    %v9394 = vpack.c.b16 %v8130, %v8122
    %v9395 = vpack.c.b16 %v8131, %v8123
    %v9396 = vpack.c.b16 %v8132, %v8124
    %v9397 = vpack.c.b16 %v8141, %v8133
    %v9398 = vpack.c.b16 %v8142, %v8134
    %v9399 = vpack.c.b16 %v8143, %v8135
    %v9400 = vpack.c.b16 %v8144, %v8136
    %v9401 = vpack.c.b16 %v8145, %v8137
    %v9402 = vpack.c.b16 %v8146, %v8138
    %v9403 = vpack.c.b16 %v8147, %v8139
    %v9404 = vpack.c.b16 %v8148, %v8140
    %v9405 = vpack.c.b16 %v8157, %v8149
    %v9406 = vpack.c.b16 %v8158, %v8150
    %v9407 = vpack.c.b16 %v8159, %v8151
    %v9408 = vpack.c.b16 %v8160, %v8152
    %v9409 = vpack.c.b16 %v8161, %v8153
    %v9410 = vpack.c.b16 %v8162, %v8154
    %v9411 = vpack.c.b16 %v8163, %v8155
    %v9412 = vpack.c.b16 %v8164, %v8156
    %v9413 = vpack.c.b16 %v8173, %v8165
    %v9414 = vpack.c.b16 %v8174, %v8166
    %v9415 = vpack.c.b16 %v8175, %v8167
    %v9416 = vpack.c.b16 %v8176, %v8168
    %v9417 = vpack.c.b16 %v8177, %v8169
    %v9418 = vpack.c.b16 %v8178, %v8170
    %v9419 = vpack.c.b16 %v8179, %v8171
    %v9420 = vpack.c.b16 %v8180, %v8172
    %v9421 = vpack.c.b16 %v8189, %v8181
    %v9422 = vpack.c.b16 %v8190, %v8182
    %v9423 = vpack.c.b16 %v8191, %v8183
    %v9424 = vpack.c.b16 %v8192, %v8184
    %v9425 = vpack.c.b16 %v8193, %v8185
    %v9426 = vpack.c.b16 %v8194, %v8186
    %v9427 = vpack.c.b16 %v8195, %v8187
    %v9428 = vpack.c.b16 %v8196, %v8188
    %v9429 = vpack.c.b16 %v8205, %v8197
    %v9430 = vpack.c.b16 %v8206, %v8198
    %v9431 = vpack.c.b16 %v8207, %v8199
    %v9432 = vpack.c.b16 %v8208, %v8200
    %v9433 = vpack.c.b16 %v8209, %v8201
    %v9434 = vpack.c.b16 %v8210, %v8202
    %v9435 = vpack.c.b16 %v8211, %v8203
    %v9436 = vpack.c.b16 %v8212, %v8204
    %v9437 = vpack.c.b16 %v8221, %v8213
    %v9438 = vpack.c.b16 %v8222, %v8214
    %v9439 = vpack.c.b16 %v8223, %v8215
    %v9440 = vpack.c.b16 %v8224, %v8216
    %v9441 = vpack.c.b16 %v8225, %v8217
    %v9442 = vpack.c.b16 %v8226, %v8218
    %v9443 = vpack.c.b16 %v8227, %v8219
    %v9444 = vpack.c.b16 %v8228, %v8220
    %v9445 = vpack.c.b16 %v8237, %v8229
    %v9446 = vpack.c.b16 %v8238, %v8230
    %v9447 = vpack.c.b16 %v8239, %v8231
    %v9448 = vpack.c.b16 %v8240, %v8232
    %v9449 = vpack.c.b16 %v8241, %v8233
    %v9450 = vpack.c.b16 %v8242, %v8234
    %v9451 = vpack.c.b16 %v8243, %v8235
    %v9452 = vpack.c.b16 %v8244, %v8236
    %v9453 = vpack.c.b16 %v8253, %v8245
    %v9454 = vpack.c.b16 %v8254, %v8246
    %v9455 = vpack.c.b16 %v8255, %v8247
    %v9456 = vpack.c.b16 %v8256, %v8248
    %v9457 = vpack.c.b16 %v8257, %v8249
    %v9458 = vpack.c.b16 %v8258, %v8250
    %v9459 = vpack.c.b16 %v8259, %v8251
    %v9460 = vpack.c.b16 %v8260, %v8252
    %v9461 = vpack.c.b16 %v8269, %v8261
    %v9462 = vpack.c.b16 %v8270, %v8262
    %v9463 = vpack.c.b16 %v8271, %v8263
    %v9464 = vpack.c.b16 %v8272, %v8264
    %v9465 = vpack.c.b16 %v8273, %v8265
    %v9466 = vpack.c.b16 %v8274, %v8266
    %v9467 = vpack.c.b16 %v8275, %v8267
    %v9468 = vpack.c.b16 %v8276, %v8268
    %v9469 = vpack.c.b16 %v8285, %v8277
    %v9470 = vpack.c.b16 %v8286, %v8278
    %v9471 = vpack.c.b16 %v8287, %v8279
    %v9472 = vpack.c.b16 %v8288, %v8280
    %v9473 = vpack.c.b16 %v8289, %v8281
    %v9474 = vpack.c.b16 %v8290, %v8282
    %v9475 = vpack.c.b16 %v8291, %v8283
    %v9476 = vpack.c.b16 %v8292, %v8284
    %v9477 = vpack.c.b16 %v8301, %v8293
    %v9478 = vpack.c.b16 %v8302, %v8294
    %v9479 = vpack.c.b16 %v8303, %v8295
    %v9480 = vpack.c.b16 %v8304, %v8296
    %v9481 = vpack.c.b16 %v8305, %v8297
    %v9482 = vpack.c.b16 %v8306, %v8298
    %v9483 = vpack.c.b16 %v8307, %v8299
    %v9484 = vpack.c.b16 %v8308, %v8300
    %v9485 = vpack.c.b16 %v8317, %v8309
    %v9486 = vpack.c.b16 %v8318, %v8310
    %v9487 = vpack.c.b16 %v8319, %v8311
    %v9488 = vpack.c.b16 %v8320, %v8312
    %v9489 = vpack.c.b16 %v8321, %v8313
    %v9490 = vpack.c.b16 %v8322, %v8314
    %v9491 = vpack.c.b16 %v8323, %v8315
    %v9492 = vpack.c.b16 %v8324, %v8316
    %v9493 = vpack.c.b16 %v8333, %v8325
    %v9494 = vpack.c.b16 %v8334, %v8326
    %v9495 = vpack.c.b16 %v8335, %v8327
    %v9496 = vpack.c.b16 %v8336, %v8328
    %v9497 = vpack.c.b16 %v8337, %v8329
    %v9498 = vpack.c.b16 %v8338, %v8330
    %v9499 = vpack.c.b16 %v8339, %v8331
    %v9500 = vpack.c.b16 %v8340, %v8332
    %v9501 = vpack.c.b16 %v8349, %v8341
    %v9502 = vpack.c.b16 %v8350, %v8342
    %v9503 = vpack.c.b16 %v8351, %v8343
    %v9504 = vpack.c.b16 %v8352, %v8344
    %v9505 = vpack.c.b16 %v8353, %v8345
    %v9506 = vpack.c.b16 %v8354, %v8346
    %v9507 = vpack.c.b16 %v8355, %v8347
    %v9508 = vpack.c.b16 %v8356, %v8348
    %v9509 = vpack.c.b16 %v8365, %v8357
    %v9510 = vpack.c.b16 %v8366, %v8358
    %v9511 = vpack.c.b16 %v8367, %v8359
    %v9512 = vpack.c.b16 %v8368, %v8360
    %v9513 = vpack.c.b16 %v8369, %v8361
    %v9514 = vpack.c.b16 %v8370, %v8362
    %v9515 = vpack.c.b16 %v8371, %v8363
    %v9516 = vpack.c.b16 %v8372, %v8364
    %v9517 = vpack.c.b16 %v8381, %v8373
    %v9518 = vpack.c.b16 %v8382, %v8374
    %v9519 = vpack.c.b16 %v8383, %v8375
    %v9520 = vpack.c.b16 %v8384, %v8376
    %v9521 = vpack.c.b16 %v8385, %v8377
    %v9522 = vpack.c.b16 %v8386, %v8378
    %v9523 = vpack.c.b16 %v8387, %v8379
    %v9524 = vpack.c.b16 %v8388, %v8380
    %v9525 = vpack.c.b16 %v8397, %v8389
    %v9526 = vpack.c.b16 %v8398, %v8390
    %v9527 = vpack.c.b16 %v8399, %v8391
    %v9528 = vpack.c.b16 %v8400, %v8392
    %v9529 = vpack.c.b16 %v8401, %v8393
    %v9530 = vpack.c.b16 %v8402, %v8394
    %v9531 = vpack.c.b16 %v8403, %v8395
    %v9532 = vpack.c.b16 %v8404, %v8396
    %v9533 = vpack.c.b16 %v8413, %v8405
    %v9534 = vpack.c.b16 %v8414, %v8406
    %v9535 = vpack.c.b16 %v8415, %v8407
    %v9536 = vpack.c.b16 %v8416, %v8408
    %v9537 = vpack.c.b16 %v8417, %v8409
    %v9538 = vpack.c.b16 %v8418, %v8410
    %v9539 = vpack.c.b16 %v8419, %v8411
    %v9540 = vpack.c.b16 %v8420, %v8412
    %v9541 = vpack.c.b16 %v8429, %v8421
    %v9542 = vpack.c.b16 %v8430, %v8422
    %v9543 = vpack.c.b16 %v8431, %v8423
    %v9544 = vpack.c.b16 %v8432, %v8424
    %v9545 = vpack.c.b16 %v8433, %v8425
    %v9546 = vpack.c.b16 %v8434, %v8426
    %v9547 = vpack.c.b16 %v8435, %v8427
    %v9548 = vpack.c.b16 %v8436, %v8428
    %v9549 = vpack.c.b16 %v8445, %v8437
    %v9550 = vpack.c.b16 %v8446, %v8438
    %v9551 = vpack.c.b16 %v8447, %v8439
    %v9552 = vpack.c.b16 %v8448, %v8440
    %v9553 = vpack.c.b16 %v8449, %v8441
    %v9554 = vpack.c.b16 %v8450, %v8442
    %v9555 = vpack.c.b16 %v8451, %v8443
    %v9556 = vpack.c.b16 %v8452, %v8444
    %v9557 = vpack.c.b16 %v8461, %v8453
    %v9558 = vpack.c.b16 %v8462, %v8454
    %v9559 = vpack.c.b16 %v8463, %v8455
    %v9560 = vpack.c.b16 %v8464, %v8456
    %v9561 = vpack.c.b16 %v8465, %v8457
    %v9562 = vpack.c.b16 %v8466, %v8458
    %v9563 = vpack.c.b16 %v8467, %v8459
    %v9564 = vpack.c.b16 %v8468, %v8460
    %v9565 = vpack.c.b16 %v8477, %v8469
    %v9566 = vpack.c.b16 %v8478, %v8470
    %v9567 = vpack.c.b16 %v8479, %v8471
    %v9568 = vpack.c.b16 %v8480, %v8472
    %v9569 = vpack.c.b16 %v8481, %v8473
    %v9570 = vpack.c.b16 %v8482, %v8474
    %v9571 = vpack.c.b16 %v8483, %v8475
    %v9572 = vpack.c.b16 %v8484, %v8476
    %v9573 = vpack.c.b16 %v8493, %v8485
    %v9574 = vpack.c.b16 %v8494, %v8486
    %v9575 = vpack.c.b16 %v8495, %v8487
    %v9576 = vpack.c.b16 %v8496, %v8488
    %v9577 = vpack.c.b16 %v8497, %v8489
    %v9578 = vpack.c.b16 %v8498, %v8490
    %v9579 = vpack.c.b16 %v8499, %v8491
    %v9580 = vpack.c.b16 %v8500, %v8492
    %v9581 = vpack.c.b16 %v8509, %v8501
    %v9582 = vpack.c.b16 %v8510, %v8502
    %v9583 = vpack.c.b16 %v8511, %v8503
    %v9584 = vpack.c.b16 %v8512, %v8504
    %v9585 = vpack.c.b16 %v8513, %v8505
    %v9586 = vpack.c.b16 %v8514, %v8506
    %v9587 = vpack.c.b16 %v8515, %v8507
    %v9588 = vpack.c.b16 %v8516, %v8508
    %v9589 = vpack.c.b16 %v8525, %v8517
    %v9590 = vpack.c.b16 %v8526, %v8518
    %v9591 = vpack.c.b16 %v8527, %v8519
    %v9592 = vpack.c.b16 %v8528, %v8520
    %v9593 = vpack.c.b16 %v8529, %v8521
    %v9594 = vpack.c.b16 %v8530, %v8522
    %v9595 = vpack.c.b16 %v8531, %v8523
    %v9596 = vpack.c.b16 %v8532, %v8524
    %v9597 = vpack.c.b16 %v8541, %v8533
    %v9598 = vpack.c.b16 %v8542, %v8534
    %v9599 = vpack.c.b16 %v8543, %v8535
    %v9600 = vpack.c.b16 %v8544, %v8536
    %v9601 = vpack.c.b16 %v8545, %v8537
    %v9602 = vpack.c.b16 %v8546, %v8538
    %v9603 = vpack.c.b16 %v8547, %v8539
    %v9604 = vpack.c.b16 %v8548, %v8540
    %v9605 = vpack.c.b16 %v8557, %v8549
    %v9606 = vpack.c.b16 %v8558, %v8550
    %v9607 = vpack.c.b16 %v8559, %v8551
    %v9608 = vpack.c.b16 %v8560, %v8552
    %v9609 = vpack.c.b16 %v8561, %v8553
    %v9610 = vpack.c.b16 %v8562, %v8554
    %v9611 = vpack.c.b16 %v8563, %v8555
    %v9612 = vpack.c.b16 %v8564, %v8556
    %v9613 = vpack.c.b16 %v8573, %v8565
    %v9614 = vpack.c.b16 %v8574, %v8566
    %v9615 = vpack.c.b16 %v8575, %v8567
    %v9616 = vpack.c.b16 %v8576, %v8568
    %v9617 = vpack.c.b16 %v8577, %v8569
    %v9618 = vpack.c.b16 %v8578, %v8570
    %v9619 = vpack.c.b16 %v8579, %v8571
    %v9620 = vpack.c.b16 %v8580, %v8572
    %v9621 = vpack.c.b16 %v8589, %v8581
    %v9622 = vpack.c.b16 %v8590, %v8582
    %v9623 = vpack.c.b16 %v8591, %v8583
    %v9624 = vpack.c.b16 %v8592, %v8584
    %v9625 = vpack.c.b16 %v8593, %v8585
    %v9626 = vpack.c.b16 %v8594, %v8586
    %v9627 = vpack.c.b16 %v8595, %v8587
    %v9628 = vpack.c.b16 %v8596, %v8588
    %v9629 = vpack.c.b16 %v8605, %v8597
    %v9630 = vpack.c.b16 %v8606, %v8598
    %v9631 = vpack.c.b16 %v8607, %v8599
    %v9632 = vpack.c.b16 %v8608, %v8600
    %v9633 = vpack.c.b16 %v8609, %v8601
    %v9634 = vpack.c.b16 %v8610, %v8602
    %v9635 = vpack.c.b16 %v8611, %v8603
    %v9636 = vpack.c.b16 %v8612, %v8604
    %10661 = vmatprep.subr.bf16.mxu0 %v8670
    %10662 = vmatpush1.bf16.msra.mxu0 %v8669
    %10663 = vmatprep.subr.bf16.mxu0 %v8662
    %10664 = vmatpush1.bf16.msra.mxu0 %v8661
    %10665 = vmatprep.subr.bf16.mxu0 %v8654
    %10666 = vmatpush1.bf16.msra.mxu0 %v8653
    %10667 = vmatprep.subr.bf16.mxu0 %v8646
    %10668 = vmatpush1.bf16.msra.mxu0 %v8645
    %10669 = vmatprep.subr.bf16.mxu0 %v8638
    %10670 = vmatpush1.bf16.msra.mxu0 %v8637
    %10671 = vmatprep.subr.bf16.mxu0 %v8630
    %10672 = vmatpush1.bf16.msra.mxu0 %v8629
    %10673 = vmatprep.subr.bf16.mxu0 %v8622
    %10674 = vmatpush1.bf16.msra.mxu0 %v8621
    %10675 = vmatprep.subr.bf16.mxu0 %v8614
    %10676 = vmatpush1.bf16.msra.mxu0 %v8613
    %10677 = vmatprep.subr.bf16.mxu0 %v8734
    %10678 = vmatpush2.bf16.msra.mxu0 %v8733
    %10679 = vmatprep.subr.bf16.mxu0 %v8726
    %10680 = vmatpush2.bf16.msra.mxu0 %v8725
    %10681 = vmatprep.subr.bf16.mxu0 %v8718
    %10682 = vmatpush2.bf16.msra.mxu0 %v8717
    %10683 = vmatprep.subr.bf16.mxu0 %v8710
    %10684 = vmatpush2.bf16.msra.mxu0 %v8709
    %10685 = vmatprep.subr.bf16.mxu0 %v8702
    %10686 = vmatpush2.bf16.msra.mxu0 %v8701
    %10687 = vmatprep.subr.bf16.mxu0 %v8694
    %10688 = vmatpush2.bf16.msra.mxu0 %v8693
    %10689 = vmatprep.subr.bf16.mxu0 %v8686
    %10690 = vmatpush2.bf16.msra.mxu0 %v8685
    %10691 = vmatprep.subr.bf16.mxu0 %v8678
    %10692 = vmatpush2.bf16.msra.mxu0 %v8677
    %10693 = vmatprep.mubr.bf16.mxu0 %v5450
    %10694 = vmatmul.mubr.bf16.gmra.mxu0 %v5449
    %v10695 = vpop.f32.mrf.mxu0
    %v10696 = vadd.f32 %v5512, %v10695
    %v10697 = vpop.f32.mrf.mxu0
    %v10698 = vadd.f32 %v5516, %v10697
    %v10699 = vpop.f32.mrf.mxu0
    %v10700 = vadd.f32 %v5512, %v10699
    %v10701 = vpop.f32.mrf.mxu0
    %v10702 = vadd.f32 %v5516, %v10701
    %10703 = vdwg.mxu0
    %10704 = vmatprep.subr.bf16.mxu0 %v8798
    %10705 = vmatpush1.bf16.msra.mxu0 %v8797
    %10706 = vmatprep.subr.bf16.mxu0 %v8790
    %10707 = vmatpush1.bf16.msra.mxu0 %v8789
    %10708 = vmatprep.subr.bf16.mxu0 %v8782
    %10709 = vmatpush1.bf16.msra.mxu0 %v8781
    %10710 = vmatprep.subr.bf16.mxu0 %v8774
    %10711 = vmatpush1.bf16.msra.mxu0 %v8773
    %10712 = vmatprep.subr.bf16.mxu0 %v8766
    %10713 = vmatpush1.bf16.msra.mxu0 %v8765
    %10714 = vmatprep.subr.bf16.mxu0 %v8758
    %10715 = vmatpush1.bf16.msra.mxu0 %v8757
    %10716 = vmatprep.subr.bf16.mxu0 %v8750
    %10717 = vmatpush1.bf16.msra.mxu0 %v8749
    %10718 = vmatprep.subr.bf16.mxu0 %v8742
    %10719 = vmatpush1.bf16.msra.mxu0 %v8741
    %10720 = vmatprep.subr.bf16.mxu0 %v8862
    %10721 = vmatpush2.bf16.msra.mxu0 %v8861
    %10722 = vmatprep.subr.bf16.mxu0 %v8854
    %10723 = vmatpush2.bf16.msra.mxu0 %v8853
    %10724 = vmatprep.subr.bf16.mxu0 %v8846
    %10725 = vmatpush2.bf16.msra.mxu0 %v8845
    %10726 = vmatprep.subr.bf16.mxu0 %v8838
    %10727 = vmatpush2.bf16.msra.mxu0 %v8837
    %10728 = vmatprep.subr.bf16.mxu0 %v8830
    %10729 = vmatpush2.bf16.msra.mxu0 %v8829
    %10730 = vmatprep.subr.bf16.mxu0 %v8822
    %10731 = vmatpush2.bf16.msra.mxu0 %v8821
    %10732 = vmatprep.subr.bf16.mxu0 %v8814
    %10733 = vmatpush2.bf16.msra.mxu0 %v8813
    %10734 = vmatprep.subr.bf16.mxu0 %v8806
    %10735 = vmatpush2.bf16.msra.mxu0 %v8805
    %10736 = vmatprep.mubr.bf16.mxu0 %v5452
    %10737 = vmatmul.mubr.bf16.gmra.mxu0 %v5451
    %v10738 = vpop.f32.mrf.mxu0
    %v10739 = vadd.f32 %v10696, %v10738
    %v10740 = vpop.f32.mrf.mxu0
    %v10741 = vadd.f32 %v10698, %v10740
    %v10742 = vpop.f32.mrf.mxu0
    %v10743 = vadd.f32 %v10700, %v10742
    %v10744 = vpop.f32.mrf.mxu0
    %v10745 = vadd.f32 %v10702, %v10744
    %10746 = vdwg.mxu0
    %10747 = vmatprep.subr.bf16.mxu0 %v8926
    %10748 = vmatpush1.bf16.msra.mxu0 %v8925
    %10749 = vmatprep.subr.bf16.mxu0 %v8918
    %10750 = vmatpush1.bf16.msra.mxu0 %v8917
    %10751 = vmatprep.subr.bf16.mxu0 %v8910
    %10752 = vmatpush1.bf16.msra.mxu0 %v8909
    %10753 = vmatprep.subr.bf16.mxu0 %v8902
    %10754 = vmatpush1.bf16.msra.mxu0 %v8901
    %10755 = vmatprep.subr.bf16.mxu0 %v8894
    %10756 = vmatpush1.bf16.msra.mxu0 %v8893
    %10757 = vmatprep.subr.bf16.mxu0 %v8886
    %10758 = vmatpush1.bf16.msra.mxu0 %v8885
    %10759 = vmatprep.subr.bf16.mxu0 %v8878
    %10760 = vmatpush1.bf16.msra.mxu0 %v8877
    %10761 = vmatprep.subr.bf16.mxu0 %v8870
    %10762 = vmatpush1.bf16.msra.mxu0 %v8869
    %10763 = vmatprep.subr.bf16.mxu0 %v8990
    %10764 = vmatpush2.bf16.msra.mxu0 %v8989
    %10765 = vmatprep.subr.bf16.mxu0 %v8982
    %10766 = vmatpush2.bf16.msra.mxu0 %v8981
    %10767 = vmatprep.subr.bf16.mxu0 %v8974
    %10768 = vmatpush2.bf16.msra.mxu0 %v8973
    %10769 = vmatprep.subr.bf16.mxu0 %v8966
    %10770 = vmatpush2.bf16.msra.mxu0 %v8965
    %10771 = vmatprep.subr.bf16.mxu0 %v8958
    %10772 = vmatpush2.bf16.msra.mxu0 %v8957
    %10773 = vmatprep.subr.bf16.mxu0 %v8950
    %10774 = vmatpush2.bf16.msra.mxu0 %v8949
    %10775 = vmatprep.subr.bf16.mxu0 %v8942
    %10776 = vmatpush2.bf16.msra.mxu0 %v8941
    %10777 = vmatprep.subr.bf16.mxu0 %v8934
    %10778 = vmatpush2.bf16.msra.mxu0 %v8933
    %10779 = vmatprep.mubr.bf16.mxu0 %v5454
    %10780 = vmatmul.mubr.bf16.gmra.mxu0 %v5453
    %v10781 = vpop.f32.mrf.mxu0
    %v10782 = vadd.f32 %v10739, %v10781
    %v10783 = vpop.f32.mrf.mxu0
    %v10784 = vadd.f32 %v10741, %v10783
    %v10785 = vpop.f32.mrf.mxu0
    %v10786 = vadd.f32 %v10743, %v10785
    %v10787 = vpop.f32.mrf.mxu0
    %v10788 = vadd.f32 %v10745, %v10787
    %10789 = vdwg.mxu0
    %10790 = vmatprep.subr.bf16.mxu0 %v9054
    %10791 = vmatpush1.bf16.msra.mxu0 %v9053
    %10792 = vmatprep.subr.bf16.mxu0 %v9046
    %10793 = vmatpush1.bf16.msra.mxu0 %v9045
    %10794 = vmatprep.subr.bf16.mxu0 %v9038
    %10795 = vmatpush1.bf16.msra.mxu0 %v9037
    %10796 = vmatprep.subr.bf16.mxu0 %v9030
    %10797 = vmatpush1.bf16.msra.mxu0 %v9029
    %10798 = vmatprep.subr.bf16.mxu0 %v9022
    %10799 = vmatpush1.bf16.msra.mxu0 %v9021
    %10800 = vmatprep.subr.bf16.mxu0 %v9014
    %10801 = vmatpush1.bf16.msra.mxu0 %v9013
    %10802 = vmatprep.subr.bf16.mxu0 %v9006
    %10803 = vmatpush1.bf16.msra.mxu0 %v9005
    %10804 = vmatprep.subr.bf16.mxu0 %v8998
    %10805 = vmatpush1.bf16.msra.mxu0 %v8997
    %10806 = vmatprep.subr.bf16.mxu0 %v9118
    %10807 = vmatpush2.bf16.msra.mxu0 %v9117
    %10808 = vmatprep.subr.bf16.mxu0 %v9110
    %10809 = vmatpush2.bf16.msra.mxu0 %v9109
    %10810 = vmatprep.subr.bf16.mxu0 %v9102
    %10811 = vmatpush2.bf16.msra.mxu0 %v9101
    %10812 = vmatprep.subr.bf16.mxu0 %v9094
    %10813 = vmatpush2.bf16.msra.mxu0 %v9093
    %10814 = vmatprep.subr.bf16.mxu0 %v9086
    %10815 = vmatpush2.bf16.msra.mxu0 %v9085
    %10816 = vmatprep.subr.bf16.mxu0 %v9078
    %10817 = vmatpush2.bf16.msra.mxu0 %v9077
    %10818 = vmatprep.subr.bf16.mxu0 %v9070
    %10819 = vmatpush2.bf16.msra.mxu0 %v9069
    %10820 = vmatprep.subr.bf16.mxu0 %v9062
    %10821 = vmatpush2.bf16.msra.mxu0 %v9061
    %10822 = vmatprep.mubr.bf16.mxu0 %v5456
    %10823 = vmatmul.mubr.bf16.gmra.mxu0 %v5455
    %v10824 = vpop.f32.mrf.mxu0
    %v10825 = vadd.f32 %v10782, %v10824
    %v10826 = vpop.f32.mrf.mxu0
    %v10827 = vadd.f32 %v10784, %v10826
    %v10828 = vpop.f32.mrf.mxu0
    %v10829 = vadd.f32 %v10786, %v10828
    %v10830 = vpop.f32.mrf.mxu0
    %v10831 = vadd.f32 %v10788, %v10830
    %10832 = vdwg.mxu0
    %10833 = vmatprep.subr.bf16.mxu0 %v9182
    %10834 = vmatpush1.bf16.msra.mxu0 %v9181
    %10835 = vmatprep.subr.bf16.mxu0 %v9174
    %10836 = vmatpush1.bf16.msra.mxu0 %v9173
    %10837 = vmatprep.subr.bf16.mxu0 %v9166
    %10838 = vmatpush1.bf16.msra.mxu0 %v9165
    %10839 = vmatprep.subr.bf16.mxu0 %v9158
    %10840 = vmatpush1.bf16.msra.mxu0 %v9157
    %10841 = vmatprep.subr.bf16.mxu0 %v9150
    %10842 = vmatpush1.bf16.msra.mxu0 %v9149
    %10843 = vmatprep.subr.bf16.mxu0 %v9142
    %10844 = vmatpush1.bf16.msra.mxu0 %v9141
    %10845 = vmatprep.subr.bf16.mxu0 %v9134
    %10846 = vmatpush1.bf16.msra.mxu0 %v9133
    %10847 = vmatprep.subr.bf16.mxu0 %v9126
    %10848 = vmatpush1.bf16.msra.mxu0 %v9125
    %10849 = vmatprep.subr.bf16.mxu0 %v9246
    %10850 = vmatpush2.bf16.msra.mxu0 %v9245
    %10851 = vmatprep.subr.bf16.mxu0 %v9238
    %10852 = vmatpush2.bf16.msra.mxu0 %v9237
    %10853 = vmatprep.subr.bf16.mxu0 %v9230
    %10854 = vmatpush2.bf16.msra.mxu0 %v9229
    %10855 = vmatprep.subr.bf16.mxu0 %v9222
    %10856 = vmatpush2.bf16.msra.mxu0 %v9221
    %10857 = vmatprep.subr.bf16.mxu0 %v9214
    %10858 = vmatpush2.bf16.msra.mxu0 %v9213
    %10859 = vmatprep.subr.bf16.mxu0 %v9206
    %10860 = vmatpush2.bf16.msra.mxu0 %v9205
    %10861 = vmatprep.subr.bf16.mxu0 %v9198
    %10862 = vmatpush2.bf16.msra.mxu0 %v9197
    %10863 = vmatprep.subr.bf16.mxu0 %v9190
    %10864 = vmatpush2.bf16.msra.mxu0 %v9189
    %10865 = vmatprep.mubr.bf16.mxu0 %v5458
    %10866 = vmatmul.mubr.bf16.gmra.mxu0 %v5457
    %v10867 = vpop.f32.mrf.mxu0
    %v10868 = vadd.f32 %v10825, %v10867
    %v10869 = vpop.f32.mrf.mxu0
    %v10870 = vadd.f32 %v10827, %v10869
    %v10871 = vpop.f32.mrf.mxu0
    %v10872 = vadd.f32 %v10829, %v10871
    %v10873 = vpop.f32.mrf.mxu0
    %v10874 = vadd.f32 %v10831, %v10873
    %10875 = vdwg.mxu0
    %10876 = vmatprep.subr.bf16.mxu0 %v9310
    %10877 = vmatpush1.bf16.msra.mxu0 %v9309
    %10878 = vmatprep.subr.bf16.mxu0 %v9302
    %10879 = vmatpush1.bf16.msra.mxu0 %v9301
    %10880 = vmatprep.subr.bf16.mxu0 %v9294
    %10881 = vmatpush1.bf16.msra.mxu0 %v9293
    %10882 = vmatprep.subr.bf16.mxu0 %v9286
    %10883 = vmatpush1.bf16.msra.mxu0 %v9285
    %10884 = vmatprep.subr.bf16.mxu0 %v9278
    %10885 = vmatpush1.bf16.msra.mxu0 %v9277
    %10886 = vmatprep.subr.bf16.mxu0 %v9270
    %10887 = vmatpush1.bf16.msra.mxu0 %v9269
    %10888 = vmatprep.subr.bf16.mxu0 %v9262
    %10889 = vmatpush1.bf16.msra.mxu0 %v9261
    %10890 = vmatprep.subr.bf16.mxu0 %v9254
    %10891 = vmatpush1.bf16.msra.mxu0 %v9253
    %10892 = vmatprep.subr.bf16.mxu0 %v9374
    %10893 = vmatpush2.bf16.msra.mxu0 %v9373
    %10894 = vmatprep.subr.bf16.mxu0 %v9366
    %10895 = vmatpush2.bf16.msra.mxu0 %v9365
    %10896 = vmatprep.subr.bf16.mxu0 %v9358
    %10897 = vmatpush2.bf16.msra.mxu0 %v9357
    %10898 = vmatprep.subr.bf16.mxu0 %v9350
    %10899 = vmatpush2.bf16.msra.mxu0 %v9349
    %10900 = vmatprep.subr.bf16.mxu0 %v9342
    %10901 = vmatpush2.bf16.msra.mxu0 %v9341
    %10902 = vmatprep.subr.bf16.mxu0 %v9334
    %10903 = vmatpush2.bf16.msra.mxu0 %v9333
    %10904 = vmatprep.subr.bf16.mxu0 %v9326
    %10905 = vmatpush2.bf16.msra.mxu0 %v9325
    %10906 = vmatprep.subr.bf16.mxu0 %v9318
    %10907 = vmatpush2.bf16.msra.mxu0 %v9317
    %10908 = vmatprep.mubr.bf16.mxu0 %v5460
    %10909 = vmatmul.mubr.bf16.gmra.mxu0 %v5459
    %v10910 = vpop.f32.mrf.mxu0
    %v10911 = vadd.f32 %v10868, %v10910
    %v10912 = vpop.f32.mrf.mxu0
    %v10913 = vadd.f32 %v10870, %v10912
    %v10914 = vpop.f32.mrf.mxu0
    %v10915 = vadd.f32 %v10872, %v10914
    %v10916 = vpop.f32.mrf.mxu0
    %v10917 = vadd.f32 %v10874, %v10916
    %10918 = vdwg.mxu0
    %10919 = vmatprep.subr.bf16.mxu0 %v9438
    %10920 = vmatpush1.bf16.msra.mxu0 %v9437
    %10921 = vmatprep.subr.bf16.mxu0 %v9430
    %10922 = vmatpush1.bf16.msra.mxu0 %v9429
    %10923 = vmatprep.subr.bf16.mxu0 %v9422
    %10924 = vmatpush1.bf16.msra.mxu0 %v9421
    %10925 = vmatprep.subr.bf16.mxu0 %v9414
    %10926 = vmatpush1.bf16.msra.mxu0 %v9413
    %10927 = vmatprep.subr.bf16.mxu0 %v9406
    %10928 = vmatpush1.bf16.msra.mxu0 %v9405
    %10929 = vmatprep.subr.bf16.mxu0 %v9398
    %10930 = vmatpush1.bf16.msra.mxu0 %v9397
    %10931 = vmatprep.subr.bf16.mxu0 %v9390
    %10932 = vmatpush1.bf16.msra.mxu0 %v9389
    %10933 = vmatprep.subr.bf16.mxu0 %v9382
    %10934 = vmatpush1.bf16.msra.mxu0 %v9381
    %10935 = vmatprep.subr.bf16.mxu0 %v9502
    %10936 = vmatpush2.bf16.msra.mxu0 %v9501
    %10937 = vmatprep.subr.bf16.mxu0 %v9494
    %10938 = vmatpush2.bf16.msra.mxu0 %v9493
    %10939 = vmatprep.subr.bf16.mxu0 %v9486
    %10940 = vmatpush2.bf16.msra.mxu0 %v9485
    %10941 = vmatprep.subr.bf16.mxu0 %v9478
    %10942 = vmatpush2.bf16.msra.mxu0 %v9477
    %10943 = vmatprep.subr.bf16.mxu0 %v9470
    %10944 = vmatpush2.bf16.msra.mxu0 %v9469
    %10945 = vmatprep.subr.bf16.mxu0 %v9462
    %10946 = vmatpush2.bf16.msra.mxu0 %v9461
    %10947 = vmatprep.subr.bf16.mxu0 %v9454
    %10948 = vmatpush2.bf16.msra.mxu0 %v9453
    %10949 = vmatprep.subr.bf16.mxu0 %v9446
    %10950 = vmatpush2.bf16.msra.mxu0 %v9445
    %10951 = vmatprep.mubr.bf16.mxu0 %v5462
    %10952 = vmatmul.mubr.bf16.gmra.mxu0 %v5461
    %v10953 = vpop.f32.mrf.mxu0
    %v10954 = vadd.f32 %v10911, %v10953
    %v10955 = vpop.f32.mrf.mxu0
    %v10956 = vadd.f32 %v10913, %v10955
    %v10957 = vpop.f32.mrf.mxu0
    %v10958 = vadd.f32 %v10915, %v10957
    %v10959 = vpop.f32.mrf.mxu0
    %v10960 = vadd.f32 %v10917, %v10959
    %10961 = vdwg.mxu0
    %10962 = vmatprep.subr.bf16.mxu0 %v9566
    %10963 = vmatpush1.bf16.msra.mxu0 %v9565
    %10964 = vmatprep.subr.bf16.mxu0 %v9558
    %10965 = vmatpush1.bf16.msra.mxu0 %v9557
    %10966 = vmatprep.subr.bf16.mxu0 %v9550
    %10967 = vmatpush1.bf16.msra.mxu0 %v9549
    %10968 = vmatprep.subr.bf16.mxu0 %v9542
    %10969 = vmatpush1.bf16.msra.mxu0 %v9541
    %10970 = vmatprep.subr.bf16.mxu0 %v9534
    %10971 = vmatpush1.bf16.msra.mxu0 %v9533
    %10972 = vmatprep.subr.bf16.mxu0 %v9526
    %10973 = vmatpush1.bf16.msra.mxu0 %v9525
    %10974 = vmatprep.subr.bf16.mxu0 %v9518
    %10975 = vmatpush1.bf16.msra.mxu0 %v9517
    %10976 = vmatprep.subr.bf16.mxu0 %v9510
    %10977 = vmatpush1.bf16.msra.mxu0 %v9509
    %10978 = vmatprep.subr.bf16.mxu0 %v9630
    %10979 = vmatpush2.bf16.msra.mxu0 %v9629
    %10980 = vmatprep.subr.bf16.mxu0 %v9622
    %10981 = vmatpush2.bf16.msra.mxu0 %v9621
    %10982 = vmatprep.subr.bf16.mxu0 %v9614
    %10983 = vmatpush2.bf16.msra.mxu0 %v9613
    %10984 = vmatprep.subr.bf16.mxu0 %v9606
    %10985 = vmatpush2.bf16.msra.mxu0 %v9605
    %10986 = vmatprep.subr.bf16.mxu0 %v9598
    %10987 = vmatpush2.bf16.msra.mxu0 %v9597
    %10988 = vmatprep.subr.bf16.mxu0 %v9590
    %10989 = vmatpush2.bf16.msra.mxu0 %v9589
    %10990 = vmatprep.subr.bf16.mxu0 %v9582
    %10991 = vmatpush2.bf16.msra.mxu0 %v9581
    %10992 = vmatprep.subr.bf16.mxu0 %v9574
    %10993 = vmatpush2.bf16.msra.mxu0 %v9573
    %10994 = vmatprep.mubr.bf16.mxu0 %v5464
    %10995 = vmatmul.mubr.bf16.gmra.mxu0 %v5463
    %v10996 = vpop.f32.mrf.mxu0
    %v10997 = vadd.f32 %v10954, %v10996
    %v10998 = vpop.f32.mrf.mxu0
    %v10999 = vadd.f32 %v10956, %v10998
    %v11000 = vpop.f32.mrf.mxu0
    %v11001 = vadd.f32 %v10958, %v11000
    %v11002 = vpop.f32.mrf.mxu0
    %v11003 = vadd.f32 %v10960, %v11002
    %11004 = vdwg.mxu0
    %11005 = vmatprep.subr.bf16.mxu0 %v8672
    %11006 = vmatpush1.bf16.msra.mxu0 %v8671
    %11007 = vmatprep.subr.bf16.mxu0 %v8664
    %11008 = vmatpush1.bf16.msra.mxu0 %v8663
    %11009 = vmatprep.subr.bf16.mxu0 %v8656
    %11010 = vmatpush1.bf16.msra.mxu0 %v8655
    %11011 = vmatprep.subr.bf16.mxu0 %v8648
    %11012 = vmatpush1.bf16.msra.mxu0 %v8647
    %11013 = vmatprep.subr.bf16.mxu0 %v8640
    %11014 = vmatpush1.bf16.msra.mxu0 %v8639
    %11015 = vmatprep.subr.bf16.mxu0 %v8632
    %11016 = vmatpush1.bf16.msra.mxu0 %v8631
    %11017 = vmatprep.subr.bf16.mxu0 %v8624
    %11018 = vmatpush1.bf16.msra.mxu0 %v8623
    %11019 = vmatprep.subr.bf16.mxu0 %v8616
    %11020 = vmatpush1.bf16.msra.mxu0 %v8615
    %11021 = vmatprep.subr.bf16.mxu0 %v8736
    %11022 = vmatpush2.bf16.msra.mxu0 %v8735
    %11023 = vmatprep.subr.bf16.mxu0 %v8728
    %11024 = vmatpush2.bf16.msra.mxu0 %v8727
    %11025 = vmatprep.subr.bf16.mxu0 %v8720
    %11026 = vmatpush2.bf16.msra.mxu0 %v8719
    %11027 = vmatprep.subr.bf16.mxu0 %v8712
    %11028 = vmatpush2.bf16.msra.mxu0 %v8711
    %11029 = vmatprep.subr.bf16.mxu0 %v8704
    %11030 = vmatpush2.bf16.msra.mxu0 %v8703
    %11031 = vmatprep.subr.bf16.mxu0 %v8696
    %11032 = vmatpush2.bf16.msra.mxu0 %v8695
    %11033 = vmatprep.subr.bf16.mxu0 %v8688
    %11034 = vmatpush2.bf16.msra.mxu0 %v8687
    %11035 = vmatprep.subr.bf16.mxu0 %v8680
    %11036 = vmatpush2.bf16.msra.mxu0 %v8679
    %11037 = vmatprep.mubr.bf16.mxu0 %v5450
    %11038 = vmatmul.mubr.bf16.gmra.mxu0 %v5449
    %v11039 = vpop.f32.mrf.mxu0
    %v11040 = vadd.f32 %v5520, %v11039
    %v11041 = vpop.f32.mrf.mxu0
    %v11042 = vadd.f32 %v5524, %v11041
    %v11043 = vpop.f32.mrf.mxu0
    %v11044 = vadd.f32 %v5520, %v11043
    %v11045 = vpop.f32.mrf.mxu0
    %v11046 = vadd.f32 %v5524, %v11045
    %11047 = vdwg.mxu0
    %11048 = vmatprep.subr.bf16.mxu0 %v8800
    %11049 = vmatpush1.bf16.msra.mxu0 %v8799
    %11050 = vmatprep.subr.bf16.mxu0 %v8792
    %11051 = vmatpush1.bf16.msra.mxu0 %v8791
    %11052 = vmatprep.subr.bf16.mxu0 %v8784
    %11053 = vmatpush1.bf16.msra.mxu0 %v8783
    %11054 = vmatprep.subr.bf16.mxu0 %v8776
    %11055 = vmatpush1.bf16.msra.mxu0 %v8775
    %11056 = vmatprep.subr.bf16.mxu0 %v8768
    %11057 = vmatpush1.bf16.msra.mxu0 %v8767
    %11058 = vmatprep.subr.bf16.mxu0 %v8760
    %11059 = vmatpush1.bf16.msra.mxu0 %v8759
    %11060 = vmatprep.subr.bf16.mxu0 %v8752
    %11061 = vmatpush1.bf16.msra.mxu0 %v8751
    %11062 = vmatprep.subr.bf16.mxu0 %v8744
    %11063 = vmatpush1.bf16.msra.mxu0 %v8743
    %11064 = vmatprep.subr.bf16.mxu0 %v8864
    %11065 = vmatpush2.bf16.msra.mxu0 %v8863
    %11066 = vmatprep.subr.bf16.mxu0 %v8856
    %11067 = vmatpush2.bf16.msra.mxu0 %v8855
    %11068 = vmatprep.subr.bf16.mxu0 %v8848
    %11069 = vmatpush2.bf16.msra.mxu0 %v8847
    %11070 = vmatprep.subr.bf16.mxu0 %v8840
    %11071 = vmatpush2.bf16.msra.mxu0 %v8839
    %11072 = vmatprep.subr.bf16.mxu0 %v8832
    %11073 = vmatpush2.bf16.msra.mxu0 %v8831
    %11074 = vmatprep.subr.bf16.mxu0 %v8824
    %11075 = vmatpush2.bf16.msra.mxu0 %v8823
    %11076 = vmatprep.subr.bf16.mxu0 %v8816
    %11077 = vmatpush2.bf16.msra.mxu0 %v8815
    %11078 = vmatprep.subr.bf16.mxu0 %v8808
    %11079 = vmatpush2.bf16.msra.mxu0 %v8807
    %11080 = vmatprep.mubr.bf16.mxu0 %v5452
    %11081 = vmatmul.mubr.bf16.gmra.mxu0 %v5451
    %v11082 = vpop.f32.mrf.mxu0
    %v11083 = vadd.f32 %v11040, %v11082
    %v11084 = vpop.f32.mrf.mxu0
    %v11085 = vadd.f32 %v11042, %v11084
    %v11086 = vpop.f32.mrf.mxu0
    %v11087 = vadd.f32 %v11044, %v11086
    %v11088 = vpop.f32.mrf.mxu0
    %v11089 = vadd.f32 %v11046, %v11088
    %11090 = vdwg.mxu0
    %11091 = vmatprep.subr.bf16.mxu0 %v8928
    %11092 = vmatpush1.bf16.msra.mxu0 %v8927
    %11093 = vmatprep.subr.bf16.mxu0 %v8920
    %11094 = vmatpush1.bf16.msra.mxu0 %v8919
    %11095 = vmatprep.subr.bf16.mxu0 %v8912
    %11096 = vmatpush1.bf16.msra.mxu0 %v8911
    %11097 = vmatprep.subr.bf16.mxu0 %v8904
    %11098 = vmatpush1.bf16.msra.mxu0 %v8903
    %11099 = vmatprep.subr.bf16.mxu0 %v8896
    %11100 = vmatpush1.bf16.msra.mxu0 %v8895
    %11101 = vmatprep.subr.bf16.mxu0 %v8888
    %11102 = vmatpush1.bf16.msra.mxu0 %v8887
    %11103 = vmatprep.subr.bf16.mxu0 %v8880
    %11104 = vmatpush1.bf16.msra.mxu0 %v8879
    %11105 = vmatprep.subr.bf16.mxu0 %v8872
    %11106 = vmatpush1.bf16.msra.mxu0 %v8871
    %11107 = vmatprep.subr.bf16.mxu0 %v8992
    %11108 = vmatpush2.bf16.msra.mxu0 %v8991
    %11109 = vmatprep.subr.bf16.mxu0 %v8984
    %11110 = vmatpush2.bf16.msra.mxu0 %v8983
    %11111 = vmatprep.subr.bf16.mxu0 %v8976
    %11112 = vmatpush2.bf16.msra.mxu0 %v8975
    %11113 = vmatprep.subr.bf16.mxu0 %v8968
    %11114 = vmatpush2.bf16.msra.mxu0 %v8967
    %11115 = vmatprep.subr.bf16.mxu0 %v8960
    %11116 = vmatpush2.bf16.msra.mxu0 %v8959
    %11117 = vmatprep.subr.bf16.mxu0 %v8952
    %11118 = vmatpush2.bf16.msra.mxu0 %v8951
    %11119 = vmatprep.subr.bf16.mxu0 %v8944
    %11120 = vmatpush2.bf16.msra.mxu0 %v8943
    %11121 = vmatprep.subr.bf16.mxu0 %v8936
    %11122 = vmatpush2.bf16.msra.mxu0 %v8935
    %11123 = vmatprep.mubr.bf16.mxu0 %v5454
    %11124 = vmatmul.mubr.bf16.gmra.mxu0 %v5453
    %v11125 = vpop.f32.mrf.mxu0
    %v11126 = vadd.f32 %v11083, %v11125
    %v11127 = vpop.f32.mrf.mxu0
    %v11128 = vadd.f32 %v11085, %v11127
    %v11129 = vpop.f32.mrf.mxu0
    %v11130 = vadd.f32 %v11087, %v11129
    %v11131 = vpop.f32.mrf.mxu0
    %v11132 = vadd.f32 %v11089, %v11131
    %11133 = vdwg.mxu0
    %11134 = vmatprep.subr.bf16.mxu0 %v9056
    %11135 = vmatpush1.bf16.msra.mxu0 %v9055
    %11136 = vmatprep.subr.bf16.mxu0 %v9048
    %11137 = vmatpush1.bf16.msra.mxu0 %v9047
    %11138 = vmatprep.subr.bf16.mxu0 %v9040
    %11139 = vmatpush1.bf16.msra.mxu0 %v9039
    %11140 = vmatprep.subr.bf16.mxu0 %v9032
    %11141 = vmatpush1.bf16.msra.mxu0 %v9031
    %11142 = vmatprep.subr.bf16.mxu0 %v9024
    %11143 = vmatpush1.bf16.msra.mxu0 %v9023
    %11144 = vmatprep.subr.bf16.mxu0 %v9016
    %11145 = vmatpush1.bf16.msra.mxu0 %v9015
    %11146 = vmatprep.subr.bf16.mxu0 %v9008
    %11147 = vmatpush1.bf16.msra.mxu0 %v9007
    %11148 = vmatprep.subr.bf16.mxu0 %v9000
    %11149 = vmatpush1.bf16.msra.mxu0 %v8999
    %11150 = vmatprep.subr.bf16.mxu0 %v9120
    %11151 = vmatpush2.bf16.msra.mxu0 %v9119
    %11152 = vmatprep.subr.bf16.mxu0 %v9112
    %11153 = vmatpush2.bf16.msra.mxu0 %v9111
    %11154 = vmatprep.subr.bf16.mxu0 %v9104
    %11155 = vmatpush2.bf16.msra.mxu0 %v9103
    %11156 = vmatprep.subr.bf16.mxu0 %v9096
    %11157 = vmatpush2.bf16.msra.mxu0 %v9095
    %11158 = vmatprep.subr.bf16.mxu0 %v9088
    %11159 = vmatpush2.bf16.msra.mxu0 %v9087
    %11160 = vmatprep.subr.bf16.mxu0 %v9080
    %11161 = vmatpush2.bf16.msra.mxu0 %v9079
    %11162 = vmatprep.subr.bf16.mxu0 %v9072
    %11163 = vmatpush2.bf16.msra.mxu0 %v9071
    %11164 = vmatprep.subr.bf16.mxu0 %v9064
    %11165 = vmatpush2.bf16.msra.mxu0 %v9063
    %11166 = vmatprep.mubr.bf16.mxu0 %v5456
    %11167 = vmatmul.mubr.bf16.gmra.mxu0 %v5455
    %v11168 = vpop.f32.mrf.mxu0
    %v11169 = vadd.f32 %v11126, %v11168
    %v11170 = vpop.f32.mrf.mxu0
    %v11171 = vadd.f32 %v11128, %v11170
    %v11172 = vpop.f32.mrf.mxu0
    %v11173 = vadd.f32 %v11130, %v11172
    %v11174 = vpop.f32.mrf.mxu0
    %v11175 = vadd.f32 %v11132, %v11174
    %11176 = vdwg.mxu0
    %11177 = vmatprep.subr.bf16.mxu0 %v9184
    %11178 = vmatpush1.bf16.msra.mxu0 %v9183
    %11179 = vmatprep.subr.bf16.mxu0 %v9176
    %11180 = vmatpush1.bf16.msra.mxu0 %v9175
    %11181 = vmatprep.subr.bf16.mxu0 %v9168
    %11182 = vmatpush1.bf16.msra.mxu0 %v9167
    %11183 = vmatprep.subr.bf16.mxu0 %v9160
    %11184 = vmatpush1.bf16.msra.mxu0 %v9159
    %11185 = vmatprep.subr.bf16.mxu0 %v9152
    %11186 = vmatpush1.bf16.msra.mxu0 %v9151
    %11187 = vmatprep.subr.bf16.mxu0 %v9144
    %11188 = vmatpush1.bf16.msra.mxu0 %v9143
    %11189 = vmatprep.subr.bf16.mxu0 %v9136
    %11190 = vmatpush1.bf16.msra.mxu0 %v9135
    %11191 = vmatprep.subr.bf16.mxu0 %v9128
    %11192 = vmatpush1.bf16.msra.mxu0 %v9127
    %11193 = vmatprep.subr.bf16.mxu0 %v9248
    %11194 = vmatpush2.bf16.msra.mxu0 %v9247
    %11195 = vmatprep.subr.bf16.mxu0 %v9240
    %11196 = vmatpush2.bf16.msra.mxu0 %v9239
    %11197 = vmatprep.subr.bf16.mxu0 %v9232
    %11198 = vmatpush2.bf16.msra.mxu0 %v9231
    %11199 = vmatprep.subr.bf16.mxu0 %v9224
    %11200 = vmatpush2.bf16.msra.mxu0 %v9223
    %11201 = vmatprep.subr.bf16.mxu0 %v9216
    %11202 = vmatpush2.bf16.msra.mxu0 %v9215
    %11203 = vmatprep.subr.bf16.mxu0 %v9208
    %11204 = vmatpush2.bf16.msra.mxu0 %v9207
    %11205 = vmatprep.subr.bf16.mxu0 %v9200
    %11206 = vmatpush2.bf16.msra.mxu0 %v9199
    %11207 = vmatprep.subr.bf16.mxu0 %v9192
    %11208 = vmatpush2.bf16.msra.mxu0 %v9191
    %11209 = vmatprep.mubr.bf16.mxu0 %v5458
    %11210 = vmatmul.mubr.bf16.gmra.mxu0 %v5457
    %v11211 = vpop.f32.mrf.mxu0
    %v11212 = vadd.f32 %v11169, %v11211
    %v11213 = vpop.f32.mrf.mxu0
    %v11214 = vadd.f32 %v11171, %v11213
    %v11215 = vpop.f32.mrf.mxu0
    %v11216 = vadd.f32 %v11173, %v11215
    %v11217 = vpop.f32.mrf.mxu0
    %v11218 = vadd.f32 %v11175, %v11217
    %11219 = vdwg.mxu0
    %11220 = vmatprep.subr.bf16.mxu0 %v9312
    %11221 = vmatpush1.bf16.msra.mxu0 %v9311
    %11222 = vmatprep.subr.bf16.mxu0 %v9304
    %11223 = vmatpush1.bf16.msra.mxu0 %v9303
    %11224 = vmatprep.subr.bf16.mxu0 %v9296
    %11225 = vmatpush1.bf16.msra.mxu0 %v9295
    %11226 = vmatprep.subr.bf16.mxu0 %v9288
    %11227 = vmatpush1.bf16.msra.mxu0 %v9287
    %11228 = vmatprep.subr.bf16.mxu0 %v9280
    %11229 = vmatpush1.bf16.msra.mxu0 %v9279
    %11230 = vmatprep.subr.bf16.mxu0 %v9272
    %11231 = vmatpush1.bf16.msra.mxu0 %v9271
    %11232 = vmatprep.subr.bf16.mxu0 %v9264
    %11233 = vmatpush1.bf16.msra.mxu0 %v9263
    %11234 = vmatprep.subr.bf16.mxu0 %v9256
    %11235 = vmatpush1.bf16.msra.mxu0 %v9255
    %11236 = vmatprep.subr.bf16.mxu0 %v9376
    %11237 = vmatpush2.bf16.msra.mxu0 %v9375
    %11238 = vmatprep.subr.bf16.mxu0 %v9368
    %11239 = vmatpush2.bf16.msra.mxu0 %v9367
    %11240 = vmatprep.subr.bf16.mxu0 %v9360
    %11241 = vmatpush2.bf16.msra.mxu0 %v9359
    %11242 = vmatprep.subr.bf16.mxu0 %v9352
    %11243 = vmatpush2.bf16.msra.mxu0 %v9351
    %11244 = vmatprep.subr.bf16.mxu0 %v9344
    %11245 = vmatpush2.bf16.msra.mxu0 %v9343
    %11246 = vmatprep.subr.bf16.mxu0 %v9336
    %11247 = vmatpush2.bf16.msra.mxu0 %v9335
    %11248 = vmatprep.subr.bf16.mxu0 %v9328
    %11249 = vmatpush2.bf16.msra.mxu0 %v9327
    %11250 = vmatprep.subr.bf16.mxu0 %v9320
    %11251 = vmatpush2.bf16.msra.mxu0 %v9319
    %11252 = vmatprep.mubr.bf16.mxu0 %v5460
    %11253 = vmatmul.mubr.bf16.gmra.mxu0 %v5459
    %v11254 = vpop.f32.mrf.mxu0
    %v11255 = vadd.f32 %v11212, %v11254
    %v11256 = vpop.f32.mrf.mxu0
    %v11257 = vadd.f32 %v11214, %v11256
    %v11258 = vpop.f32.mrf.mxu0
    %v11259 = vadd.f32 %v11216, %v11258
    %v11260 = vpop.f32.mrf.mxu0
    %v11261 = vadd.f32 %v11218, %v11260
    %11262 = vdwg.mxu0
    %11263 = vmatprep.subr.bf16.mxu0 %v9440
    %11264 = vmatpush1.bf16.msra.mxu0 %v9439
    %11265 = vmatprep.subr.bf16.mxu0 %v9432
    %11266 = vmatpush1.bf16.msra.mxu0 %v9431
    %11267 = vmatprep.subr.bf16.mxu0 %v9424
    %11268 = vmatpush1.bf16.msra.mxu0 %v9423
    %11269 = vmatprep.subr.bf16.mxu0 %v9416
    %11270 = vmatpush1.bf16.msra.mxu0 %v9415
    %11271 = vmatprep.subr.bf16.mxu0 %v9408
    %11272 = vmatpush1.bf16.msra.mxu0 %v9407
    %11273 = vmatprep.subr.bf16.mxu0 %v9400
    %11274 = vmatpush1.bf16.msra.mxu0 %v9399
    %11275 = vmatprep.subr.bf16.mxu0 %v9392
    %11276 = vmatpush1.bf16.msra.mxu0 %v9391
    %11277 = vmatprep.subr.bf16.mxu0 %v9384
    %11278 = vmatpush1.bf16.msra.mxu0 %v9383
    %11279 = vmatprep.subr.bf16.mxu0 %v9504
    %11280 = vmatpush2.bf16.msra.mxu0 %v9503
    %11281 = vmatprep.subr.bf16.mxu0 %v9496
    %11282 = vmatpush2.bf16.msra.mxu0 %v9495
    %11283 = vmatprep.subr.bf16.mxu0 %v9488
    %11284 = vmatpush2.bf16.msra.mxu0 %v9487
    %11285 = vmatprep.subr.bf16.mxu0 %v9480
    %11286 = vmatpush2.bf16.msra.mxu0 %v9479
    %11287 = vmatprep.subr.bf16.mxu0 %v9472
    %11288 = vmatpush2.bf16.msra.mxu0 %v9471
    %11289 = vmatprep.subr.bf16.mxu0 %v9464
    %11290 = vmatpush2.bf16.msra.mxu0 %v9463
    %11291 = vmatprep.subr.bf16.mxu0 %v9456
    %11292 = vmatpush2.bf16.msra.mxu0 %v9455
    %11293 = vmatprep.subr.bf16.mxu0 %v9448
    %11294 = vmatpush2.bf16.msra.mxu0 %v9447
    %11295 = vmatprep.mubr.bf16.mxu0 %v5462
    %11296 = vmatmul.mubr.bf16.gmra.mxu0 %v5461
    %v11297 = vpop.f32.mrf.mxu0
    %v11298 = vadd.f32 %v11255, %v11297
    %v11299 = vpop.f32.mrf.mxu0
    %v11300 = vadd.f32 %v11257, %v11299
    %v11301 = vpop.f32.mrf.mxu0
    %v11302 = vadd.f32 %v11259, %v11301
    %v11303 = vpop.f32.mrf.mxu0
    %v11304 = vadd.f32 %v11261, %v11303
    %11305 = vdwg.mxu0
    %11306 = vmatprep.subr.bf16.mxu0 %v9568
    %11307 = vmatpush1.bf16.msra.mxu0 %v9567
    %11308 = vmatprep.subr.bf16.mxu0 %v9560
    %11309 = vmatpush1.bf16.msra.mxu0 %v9559
    %11310 = vmatprep.subr.bf16.mxu0 %v9552
    %11311 = vmatpush1.bf16.msra.mxu0 %v9551
    %11312 = vmatprep.subr.bf16.mxu0 %v9544
    %11313 = vmatpush1.bf16.msra.mxu0 %v9543
    %11314 = vmatprep.subr.bf16.mxu0 %v9536
    %11315 = vmatpush1.bf16.msra.mxu0 %v9535
    %11316 = vmatprep.subr.bf16.mxu0 %v9528
    %11317 = vmatpush1.bf16.msra.mxu0 %v9527
    %11318 = vmatprep.subr.bf16.mxu0 %v9520
    %11319 = vmatpush1.bf16.msra.mxu0 %v9519
    %11320 = vmatprep.subr.bf16.mxu0 %v9512
    %11321 = vmatpush1.bf16.msra.mxu0 %v9511
    %11322 = vmatprep.subr.bf16.mxu0 %v9632
    %11323 = vmatpush2.bf16.msra.mxu0 %v9631
    %11324 = vmatprep.subr.bf16.mxu0 %v9624
    %11325 = vmatpush2.bf16.msra.mxu0 %v9623
    %11326 = vmatprep.subr.bf16.mxu0 %v9616
    %11327 = vmatpush2.bf16.msra.mxu0 %v9615
    %11328 = vmatprep.subr.bf16.mxu0 %v9608
    %11329 = vmatpush2.bf16.msra.mxu0 %v9607
    %11330 = vmatprep.subr.bf16.mxu0 %v9600
    %11331 = vmatpush2.bf16.msra.mxu0 %v9599
    %11332 = vmatprep.subr.bf16.mxu0 %v9592
    %11333 = vmatpush2.bf16.msra.mxu0 %v9591
    %11334 = vmatprep.subr.bf16.mxu0 %v9584
    %11335 = vmatpush2.bf16.msra.mxu0 %v9583
    %11336 = vmatprep.subr.bf16.mxu0 %v9576
    %11337 = vmatpush2.bf16.msra.mxu0 %v9575
    %11338 = vmatprep.mubr.bf16.mxu0 %v5464
    %11339 = vmatmul.mubr.bf16.gmra.mxu0 %v5463
    %v11340 = vpop.f32.mrf.mxu0
    %v11341 = vadd.f32 %v11298, %v11340
    %v11342 = vpop.f32.mrf.mxu0
    %v11343 = vadd.f32 %v11300, %v11342
    %v11344 = vpop.f32.mrf.mxu0
    %v11345 = vadd.f32 %v11302, %v11344
    %v11346 = vpop.f32.mrf.mxu0
    %v11347 = vadd.f32 %v11304, %v11346
    %11348 = vdwg.mxu0
    %11349 = vmatprep.subr.bf16.mxu0 %v8674
    %11350 = vmatpush1.bf16.msra.mxu0 %v8673
    %11351 = vmatprep.subr.bf16.mxu0 %v8666
    %11352 = vmatpush1.bf16.msra.mxu0 %v8665
    %11353 = vmatprep.subr.bf16.mxu0 %v8658
    %11354 = vmatpush1.bf16.msra.mxu0 %v8657
    %11355 = vmatprep.subr.bf16.mxu0 %v8650
    %11356 = vmatpush1.bf16.msra.mxu0 %v8649
    %11357 = vmatprep.subr.bf16.mxu0 %v8642
    %11358 = vmatpush1.bf16.msra.mxu0 %v8641
    %11359 = vmatprep.subr.bf16.mxu0 %v8634
    %11360 = vmatpush1.bf16.msra.mxu0 %v8633
    %11361 = vmatprep.subr.bf16.mxu0 %v8626
    %11362 = vmatpush1.bf16.msra.mxu0 %v8625
    %11363 = vmatprep.subr.bf16.mxu0 %v8618
    %11364 = vmatpush1.bf16.msra.mxu0 %v8617
    %11365 = vmatprep.subr.bf16.mxu0 %v8738
    %11366 = vmatpush2.bf16.msra.mxu0 %v8737
    %11367 = vmatprep.subr.bf16.mxu0 %v8730
    %11368 = vmatpush2.bf16.msra.mxu0 %v8729
    %11369 = vmatprep.subr.bf16.mxu0 %v8722
    %11370 = vmatpush2.bf16.msra.mxu0 %v8721
    %11371 = vmatprep.subr.bf16.mxu0 %v8714
    %11372 = vmatpush2.bf16.msra.mxu0 %v8713
    %11373 = vmatprep.subr.bf16.mxu0 %v8706
    %11374 = vmatpush2.bf16.msra.mxu0 %v8705
    %11375 = vmatprep.subr.bf16.mxu0 %v8698
    %11376 = vmatpush2.bf16.msra.mxu0 %v8697
    %11377 = vmatprep.subr.bf16.mxu0 %v8690
    %11378 = vmatpush2.bf16.msra.mxu0 %v8689
    %11379 = vmatprep.subr.bf16.mxu0 %v8682
    %11380 = vmatpush2.bf16.msra.mxu0 %v8681
    %11381 = vmatprep.mubr.bf16.mxu0 %v5450
    %11382 = vmatmul.mubr.bf16.gmra.mxu0 %v5449
    %v11383 = vpop.f32.mrf.mxu0
    %v11384 = vadd.f32 %v5528, %v11383
    %v11385 = vpop.f32.mrf.mxu0
    %v11386 = vadd.f32 %v5532, %v11385
    %v11387 = vpop.f32.mrf.mxu0
    %v11388 = vadd.f32 %v5528, %v11387
    %v11389 = vpop.f32.mrf.mxu0
    %v11390 = vadd.f32 %v5532, %v11389
    %11391 = vdwg.mxu0
    %11392 = vmatprep.subr.bf16.mxu0 %v8802
    %11393 = vmatpush1.bf16.msra.mxu0 %v8801
    %11394 = vmatprep.subr.bf16.mxu0 %v8794
    %11395 = vmatpush1.bf16.msra.mxu0 %v8793
    %11396 = vmatprep.subr.bf16.mxu0 %v8786
    %11397 = vmatpush1.bf16.msra.mxu0 %v8785
    %11398 = vmatprep.subr.bf16.mxu0 %v8778
    %11399 = vmatpush1.bf16.msra.mxu0 %v8777
    %11400 = vmatprep.subr.bf16.mxu0 %v8770
    %11401 = vmatpush1.bf16.msra.mxu0 %v8769
    %11402 = vmatprep.subr.bf16.mxu0 %v8762
    %11403 = vmatpush1.bf16.msra.mxu0 %v8761
    %11404 = vmatprep.subr.bf16.mxu0 %v8754
    %11405 = vmatpush1.bf16.msra.mxu0 %v8753
    %11406 = vmatprep.subr.bf16.mxu0 %v8746
    %11407 = vmatpush1.bf16.msra.mxu0 %v8745
    %11408 = vmatprep.subr.bf16.mxu0 %v8866
    %11409 = vmatpush2.bf16.msra.mxu0 %v8865
    %11410 = vmatprep.subr.bf16.mxu0 %v8858
    %11411 = vmatpush2.bf16.msra.mxu0 %v8857
    %11412 = vmatprep.subr.bf16.mxu0 %v8850
    %11413 = vmatpush2.bf16.msra.mxu0 %v8849
    %11414 = vmatprep.subr.bf16.mxu0 %v8842
    %11415 = vmatpush2.bf16.msra.mxu0 %v8841
    %11416 = vmatprep.subr.bf16.mxu0 %v8834
    %11417 = vmatpush2.bf16.msra.mxu0 %v8833
    %11418 = vmatprep.subr.bf16.mxu0 %v8826
    %11419 = vmatpush2.bf16.msra.mxu0 %v8825
    %11420 = vmatprep.subr.bf16.mxu0 %v8818
    %11421 = vmatpush2.bf16.msra.mxu0 %v8817
    %11422 = vmatprep.subr.bf16.mxu0 %v8810
    %11423 = vmatpush2.bf16.msra.mxu0 %v8809
    %11424 = vmatprep.mubr.bf16.mxu0 %v5452
    %11425 = vmatmul.mubr.bf16.gmra.mxu0 %v5451
    %v11426 = vpop.f32.mrf.mxu0
    %v11427 = vadd.f32 %v11384, %v11426
    %v11428 = vpop.f32.mrf.mxu0
    %v11429 = vadd.f32 %v11386, %v11428
    %v11430 = vpop.f32.mrf.mxu0
    %v11431 = vadd.f32 %v11388, %v11430
    %v11432 = vpop.f32.mrf.mxu0
    %v11433 = vadd.f32 %v11390, %v11432
    %11434 = vdwg.mxu0
    %11435 = vmatprep.subr.bf16.mxu0 %v8930
    %11436 = vmatpush1.bf16.msra.mxu0 %v8929
    %11437 = vmatprep.subr.bf16.mxu0 %v8922
    %11438 = vmatpush1.bf16.msra.mxu0 %v8921
    %11439 = vmatprep.subr.bf16.mxu0 %v8914
    %11440 = vmatpush1.bf16.msra.mxu0 %v8913
    %11441 = vmatprep.subr.bf16.mxu0 %v8906
    %11442 = vmatpush1.bf16.msra.mxu0 %v8905
    %11443 = vmatprep.subr.bf16.mxu0 %v8898
    %11444 = vmatpush1.bf16.msra.mxu0 %v8897
    %11445 = vmatprep.subr.bf16.mxu0 %v8890
    %11446 = vmatpush1.bf16.msra.mxu0 %v8889
    %11447 = vmatprep.subr.bf16.mxu0 %v8882
    %11448 = vmatpush1.bf16.msra.mxu0 %v8881
    %11449 = vmatprep.subr.bf16.mxu0 %v8874
    %11450 = vmatpush1.bf16.msra.mxu0 %v8873
    %11451 = vmatprep.subr.bf16.mxu0 %v8994
    %11452 = vmatpush2.bf16.msra.mxu0 %v8993
    %11453 = vmatprep.subr.bf16.mxu0 %v8986
    %11454 = vmatpush2.bf16.msra.mxu0 %v8985
    %11455 = vmatprep.subr.bf16.mxu0 %v8978
    %11456 = vmatpush2.bf16.msra.mxu0 %v8977
    %11457 = vmatprep.subr.bf16.mxu0 %v8970
    %11458 = vmatpush2.bf16.msra.mxu0 %v8969
    %11459 = vmatprep.subr.bf16.mxu0 %v8962
    %11460 = vmatpush2.bf16.msra.mxu0 %v8961
    %11461 = vmatprep.subr.bf16.mxu0 %v8954
    %11462 = vmatpush2.bf16.msra.mxu0 %v8953
    %11463 = vmatprep.subr.bf16.mxu0 %v8946
    %11464 = vmatpush2.bf16.msra.mxu0 %v8945
    %11465 = vmatprep.subr.bf16.mxu0 %v8938
    %11466 = vmatpush2.bf16.msra.mxu0 %v8937
    %11467 = vmatprep.mubr.bf16.mxu0 %v5454
    %11468 = vmatmul.mubr.bf16.gmra.mxu0 %v5453
    %v11469 = vpop.f32.mrf.mxu0
    %v11470 = vadd.f32 %v11427, %v11469
    %v11471 = vpop.f32.mrf.mxu0
    %v11472 = vadd.f32 %v11429, %v11471
    %v11473 = vpop.f32.mrf.mxu0
    %v11474 = vadd.f32 %v11431, %v11473
    %v11475 = vpop.f32.mrf.mxu0
    %v11476 = vadd.f32 %v11433, %v11475
    %11477 = vdwg.mxu0
    %11478 = vmatprep.subr.bf16.mxu0 %v9058
    %11479 = vmatpush1.bf16.msra.mxu0 %v9057
    %11480 = vmatprep.subr.bf16.mxu0 %v9050
    %11481 = vmatpush1.bf16.msra.mxu0 %v9049
    %11482 = vmatprep.subr.bf16.mxu0 %v9042
    %11483 = vmatpush1.bf16.msra.mxu0 %v9041
    %11484 = vmatprep.subr.bf16.mxu0 %v9034
    %11485 = vmatpush1.bf16.msra.mxu0 %v9033
    %11486 = vmatprep.subr.bf16.mxu0 %v9026
    %11487 = vmatpush1.bf16.msra.mxu0 %v9025
    %11488 = vmatprep.subr.bf16.mxu0 %v9018
    %11489 = vmatpush1.bf16.msra.mxu0 %v9017
    %11490 = vmatprep.subr.bf16.mxu0 %v9010
    %11491 = vmatpush1.bf16.msra.mxu0 %v9009
    %11492 = vmatprep.subr.bf16.mxu0 %v9002
    %11493 = vmatpush1.bf16.msra.mxu0 %v9001
    %11494 = vmatprep.subr.bf16.mxu0 %v9122
    %11495 = vmatpush2.bf16.msra.mxu0 %v9121
    %11496 = vmatprep.subr.bf16.mxu0 %v9114
    %11497 = vmatpush2.bf16.msra.mxu0 %v9113
    %11498 = vmatprep.subr.bf16.mxu0 %v9106
    %11499 = vmatpush2.bf16.msra.mxu0 %v9105
    %11500 = vmatprep.subr.bf16.mxu0 %v9098
    %11501 = vmatpush2.bf16.msra.mxu0 %v9097
    %11502 = vmatprep.subr.bf16.mxu0 %v9090
    %11503 = vmatpush2.bf16.msra.mxu0 %v9089
    %11504 = vmatprep.subr.bf16.mxu0 %v9082
    %11505 = vmatpush2.bf16.msra.mxu0 %v9081
    %11506 = vmatprep.subr.bf16.mxu0 %v9074
    %11507 = vmatpush2.bf16.msra.mxu0 %v9073
    %11508 = vmatprep.subr.bf16.mxu0 %v9066
    %11509 = vmatpush2.bf16.msra.mxu0 %v9065
    %11510 = vmatprep.mubr.bf16.mxu0 %v5456
    %11511 = vmatmul.mubr.bf16.gmra.mxu0 %v5455
    %v11512 = vpop.f32.mrf.mxu0
    %v11513 = vadd.f32 %v11470, %v11512
    %v11514 = vpop.f32.mrf.mxu0
    %v11515 = vadd.f32 %v11472, %v11514
    %v11516 = vpop.f32.mrf.mxu0
    %v11517 = vadd.f32 %v11474, %v11516
    %v11518 = vpop.f32.mrf.mxu0
    %v11519 = vadd.f32 %v11476, %v11518
    %11520 = vdwg.mxu0
    %11521 = vmatprep.subr.bf16.mxu0 %v9186
    %11522 = vmatpush1.bf16.msra.mxu0 %v9185
    %11523 = vmatprep.subr.bf16.mxu0 %v9178
    %11524 = vmatpush1.bf16.msra.mxu0 %v9177
    %11525 = vmatprep.subr.bf16.mxu0 %v9170
    %11526 = vmatpush1.bf16.msra.mxu0 %v9169
    %11527 = vmatprep.subr.bf16.mxu0 %v9162
    %11528 = vmatpush1.bf16.msra.mxu0 %v9161
    %11529 = vmatprep.subr.bf16.mxu0 %v9154
    %11530 = vmatpush1.bf16.msra.mxu0 %v9153
    %11531 = vmatprep.subr.bf16.mxu0 %v9146
    %11532 = vmatpush1.bf16.msra.mxu0 %v9145
    %11533 = vmatprep.subr.bf16.mxu0 %v9138
    %11534 = vmatpush1.bf16.msra.mxu0 %v9137
    %11535 = vmatprep.subr.bf16.mxu0 %v9130
    %11536 = vmatpush1.bf16.msra.mxu0 %v9129
    %11537 = vmatprep.subr.bf16.mxu0 %v9250
    %11538 = vmatpush2.bf16.msra.mxu0 %v9249
    %11539 = vmatprep.subr.bf16.mxu0 %v9242
    %11540 = vmatpush2.bf16.msra.mxu0 %v9241
    %11541 = vmatprep.subr.bf16.mxu0 %v9234
    %11542 = vmatpush2.bf16.msra.mxu0 %v9233
    %11543 = vmatprep.subr.bf16.mxu0 %v9226
    %11544 = vmatpush2.bf16.msra.mxu0 %v9225
    %11545 = vmatprep.subr.bf16.mxu0 %v9218
    %11546 = vmatpush2.bf16.msra.mxu0 %v9217
    %11547 = vmatprep.subr.bf16.mxu0 %v9210
    %11548 = vmatpush2.bf16.msra.mxu0 %v9209
    %11549 = vmatprep.subr.bf16.mxu0 %v9202
    %11550 = vmatpush2.bf16.msra.mxu0 %v9201
    %11551 = vmatprep.subr.bf16.mxu0 %v9194
    %11552 = vmatpush2.bf16.msra.mxu0 %v9193
    %11553 = vmatprep.mubr.bf16.mxu0 %v5458
    %11554 = vmatmul.mubr.bf16.gmra.mxu0 %v5457
    %v11555 = vpop.f32.mrf.mxu0
    %v11556 = vadd.f32 %v11513, %v11555
    %v11557 = vpop.f32.mrf.mxu0
    %v11558 = vadd.f32 %v11515, %v11557
    %v11559 = vpop.f32.mrf.mxu0
    %v11560 = vadd.f32 %v11517, %v11559
    %v11561 = vpop.f32.mrf.mxu0
    %v11562 = vadd.f32 %v11519, %v11561
    %11563 = vdwg.mxu0
    %11564 = vmatprep.subr.bf16.mxu0 %v9314
    %11565 = vmatpush1.bf16.msra.mxu0 %v9313
    %11566 = vmatprep.subr.bf16.mxu0 %v9306
    %11567 = vmatpush1.bf16.msra.mxu0 %v9305
    %11568 = vmatprep.subr.bf16.mxu0 %v9298
    %11569 = vmatpush1.bf16.msra.mxu0 %v9297
    %11570 = vmatprep.subr.bf16.mxu0 %v9290
    %11571 = vmatpush1.bf16.msra.mxu0 %v9289
    %11572 = vmatprep.subr.bf16.mxu0 %v9282
    %11573 = vmatpush1.bf16.msra.mxu0 %v9281
    %11574 = vmatprep.subr.bf16.mxu0 %v9274
    %11575 = vmatpush1.bf16.msra.mxu0 %v9273
    %11576 = vmatprep.subr.bf16.mxu0 %v9266
    %11577 = vmatpush1.bf16.msra.mxu0 %v9265
    %11578 = vmatprep.subr.bf16.mxu0 %v9258
    %11579 = vmatpush1.bf16.msra.mxu0 %v9257
    %11580 = vmatprep.subr.bf16.mxu0 %v9378
    %11581 = vmatpush2.bf16.msra.mxu0 %v9377
    %11582 = vmatprep.subr.bf16.mxu0 %v9370
    %11583 = vmatpush2.bf16.msra.mxu0 %v9369
    %11584 = vmatprep.subr.bf16.mxu0 %v9362
    %11585 = vmatpush2.bf16.msra.mxu0 %v9361
    %11586 = vmatprep.subr.bf16.mxu0 %v9354
    %11587 = vmatpush2.bf16.msra.mxu0 %v9353
    %11588 = vmatprep.subr.bf16.mxu0 %v9346
    %11589 = vmatpush2.bf16.msra.mxu0 %v9345
    %11590 = vmatprep.subr.bf16.mxu0 %v9338
    %11591 = vmatpush2.bf16.msra.mxu0 %v9337
    %11592 = vmatprep.subr.bf16.mxu0 %v9330
    %11593 = vmatpush2.bf16.msra.mxu0 %v9329
    %11594 = vmatprep.subr.bf16.mxu0 %v9322
    %11595 = vmatpush2.bf16.msra.mxu0 %v9321
    %11596 = vmatprep.mubr.bf16.mxu0 %v5460
    %11597 = vmatmul.mubr.bf16.gmra.mxu0 %v5459
    %v11598 = vpop.f32.mrf.mxu0
    %v11599 = vadd.f32 %v11556, %v11598
    %v11600 = vpop.f32.mrf.mxu0
    %v11601 = vadd.f32 %v11558, %v11600
    %v11602 = vpop.f32.mrf.mxu0
    %v11603 = vadd.f32 %v11560, %v11602
    %v11604 = vpop.f32.mrf.mxu0
    %v11605 = vadd.f32 %v11562, %v11604
    %11606 = vdwg.mxu0
    %11607 = vmatprep.subr.bf16.mxu0 %v9442
    %11608 = vmatpush1.bf16.msra.mxu0 %v9441
    %11609 = vmatprep.subr.bf16.mxu0 %v9434
    %11610 = vmatpush1.bf16.msra.mxu0 %v9433
    %11611 = vmatprep.subr.bf16.mxu0 %v9426
    %11612 = vmatpush1.bf16.msra.mxu0 %v9425
    %11613 = vmatprep.subr.bf16.mxu0 %v9418
    %11614 = vmatpush1.bf16.msra.mxu0 %v9417
    %11615 = vmatprep.subr.bf16.mxu0 %v9410
    %11616 = vmatpush1.bf16.msra.mxu0 %v9409
    %11617 = vmatprep.subr.bf16.mxu0 %v9402
    %11618 = vmatpush1.bf16.msra.mxu0 %v9401
    %11619 = vmatprep.subr.bf16.mxu0 %v9394
    %11620 = vmatpush1.bf16.msra.mxu0 %v9393
    %11621 = vmatprep.subr.bf16.mxu0 %v9386
    %11622 = vmatpush1.bf16.msra.mxu0 %v9385
    %11623 = vmatprep.subr.bf16.mxu0 %v9506
    %11624 = vmatpush2.bf16.msra.mxu0 %v9505
    %11625 = vmatprep.subr.bf16.mxu0 %v9498
    %11626 = vmatpush2.bf16.msra.mxu0 %v9497
    %11627 = vmatprep.subr.bf16.mxu0 %v9490
    %11628 = vmatpush2.bf16.msra.mxu0 %v9489
    %11629 = vmatprep.subr.bf16.mxu0 %v9482
    %11630 = vmatpush2.bf16.msra.mxu0 %v9481
    %11631 = vmatprep.subr.bf16.mxu0 %v9474
    %11632 = vmatpush2.bf16.msra.mxu0 %v9473
    %11633 = vmatprep.subr.bf16.mxu0 %v9466
    %11634 = vmatpush2.bf16.msra.mxu0 %v9465
    %11635 = vmatprep.subr.bf16.mxu0 %v9458
    %11636 = vmatpush2.bf16.msra.mxu0 %v9457
    %11637 = vmatprep.subr.bf16.mxu0 %v9450
    %11638 = vmatpush2.bf16.msra.mxu0 %v9449
    %11639 = vmatprep.mubr.bf16.mxu0 %v5462
    %11640 = vmatmul.mubr.bf16.gmra.mxu0 %v5461
    %v11641 = vpop.f32.mrf.mxu0
    %v11642 = vadd.f32 %v11599, %v11641
    %v11643 = vpop.f32.mrf.mxu0
    %v11644 = vadd.f32 %v11601, %v11643
    %v11645 = vpop.f32.mrf.mxu0
    %v11646 = vadd.f32 %v11603, %v11645
    %v11647 = vpop.f32.mrf.mxu0
    %v11648 = vadd.f32 %v11605, %v11647
    %11649 = vdwg.mxu0
    %11650 = vmatprep.subr.bf16.mxu0 %v9570
    %11651 = vmatpush1.bf16.msra.mxu0 %v9569
    %11652 = vmatprep.subr.bf16.mxu0 %v9562
    %11653 = vmatpush1.bf16.msra.mxu0 %v9561
    %11654 = vmatprep.subr.bf16.mxu0 %v9554
    %11655 = vmatpush1.bf16.msra.mxu0 %v9553
    %11656 = vmatprep.subr.bf16.mxu0 %v9546
    %11657 = vmatpush1.bf16.msra.mxu0 %v9545
    %11658 = vmatprep.subr.bf16.mxu0 %v9538
    %11659 = vmatpush1.bf16.msra.mxu0 %v9537
    %11660 = vmatprep.subr.bf16.mxu0 %v9530
    %11661 = vmatpush1.bf16.msra.mxu0 %v9529
    %11662 = vmatprep.subr.bf16.mxu0 %v9522
    %11663 = vmatpush1.bf16.msra.mxu0 %v9521
    %11664 = vmatprep.subr.bf16.mxu0 %v9514
    %11665 = vmatpush1.bf16.msra.mxu0 %v9513
    %11666 = vmatprep.subr.bf16.mxu0 %v9634
    %11667 = vmatpush2.bf16.msra.mxu0 %v9633
    %11668 = vmatprep.subr.bf16.mxu0 %v9626
    %11669 = vmatpush2.bf16.msra.mxu0 %v9625
    %11670 = vmatprep.subr.bf16.mxu0 %v9618
    %11671 = vmatpush2.bf16.msra.mxu0 %v9617
    %11672 = vmatprep.subr.bf16.mxu0 %v9610
    %11673 = vmatpush2.bf16.msra.mxu0 %v9609
    %11674 = vmatprep.subr.bf16.mxu0 %v9602
    %11675 = vmatpush2.bf16.msra.mxu0 %v9601
    %11676 = vmatprep.subr.bf16.mxu0 %v9594
    %11677 = vmatpush2.bf16.msra.mxu0 %v9593
    %11678 = vmatprep.subr.bf16.mxu0 %v9586
    %11679 = vmatpush2.bf16.msra.mxu0 %v9585
    %11680 = vmatprep.subr.bf16.mxu0 %v9578
    %11681 = vmatpush2.bf16.msra.mxu0 %v9577
    %11682 = vmatprep.mubr.bf16.mxu0 %v5464
    %11683 = vmatmul.mubr.bf16.gmra.mxu0 %v5463
    %v11684 = vpop.f32.mrf.mxu0
    %v11685 = vadd.f32 %v11642, %v11684
    %v11686 = vpop.f32.mrf.mxu0
    %v11687 = vadd.f32 %v11644, %v11686
    %v11688 = vpop.f32.mrf.mxu0
    %v11689 = vadd.f32 %v11646, %v11688
    %v11690 = vpop.f32.mrf.mxu0
    %v11691 = vadd.f32 %v11648, %v11690
    %11692 = vdwg.mxu0
    %11693 = vmatprep.subr.bf16.mxu0 %v8676
    %11694 = vmatpush1.bf16.msra.mxu0 %v8675
    %11695 = vmatprep.subr.bf16.mxu0 %v8668
    %11696 = vmatpush1.bf16.msra.mxu0 %v8667
    %11697 = vmatprep.subr.bf16.mxu0 %v8660
    %11698 = vmatpush1.bf16.msra.mxu0 %v8659
    %11699 = vmatprep.subr.bf16.mxu0 %v8652
    %11700 = vmatpush1.bf16.msra.mxu0 %v8651
    %11701 = vmatprep.subr.bf16.mxu0 %v8644
    %11702 = vmatpush1.bf16.msra.mxu0 %v8643
    %11703 = vmatprep.subr.bf16.mxu0 %v8636
    %11704 = vmatpush1.bf16.msra.mxu0 %v8635
    %11705 = vmatprep.subr.bf16.mxu0 %v8628
    %11706 = vmatpush1.bf16.msra.mxu0 %v8627
    %11707 = vmatprep.subr.bf16.mxu0 %v8620
    %11708 = vmatpush1.bf16.msra.mxu0 %v8619
    %11709 = vmatprep.subr.bf16.mxu0 %v8740
    %11710 = vmatpush2.bf16.msra.mxu0 %v8739
    %11711 = vmatprep.subr.bf16.mxu0 %v8732
    %11712 = vmatpush2.bf16.msra.mxu0 %v8731
    %11713 = vmatprep.subr.bf16.mxu0 %v8724
    %11714 = vmatpush2.bf16.msra.mxu0 %v8723
    %11715 = vmatprep.subr.bf16.mxu0 %v8716
    %11716 = vmatpush2.bf16.msra.mxu0 %v8715
    %11717 = vmatprep.subr.bf16.mxu0 %v8708
    %11718 = vmatpush2.bf16.msra.mxu0 %v8707
    %11719 = vmatprep.subr.bf16.mxu0 %v8700
    %11720 = vmatpush2.bf16.msra.mxu0 %v8699
    %11721 = vmatprep.subr.bf16.mxu0 %v8692
    %11722 = vmatpush2.bf16.msra.mxu0 %v8691
    %11723 = vmatprep.subr.bf16.mxu0 %v8684
    %11724 = vmatpush2.bf16.msra.mxu0 %v8683
    %11725 = vmatprep.mubr.bf16.mxu0 %v5450
    %11726 = vmatmul.mubr.bf16.gmra.mxu0 %v5449
    %v11727 = vpop.f32.mrf.mxu0
    %v11728 = vadd.f32 %v5536, %v11727
    %v11729 = vpop.f32.mrf.mxu0
    %v11730 = vadd.f32 %v5540, %v11729
    %v11731 = vpop.f32.mrf.mxu0
    %v11732 = vadd.f32 %v5536, %v11731
    %v11733 = vpop.f32.mrf.mxu0
    %v11734 = vadd.f32 %v5540, %v11733
    %11735 = vdwg.mxu0
    %11736 = vmatprep.subr.bf16.mxu0 %v8804
    %11737 = vmatpush1.bf16.msra.mxu0 %v8803
    %11738 = vmatprep.subr.bf16.mxu0 %v8796
    %11739 = vmatpush1.bf16.msra.mxu0 %v8795
    %11740 = vmatprep.subr.bf16.mxu0 %v8788
    %11741 = vmatpush1.bf16.msra.mxu0 %v8787
    %11742 = vmatprep.subr.bf16.mxu0 %v8780
    %11743 = vmatpush1.bf16.msra.mxu0 %v8779
    %11744 = vmatprep.subr.bf16.mxu0 %v8772
    %11745 = vmatpush1.bf16.msra.mxu0 %v8771
    %11746 = vmatprep.subr.bf16.mxu0 %v8764
    %11747 = vmatpush1.bf16.msra.mxu0 %v8763
    %11748 = vmatprep.subr.bf16.mxu0 %v8756
    %11749 = vmatpush1.bf16.msra.mxu0 %v8755
    %11750 = vmatprep.subr.bf16.mxu0 %v8748
    %11751 = vmatpush1.bf16.msra.mxu0 %v8747
    %11752 = vmatprep.subr.bf16.mxu0 %v8868
    %11753 = vmatpush2.bf16.msra.mxu0 %v8867
    %11754 = vmatprep.subr.bf16.mxu0 %v8860
    %11755 = vmatpush2.bf16.msra.mxu0 %v8859
    %11756 = vmatprep.subr.bf16.mxu0 %v8852
    %11757 = vmatpush2.bf16.msra.mxu0 %v8851
    %11758 = vmatprep.subr.bf16.mxu0 %v8844
    %11759 = vmatpush2.bf16.msra.mxu0 %v8843
    %11760 = vmatprep.subr.bf16.mxu0 %v8836
    %11761 = vmatpush2.bf16.msra.mxu0 %v8835
    %11762 = vmatprep.subr.bf16.mxu0 %v8828
    %11763 = vmatpush2.bf16.msra.mxu0 %v8827
    %11764 = vmatprep.subr.bf16.mxu0 %v8820
    %11765 = vmatpush2.bf16.msra.mxu0 %v8819
    %11766 = vmatprep.subr.bf16.mxu0 %v8812
    %11767 = vmatpush2.bf16.msra.mxu0 %v8811
    %11768 = vmatprep.mubr.bf16.mxu0 %v5452
    %11769 = vmatmul.mubr.bf16.gmra.mxu0 %v5451
    %v11770 = vpop.f32.mrf.mxu0
    %v11771 = vadd.f32 %v11728, %v11770
    %v11772 = vpop.f32.mrf.mxu0
    %v11773 = vadd.f32 %v11730, %v11772
    %v11774 = vpop.f32.mrf.mxu0
    %v11775 = vadd.f32 %v11732, %v11774
    %v11776 = vpop.f32.mrf.mxu0
    %v11777 = vadd.f32 %v11734, %v11776
    %11778 = vdwg.mxu0
    %11779 = vmatprep.subr.bf16.mxu0 %v8932
    %11780 = vmatpush1.bf16.msra.mxu0 %v8931
    %11781 = vmatprep.subr.bf16.mxu0 %v8924
    %11782 = vmatpush1.bf16.msra.mxu0 %v8923
    %11783 = vmatprep.subr.bf16.mxu0 %v8916
    %11784 = vmatpush1.bf16.msra.mxu0 %v8915
    %11785 = vmatprep.subr.bf16.mxu0 %v8908
    %11786 = vmatpush1.bf16.msra.mxu0 %v8907
    %11787 = vmatprep.subr.bf16.mxu0 %v8900
    %11788 = vmatpush1.bf16.msra.mxu0 %v8899
    %11789 = vmatprep.subr.bf16.mxu0 %v8892
    %11790 = vmatpush1.bf16.msra.mxu0 %v8891
    %11791 = vmatprep.subr.bf16.mxu0 %v8884
    %11792 = vmatpush1.bf16.msra.mxu0 %v8883
    %11793 = vmatprep.subr.bf16.mxu0 %v8876
    %11794 = vmatpush1.bf16.msra.mxu0 %v8875
    %11795 = vmatprep.subr.bf16.mxu0 %v8996
    %11796 = vmatpush2.bf16.msra.mxu0 %v8995
    %11797 = vmatprep.subr.bf16.mxu0 %v8988
    %11798 = vmatpush2.bf16.msra.mxu0 %v8987
    %11799 = vmatprep.subr.bf16.mxu0 %v8980
    %11800 = vmatpush2.bf16.msra.mxu0 %v8979
    %11801 = vmatprep.subr.bf16.mxu0 %v8972
    %11802 = vmatpush2.bf16.msra.mxu0 %v8971
    %11803 = vmatprep.subr.bf16.mxu0 %v8964
    %11804 = vmatpush2.bf16.msra.mxu0 %v8963
    %11805 = vmatprep.subr.bf16.mxu0 %v8956
    %11806 = vmatpush2.bf16.msra.mxu0 %v8955
    %11807 = vmatprep.subr.bf16.mxu0 %v8948
    %11808 = vmatpush2.bf16.msra.mxu0 %v8947
    %11809 = vmatprep.subr.bf16.mxu0 %v8940
    %11810 = vmatpush2.bf16.msra.mxu0 %v8939
    %11811 = vmatprep.mubr.bf16.mxu0 %v5454
    %11812 = vmatmul.mubr.bf16.gmra.mxu0 %v5453
    %v11813 = vpop.f32.mrf.mxu0
    %v11814 = vadd.f32 %v11771, %v11813
    %v11815 = vpop.f32.mrf.mxu0
    %v11816 = vadd.f32 %v11773, %v11815
    %v11817 = vpop.f32.mrf.mxu0
    %v11818 = vadd.f32 %v11775, %v11817
    %v11819 = vpop.f32.mrf.mxu0
    %v11820 = vadd.f32 %v11777, %v11819
    %11821 = vdwg.mxu0
    %11822 = vmatprep.subr.bf16.mxu0 %v9060
    %11823 = vmatpush1.bf16.msra.mxu0 %v9059
    %11824 = vmatprep.subr.bf16.mxu0 %v9052
    %11825 = vmatpush1.bf16.msra.mxu0 %v9051
    %11826 = vmatprep.subr.bf16.mxu0 %v9044
    %11827 = vmatpush1.bf16.msra.mxu0 %v9043
    %11828 = vmatprep.subr.bf16.mxu0 %v9036
    %11829 = vmatpush1.bf16.msra.mxu0 %v9035
    %11830 = vmatprep.subr.bf16.mxu0 %v9028
    %11831 = vmatpush1.bf16.msra.mxu0 %v9027
    %11832 = vmatprep.subr.bf16.mxu0 %v9020
    %11833 = vmatpush1.bf16.msra.mxu0 %v9019
    %11834 = vmatprep.subr.bf16.mxu0 %v9012
    %11835 = vmatpush1.bf16.msra.mxu0 %v9011
    %11836 = vmatprep.subr.bf16.mxu0 %v9004
    %11837 = vmatpush1.bf16.msra.mxu0 %v9003
    %11838 = vmatprep.subr.bf16.mxu0 %v9124
    %11839 = vmatpush2.bf16.msra.mxu0 %v9123
    %11840 = vmatprep.subr.bf16.mxu0 %v9116
    %11841 = vmatpush2.bf16.msra.mxu0 %v9115
    %11842 = vmatprep.subr.bf16.mxu0 %v9108
    %11843 = vmatpush2.bf16.msra.mxu0 %v9107
    %11844 = vmatprep.subr.bf16.mxu0 %v9100
    %11845 = vmatpush2.bf16.msra.mxu0 %v9099
    %11846 = vmatprep.subr.bf16.mxu0 %v9092
    %11847 = vmatpush2.bf16.msra.mxu0 %v9091
    %11848 = vmatprep.subr.bf16.mxu0 %v9084
    %11849 = vmatpush2.bf16.msra.mxu0 %v9083
    %11850 = vmatprep.subr.bf16.mxu0 %v9076
    %11851 = vmatpush2.bf16.msra.mxu0 %v9075
    %11852 = vmatprep.subr.bf16.mxu0 %v9068
    %11853 = vmatpush2.bf16.msra.mxu0 %v9067
    %11854 = vmatprep.mubr.bf16.mxu0 %v5456
    %11855 = vmatmul.mubr.bf16.gmra.mxu0 %v5455
    %v11856 = vpop.f32.mrf.mxu0
    %v11857 = vadd.f32 %v11814, %v11856
    %v11858 = vpop.f32.mrf.mxu0
    %v11859 = vadd.f32 %v11816, %v11858
    %v11860 = vpop.f32.mrf.mxu0
    %v11861 = vadd.f32 %v11818, %v11860
    %v11862 = vpop.f32.mrf.mxu0
    %v11863 = vadd.f32 %v11820, %v11862
    %11864 = vdwg.mxu0
    %11865 = vmatprep.subr.bf16.mxu0 %v9188
    %11866 = vmatpush1.bf16.msra.mxu0 %v9187
    %11867 = vmatprep.subr.bf16.mxu0 %v9180
    %11868 = vmatpush1.bf16.msra.mxu0 %v9179
    %11869 = vmatprep.subr.bf16.mxu0 %v9172
    %11870 = vmatpush1.bf16.msra.mxu0 %v9171
    %11871 = vmatprep.subr.bf16.mxu0 %v9164
    %11872 = vmatpush1.bf16.msra.mxu0 %v9163
    %11873 = vmatprep.subr.bf16.mxu0 %v9156
    %11874 = vmatpush1.bf16.msra.mxu0 %v9155
    %11875 = vmatprep.subr.bf16.mxu0 %v9148
    %11876 = vmatpush1.bf16.msra.mxu0 %v9147
    %11877 = vmatprep.subr.bf16.mxu0 %v9140
    %11878 = vmatpush1.bf16.msra.mxu0 %v9139
    %11879 = vmatprep.subr.bf16.mxu0 %v9132
    %11880 = vmatpush1.bf16.msra.mxu0 %v9131
    %11881 = vmatprep.subr.bf16.mxu0 %v9252
    %11882 = vmatpush2.bf16.msra.mxu0 %v9251
    %11883 = vmatprep.subr.bf16.mxu0 %v9244
    %11884 = vmatpush2.bf16.msra.mxu0 %v9243
    %11885 = vmatprep.subr.bf16.mxu0 %v9236
    %11886 = vmatpush2.bf16.msra.mxu0 %v9235
    %11887 = vmatprep.subr.bf16.mxu0 %v9228
    %11888 = vmatpush2.bf16.msra.mxu0 %v9227
    %11889 = vmatprep.subr.bf16.mxu0 %v9220
    %11890 = vmatpush2.bf16.msra.mxu0 %v9219
    %11891 = vmatprep.subr.bf16.mxu0 %v9212
    %11892 = vmatpush2.bf16.msra.mxu0 %v9211
    %11893 = vmatprep.subr.bf16.mxu0 %v9204
    %11894 = vmatpush2.bf16.msra.mxu0 %v9203
    %11895 = vmatprep.subr.bf16.mxu0 %v9196
    %11896 = vmatpush2.bf16.msra.mxu0 %v9195
    %11897 = vmatprep.mubr.bf16.mxu0 %v5458
    %11898 = vmatmul.mubr.bf16.gmra.mxu0 %v5457
    %v11899 = vpop.f32.mrf.mxu0
    %v11900 = vadd.f32 %v11857, %v11899
    %v11901 = vpop.f32.mrf.mxu0
    %v11902 = vadd.f32 %v11859, %v11901
    %v11903 = vpop.f32.mrf.mxu0
    %v11904 = vadd.f32 %v11861, %v11903
    %v11905 = vpop.f32.mrf.mxu0
    %v11906 = vadd.f32 %v11863, %v11905
    %11907 = vdwg.mxu0
    %11908 = vmatprep.subr.bf16.mxu0 %v9316
    %11909 = vmatpush1.bf16.msra.mxu0 %v9315
    %11910 = vmatprep.subr.bf16.mxu0 %v9308
    %11911 = vmatpush1.bf16.msra.mxu0 %v9307
    %11912 = vmatprep.subr.bf16.mxu0 %v9300
    %11913 = vmatpush1.bf16.msra.mxu0 %v9299
    %11914 = vmatprep.subr.bf16.mxu0 %v9292
    %11915 = vmatpush1.bf16.msra.mxu0 %v9291
    %11916 = vmatprep.subr.bf16.mxu0 %v9284
    %11917 = vmatpush1.bf16.msra.mxu0 %v9283
    %11918 = vmatprep.subr.bf16.mxu0 %v9276
    %11919 = vmatpush1.bf16.msra.mxu0 %v9275
    %11920 = vmatprep.subr.bf16.mxu0 %v9268
    %11921 = vmatpush1.bf16.msra.mxu0 %v9267
    %11922 = vmatprep.subr.bf16.mxu0 %v9260
    %11923 = vmatpush1.bf16.msra.mxu0 %v9259
    %11924 = vmatprep.subr.bf16.mxu0 %v9380
    %11925 = vmatpush2.bf16.msra.mxu0 %v9379
    %11926 = vmatprep.subr.bf16.mxu0 %v9372
    %11927 = vmatpush2.bf16.msra.mxu0 %v9371
    %11928 = vmatprep.subr.bf16.mxu0 %v9364
    %11929 = vmatpush2.bf16.msra.mxu0 %v9363
    %11930 = vmatprep.subr.bf16.mxu0 %v9356
    %11931 = vmatpush2.bf16.msra.mxu0 %v9355
    %11932 = vmatprep.subr.bf16.mxu0 %v9348
    %11933 = vmatpush2.bf16.msra.mxu0 %v9347
    %11934 = vmatprep.subr.bf16.mxu0 %v9340
    %11935 = vmatpush2.bf16.msra.mxu0 %v9339
    %11936 = vmatprep.subr.bf16.mxu0 %v9332
    %11937 = vmatpush2.bf16.msra.mxu0 %v9331
    %11938 = vmatprep.subr.bf16.mxu0 %v9324
    %11939 = vmatpush2.bf16.msra.mxu0 %v9323
    %11940 = vmatprep.mubr.bf16.mxu0 %v5460
    %11941 = vmatmul.mubr.bf16.gmra.mxu0 %v5459
    %v11942 = vpop.f32.mrf.mxu0
    %v11943 = vadd.f32 %v11900, %v11942
    %v11944 = vpop.f32.mrf.mxu0
    %v11945 = vadd.f32 %v11902, %v11944
    %v11946 = vpop.f32.mrf.mxu0
    %v11947 = vadd.f32 %v11904, %v11946
    %v11948 = vpop.f32.mrf.mxu0
    %v11949 = vadd.f32 %v11906, %v11948
    %11950 = vdwg.mxu0
    %11951 = vmatprep.subr.bf16.mxu0 %v9444
    %11952 = vmatpush1.bf16.msra.mxu0 %v9443
    %11953 = vmatprep.subr.bf16.mxu0 %v9436
    %11954 = vmatpush1.bf16.msra.mxu0 %v9435
    %11955 = vmatprep.subr.bf16.mxu0 %v9428
    %11956 = vmatpush1.bf16.msra.mxu0 %v9427
    %11957 = vmatprep.subr.bf16.mxu0 %v9420
    %11958 = vmatpush1.bf16.msra.mxu0 %v9419
    %11959 = vmatprep.subr.bf16.mxu0 %v9412
    %11960 = vmatpush1.bf16.msra.mxu0 %v9411
    %11961 = vmatprep.subr.bf16.mxu0 %v9404
    %11962 = vmatpush1.bf16.msra.mxu0 %v9403
    %11963 = vmatprep.subr.bf16.mxu0 %v9396
    %11964 = vmatpush1.bf16.msra.mxu0 %v9395
    %11965 = vmatprep.subr.bf16.mxu0 %v9388
    %11966 = vmatpush1.bf16.msra.mxu0 %v9387
    %11967 = vmatprep.subr.bf16.mxu0 %v9508
    %11968 = vmatpush2.bf16.msra.mxu0 %v9507
    %11969 = vmatprep.subr.bf16.mxu0 %v9500
    %11970 = vmatpush2.bf16.msra.mxu0 %v9499
    %11971 = vmatprep.subr.bf16.mxu0 %v9492
    %11972 = vmatpush2.bf16.msra.mxu0 %v9491
    %11973 = vmatprep.subr.bf16.mxu0 %v9484
    %11974 = vmatpush2.bf16.msra.mxu0 %v9483
    %11975 = vmatprep.subr.bf16.mxu0 %v9476
    %11976 = vmatpush2.bf16.msra.mxu0 %v9475
    %11977 = vmatprep.subr.bf16.mxu0 %v9468
    %11978 = vmatpush2.bf16.msra.mxu0 %v9467
    %11979 = vmatprep.subr.bf16.mxu0 %v9460
    %11980 = vmatpush2.bf16.msra.mxu0 %v9459
    %11981 = vmatprep.subr.bf16.mxu0 %v9452
    %11982 = vmatpush2.bf16.msra.mxu0 %v9451
    %11983 = vmatprep.mubr.bf16.mxu0 %v5462
    %11984 = vmatmul.mubr.bf16.gmra.mxu0 %v5461
    %v11985 = vpop.f32.mrf.mxu0
    %v11986 = vadd.f32 %v11943, %v11985
    %v11987 = vpop.f32.mrf.mxu0
    %v11988 = vadd.f32 %v11945, %v11987
    %v11989 = vpop.f32.mrf.mxu0
    %v11990 = vadd.f32 %v11947, %v11989
    %v11991 = vpop.f32.mrf.mxu0
    %v11992 = vadd.f32 %v11949, %v11991
    %11993 = vdwg.mxu0
    %11994 = vmatprep.subr.bf16.mxu0 %v9572
    %11995 = vmatpush1.bf16.msra.mxu0 %v9571
    %11996 = vmatprep.subr.bf16.mxu0 %v9564
    %11997 = vmatpush1.bf16.msra.mxu0 %v9563
    %11998 = vmatprep.subr.bf16.mxu0 %v9556
    %11999 = vmatpush1.bf16.msra.mxu0 %v9555
    %12000 = vmatprep.subr.bf16.mxu0 %v9548
    %12001 = vmatpush1.bf16.msra.mxu0 %v9547
    %12002 = vmatprep.subr.bf16.mxu0 %v9540
    %12003 = vmatpush1.bf16.msra.mxu0 %v9539
    %12004 = vmatprep.subr.bf16.mxu0 %v9532
    %12005 = vmatpush1.bf16.msra.mxu0 %v9531
    %12006 = vmatprep.subr.bf16.mxu0 %v9524
    %12007 = vmatpush1.bf16.msra.mxu0 %v9523
    %12008 = vmatprep.subr.bf16.mxu0 %v9516
    %12009 = vmatpush1.bf16.msra.mxu0 %v9515
    %12010 = vmatprep.subr.bf16.mxu0 %v9636
    %12011 = vmatpush2.bf16.msra.mxu0 %v9635
    %12012 = vmatprep.subr.bf16.mxu0 %v9628
    %12013 = vmatpush2.bf16.msra.mxu0 %v9627
    %12014 = vmatprep.subr.bf16.mxu0 %v9620
    %12015 = vmatpush2.bf16.msra.mxu0 %v9619
    %12016 = vmatprep.subr.bf16.mxu0 %v9612
    %12017 = vmatpush2.bf16.msra.mxu0 %v9611
    %12018 = vmatprep.subr.bf16.mxu0 %v9604
    %12019 = vmatpush2.bf16.msra.mxu0 %v9603
    %12020 = vmatprep.subr.bf16.mxu0 %v9596
    %12021 = vmatpush2.bf16.msra.mxu0 %v9595
    %12022 = vmatprep.subr.bf16.mxu0 %v9588
    %12023 = vmatpush2.bf16.msra.mxu0 %v9587
    %12024 = vmatprep.subr.bf16.mxu0 %v9580
    %12025 = vmatpush2.bf16.msra.mxu0 %v9579
    %12026 = vmatprep.mubr.bf16.mxu0 %v5464
    %12027 = vmatmul.mubr.bf16.gmra.mxu0 %v5463
    %v12028 = vpop.f32.mrf.mxu0
    %v12029 = vadd.f32 %v11986, %v12028
    %v12030 = vpop.f32.mrf.mxu0
    %v12031 = vadd.f32 %v11988, %v12030
    %v12032 = vpop.f32.mrf.mxu0
    %v12033 = vadd.f32 %v11990, %v12032
    %v12034 = vpop.f32.mrf.mxu0
    %v12035 = vadd.f32 %v11992, %v12034
    %12036 = vdwg.mxu0
    %vm12037 = vcmp.gt.f32.partialorder %v10997, 0.0
    %vm12038 = vcmp.gt.f32.partialorder %v10999, 0.0
    %vm12039 = vcmp.gt.f32.partialorder %v11341, 0.0
    %vm12040 = vcmp.gt.f32.partialorder %v11343, 0.0
    %vm12041 = vcmp.gt.f32.partialorder %v11685, 0.0
    %vm12042 = vcmp.gt.f32.partialorder %v11687, 0.0
    %vm12043 = vcmp.gt.f32.partialorder %v12029, 0.0
    %vm12044 = vcmp.gt.f32.partialorder %v12031, 0.0
    %vm12045 = vcmp.gt.f32.partialorder %v11001, 0.0
    %vm12046 = vcmp.gt.f32.partialorder %v11003, 0.0
    %vm12047 = vcmp.gt.f32.partialorder %v11345, 0.0
    %vm12048 = vcmp.gt.f32.partialorder %v11347, 0.0
    %vm12049 = vcmp.gt.f32.partialorder %v11689, 0.0
    %vm12050 = vcmp.gt.f32.partialorder %v11691, 0.0
    %vm12051 = vcmp.gt.f32.partialorder %v12033, 0.0
    %vm12052 = vcmp.gt.f32.partialorder %v12035, 0.0
    %v12053 = vmul.f32 %v10997, 0.01
    %v12054 = vmul.f32 %v10999, 0.01
    %v12055 = vmul.f32 %v11341, 0.01
    %v12056 = vmul.f32 %v11343, 0.01
    %v12057 = vmul.f32 %v11685, 0.01
    %v12058 = vmul.f32 %v11687, 0.01
    %v12059 = vmul.f32 %v12029, 0.01
    %v12060 = vmul.f32 %v12031, 0.01
    %v12061 = vmul.f32 %v11001, 0.01
    %v12062 = vmul.f32 %v11003, 0.01
    %v12063 = vmul.f32 %v11345, 0.01
    %v12064 = vmul.f32 %v11347, 0.01
    %v12065 = vmul.f32 %v11689, 0.01
    %v12066 = vmul.f32 %v11691, 0.01
    %v12067 = vmul.f32 %v12033, 0.01
    %v12068 = vmul.f32 %v12035, 0.01
    %v12069 = vsel %vm12037, %v10997, %v12053
    %v12070 = vsel %vm12038, %v10999, %v12054
    %v12071 = vsel %vm12039, %v11341, %v12055
    %v12072 = vsel %vm12040, %v11343, %v12056
    %v12073 = vsel %vm12041, %v11685, %v12057
    %v12074 = vsel %vm12042, %v11687, %v12058
    %v12075 = vsel %vm12043, %v12029, %v12059
    %v12076 = vsel %vm12044, %v12031, %v12060
    %v12077 = vsel %vm12045, %v11001, %v12061
    %v12078 = vsel %vm12046, %v11003, %v12062
    %v12079 = vsel %vm12047, %v11345, %v12063
    %v12080 = vsel %vm12048, %v11347, %v12064
    %v12081 = vsel %vm12049, %v11689, %v12065
    %v12082 = vsel %vm12050, %v11691, %v12066
    %v12083 = vsel %vm12051, %v12033, %v12067
    %v12084 = vsel %vm12052, %v12035, %v12068
    %v12085 = vpack.c.bf16 %v12077, %v12069
    %v12086 = vpack.c.bf16 %v12078, %v12070
    %v12087 = vpack.c.bf16 %v12079, %v12071
    %v12088 = vpack.c.bf16 %v12080, %v12072
    %v12089 = vpack.c.bf16 %v12081, %v12073
    %v12090 = vpack.c.bf16 %v12082, %v12074
    %v12091 = vpack.c.bf16 %v12083, %v12075
    %v12092 = vpack.c.bf16 %v12084, %v12076
    %v12093 = vunpack.c.l.bf16 %v1932
    %v12095 = vlaneseq
    %v12096 = vshrl.u32 %v12095, 7
    %v12097 = vsub.s32 0, %v12096
    %v12098 = vrot.slane %v12093, %v12097
    %v12099 = vlaneseq
    %v12100 = vshrl.u32 %v12099, 7
    %v12101 = vsub.s32 2, %v12100
    %v12102 = vrot.slane %v12093, %v12101
    %v12103 = vlaneseq
    %v12104 = vshrl.u32 %v12103, 7
    %v12105 = vsub.s32 4, %v12104
    %v12106 = vrot.slane %v12093, %v12105
    %v12107 = vlaneseq
    %v12108 = vshrl.u32 %v12107, 7
    %v12109 = vsub.s32 6, %v12108
    %v12110 = vrot.slane %v12093, %v12109
    %v12115 = vlaneseq
    %v12116 = vshrl.u32 %v12115, 7
    %v12117 = vsub.s32 0, %v12116
    %v12118 = vrot.slane %v12098, %v12117
    %v12119 = vlaneseq
    %v12120 = vshrl.u32 %v12119, 7
    %v12121 = vsub.s32 0, %v12120
    %v12122 = vrot.slane %v12102, %v12121
    %v12123 = vlaneseq
    %v12124 = vshrl.u32 %v12123, 7
    %v12125 = vsub.s32 0, %v12124
    %v12126 = vrot.slane %v12106, %v12125
    %v12127 = vlaneseq
    %v12128 = vshrl.u32 %v12127, 7
    %v12129 = vsub.s32 0, %v12128
    %v12130 = vrot.slane %v12110, %v12129
    %v12387 = vunpack.c.l.b16 %v1676
    %v12388 = vunpack.c.h.b16 %v1676
    %v12389 = vunpack.c.l.b16 %v1677
    %v12390 = vunpack.c.h.b16 %v1677
    %v12391 = vunpack.c.l.b16 %v1678
    %v12392 = vunpack.c.h.b16 %v1678
    %v12393 = vunpack.c.l.b16 %v1679
    %v12394 = vunpack.c.h.b16 %v1679
    %v12395 = vunpack.c.l.b16 %v1680
    %v12396 = vunpack.c.h.b16 %v1680
    %v12397 = vunpack.c.l.b16 %v1681
    %v12398 = vunpack.c.h.b16 %v1681
    %v12399 = vunpack.c.l.b16 %v1682
    %v12400 = vunpack.c.h.b16 %v1682
    %v12401 = vunpack.c.l.b16 %v1683
    %v12402 = vunpack.c.h.b16 %v1683
    %v12403 = vunpack.c.l.b16 %v1684
    %v12404 = vunpack.c.h.b16 %v1684
    %v12405 = vunpack.c.l.b16 %v1685
    %v12406 = vunpack.c.h.b16 %v1685
    %v12407 = vunpack.c.l.b16 %v1686
    %v12408 = vunpack.c.h.b16 %v1686
    %v12409 = vunpack.c.l.b16 %v1687
    %v12410 = vunpack.c.h.b16 %v1687
    %v12411 = vunpack.c.l.b16 %v1688
    %v12412 = vunpack.c.h.b16 %v1688
    %v12413 = vunpack.c.l.b16 %v1689
    %v12414 = vunpack.c.h.b16 %v1689
    %v12415 = vunpack.c.l.b16 %v1690
    %v12416 = vunpack.c.h.b16 %v1690
    %v12417 = vunpack.c.l.b16 %v1691
    %v12418 = vunpack.c.h.b16 %v1691
    %v12419 = vunpack.c.l.b16 %v1692
    %v12420 = vunpack.c.h.b16 %v1692
    %v12421 = vunpack.c.l.b16 %v1693
    %v12422 = vunpack.c.h.b16 %v1693
    %v12423 = vunpack.c.l.b16 %v1694
    %v12424 = vunpack.c.h.b16 %v1694
    %v12425 = vunpack.c.l.b16 %v1695
    %v12426 = vunpack.c.h.b16 %v1695
    %v12427 = vunpack.c.l.b16 %v1696
    %v12428 = vunpack.c.h.b16 %v1696
    %v12429 = vunpack.c.l.b16 %v1697
    %v12430 = vunpack.c.h.b16 %v1697
    %v12431 = vunpack.c.l.b16 %v1698
    %v12432 = vunpack.c.h.b16 %v1698
    %v12433 = vunpack.c.l.b16 %v1699
    %v12434 = vunpack.c.h.b16 %v1699
    %v12435 = vunpack.c.l.b16 %v1700
    %v12436 = vunpack.c.h.b16 %v1700
    %v12437 = vunpack.c.l.b16 %v1701
    %v12438 = vunpack.c.h.b16 %v1701
    %v12439 = vunpack.c.l.b16 %v1702
    %v12440 = vunpack.c.h.b16 %v1702
    %v12441 = vunpack.c.l.b16 %v1703
    %v12442 = vunpack.c.h.b16 %v1703
    %v12443 = vunpack.c.l.b16 %v1704
    %v12444 = vunpack.c.h.b16 %v1704
    %v12445 = vunpack.c.l.b16 %v1705
    %v12446 = vunpack.c.h.b16 %v1705
    %v12447 = vunpack.c.l.b16 %v1706
    %v12448 = vunpack.c.h.b16 %v1706
    %v12449 = vunpack.c.l.b16 %v1707
    %v12450 = vunpack.c.h.b16 %v1707
    %v12451 = vunpack.c.l.b16 %v1708
    %v12452 = vunpack.c.h.b16 %v1708
    %v12453 = vunpack.c.l.b16 %v1709
    %v12454 = vunpack.c.h.b16 %v1709
    %v12455 = vunpack.c.l.b16 %v1710
    %v12456 = vunpack.c.h.b16 %v1710
    %v12457 = vunpack.c.l.b16 %v1711
    %v12458 = vunpack.c.h.b16 %v1711
    %v12459 = vunpack.c.l.b16 %v1712
    %v12460 = vunpack.c.h.b16 %v1712
    %v12461 = vunpack.c.l.b16 %v1713
    %v12462 = vunpack.c.h.b16 %v1713
    %v12463 = vunpack.c.l.b16 %v1714
    %v12464 = vunpack.c.h.b16 %v1714
    %v12465 = vunpack.c.l.b16 %v1715
    %v12466 = vunpack.c.h.b16 %v1715
    %v12467 = vunpack.c.l.b16 %v1716
    %v12468 = vunpack.c.h.b16 %v1716
    %v12469 = vunpack.c.l.b16 %v1717
    %v12470 = vunpack.c.h.b16 %v1717
    %v12471 = vunpack.c.l.b16 %v1718
    %v12472 = vunpack.c.h.b16 %v1718
    %v12473 = vunpack.c.l.b16 %v1719
    %v12474 = vunpack.c.h.b16 %v1719
    %v12475 = vunpack.c.l.b16 %v1720
    %v12476 = vunpack.c.h.b16 %v1720
    %v12477 = vunpack.c.l.b16 %v1721
    %v12478 = vunpack.c.h.b16 %v1721
    %v12479 = vunpack.c.l.b16 %v1722
    %v12480 = vunpack.c.h.b16 %v1722
    %v12481 = vunpack.c.l.b16 %v1723
    %v12482 = vunpack.c.h.b16 %v1723
    %v12483 = vunpack.c.l.b16 %v1724
    %v12484 = vunpack.c.h.b16 %v1724
    %v12485 = vunpack.c.l.b16 %v1725
    %v12486 = vunpack.c.h.b16 %v1725
    %v12487 = vunpack.c.l.b16 %v1726
    %v12488 = vunpack.c.h.b16 %v1726
    %v12489 = vunpack.c.l.b16 %v1727
    %v12490 = vunpack.c.h.b16 %v1727
    %v12491 = vunpack.c.l.b16 %v1728
    %v12492 = vunpack.c.h.b16 %v1728
    %v12493 = vunpack.c.l.b16 %v1729
    %v12494 = vunpack.c.h.b16 %v1729
    %v12495 = vunpack.c.l.b16 %v1730
    %v12496 = vunpack.c.h.b16 %v1730
    %v12497 = vunpack.c.l.b16 %v1731
    %v12498 = vunpack.c.h.b16 %v1731
    %v12499 = vunpack.c.l.b16 %v1732
    %v12500 = vunpack.c.h.b16 %v1732
    %v12501 = vunpack.c.l.b16 %v1733
    %v12502 = vunpack.c.h.b16 %v1733
    %v12503 = vunpack.c.l.b16 %v1734
    %v12504 = vunpack.c.h.b16 %v1734
    %v12505 = vunpack.c.l.b16 %v1735
    %v12506 = vunpack.c.h.b16 %v1735
    %v12507 = vunpack.c.l.b16 %v1736
    %v12508 = vunpack.c.h.b16 %v1736
    %v12509 = vunpack.c.l.b16 %v1737
    %v12510 = vunpack.c.h.b16 %v1737
    %v12511 = vunpack.c.l.b16 %v1738
    %v12512 = vunpack.c.h.b16 %v1738
    %v12513 = vunpack.c.l.b16 %v1739
    %v12514 = vunpack.c.h.b16 %v1739
    %v12515 = vunpack.c.l.b16 %v1740
    %v12516 = vunpack.c.h.b16 %v1740
    %v12517 = vunpack.c.l.b16 %v1741
    %v12518 = vunpack.c.h.b16 %v1741
    %v12519 = vunpack.c.l.b16 %v1742
    %v12520 = vunpack.c.h.b16 %v1742
    %v12521 = vunpack.c.l.b16 %v1743
    %v12522 = vunpack.c.h.b16 %v1743
    %v12523 = vunpack.c.l.b16 %v1744
    %v12524 = vunpack.c.h.b16 %v1744
    %v12525 = vunpack.c.l.b16 %v1745
    %v12526 = vunpack.c.h.b16 %v1745
    %v12527 = vunpack.c.l.b16 %v1746
    %v12528 = vunpack.c.h.b16 %v1746
    %v12529 = vunpack.c.l.b16 %v1747
    %v12530 = vunpack.c.h.b16 %v1747
    %v12531 = vunpack.c.l.b16 %v1748
    %v12532 = vunpack.c.h.b16 %v1748
    %v12533 = vunpack.c.l.b16 %v1749
    %v12534 = vunpack.c.h.b16 %v1749
    %v12535 = vunpack.c.l.b16 %v1750
    %v12536 = vunpack.c.h.b16 %v1750
    %v12537 = vunpack.c.l.b16 %v1751
    %v12538 = vunpack.c.h.b16 %v1751
    %v12539 = vunpack.c.l.b16 %v1752
    %v12540 = vunpack.c.h.b16 %v1752
    %v12541 = vunpack.c.l.b16 %v1753
    %v12542 = vunpack.c.h.b16 %v1753
    %v12543 = vunpack.c.l.b16 %v1754
    %v12544 = vunpack.c.h.b16 %v1754
    %v12545 = vunpack.c.l.b16 %v1755
    %v12546 = vunpack.c.h.b16 %v1755
    %v12547 = vunpack.c.l.b16 %v1756
    %v12548 = vunpack.c.h.b16 %v1756
    %v12549 = vunpack.c.l.b16 %v1757
    %v12550 = vunpack.c.h.b16 %v1757
    %v12551 = vunpack.c.l.b16 %v1758
    %v12552 = vunpack.c.h.b16 %v1758
    %v12553 = vunpack.c.l.b16 %v1759
    %v12554 = vunpack.c.h.b16 %v1759
    %v12555 = vunpack.c.l.b16 %v1760
    %v12556 = vunpack.c.h.b16 %v1760
    %v12557 = vunpack.c.l.b16 %v1761
    %v12558 = vunpack.c.h.b16 %v1761
    %v12559 = vunpack.c.l.b16 %v1762
    %v12560 = vunpack.c.h.b16 %v1762
    %v12561 = vunpack.c.l.b16 %v1763
    %v12562 = vunpack.c.h.b16 %v1763
    %v12563 = vunpack.c.l.b16 %v1764
    %v12564 = vunpack.c.h.b16 %v1764
    %v12565 = vunpack.c.l.b16 %v1765
    %v12566 = vunpack.c.h.b16 %v1765
    %v12567 = vunpack.c.l.b16 %v1766
    %v12568 = vunpack.c.h.b16 %v1766
    %v12569 = vunpack.c.l.b16 %v1767
    %v12570 = vunpack.c.h.b16 %v1767
    %v12571 = vunpack.c.l.b16 %v1768
    %v12572 = vunpack.c.h.b16 %v1768
    %v12573 = vunpack.c.l.b16 %v1769
    %v12574 = vunpack.c.h.b16 %v1769
    %v12575 = vunpack.c.l.b16 %v1770
    %v12576 = vunpack.c.h.b16 %v1770
    %v12577 = vunpack.c.l.b16 %v1771
    %v12578 = vunpack.c.h.b16 %v1771
    %v12579 = vunpack.c.l.b16 %v1772
    %v12580 = vunpack.c.h.b16 %v1772
    %v12581 = vunpack.c.l.b16 %v1773
    %v12582 = vunpack.c.h.b16 %v1773
    %v12583 = vunpack.c.l.b16 %v1774
    %v12584 = vunpack.c.h.b16 %v1774
    %v12585 = vunpack.c.l.b16 %v1775
    %v12586 = vunpack.c.h.b16 %v1775
    %v12587 = vunpack.c.l.b16 %v1776
    %v12588 = vunpack.c.h.b16 %v1776
    %v12589 = vunpack.c.l.b16 %v1777
    %v12590 = vunpack.c.h.b16 %v1777
    %v12591 = vunpack.c.l.b16 %v1778
    %v12592 = vunpack.c.h.b16 %v1778
    %v12593 = vunpack.c.l.b16 %v1779
    %v12594 = vunpack.c.h.b16 %v1779
    %v12595 = vunpack.c.l.b16 %v1780
    %v12596 = vunpack.c.h.b16 %v1780
    %v12597 = vunpack.c.l.b16 %v1781
    %v12598 = vunpack.c.h.b16 %v1781
    %v12599 = vunpack.c.l.b16 %v1782
    %v12600 = vunpack.c.h.b16 %v1782
    %v12601 = vunpack.c.l.b16 %v1783
    %v12602 = vunpack.c.h.b16 %v1783
    %v12603 = vunpack.c.l.b16 %v1784
    %v12604 = vunpack.c.h.b16 %v1784
    %v12605 = vunpack.c.l.b16 %v1785
    %v12606 = vunpack.c.h.b16 %v1785
    %v12607 = vunpack.c.l.b16 %v1786
    %v12608 = vunpack.c.h.b16 %v1786
    %v12609 = vunpack.c.l.b16 %v1787
    %v12610 = vunpack.c.h.b16 %v1787
    %v12611 = vunpack.c.l.b16 %v1788
    %v12612 = vunpack.c.h.b16 %v1788
    %v12613 = vunpack.c.l.b16 %v1789
    %v12614 = vunpack.c.h.b16 %v1789
    %v12615 = vunpack.c.l.b16 %v1790
    %v12616 = vunpack.c.h.b16 %v1790
    %v12617 = vunpack.c.l.b16 %v1791
    %v12618 = vunpack.c.h.b16 %v1791
    %v12619 = vunpack.c.l.b16 %v1792
    %v12620 = vunpack.c.h.b16 %v1792
    %v12621 = vunpack.c.l.b16 %v1793
    %v12622 = vunpack.c.h.b16 %v1793
    %v12623 = vunpack.c.l.b16 %v1794
    %v12624 = vunpack.c.h.b16 %v1794
    %v12625 = vunpack.c.l.b16 %v1795
    %v12626 = vunpack.c.h.b16 %v1795
    %v12627 = vunpack.c.l.b16 %v1796
    %v12628 = vunpack.c.h.b16 %v1796
    %v12629 = vunpack.c.l.b16 %v1797
    %v12630 = vunpack.c.h.b16 %v1797
    %v12631 = vunpack.c.l.b16 %v1798
    %v12632 = vunpack.c.h.b16 %v1798
    %v12633 = vunpack.c.l.b16 %v1799
    %v12634 = vunpack.c.h.b16 %v1799
    %v12635 = vunpack.c.l.b16 %v1800
    %v12636 = vunpack.c.h.b16 %v1800
    %v12637 = vunpack.c.l.b16 %v1801
    %v12638 = vunpack.c.h.b16 %v1801
    %v12639 = vunpack.c.l.b16 %v1802
    %v12640 = vunpack.c.h.b16 %v1802
    %v12641 = vunpack.c.l.b16 %v1803
    %v12642 = vunpack.c.h.b16 %v1803
    %v12643 = vunpack.c.l.b16 %v1804
    %v12644 = vunpack.c.h.b16 %v1804
    %v12645 = vunpack.c.l.b16 %v1805
    %v12646 = vunpack.c.h.b16 %v1805
    %v12647 = vunpack.c.l.b16 %v1806
    %v12648 = vunpack.c.h.b16 %v1806
    %v12649 = vunpack.c.l.b16 %v1807
    %v12650 = vunpack.c.h.b16 %v1807
    %v12651 = vunpack.c.l.b16 %v1808
    %v12652 = vunpack.c.h.b16 %v1808
    %v12653 = vunpack.c.l.b16 %v1809
    %v12654 = vunpack.c.h.b16 %v1809
    %v12655 = vunpack.c.l.b16 %v1810
    %v12656 = vunpack.c.h.b16 %v1810
    %v12657 = vunpack.c.l.b16 %v1811
    %v12658 = vunpack.c.h.b16 %v1811
    %v12659 = vunpack.c.l.b16 %v1812
    %v12660 = vunpack.c.h.b16 %v1812
    %v12661 = vunpack.c.l.b16 %v1813
    %v12662 = vunpack.c.h.b16 %v1813
    %v12663 = vunpack.c.l.b16 %v1814
    %v12664 = vunpack.c.h.b16 %v1814
    %v12665 = vunpack.c.l.b16 %v1815
    %v12666 = vunpack.c.h.b16 %v1815
    %v12667 = vunpack.c.l.b16 %v1816
    %v12668 = vunpack.c.h.b16 %v1816
    %v12669 = vunpack.c.l.b16 %v1817
    %v12670 = vunpack.c.h.b16 %v1817
    %v12671 = vunpack.c.l.b16 %v1818
    %v12672 = vunpack.c.h.b16 %v1818
    %v12673 = vunpack.c.l.b16 %v1819
    %v12674 = vunpack.c.h.b16 %v1819
    %v12675 = vunpack.c.l.b16 %v1820
    %v12676 = vunpack.c.h.b16 %v1820
    %v12677 = vunpack.c.l.b16 %v1821
    %v12678 = vunpack.c.h.b16 %v1821
    %v12679 = vunpack.c.l.b16 %v1822
    %v12680 = vunpack.c.h.b16 %v1822
    %v12681 = vunpack.c.l.b16 %v1823
    %v12682 = vunpack.c.h.b16 %v1823
    %v12683 = vunpack.c.l.b16 %v1824
    %v12684 = vunpack.c.h.b16 %v1824
    %v12685 = vunpack.c.l.b16 %v1825
    %v12686 = vunpack.c.h.b16 %v1825
    %v12687 = vunpack.c.l.b16 %v1826
    %v12688 = vunpack.c.h.b16 %v1826
    %v12689 = vunpack.c.l.b16 %v1827
    %v12690 = vunpack.c.h.b16 %v1827
    %v12691 = vunpack.c.l.b16 %v1828
    %v12692 = vunpack.c.h.b16 %v1828
    %v12693 = vunpack.c.l.b16 %v1829
    %v12694 = vunpack.c.h.b16 %v1829
    %v12695 = vunpack.c.l.b16 %v1830
    %v12696 = vunpack.c.h.b16 %v1830
    %v12697 = vunpack.c.l.b16 %v1831
    %v12698 = vunpack.c.h.b16 %v1831
    %v12699 = vunpack.c.l.b16 %v1832
    %v12700 = vunpack.c.h.b16 %v1832
    %v12701 = vunpack.c.l.b16 %v1833
    %v12702 = vunpack.c.h.b16 %v1833
    %v12703 = vunpack.c.l.b16 %v1834
    %v12704 = vunpack.c.h.b16 %v1834
    %v12705 = vunpack.c.l.b16 %v1835
    %v12706 = vunpack.c.h.b16 %v1835
    %v12707 = vunpack.c.l.b16 %v1836
    %v12708 = vunpack.c.h.b16 %v1836
    %v12709 = vunpack.c.l.b16 %v1837
    %v12710 = vunpack.c.h.b16 %v1837
    %v12711 = vunpack.c.l.b16 %v1838
    %v12712 = vunpack.c.h.b16 %v1838
    %v12713 = vunpack.c.l.b16 %v1839
    %v12714 = vunpack.c.h.b16 %v1839
    %v12715 = vunpack.c.l.b16 %v1840
    %v12716 = vunpack.c.h.b16 %v1840
    %v12717 = vunpack.c.l.b16 %v1841
    %v12718 = vunpack.c.h.b16 %v1841
    %v12719 = vunpack.c.l.b16 %v1842
    %v12720 = vunpack.c.h.b16 %v1842
    %v12721 = vunpack.c.l.b16 %v1843
    %v12722 = vunpack.c.h.b16 %v1843
    %v12723 = vunpack.c.l.b16 %v1844
    %v12724 = vunpack.c.h.b16 %v1844
    %v12725 = vunpack.c.l.b16 %v1845
    %v12726 = vunpack.c.h.b16 %v1845
    %v12727 = vunpack.c.l.b16 %v1846
    %v12728 = vunpack.c.h.b16 %v1846
    %v12729 = vunpack.c.l.b16 %v1847
    %v12730 = vunpack.c.h.b16 %v1847
    %v12731 = vunpack.c.l.b16 %v1848
    %v12732 = vunpack.c.h.b16 %v1848
    %v12733 = vunpack.c.l.b16 %v1849
    %v12734 = vunpack.c.h.b16 %v1849
    %v12735 = vunpack.c.l.b16 %v1850
    %v12736 = vunpack.c.h.b16 %v1850
    %v12737 = vunpack.c.l.b16 %v1851
    %v12738 = vunpack.c.h.b16 %v1851
    %v12739 = vunpack.c.l.b16 %v1852
    %v12740 = vunpack.c.h.b16 %v1852
    %v12741 = vunpack.c.l.b16 %v1853
    %v12742 = vunpack.c.h.b16 %v1853
    %v12743 = vunpack.c.l.b16 %v1854
    %v12744 = vunpack.c.h.b16 %v1854
    %v12745 = vunpack.c.l.b16 %v1855
    %v12746 = vunpack.c.h.b16 %v1855
    %v12747 = vunpack.c.l.b16 %v1856
    %v12748 = vunpack.c.h.b16 %v1856
    %v12749 = vunpack.c.l.b16 %v1857
    %v12750 = vunpack.c.h.b16 %v1857
    %v12751 = vunpack.c.l.b16 %v1858
    %v12752 = vunpack.c.h.b16 %v1858
    %v12753 = vunpack.c.l.b16 %v1859
    %v12754 = vunpack.c.h.b16 %v1859
    %v12755 = vunpack.c.l.b16 %v1860
    %v12756 = vunpack.c.h.b16 %v1860
    %v12757 = vunpack.c.l.b16 %v1861
    %v12758 = vunpack.c.h.b16 %v1861
    %v12759 = vunpack.c.l.b16 %v1862
    %v12760 = vunpack.c.h.b16 %v1862
    %v12761 = vunpack.c.l.b16 %v1863
    %v12762 = vunpack.c.h.b16 %v1863
    %v12763 = vunpack.c.l.b16 %v1864
    %v12764 = vunpack.c.h.b16 %v1864
    %v12765 = vunpack.c.l.b16 %v1865
    %v12766 = vunpack.c.h.b16 %v1865
    %v12767 = vunpack.c.l.b16 %v1866
    %v12768 = vunpack.c.h.b16 %v1866
    %v12769 = vunpack.c.l.b16 %v1867
    %v12770 = vunpack.c.h.b16 %v1867
    %v12771 = vunpack.c.l.b16 %v1868
    %v12772 = vunpack.c.h.b16 %v1868
    %v12773 = vunpack.c.l.b16 %v1869
    %v12774 = vunpack.c.h.b16 %v1869
    %v12775 = vunpack.c.l.b16 %v1870
    %v12776 = vunpack.c.h.b16 %v1870
    %v12777 = vunpack.c.l.b16 %v1871
    %v12778 = vunpack.c.h.b16 %v1871
    %v12779 = vunpack.c.l.b16 %v1872
    %v12780 = vunpack.c.h.b16 %v1872
    %v12781 = vunpack.c.l.b16 %v1873
    %v12782 = vunpack.c.h.b16 %v1873
    %v12783 = vunpack.c.l.b16 %v1874
    %v12784 = vunpack.c.h.b16 %v1874
    %v12785 = vunpack.c.l.b16 %v1875
    %v12786 = vunpack.c.h.b16 %v1875
    %v12787 = vunpack.c.l.b16 %v1876
    %v12788 = vunpack.c.h.b16 %v1876
    %v12789 = vunpack.c.l.b16 %v1877
    %v12790 = vunpack.c.h.b16 %v1877
    %v12791 = vunpack.c.l.b16 %v1878
    %v12792 = vunpack.c.h.b16 %v1878
    %v12793 = vunpack.c.l.b16 %v1879
    %v12794 = vunpack.c.h.b16 %v1879
    %v12795 = vunpack.c.l.b16 %v1880
    %v12796 = vunpack.c.h.b16 %v1880
    %v12797 = vunpack.c.l.b16 %v1881
    %v12798 = vunpack.c.h.b16 %v1881
    %v12799 = vunpack.c.l.b16 %v1882
    %v12800 = vunpack.c.h.b16 %v1882
    %v12801 = vunpack.c.l.b16 %v1883
    %v12802 = vunpack.c.h.b16 %v1883
    %v12803 = vunpack.c.l.b16 %v1884
    %v12804 = vunpack.c.h.b16 %v1884
    %v12805 = vunpack.c.l.b16 %v1885
    %v12806 = vunpack.c.h.b16 %v1885
    %v12807 = vunpack.c.l.b16 %v1886
    %v12808 = vunpack.c.h.b16 %v1886
    %v12809 = vunpack.c.l.b16 %v1887
    %v12810 = vunpack.c.h.b16 %v1887
    %v12811 = vunpack.c.l.b16 %v1888
    %v12812 = vunpack.c.h.b16 %v1888
    %v12813 = vunpack.c.l.b16 %v1889
    %v12814 = vunpack.c.h.b16 %v1889
    %v12815 = vunpack.c.l.b16 %v1890
    %v12816 = vunpack.c.h.b16 %v1890
    %v12817 = vunpack.c.l.b16 %v1891
    %v12818 = vunpack.c.h.b16 %v1891
    %v12819 = vunpack.c.l.b16 %v1892
    %v12820 = vunpack.c.h.b16 %v1892
    %v12821 = vunpack.c.l.b16 %v1893
    %v12822 = vunpack.c.h.b16 %v1893
    %v12823 = vunpack.c.l.b16 %v1894
    %v12824 = vunpack.c.h.b16 %v1894
    %v12825 = vunpack.c.l.b16 %v1895
    %v12826 = vunpack.c.h.b16 %v1895
    %v12827 = vunpack.c.l.b16 %v1896
    %v12828 = vunpack.c.h.b16 %v1896
    %v12829 = vunpack.c.l.b16 %v1897
    %v12830 = vunpack.c.h.b16 %v1897
    %v12831 = vunpack.c.l.b16 %v1898
    %v12832 = vunpack.c.h.b16 %v1898
    %v12833 = vunpack.c.l.b16 %v1899
    %v12834 = vunpack.c.h.b16 %v1899
    %v12835 = vunpack.c.l.b16 %v1900
    %v12836 = vunpack.c.h.b16 %v1900
    %v12837 = vunpack.c.l.b16 %v1901
    %v12838 = vunpack.c.h.b16 %v1901
    %v12839 = vunpack.c.l.b16 %v1902
    %v12840 = vunpack.c.h.b16 %v1902
    %v12841 = vunpack.c.l.b16 %v1903
    %v12842 = vunpack.c.h.b16 %v1903
    %v12843 = vunpack.c.l.b16 %v1904
    %v12844 = vunpack.c.h.b16 %v1904
    %v12845 = vunpack.c.l.b16 %v1905
    %v12846 = vunpack.c.h.b16 %v1905
    %v12847 = vunpack.c.l.b16 %v1906
    %v12848 = vunpack.c.h.b16 %v1906
    %v12849 = vunpack.c.l.b16 %v1907
    %v12850 = vunpack.c.h.b16 %v1907
    %v12851 = vunpack.c.l.b16 %v1908
    %v12852 = vunpack.c.h.b16 %v1908
    %v12853 = vunpack.c.l.b16 %v1909
    %v12854 = vunpack.c.h.b16 %v1909
    %v12855 = vunpack.c.l.b16 %v1910
    %v12856 = vunpack.c.h.b16 %v1910
    %v12857 = vunpack.c.l.b16 %v1911
    %v12858 = vunpack.c.h.b16 %v1911
    %v12859 = vunpack.c.l.b16 %v1912
    %v12860 = vunpack.c.h.b16 %v1912
    %v12861 = vunpack.c.l.b16 %v1913
    %v12862 = vunpack.c.h.b16 %v1913
    %v12863 = vunpack.c.l.b16 %v1914
    %v12864 = vunpack.c.h.b16 %v1914
    %v12865 = vunpack.c.l.b16 %v1915
    %v12866 = vunpack.c.h.b16 %v1915
    %v12867 = vunpack.c.l.b16 %v1916
    %v12868 = vunpack.c.h.b16 %v1916
    %v12869 = vunpack.c.l.b16 %v1917
    %v12870 = vunpack.c.h.b16 %v1917
    %v12871 = vunpack.c.l.b16 %v1918
    %v12872 = vunpack.c.h.b16 %v1918
    %v12873 = vunpack.c.l.b16 %v1919
    %v12874 = vunpack.c.h.b16 %v1919
    %v12875 = vunpack.c.l.b16 %v1920
    %v12876 = vunpack.c.h.b16 %v1920
    %v12877 = vunpack.c.l.b16 %v1921
    %v12878 = vunpack.c.h.b16 %v1921
    %v12879 = vunpack.c.l.b16 %v1922
    %v12880 = vunpack.c.h.b16 %v1922
    %v12881 = vunpack.c.l.b16 %v1923
    %v12882 = vunpack.c.h.b16 %v1923
    %v12883 = vunpack.c.l.b16 %v1924
    %v12884 = vunpack.c.h.b16 %v1924
    %v12885 = vunpack.c.l.b16 %v1925
    %v12886 = vunpack.c.h.b16 %v1925
    %v12887 = vunpack.c.l.b16 %v1926
    %v12888 = vunpack.c.h.b16 %v1926
    %v12889 = vunpack.c.l.b16 %v1927
    %v12890 = vunpack.c.h.b16 %v1927
    %v12891 = vunpack.c.l.b16 %v1928
    %v12892 = vunpack.c.h.b16 %v1928
    %v12893 = vunpack.c.l.b16 %v1929
    %v12894 = vunpack.c.h.b16 %v1929
    %v12895 = vunpack.c.l.b16 %v1930
    %v12896 = vunpack.c.h.b16 %v1930
    %v12897 = vunpack.c.l.b16 %v1931
    %v12898 = vunpack.c.h.b16 %v1931
    %v12899 = vpack.c.b16 %v12391, %v12387
    %v12900 = vpack.c.b16 %v12392, %v12388
    %v12901 = vpack.c.b16 %v12393, %v12389
    %v12902 = vpack.c.b16 %v12394, %v12390
    %v12903 = vpack.c.b16 %v12399, %v12395
    %v12904 = vpack.c.b16 %v12400, %v12396
    %v12905 = vpack.c.b16 %v12401, %v12397
    %v12906 = vpack.c.b16 %v12402, %v12398
    %v12907 = vpack.c.b16 %v12407, %v12403
    %v12908 = vpack.c.b16 %v12408, %v12404
    %v12909 = vpack.c.b16 %v12409, %v12405
    %v12910 = vpack.c.b16 %v12410, %v12406
    %v12911 = vpack.c.b16 %v12415, %v12411
    %v12912 = vpack.c.b16 %v12416, %v12412
    %v12913 = vpack.c.b16 %v12417, %v12413
    %v12914 = vpack.c.b16 %v12418, %v12414
    %v12915 = vpack.c.b16 %v12423, %v12419
    %v12916 = vpack.c.b16 %v12424, %v12420
    %v12917 = vpack.c.b16 %v12425, %v12421
    %v12918 = vpack.c.b16 %v12426, %v12422
    %v12919 = vpack.c.b16 %v12431, %v12427
    %v12920 = vpack.c.b16 %v12432, %v12428
    %v12921 = vpack.c.b16 %v12433, %v12429
    %v12922 = vpack.c.b16 %v12434, %v12430
    %v12923 = vpack.c.b16 %v12439, %v12435
    %v12924 = vpack.c.b16 %v12440, %v12436
    %v12925 = vpack.c.b16 %v12441, %v12437
    %v12926 = vpack.c.b16 %v12442, %v12438
    %v12927 = vpack.c.b16 %v12447, %v12443
    %v12928 = vpack.c.b16 %v12448, %v12444
    %v12929 = vpack.c.b16 %v12449, %v12445
    %v12930 = vpack.c.b16 %v12450, %v12446
    %v12931 = vpack.c.b16 %v12455, %v12451
    %v12932 = vpack.c.b16 %v12456, %v12452
    %v12933 = vpack.c.b16 %v12457, %v12453
    %v12934 = vpack.c.b16 %v12458, %v12454
    %v12935 = vpack.c.b16 %v12463, %v12459
    %v12936 = vpack.c.b16 %v12464, %v12460
    %v12937 = vpack.c.b16 %v12465, %v12461
    %v12938 = vpack.c.b16 %v12466, %v12462
    %v12939 = vpack.c.b16 %v12471, %v12467
    %v12940 = vpack.c.b16 %v12472, %v12468
    %v12941 = vpack.c.b16 %v12473, %v12469
    %v12942 = vpack.c.b16 %v12474, %v12470
    %v12943 = vpack.c.b16 %v12479, %v12475
    %v12944 = vpack.c.b16 %v12480, %v12476
    %v12945 = vpack.c.b16 %v12481, %v12477
    %v12946 = vpack.c.b16 %v12482, %v12478
    %v12947 = vpack.c.b16 %v12487, %v12483
    %v12948 = vpack.c.b16 %v12488, %v12484
    %v12949 = vpack.c.b16 %v12489, %v12485
    %v12950 = vpack.c.b16 %v12490, %v12486
    %v12951 = vpack.c.b16 %v12495, %v12491
    %v12952 = vpack.c.b16 %v12496, %v12492
    %v12953 = vpack.c.b16 %v12497, %v12493
    %v12954 = vpack.c.b16 %v12498, %v12494
    %v12955 = vpack.c.b16 %v12503, %v12499
    %v12956 = vpack.c.b16 %v12504, %v12500
    %v12957 = vpack.c.b16 %v12505, %v12501
    %v12958 = vpack.c.b16 %v12506, %v12502
    %v12959 = vpack.c.b16 %v12511, %v12507
    %v12960 = vpack.c.b16 %v12512, %v12508
    %v12961 = vpack.c.b16 %v12513, %v12509
    %v12962 = vpack.c.b16 %v12514, %v12510
    %v12963 = vpack.c.b16 %v12519, %v12515
    %v12964 = vpack.c.b16 %v12520, %v12516
    %v12965 = vpack.c.b16 %v12521, %v12517
    %v12966 = vpack.c.b16 %v12522, %v12518
    %v12967 = vpack.c.b16 %v12527, %v12523
    %v12968 = vpack.c.b16 %v12528, %v12524
    %v12969 = vpack.c.b16 %v12529, %v12525
    %v12970 = vpack.c.b16 %v12530, %v12526
    %v12971 = vpack.c.b16 %v12535, %v12531
    %v12972 = vpack.c.b16 %v12536, %v12532
    %v12973 = vpack.c.b16 %v12537, %v12533
    %v12974 = vpack.c.b16 %v12538, %v12534
    %v12975 = vpack.c.b16 %v12543, %v12539
    %v12976 = vpack.c.b16 %v12544, %v12540
    %v12977 = vpack.c.b16 %v12545, %v12541
    %v12978 = vpack.c.b16 %v12546, %v12542
    %v12979 = vpack.c.b16 %v12551, %v12547
    %v12980 = vpack.c.b16 %v12552, %v12548
    %v12981 = vpack.c.b16 %v12553, %v12549
    %v12982 = vpack.c.b16 %v12554, %v12550
    %v12983 = vpack.c.b16 %v12559, %v12555
    %v12984 = vpack.c.b16 %v12560, %v12556
    %v12985 = vpack.c.b16 %v12561, %v12557
    %v12986 = vpack.c.b16 %v12562, %v12558
    %v12987 = vpack.c.b16 %v12567, %v12563
    %v12988 = vpack.c.b16 %v12568, %v12564
    %v12989 = vpack.c.b16 %v12569, %v12565
    %v12990 = vpack.c.b16 %v12570, %v12566
    %v12991 = vpack.c.b16 %v12575, %v12571
    %v12992 = vpack.c.b16 %v12576, %v12572
    %v12993 = vpack.c.b16 %v12577, %v12573
    %v12994 = vpack.c.b16 %v12578, %v12574
    %v12995 = vpack.c.b16 %v12583, %v12579
    %v12996 = vpack.c.b16 %v12584, %v12580
    %v12997 = vpack.c.b16 %v12585, %v12581
    %v12998 = vpack.c.b16 %v12586, %v12582
    %v12999 = vpack.c.b16 %v12591, %v12587
    %v13000 = vpack.c.b16 %v12592, %v12588
    %v13001 = vpack.c.b16 %v12593, %v12589
    %v13002 = vpack.c.b16 %v12594, %v12590
    %v13003 = vpack.c.b16 %v12599, %v12595
    %v13004 = vpack.c.b16 %v12600, %v12596
    %v13005 = vpack.c.b16 %v12601, %v12597
    %v13006 = vpack.c.b16 %v12602, %v12598
    %v13007 = vpack.c.b16 %v12607, %v12603
    %v13008 = vpack.c.b16 %v12608, %v12604
    %v13009 = vpack.c.b16 %v12609, %v12605
    %v13010 = vpack.c.b16 %v12610, %v12606
    %v13011 = vpack.c.b16 %v12615, %v12611
    %v13012 = vpack.c.b16 %v12616, %v12612
    %v13013 = vpack.c.b16 %v12617, %v12613
    %v13014 = vpack.c.b16 %v12618, %v12614
    %v13015 = vpack.c.b16 %v12623, %v12619
    %v13016 = vpack.c.b16 %v12624, %v12620
    %v13017 = vpack.c.b16 %v12625, %v12621
    %v13018 = vpack.c.b16 %v12626, %v12622
    %v13019 = vpack.c.b16 %v12631, %v12627
    %v13020 = vpack.c.b16 %v12632, %v12628
    %v13021 = vpack.c.b16 %v12633, %v12629
    %v13022 = vpack.c.b16 %v12634, %v12630
    %v13023 = vpack.c.b16 %v12639, %v12635
    %v13024 = vpack.c.b16 %v12640, %v12636
    %v13025 = vpack.c.b16 %v12641, %v12637
    %v13026 = vpack.c.b16 %v12642, %v12638
    %v13027 = vpack.c.b16 %v12647, %v12643
    %v13028 = vpack.c.b16 %v12648, %v12644
    %v13029 = vpack.c.b16 %v12649, %v12645
    %v13030 = vpack.c.b16 %v12650, %v12646
    %v13031 = vpack.c.b16 %v12655, %v12651
    %v13032 = vpack.c.b16 %v12656, %v12652
    %v13033 = vpack.c.b16 %v12657, %v12653
    %v13034 = vpack.c.b16 %v12658, %v12654
    %v13035 = vpack.c.b16 %v12663, %v12659
    %v13036 = vpack.c.b16 %v12664, %v12660
    %v13037 = vpack.c.b16 %v12665, %v12661
    %v13038 = vpack.c.b16 %v12666, %v12662
    %v13039 = vpack.c.b16 %v12671, %v12667
    %v13040 = vpack.c.b16 %v12672, %v12668
    %v13041 = vpack.c.b16 %v12673, %v12669
    %v13042 = vpack.c.b16 %v12674, %v12670
    %v13043 = vpack.c.b16 %v12679, %v12675
    %v13044 = vpack.c.b16 %v12680, %v12676
    %v13045 = vpack.c.b16 %v12681, %v12677
    %v13046 = vpack.c.b16 %v12682, %v12678
    %v13047 = vpack.c.b16 %v12687, %v12683
    %v13048 = vpack.c.b16 %v12688, %v12684
    %v13049 = vpack.c.b16 %v12689, %v12685
    %v13050 = vpack.c.b16 %v12690, %v12686
    %v13051 = vpack.c.b16 %v12695, %v12691
    %v13052 = vpack.c.b16 %v12696, %v12692
    %v13053 = vpack.c.b16 %v12697, %v12693
    %v13054 = vpack.c.b16 %v12698, %v12694
    %v13055 = vpack.c.b16 %v12703, %v12699
    %v13056 = vpack.c.b16 %v12704, %v12700
    %v13057 = vpack.c.b16 %v12705, %v12701
    %v13058 = vpack.c.b16 %v12706, %v12702
    %v13059 = vpack.c.b16 %v12711, %v12707
    %v13060 = vpack.c.b16 %v12712, %v12708
    %v13061 = vpack.c.b16 %v12713, %v12709
    %v13062 = vpack.c.b16 %v12714, %v12710
    %v13063 = vpack.c.b16 %v12719, %v12715
    %v13064 = vpack.c.b16 %v12720, %v12716
    %v13065 = vpack.c.b16 %v12721, %v12717
    %v13066 = vpack.c.b16 %v12722, %v12718
    %v13067 = vpack.c.b16 %v12727, %v12723
    %v13068 = vpack.c.b16 %v12728, %v12724
    %v13069 = vpack.c.b16 %v12729, %v12725
    %v13070 = vpack.c.b16 %v12730, %v12726
    %v13071 = vpack.c.b16 %v12735, %v12731
    %v13072 = vpack.c.b16 %v12736, %v12732
    %v13073 = vpack.c.b16 %v12737, %v12733
    %v13074 = vpack.c.b16 %v12738, %v12734
    %v13075 = vpack.c.b16 %v12743, %v12739
    %v13076 = vpack.c.b16 %v12744, %v12740
    %v13077 = vpack.c.b16 %v12745, %v12741
    %v13078 = vpack.c.b16 %v12746, %v12742
    %v13079 = vpack.c.b16 %v12751, %v12747
    %v13080 = vpack.c.b16 %v12752, %v12748
    %v13081 = vpack.c.b16 %v12753, %v12749
    %v13082 = vpack.c.b16 %v12754, %v12750
    %v13083 = vpack.c.b16 %v12759, %v12755
    %v13084 = vpack.c.b16 %v12760, %v12756
    %v13085 = vpack.c.b16 %v12761, %v12757
    %v13086 = vpack.c.b16 %v12762, %v12758
    %v13087 = vpack.c.b16 %v12767, %v12763
    %v13088 = vpack.c.b16 %v12768, %v12764
    %v13089 = vpack.c.b16 %v12769, %v12765
    %v13090 = vpack.c.b16 %v12770, %v12766
    %v13091 = vpack.c.b16 %v12775, %v12771
    %v13092 = vpack.c.b16 %v12776, %v12772
    %v13093 = vpack.c.b16 %v12777, %v12773
    %v13094 = vpack.c.b16 %v12778, %v12774
    %v13095 = vpack.c.b16 %v12783, %v12779
    %v13096 = vpack.c.b16 %v12784, %v12780
    %v13097 = vpack.c.b16 %v12785, %v12781
    %v13098 = vpack.c.b16 %v12786, %v12782
    %v13099 = vpack.c.b16 %v12791, %v12787
    %v13100 = vpack.c.b16 %v12792, %v12788
    %v13101 = vpack.c.b16 %v12793, %v12789
    %v13102 = vpack.c.b16 %v12794, %v12790
    %v13103 = vpack.c.b16 %v12799, %v12795
    %v13104 = vpack.c.b16 %v12800, %v12796
    %v13105 = vpack.c.b16 %v12801, %v12797
    %v13106 = vpack.c.b16 %v12802, %v12798
    %v13107 = vpack.c.b16 %v12807, %v12803
    %v13108 = vpack.c.b16 %v12808, %v12804
    %v13109 = vpack.c.b16 %v12809, %v12805
    %v13110 = vpack.c.b16 %v12810, %v12806
    %v13111 = vpack.c.b16 %v12815, %v12811
    %v13112 = vpack.c.b16 %v12816, %v12812
    %v13113 = vpack.c.b16 %v12817, %v12813
    %v13114 = vpack.c.b16 %v12818, %v12814
    %v13115 = vpack.c.b16 %v12823, %v12819
    %v13116 = vpack.c.b16 %v12824, %v12820
    %v13117 = vpack.c.b16 %v12825, %v12821
    %v13118 = vpack.c.b16 %v12826, %v12822
    %v13119 = vpack.c.b16 %v12831, %v12827
    %v13120 = vpack.c.b16 %v12832, %v12828
    %v13121 = vpack.c.b16 %v12833, %v12829
    %v13122 = vpack.c.b16 %v12834, %v12830
    %v13123 = vpack.c.b16 %v12839, %v12835
    %v13124 = vpack.c.b16 %v12840, %v12836
    %v13125 = vpack.c.b16 %v12841, %v12837
    %v13126 = vpack.c.b16 %v12842, %v12838
    %v13127 = vpack.c.b16 %v12847, %v12843
    %v13128 = vpack.c.b16 %v12848, %v12844
    %v13129 = vpack.c.b16 %v12849, %v12845
    %v13130 = vpack.c.b16 %v12850, %v12846
    %v13131 = vpack.c.b16 %v12855, %v12851
    %v13132 = vpack.c.b16 %v12856, %v12852
    %v13133 = vpack.c.b16 %v12857, %v12853
    %v13134 = vpack.c.b16 %v12858, %v12854
    %v13135 = vpack.c.b16 %v12863, %v12859
    %v13136 = vpack.c.b16 %v12864, %v12860
    %v13137 = vpack.c.b16 %v12865, %v12861
    %v13138 = vpack.c.b16 %v12866, %v12862
    %v13139 = vpack.c.b16 %v12871, %v12867
    %v13140 = vpack.c.b16 %v12872, %v12868
    %v13141 = vpack.c.b16 %v12873, %v12869
    %v13142 = vpack.c.b16 %v12874, %v12870
    %v13143 = vpack.c.b16 %v12879, %v12875
    %v13144 = vpack.c.b16 %v12880, %v12876
    %v13145 = vpack.c.b16 %v12881, %v12877
    %v13146 = vpack.c.b16 %v12882, %v12878
    %v13147 = vpack.c.b16 %v12887, %v12883
    %v13148 = vpack.c.b16 %v12888, %v12884
    %v13149 = vpack.c.b16 %v12889, %v12885
    %v13150 = vpack.c.b16 %v12890, %v12886
    %v13151 = vpack.c.b16 %v12895, %v12891
    %v13152 = vpack.c.b16 %v12896, %v12892
    %v13153 = vpack.c.b16 %v12897, %v12893
    %v13154 = vpack.c.b16 %v12898, %v12894
    %13411 = vmatprep.subr.bf16.mxu0 %v12928
    %13412 = vmatpush1.bf16.msra.mxu0 %v12927
    %13413 = vmatprep.subr.bf16.mxu0 %v12924
    %13414 = vmatpush1.bf16.msra.mxu0 %v12923
    %13415 = vmatprep.subr.bf16.mxu0 %v12920
    %13416 = vmatpush1.bf16.msra.mxu0 %v12919
    %13417 = vmatprep.subr.bf16.mxu0 %v12916
    %13418 = vmatpush1.bf16.msra.mxu0 %v12915
    %13419 = vmatprep.subr.bf16.mxu0 %v12912
    %13420 = vmatpush1.bf16.msra.mxu0 %v12911
    %13421 = vmatprep.subr.bf16.mxu0 %v12908
    %13422 = vmatpush1.bf16.msra.mxu0 %v12907
    %13423 = vmatprep.subr.bf16.mxu0 %v12904
    %13424 = vmatpush1.bf16.msra.mxu0 %v12903
    %13425 = vmatprep.subr.bf16.mxu0 %v12900
    %13426 = vmatpush1.bf16.msra.mxu0 %v12899
    %13427 = vmatprep.subr.bf16.mxu0 %v12960
    %13428 = vmatpush2.bf16.msra.mxu0 %v12959
    %13429 = vmatprep.subr.bf16.mxu0 %v12956
    %13430 = vmatpush2.bf16.msra.mxu0 %v12955
    %13431 = vmatprep.subr.bf16.mxu0 %v12952
    %13432 = vmatpush2.bf16.msra.mxu0 %v12951
    %13433 = vmatprep.subr.bf16.mxu0 %v12948
    %13434 = vmatpush2.bf16.msra.mxu0 %v12947
    %13435 = vmatprep.subr.bf16.mxu0 %v12944
    %13436 = vmatpush2.bf16.msra.mxu0 %v12943
    %13437 = vmatprep.subr.bf16.mxu0 %v12940
    %13438 = vmatpush2.bf16.msra.mxu0 %v12939
    %13439 = vmatprep.subr.bf16.mxu0 %v12936
    %13440 = vmatpush2.bf16.msra.mxu0 %v12935
    %13441 = vmatprep.subr.bf16.mxu0 %v12932
    %13442 = vmatpush2.bf16.msra.mxu0 %v12931
    %13443 = vmatprep.mubr.bf16.mxu0 %v12086
    %13444 = vmatmul.mubr.bf16.gmra.mxu0 %v12085
    %v13445 = vpop.f32.mrf.mxu0
    %v13446 = vadd.f32 %v12118, %v13445
    %v13447 = vpop.f32.mrf.mxu0
    %v13448 = vadd.f32 %v12122, %v13447
    %v13449 = vpop.f32.mrf.mxu0
    %v13450 = vadd.f32 %v12118, %v13449
    %v13451 = vpop.f32.mrf.mxu0
    %v13452 = vadd.f32 %v12122, %v13451
    %13453 = vdwg.mxu0
    %13454 = vmatprep.subr.bf16.mxu0 %v12992
    %13455 = vmatpush1.bf16.msra.mxu0 %v12991
    %13456 = vmatprep.subr.bf16.mxu0 %v12988
    %13457 = vmatpush1.bf16.msra.mxu0 %v12987
    %13458 = vmatprep.subr.bf16.mxu0 %v12984
    %13459 = vmatpush1.bf16.msra.mxu0 %v12983
    %13460 = vmatprep.subr.bf16.mxu0 %v12980
    %13461 = vmatpush1.bf16.msra.mxu0 %v12979
    %13462 = vmatprep.subr.bf16.mxu0 %v12976
    %13463 = vmatpush1.bf16.msra.mxu0 %v12975
    %13464 = vmatprep.subr.bf16.mxu0 %v12972
    %13465 = vmatpush1.bf16.msra.mxu0 %v12971
    %13466 = vmatprep.subr.bf16.mxu0 %v12968
    %13467 = vmatpush1.bf16.msra.mxu0 %v12967
    %13468 = vmatprep.subr.bf16.mxu0 %v12964
    %13469 = vmatpush1.bf16.msra.mxu0 %v12963
    %13470 = vmatprep.subr.bf16.mxu0 %v13024
    %13471 = vmatpush2.bf16.msra.mxu0 %v13023
    %13472 = vmatprep.subr.bf16.mxu0 %v13020
    %13473 = vmatpush2.bf16.msra.mxu0 %v13019
    %13474 = vmatprep.subr.bf16.mxu0 %v13016
    %13475 = vmatpush2.bf16.msra.mxu0 %v13015
    %13476 = vmatprep.subr.bf16.mxu0 %v13012
    %13477 = vmatpush2.bf16.msra.mxu0 %v13011
    %13478 = vmatprep.subr.bf16.mxu0 %v13008
    %13479 = vmatpush2.bf16.msra.mxu0 %v13007
    %13480 = vmatprep.subr.bf16.mxu0 %v13004
    %13481 = vmatpush2.bf16.msra.mxu0 %v13003
    %13482 = vmatprep.subr.bf16.mxu0 %v13000
    %13483 = vmatpush2.bf16.msra.mxu0 %v12999
    %13484 = vmatprep.subr.bf16.mxu0 %v12996
    %13485 = vmatpush2.bf16.msra.mxu0 %v12995
    %13486 = vmatprep.mubr.bf16.mxu0 %v12088
    %13487 = vmatmul.mubr.bf16.gmra.mxu0 %v12087
    %v13488 = vpop.f32.mrf.mxu0
    %v13489 = vadd.f32 %v13446, %v13488
    %v13490 = vpop.f32.mrf.mxu0
    %v13491 = vadd.f32 %v13448, %v13490
    %v13492 = vpop.f32.mrf.mxu0
    %v13493 = vadd.f32 %v13450, %v13492
    %v13494 = vpop.f32.mrf.mxu0
    %v13495 = vadd.f32 %v13452, %v13494
    %13496 = vdwg.mxu0
    %13497 = vmatprep.subr.bf16.mxu0 %v13056
    %13498 = vmatpush1.bf16.msra.mxu0 %v13055
    %13499 = vmatprep.subr.bf16.mxu0 %v13052
    %13500 = vmatpush1.bf16.msra.mxu0 %v13051
    %13501 = vmatprep.subr.bf16.mxu0 %v13048
    %13502 = vmatpush1.bf16.msra.mxu0 %v13047
    %13503 = vmatprep.subr.bf16.mxu0 %v13044
    %13504 = vmatpush1.bf16.msra.mxu0 %v13043
    %13505 = vmatprep.subr.bf16.mxu0 %v13040
    %13506 = vmatpush1.bf16.msra.mxu0 %v13039
    %13507 = vmatprep.subr.bf16.mxu0 %v13036
    %13508 = vmatpush1.bf16.msra.mxu0 %v13035
    %13509 = vmatprep.subr.bf16.mxu0 %v13032
    %13510 = vmatpush1.bf16.msra.mxu0 %v13031
    %13511 = vmatprep.subr.bf16.mxu0 %v13028
    %13512 = vmatpush1.bf16.msra.mxu0 %v13027
    %13513 = vmatprep.subr.bf16.mxu0 %v13088
    %13514 = vmatpush2.bf16.msra.mxu0 %v13087
    %13515 = vmatprep.subr.bf16.mxu0 %v13084
    %13516 = vmatpush2.bf16.msra.mxu0 %v13083
    %13517 = vmatprep.subr.bf16.mxu0 %v13080
    %13518 = vmatpush2.bf16.msra.mxu0 %v13079
    %13519 = vmatprep.subr.bf16.mxu0 %v13076
    %13520 = vmatpush2.bf16.msra.mxu0 %v13075
    %13521 = vmatprep.subr.bf16.mxu0 %v13072
    %13522 = vmatpush2.bf16.msra.mxu0 %v13071
    %13523 = vmatprep.subr.bf16.mxu0 %v13068
    %13524 = vmatpush2.bf16.msra.mxu0 %v13067
    %13525 = vmatprep.subr.bf16.mxu0 %v13064
    %13526 = vmatpush2.bf16.msra.mxu0 %v13063
    %13527 = vmatprep.subr.bf16.mxu0 %v13060
    %13528 = vmatpush2.bf16.msra.mxu0 %v13059
    %13529 = vmatprep.mubr.bf16.mxu0 %v12090
    %13530 = vmatmul.mubr.bf16.gmra.mxu0 %v12089
    %v13531 = vpop.f32.mrf.mxu0
    %v13532 = vadd.f32 %v13489, %v13531
    %v13533 = vpop.f32.mrf.mxu0
    %v13534 = vadd.f32 %v13491, %v13533
    %v13535 = vpop.f32.mrf.mxu0
    %v13536 = vadd.f32 %v13493, %v13535
    %v13537 = vpop.f32.mrf.mxu0
    %v13538 = vadd.f32 %v13495, %v13537
    %13539 = vdwg.mxu0
    %13540 = vmatprep.subr.bf16.mxu0 %v13120
    %13541 = vmatpush1.bf16.msra.mxu0 %v13119
    %13542 = vmatprep.subr.bf16.mxu0 %v13116
    %13543 = vmatpush1.bf16.msra.mxu0 %v13115
    %13544 = vmatprep.subr.bf16.mxu0 %v13112
    %13545 = vmatpush1.bf16.msra.mxu0 %v13111
    %13546 = vmatprep.subr.bf16.mxu0 %v13108
    %13547 = vmatpush1.bf16.msra.mxu0 %v13107
    %13548 = vmatprep.subr.bf16.mxu0 %v13104
    %13549 = vmatpush1.bf16.msra.mxu0 %v13103
    %13550 = vmatprep.subr.bf16.mxu0 %v13100
    %13551 = vmatpush1.bf16.msra.mxu0 %v13099
    %13552 = vmatprep.subr.bf16.mxu0 %v13096
    %13553 = vmatpush1.bf16.msra.mxu0 %v13095
    %13554 = vmatprep.subr.bf16.mxu0 %v13092
    %13555 = vmatpush1.bf16.msra.mxu0 %v13091
    %13556 = vmatprep.subr.bf16.mxu0 %v13152
    %13557 = vmatpush2.bf16.msra.mxu0 %v13151
    %13558 = vmatprep.subr.bf16.mxu0 %v13148
    %13559 = vmatpush2.bf16.msra.mxu0 %v13147
    %13560 = vmatprep.subr.bf16.mxu0 %v13144
    %13561 = vmatpush2.bf16.msra.mxu0 %v13143
    %13562 = vmatprep.subr.bf16.mxu0 %v13140
    %13563 = vmatpush2.bf16.msra.mxu0 %v13139
    %13564 = vmatprep.subr.bf16.mxu0 %v13136
    %13565 = vmatpush2.bf16.msra.mxu0 %v13135
    %13566 = vmatprep.subr.bf16.mxu0 %v13132
    %13567 = vmatpush2.bf16.msra.mxu0 %v13131
    %13568 = vmatprep.subr.bf16.mxu0 %v13128
    %13569 = vmatpush2.bf16.msra.mxu0 %v13127
    %13570 = vmatprep.subr.bf16.mxu0 %v13124
    %13571 = vmatpush2.bf16.msra.mxu0 %v13123
    %13572 = vmatprep.mubr.bf16.mxu0 %v12092
    %13573 = vmatmul.mubr.bf16.gmra.mxu0 %v12091
    %v13574 = vpop.f32.mrf.mxu0
    %v13575 = vadd.f32 %v13532, %v13574
    %v13576 = vpop.f32.mrf.mxu0
    %v13577 = vadd.f32 %v13534, %v13576
    %v13578 = vpop.f32.mrf.mxu0
    %v13579 = vadd.f32 %v13536, %v13578
    %v13580 = vpop.f32.mrf.mxu0
    %v13581 = vadd.f32 %v13538, %v13580
    %13582 = vdwg.mxu0
    %13583 = vmatprep.subr.bf16.mxu0 %v12930
    %13584 = vmatpush1.bf16.msra.mxu0 %v12929
    %13585 = vmatprep.subr.bf16.mxu0 %v12926
    %13586 = vmatpush1.bf16.msra.mxu0 %v12925
    %13587 = vmatprep.subr.bf16.mxu0 %v12922
    %13588 = vmatpush1.bf16.msra.mxu0 %v12921
    %13589 = vmatprep.subr.bf16.mxu0 %v12918
    %13590 = vmatpush1.bf16.msra.mxu0 %v12917
    %13591 = vmatprep.subr.bf16.mxu0 %v12914
    %13592 = vmatpush1.bf16.msra.mxu0 %v12913
    %13593 = vmatprep.subr.bf16.mxu0 %v12910
    %13594 = vmatpush1.bf16.msra.mxu0 %v12909
    %13595 = vmatprep.subr.bf16.mxu0 %v12906
    %13596 = vmatpush1.bf16.msra.mxu0 %v12905
    %13597 = vmatprep.subr.bf16.mxu0 %v12902
    %13598 = vmatpush1.bf16.msra.mxu0 %v12901
    %13599 = vmatprep.subr.bf16.mxu0 %v12962
    %13600 = vmatpush2.bf16.msra.mxu0 %v12961
    %13601 = vmatprep.subr.bf16.mxu0 %v12958
    %13602 = vmatpush2.bf16.msra.mxu0 %v12957
    %13603 = vmatprep.subr.bf16.mxu0 %v12954
    %13604 = vmatpush2.bf16.msra.mxu0 %v12953
    %13605 = vmatprep.subr.bf16.mxu0 %v12950
    %13606 = vmatpush2.bf16.msra.mxu0 %v12949
    %13607 = vmatprep.subr.bf16.mxu0 %v12946
    %13608 = vmatpush2.bf16.msra.mxu0 %v12945
    %13609 = vmatprep.subr.bf16.mxu0 %v12942
    %13610 = vmatpush2.bf16.msra.mxu0 %v12941
    %13611 = vmatprep.subr.bf16.mxu0 %v12938
    %13612 = vmatpush2.bf16.msra.mxu0 %v12937
    %13613 = vmatprep.subr.bf16.mxu0 %v12934
    %13614 = vmatpush2.bf16.msra.mxu0 %v12933
    %13615 = vmatprep.mubr.bf16.mxu0 %v12086
    %13616 = vmatmul.mubr.bf16.gmra.mxu0 %v12085
    %v13617 = vpop.f32.mrf.mxu0
    %v13618 = vadd.f32 %v12126, %v13617
    %v13619 = vpop.f32.mrf.mxu0
    %v13620 = vadd.f32 %v12130, %v13619
    %v13621 = vpop.f32.mrf.mxu0
    %v13622 = vadd.f32 %v12126, %v13621
    %v13623 = vpop.f32.mrf.mxu0
    %v13624 = vadd.f32 %v12130, %v13623
    %13625 = vdwg.mxu0
    %13626 = vmatprep.subr.bf16.mxu0 %v12994
    %13627 = vmatpush1.bf16.msra.mxu0 %v12993
    %13628 = vmatprep.subr.bf16.mxu0 %v12990
    %13629 = vmatpush1.bf16.msra.mxu0 %v12989
    %13630 = vmatprep.subr.bf16.mxu0 %v12986
    %13631 = vmatpush1.bf16.msra.mxu0 %v12985
    %13632 = vmatprep.subr.bf16.mxu0 %v12982
    %13633 = vmatpush1.bf16.msra.mxu0 %v12981
    %13634 = vmatprep.subr.bf16.mxu0 %v12978
    %13635 = vmatpush1.bf16.msra.mxu0 %v12977
    %13636 = vmatprep.subr.bf16.mxu0 %v12974
    %13637 = vmatpush1.bf16.msra.mxu0 %v12973
    %13638 = vmatprep.subr.bf16.mxu0 %v12970
    %13639 = vmatpush1.bf16.msra.mxu0 %v12969
    %13640 = vmatprep.subr.bf16.mxu0 %v12966
    %13641 = vmatpush1.bf16.msra.mxu0 %v12965
    %13642 = vmatprep.subr.bf16.mxu0 %v13026
    %13643 = vmatpush2.bf16.msra.mxu0 %v13025
    %13644 = vmatprep.subr.bf16.mxu0 %v13022
    %13645 = vmatpush2.bf16.msra.mxu0 %v13021
    %13646 = vmatprep.subr.bf16.mxu0 %v13018
    %13647 = vmatpush2.bf16.msra.mxu0 %v13017
    %13648 = vmatprep.subr.bf16.mxu0 %v13014
    %13649 = vmatpush2.bf16.msra.mxu0 %v13013
    %13650 = vmatprep.subr.bf16.mxu0 %v13010
    %13651 = vmatpush2.bf16.msra.mxu0 %v13009
    %13652 = vmatprep.subr.bf16.mxu0 %v13006
    %13653 = vmatpush2.bf16.msra.mxu0 %v13005
    %13654 = vmatprep.subr.bf16.mxu0 %v13002
    %13655 = vmatpush2.bf16.msra.mxu0 %v13001
    %13656 = vmatprep.subr.bf16.mxu0 %v12998
    %13657 = vmatpush2.bf16.msra.mxu0 %v12997
    %13658 = vmatprep.mubr.bf16.mxu0 %v12088
    %13659 = vmatmul.mubr.bf16.gmra.mxu0 %v12087
    %v13660 = vpop.f32.mrf.mxu0
    %v13661 = vadd.f32 %v13618, %v13660
    %v13662 = vpop.f32.mrf.mxu0
    %v13663 = vadd.f32 %v13620, %v13662
    %v13664 = vpop.f32.mrf.mxu0
    %v13665 = vadd.f32 %v13622, %v13664
    %v13666 = vpop.f32.mrf.mxu0
    %v13667 = vadd.f32 %v13624, %v13666
    %13668 = vdwg.mxu0
    %13669 = vmatprep.subr.bf16.mxu0 %v13058
    %13670 = vmatpush1.bf16.msra.mxu0 %v13057
    %13671 = vmatprep.subr.bf16.mxu0 %v13054
    %13672 = vmatpush1.bf16.msra.mxu0 %v13053
    %13673 = vmatprep.subr.bf16.mxu0 %v13050
    %13674 = vmatpush1.bf16.msra.mxu0 %v13049
    %13675 = vmatprep.subr.bf16.mxu0 %v13046
    %13676 = vmatpush1.bf16.msra.mxu0 %v13045
    %13677 = vmatprep.subr.bf16.mxu0 %v13042
    %13678 = vmatpush1.bf16.msra.mxu0 %v13041
    %13679 = vmatprep.subr.bf16.mxu0 %v13038
    %13680 = vmatpush1.bf16.msra.mxu0 %v13037
    %13681 = vmatprep.subr.bf16.mxu0 %v13034
    %13682 = vmatpush1.bf16.msra.mxu0 %v13033
    %13683 = vmatprep.subr.bf16.mxu0 %v13030
    %13684 = vmatpush1.bf16.msra.mxu0 %v13029
    %13685 = vmatprep.subr.bf16.mxu0 %v13090
    %13686 = vmatpush2.bf16.msra.mxu0 %v13089
    %13687 = vmatprep.subr.bf16.mxu0 %v13086
    %13688 = vmatpush2.bf16.msra.mxu0 %v13085
    %13689 = vmatprep.subr.bf16.mxu0 %v13082
    %13690 = vmatpush2.bf16.msra.mxu0 %v13081
    %13691 = vmatprep.subr.bf16.mxu0 %v13078
    %13692 = vmatpush2.bf16.msra.mxu0 %v13077
    %13693 = vmatprep.subr.bf16.mxu0 %v13074
    %13694 = vmatpush2.bf16.msra.mxu0 %v13073
    %13695 = vmatprep.subr.bf16.mxu0 %v13070
    %13696 = vmatpush2.bf16.msra.mxu0 %v13069
    %13697 = vmatprep.subr.bf16.mxu0 %v13066
    %13698 = vmatpush2.bf16.msra.mxu0 %v13065
    %13699 = vmatprep.subr.bf16.mxu0 %v13062
    %13700 = vmatpush2.bf16.msra.mxu0 %v13061
    %13701 = vmatprep.mubr.bf16.mxu0 %v12090
    %13702 = vmatmul.mubr.bf16.gmra.mxu0 %v12089
    %v13703 = vpop.f32.mrf.mxu0
    %v13704 = vadd.f32 %v13661, %v13703
    %v13705 = vpop.f32.mrf.mxu0
    %v13706 = vadd.f32 %v13663, %v13705
    %v13707 = vpop.f32.mrf.mxu0
    %v13708 = vadd.f32 %v13665, %v13707
    %v13709 = vpop.f32.mrf.mxu0
    %v13710 = vadd.f32 %v13667, %v13709
    %13711 = vdwg.mxu0
    %13712 = vmatprep.subr.bf16.mxu0 %v13122
    %13713 = vmatpush1.bf16.msra.mxu0 %v13121
    %13714 = vmatprep.subr.bf16.mxu0 %v13118
    %13715 = vmatpush1.bf16.msra.mxu0 %v13117
    %13716 = vmatprep.subr.bf16.mxu0 %v13114
    %13717 = vmatpush1.bf16.msra.mxu0 %v13113
    %13718 = vmatprep.subr.bf16.mxu0 %v13110
    %13719 = vmatpush1.bf16.msra.mxu0 %v13109
    %13720 = vmatprep.subr.bf16.mxu0 %v13106
    %13721 = vmatpush1.bf16.msra.mxu0 %v13105
    %13722 = vmatprep.subr.bf16.mxu0 %v13102
    %13723 = vmatpush1.bf16.msra.mxu0 %v13101
    %13724 = vmatprep.subr.bf16.mxu0 %v13098
    %13725 = vmatpush1.bf16.msra.mxu0 %v13097
    %13726 = vmatprep.subr.bf16.mxu0 %v13094
    %13727 = vmatpush1.bf16.msra.mxu0 %v13093
    %13728 = vmatprep.subr.bf16.mxu0 %v13154
    %13729 = vmatpush2.bf16.msra.mxu0 %v13153
    %13730 = vmatprep.subr.bf16.mxu0 %v13150
    %13731 = vmatpush2.bf16.msra.mxu0 %v13149
    %13732 = vmatprep.subr.bf16.mxu0 %v13146
    %13733 = vmatpush2.bf16.msra.mxu0 %v13145
    %13734 = vmatprep.subr.bf16.mxu0 %v13142
    %13735 = vmatpush2.bf16.msra.mxu0 %v13141
    %13736 = vmatprep.subr.bf16.mxu0 %v13138
    %13737 = vmatpush2.bf16.msra.mxu0 %v13137
    %13738 = vmatprep.subr.bf16.mxu0 %v13134
    %13739 = vmatpush2.bf16.msra.mxu0 %v13133
    %13740 = vmatprep.subr.bf16.mxu0 %v13130
    %13741 = vmatpush2.bf16.msra.mxu0 %v13129
    %13742 = vmatprep.subr.bf16.mxu0 %v13126
    %13743 = vmatpush2.bf16.msra.mxu0 %v13125
    %13744 = vmatprep.mubr.bf16.mxu0 %v12092
    %13745 = vmatmul.mubr.bf16.gmra.mxu0 %v12091
    %v13746 = vpop.f32.mrf.mxu0
    %v13747 = vadd.f32 %v13704, %v13746
    %v13748 = vpop.f32.mrf.mxu0
    %v13749 = vadd.f32 %v13706, %v13748
    %v13750 = vpop.f32.mrf.mxu0
    %v13751 = vadd.f32 %v13708, %v13750
    %v13752 = vpop.f32.mrf.mxu0
    %v13753 = vadd.f32 %v13710, %v13752
    %13754 = vdwg.mxu0
    %vm13755 = vcmp.gt.f32.partialorder %v13575, 0.0
    %vm13756 = vcmp.gt.f32.partialorder %v13577, 0.0
    %vm13757 = vcmp.gt.f32.partialorder %v13747, 0.0
    %vm13758 = vcmp.gt.f32.partialorder %v13749, 0.0
    %vm13759 = vcmp.gt.f32.partialorder %v13579, 0.0
    %vm13760 = vcmp.gt.f32.partialorder %v13581, 0.0
    %vm13761 = vcmp.gt.f32.partialorder %v13751, 0.0
    %vm13762 = vcmp.gt.f32.partialorder %v13753, 0.0
    %v13763 = vmul.f32 %v13575, 0.01
    %v13764 = vmul.f32 %v13577, 0.01
    %v13765 = vmul.f32 %v13747, 0.01
    %v13766 = vmul.f32 %v13749, 0.01
    %v13767 = vmul.f32 %v13579, 0.01
    %v13768 = vmul.f32 %v13581, 0.01
    %v13769 = vmul.f32 %v13751, 0.01
    %v13770 = vmul.f32 %v13753, 0.01
    %v13771 = vsel %vm13755, %v13575, %v13763
    %v13772 = vsel %vm13756, %v13577, %v13764
    %v13773 = vsel %vm13757, %v13747, %v13765
    %v13774 = vsel %vm13758, %v13749, %v13766
    %v13775 = vsel %vm13759, %v13579, %v13767
    %v13776 = vsel %vm13760, %v13581, %v13768
    %v13777 = vsel %vm13761, %v13751, %v13769
    %v13778 = vsel %vm13762, %v13753, %v13770
    %v13779 = vpack.c.bf16 %v13775, %v13771
    %v13780 = vpack.c.bf16 %v13776, %v13772
    %v13781 = vpack.c.bf16 %v13777, %v13773
    %v13782 = vpack.c.bf16 %v13778, %v13774
    %v13783 = vld [vmem:[#allocation12] sm:$0xff]
    %v13784 = vld [vmem:[#allocation12 + $0x8] sm:$0xff]
    %v13785 = vld [vmem:[#allocation12 + $0x10] sm:$0xff]
    %v13786 = vld [vmem:[#allocation12 + $0x18] sm:$0xff]
    %v13787 = vld [vmem:[#allocation12 + $0x20] sm:$0xff]
    %v13788 = vld [vmem:[#allocation12 + $0x28] sm:$0xff]
    %v13789 = vld [vmem:[#allocation12 + $0x30] sm:$0xff]
    %v13790 = vld [vmem:[#allocation12 + $0x38] sm:$0xff]
    %v13791 = vld [vmem:[#allocation12 + $0x40] sm:$0xff]
    %v13792 = vld [vmem:[#allocation12 + $0x48] sm:$0xff]
    %v13793 = vld [vmem:[#allocation12 + $0x50] sm:$0xff]
    %v13794 = vld [vmem:[#allocation12 + $0x58] sm:$0xff]
    %v13795 = vld [vmem:[#allocation12 + $0x60] sm:$0xff]
    %v13796 = vld [vmem:[#allocation12 + $0x68] sm:$0xff]
    %v13797 = vld [vmem:[#allocation12 + $0x70] sm:$0xff]
    %v13798 = vld [vmem:[#allocation12 + $0x78] sm:$0xff]
    %v13799 = vld [vmem:[#allocation12 + $0x80] sm:$0xff]
    %v13800 = vld [vmem:[#allocation12 + $0x88] sm:$0xff]
    %v13801 = vld [vmem:[#allocation12 + $0x90] sm:$0xff]
    %v13802 = vld [vmem:[#allocation12 + $0x98] sm:$0xff]
    %v13803 = vld [vmem:[#allocation12 + $0xa0] sm:$0xff]
    %v13804 = vld [vmem:[#allocation12 + $0xa8] sm:$0xff]
    %v13805 = vld [vmem:[#allocation12 + $0xb0] sm:$0xff]
    %v13806 = vld [vmem:[#allocation12 + $0xb8] sm:$0xff]
    %v13807 = vld [vmem:[#allocation12 + $0xc0] sm:$0xff]
    %v13808 = vld [vmem:[#allocation12 + $0xc8] sm:$0xff]
    %v13809 = vld [vmem:[#allocation12 + $0xd0] sm:$0xff]
    %v13810 = vld [vmem:[#allocation12 + $0xd8] sm:$0xff]
    %v13811 = vld [vmem:[#allocation12 + $0xe0] sm:$0xff]
    %v13812 = vld [vmem:[#allocation12 + $0xe8] sm:$0xff]
    %v13813 = vld [vmem:[#allocation12 + $0xf0] sm:$0xff]
    %v13814 = vld [vmem:[#allocation12 + $0xf8] sm:$0xff]
    %v13815 = vld [vmem:[#allocation12 + $0x100] sm:$0xff]
    %v13816 = vld [vmem:[#allocation12 + $0x108] sm:$0xff]
    %v13817 = vld [vmem:[#allocation12 + $0x110] sm:$0xff]
    %v13818 = vld [vmem:[#allocation12 + $0x118] sm:$0xff]
    %v13819 = vld [vmem:[#allocation12 + $0x120] sm:$0xff]
    %v13820 = vld [vmem:[#allocation12 + $0x128] sm:$0xff]
    %v13821 = vld [vmem:[#allocation12 + $0x130] sm:$0xff]
    %v13822 = vld [vmem:[#allocation12 + $0x138] sm:$0xff]
    %v13823 = vld [vmem:[#allocation12 + $0x140] sm:$0xff]
    %v13824 = vld [vmem:[#allocation12 + $0x148] sm:$0xff]
    %v13825 = vld [vmem:[#allocation12 + $0x150] sm:$0xff]
    %v13826 = vld [vmem:[#allocation12 + $0x158] sm:$0xff]
    %v13827 = vld [vmem:[#allocation12 + $0x160] sm:$0xff]
    %v13828 = vld [vmem:[#allocation12 + $0x168] sm:$0xff]
    %v13829 = vld [vmem:[#allocation12 + $0x170] sm:$0xff]
    %v13830 = vld [vmem:[#allocation12 + $0x178] sm:$0xff]
    %v13831 = vld [vmem:[#allocation12 + $0x180] sm:$0xff]
    %v13832 = vld [vmem:[#allocation12 + $0x188] sm:$0xff]
    %v13833 = vld [vmem:[#allocation12 + $0x190] sm:$0xff]
    %v13834 = vld [vmem:[#allocation12 + $0x198] sm:$0xff]
    %v13835 = vld [vmem:[#allocation12 + $0x1a0] sm:$0xff]
    %v13836 = vld [vmem:[#allocation12 + $0x1a8] sm:$0xff]
    %v13837 = vld [vmem:[#allocation12 + $0x1b0] sm:$0xff]
    %v13838 = vld [vmem:[#allocation12 + $0x1b8] sm:$0xff]
    %v13839 = vld [vmem:[#allocation12 + $0x1c0] sm:$0xff]
    %v13840 = vld [vmem:[#allocation12 + $0x1c8] sm:$0xff]
    %v13841 = vld [vmem:[#allocation12 + $0x1d0] sm:$0xff]
    %v13842 = vld [vmem:[#allocation12 + $0x1d8] sm:$0xff]
    %v13843 = vld [vmem:[#allocation12 + $0x1e0] sm:$0xff]
    %v13844 = vld [vmem:[#allocation12 + $0x1e8] sm:$0xff]
    %v13845 = vld [vmem:[#allocation12 + $0x1f0] sm:$0xff]
    %v13846 = vld [vmem:[#allocation12 + $0x1f8] sm:$0xff]
    %v13847 = vld [vmem:[#allocation12 + $0x200] sm:$0xff]
    %v13848 = vld [vmem:[#allocation12 + $0x208] sm:$0xff]
    %v13849 = vld [vmem:[#allocation12 + $0x210] sm:$0xff]
    %v13850 = vld [vmem:[#allocation12 + $0x218] sm:$0xff]
    %v13851 = vld [vmem:[#allocation12 + $0x220] sm:$0xff]
    %v13852 = vld [vmem:[#allocation12 + $0x228] sm:$0xff]
    %v13853 = vld [vmem:[#allocation12 + $0x230] sm:$0xff]
    %v13854 = vld [vmem:[#allocation12 + $0x238] sm:$0xff]
    %v13855 = vld [vmem:[#allocation12 + $0x240] sm:$0xff]
    %v13856 = vld [vmem:[#allocation12 + $0x248] sm:$0xff]
    %v13857 = vld [vmem:[#allocation12 + $0x250] sm:$0xff]
    %v13858 = vld [vmem:[#allocation12 + $0x258] sm:$0xff]
    %v13859 = vld [vmem:[#allocation12 + $0x260] sm:$0xff]
    %v13860 = vld [vmem:[#allocation12 + $0x268] sm:$0xff]
    %v13861 = vld [vmem:[#allocation12 + $0x270] sm:$0xff]
    %v13862 = vld [vmem:[#allocation12 + $0x278] sm:$0xff]
    %v13863 = vld [vmem:[#allocation12 + $0x280] sm:$0xff]
    %v13864 = vld [vmem:[#allocation12 + $0x288] sm:$0xff]
    %v13865 = vld [vmem:[#allocation12 + $0x290] sm:$0xff]
    %v13866 = vld [vmem:[#allocation12 + $0x298] sm:$0xff]
    %v13867 = vld [vmem:[#allocation12 + $0x2a0] sm:$0xff]
    %v13868 = vld [vmem:[#allocation12 + $0x2a8] sm:$0xff]
    %v13869 = vld [vmem:[#allocation12 + $0x2b0] sm:$0xff]
    %v13870 = vld [vmem:[#allocation12 + $0x2b8] sm:$0xff]
    %v13871 = vld [vmem:[#allocation12 + $0x2c0] sm:$0xff]
    %v13872 = vld [vmem:[#allocation12 + $0x2c8] sm:$0xff]
    %v13873 = vld [vmem:[#allocation12 + $0x2d0] sm:$0xff]
    %v13874 = vld [vmem:[#allocation12 + $0x2d8] sm:$0xff]
    %v13875 = vld [vmem:[#allocation12 + $0x2e0] sm:$0xff]
    %v13876 = vld [vmem:[#allocation12 + $0x2e8] sm:$0xff]
    %v13877 = vld [vmem:[#allocation12 + $0x2f0] sm:$0xff]
    %v13878 = vld [vmem:[#allocation12 + $0x2f8] sm:$0xff]
    %v13879 = vld [vmem:[#allocation12 + $0x300] sm:$0xff]
    %v13880 = vld [vmem:[#allocation12 + $0x308] sm:$0xff]
    %v13881 = vld [vmem:[#allocation12 + $0x310] sm:$0xff]
    %v13882 = vld [vmem:[#allocation12 + $0x318] sm:$0xff]
    %v13883 = vld [vmem:[#allocation12 + $0x320] sm:$0xff]
    %v13884 = vld [vmem:[#allocation12 + $0x328] sm:$0xff]
    %v13885 = vld [vmem:[#allocation12 + $0x330] sm:$0xff]
    %v13886 = vld [vmem:[#allocation12 + $0x338] sm:$0xff]
    %v13887 = vld [vmem:[#allocation12 + $0x340] sm:$0xff]
    %v13888 = vld [vmem:[#allocation12 + $0x348] sm:$0xff]
    %v13889 = vld [vmem:[#allocation12 + $0x350] sm:$0xff]
    %v13890 = vld [vmem:[#allocation12 + $0x358] sm:$0xff]
    %v13891 = vld [vmem:[#allocation12 + $0x360] sm:$0xff]
    %v13892 = vld [vmem:[#allocation12 + $0x368] sm:$0xff]
    %v13893 = vld [vmem:[#allocation12 + $0x370] sm:$0xff]
    %v13894 = vld [vmem:[#allocation12 + $0x378] sm:$0xff]
    %v13895 = vld [vmem:[#allocation12 + $0x380] sm:$0xff]
    %v13896 = vld [vmem:[#allocation12 + $0x388] sm:$0xff]
    %v13897 = vld [vmem:[#allocation12 + $0x390] sm:$0xff]
    %v13898 = vld [vmem:[#allocation12 + $0x398] sm:$0xff]
    %v13899 = vld [vmem:[#allocation12 + $0x3a0] sm:$0xff]
    %v13900 = vld [vmem:[#allocation12 + $0x3a8] sm:$0xff]
    %v13901 = vld [vmem:[#allocation12 + $0x3b0] sm:$0xff]
    %v13902 = vld [vmem:[#allocation12 + $0x3b8] sm:$0xff]
    %v13903 = vld [vmem:[#allocation12 + $0x3c0] sm:$0xff]
    %v13904 = vld [vmem:[#allocation12 + $0x3c8] sm:$0xff]
    %v13905 = vld [vmem:[#allocation12 + $0x3d0] sm:$0xff]
    %v13906 = vld [vmem:[#allocation12 + $0x3d8] sm:$0xff]
    %v13907 = vld [vmem:[#allocation12 + $0x3e0] sm:$0xff]
    %v13908 = vld [vmem:[#allocation12 + $0x3e8] sm:$0xff]
    %v13909 = vld [vmem:[#allocation12 + $0x3f0] sm:$0xff]
    %v13910 = vld [vmem:[#allocation12 + $0x3f8] sm:$0xff]
    %v13911 = vld [vmem:[#allocation13] sm:$0xf]
    %v13912 = vunpack.c.l.bf16 %v13911
    %v13914 = vlaneseq
    %v13915 = vshrl.u32 %v13914, 7
    %v13916 = vsub.s32 0, %v13915
    %v13917 = vrot.slane %v13912, %v13916
    %v13918 = vlaneseq
    %v13919 = vshrl.u32 %v13918, 7
    %v13920 = vsub.s32 2, %v13919
    %v13921 = vrot.slane %v13912, %v13920
    %v13922 = vlaneseq
    %v13923 = vshrl.u32 %v13922, 7
    %v13924 = vsub.s32 4, %v13923
    %v13925 = vrot.slane %v13912, %v13924
    %v13926 = vlaneseq
    %v13927 = vshrl.u32 %v13926, 7
    %v13928 = vsub.s32 6, %v13927
    %v13929 = vrot.slane %v13912, %v13928
    %v13934 = vlaneseq
    %v13935 = vshrl.u32 %v13934, 7
    %v13936 = vsub.s32 0, %v13935
    %v13937 = vrot.slane %v13917, %v13936
    %v13938 = vlaneseq
    %v13939 = vshrl.u32 %v13938, 7
    %v13940 = vsub.s32 0, %v13939
    %v13941 = vrot.slane %v13921, %v13940
    %v13942 = vlaneseq
    %v13943 = vshrl.u32 %v13942, 7
    %v13944 = vsub.s32 0, %v13943
    %v13945 = vrot.slane %v13925, %v13944
    %v13946 = vlaneseq
    %v13947 = vshrl.u32 %v13946, 7
    %v13948 = vsub.s32 0, %v13947
    %v13949 = vrot.slane %v13929, %v13948
    %v14078 = vunpack.c.l.b16 %v13783
    %v14079 = vunpack.c.h.b16 %v13783
    %v14080 = vunpack.c.l.b16 %v13784
    %v14081 = vunpack.c.h.b16 %v13784
    %v14082 = vunpack.c.l.b16 %v13785
    %v14083 = vunpack.c.h.b16 %v13785
    %v14084 = vunpack.c.l.b16 %v13786
    %v14085 = vunpack.c.h.b16 %v13786
    %v14086 = vunpack.c.l.b16 %v13787
    %v14087 = vunpack.c.h.b16 %v13787
    %v14088 = vunpack.c.l.b16 %v13788
    %v14089 = vunpack.c.h.b16 %v13788
    %v14090 = vunpack.c.l.b16 %v13789
    %v14091 = vunpack.c.h.b16 %v13789
    %v14092 = vunpack.c.l.b16 %v13790
    %v14093 = vunpack.c.h.b16 %v13790
    %v14094 = vunpack.c.l.b16 %v13791
    %v14095 = vunpack.c.h.b16 %v13791
    %v14096 = vunpack.c.l.b16 %v13792
    %v14097 = vunpack.c.h.b16 %v13792
    %v14098 = vunpack.c.l.b16 %v13793
    %v14099 = vunpack.c.h.b16 %v13793
    %v14100 = vunpack.c.l.b16 %v13794
    %v14101 = vunpack.c.h.b16 %v13794
    %v14102 = vunpack.c.l.b16 %v13795
    %v14103 = vunpack.c.h.b16 %v13795
    %v14104 = vunpack.c.l.b16 %v13796
    %v14105 = vunpack.c.h.b16 %v13796
    %v14106 = vunpack.c.l.b16 %v13797
    %v14107 = vunpack.c.h.b16 %v13797
    %v14108 = vunpack.c.l.b16 %v13798
    %v14109 = vunpack.c.h.b16 %v13798
    %v14110 = vunpack.c.l.b16 %v13799
    %v14111 = vunpack.c.h.b16 %v13799
    %v14112 = vunpack.c.l.b16 %v13800
    %v14113 = vunpack.c.h.b16 %v13800
    %v14114 = vunpack.c.l.b16 %v13801
    %v14115 = vunpack.c.h.b16 %v13801
    %v14116 = vunpack.c.l.b16 %v13802
    %v14117 = vunpack.c.h.b16 %v13802
    %v14118 = vunpack.c.l.b16 %v13803
    %v14119 = vunpack.c.h.b16 %v13803
    %v14120 = vunpack.c.l.b16 %v13804
    %v14121 = vunpack.c.h.b16 %v13804
    %v14122 = vunpack.c.l.b16 %v13805
    %v14123 = vunpack.c.h.b16 %v13805
    %v14124 = vunpack.c.l.b16 %v13806
    %v14125 = vunpack.c.h.b16 %v13806
    %v14126 = vunpack.c.l.b16 %v13807
    %v14127 = vunpack.c.h.b16 %v13807
    %v14128 = vunpack.c.l.b16 %v13808
    %v14129 = vunpack.c.h.b16 %v13808
    %v14130 = vunpack.c.l.b16 %v13809
    %v14131 = vunpack.c.h.b16 %v13809
    %v14132 = vunpack.c.l.b16 %v13810
    %v14133 = vunpack.c.h.b16 %v13810
    %v14134 = vunpack.c.l.b16 %v13811
    %v14135 = vunpack.c.h.b16 %v13811
    %v14136 = vunpack.c.l.b16 %v13812
    %v14137 = vunpack.c.h.b16 %v13812
    %v14138 = vunpack.c.l.b16 %v13813
    %v14139 = vunpack.c.h.b16 %v13813
    %v14140 = vunpack.c.l.b16 %v13814
    %v14141 = vunpack.c.h.b16 %v13814
    %v14142 = vunpack.c.l.b16 %v13815
    %v14143 = vunpack.c.h.b16 %v13815
    %v14144 = vunpack.c.l.b16 %v13816
    %v14145 = vunpack.c.h.b16 %v13816
    %v14146 = vunpack.c.l.b16 %v13817
    %v14147 = vunpack.c.h.b16 %v13817
    %v14148 = vunpack.c.l.b16 %v13818
    %v14149 = vunpack.c.h.b16 %v13818
    %v14150 = vunpack.c.l.b16 %v13819
    %v14151 = vunpack.c.h.b16 %v13819
    %v14152 = vunpack.c.l.b16 %v13820
    %v14153 = vunpack.c.h.b16 %v13820
    %v14154 = vunpack.c.l.b16 %v13821
    %v14155 = vunpack.c.h.b16 %v13821
    %v14156 = vunpack.c.l.b16 %v13822
    %v14157 = vunpack.c.h.b16 %v13822
    %v14158 = vunpack.c.l.b16 %v13823
    %v14159 = vunpack.c.h.b16 %v13823
    %v14160 = vunpack.c.l.b16 %v13824
    %v14161 = vunpack.c.h.b16 %v13824
    %v14162 = vunpack.c.l.b16 %v13825
    %v14163 = vunpack.c.h.b16 %v13825
    %v14164 = vunpack.c.l.b16 %v13826
    %v14165 = vunpack.c.h.b16 %v13826
    %v14166 = vunpack.c.l.b16 %v13827
    %v14167 = vunpack.c.h.b16 %v13827
    %v14168 = vunpack.c.l.b16 %v13828
    %v14169 = vunpack.c.h.b16 %v13828
    %v14170 = vunpack.c.l.b16 %v13829
    %v14171 = vunpack.c.h.b16 %v13829
    %v14172 = vunpack.c.l.b16 %v13830
    %v14173 = vunpack.c.h.b16 %v13830
    %v14174 = vunpack.c.l.b16 %v13831
    %v14175 = vunpack.c.h.b16 %v13831
    %v14176 = vunpack.c.l.b16 %v13832
    %v14177 = vunpack.c.h.b16 %v13832
    %v14178 = vunpack.c.l.b16 %v13833
    %v14179 = vunpack.c.h.b16 %v13833
    %v14180 = vunpack.c.l.b16 %v13834
    %v14181 = vunpack.c.h.b16 %v13834
    %v14182 = vunpack.c.l.b16 %v13835
    %v14183 = vunpack.c.h.b16 %v13835
    %v14184 = vunpack.c.l.b16 %v13836
    %v14185 = vunpack.c.h.b16 %v13836
    %v14186 = vunpack.c.l.b16 %v13837
    %v14187 = vunpack.c.h.b16 %v13837
    %v14188 = vunpack.c.l.b16 %v13838
    %v14189 = vunpack.c.h.b16 %v13838
    %v14190 = vunpack.c.l.b16 %v13839
    %v14191 = vunpack.c.h.b16 %v13839
    %v14192 = vunpack.c.l.b16 %v13840
    %v14193 = vunpack.c.h.b16 %v13840
    %v14194 = vunpack.c.l.b16 %v13841
    %v14195 = vunpack.c.h.b16 %v13841
    %v14196 = vunpack.c.l.b16 %v13842
    %v14197 = vunpack.c.h.b16 %v13842
    %v14198 = vunpack.c.l.b16 %v13843
    %v14199 = vunpack.c.h.b16 %v13843
    %v14200 = vunpack.c.l.b16 %v13844
    %v14201 = vunpack.c.h.b16 %v13844
    %v14202 = vunpack.c.l.b16 %v13845
    %v14203 = vunpack.c.h.b16 %v13845
    %v14204 = vunpack.c.l.b16 %v13846
    %v14205 = vunpack.c.h.b16 %v13846
    %v14206 = vunpack.c.l.b16 %v13847
    %v14207 = vunpack.c.h.b16 %v13847
    %v14208 = vunpack.c.l.b16 %v13848
    %v14209 = vunpack.c.h.b16 %v13848
    %v14210 = vunpack.c.l.b16 %v13849
    %v14211 = vunpack.c.h.b16 %v13849
    %v14212 = vunpack.c.l.b16 %v13850
    %v14213 = vunpack.c.h.b16 %v13850
    %v14214 = vunpack.c.l.b16 %v13851
    %v14215 = vunpack.c.h.b16 %v13851
    %v14216 = vunpack.c.l.b16 %v13852
    %v14217 = vunpack.c.h.b16 %v13852
    %v14218 = vunpack.c.l.b16 %v13853
    %v14219 = vunpack.c.h.b16 %v13853
    %v14220 = vunpack.c.l.b16 %v13854
    %v14221 = vunpack.c.h.b16 %v13854
    %v14222 = vunpack.c.l.b16 %v13855
    %v14223 = vunpack.c.h.b16 %v13855
    %v14224 = vunpack.c.l.b16 %v13856
    %v14225 = vunpack.c.h.b16 %v13856
    %v14226 = vunpack.c.l.b16 %v13857
    %v14227 = vunpack.c.h.b16 %v13857
    %v14228 = vunpack.c.l.b16 %v13858
    %v14229 = vunpack.c.h.b16 %v13858
    %v14230 = vunpack.c.l.b16 %v13859
    %v14231 = vunpack.c.h.b16 %v13859
    %v14232 = vunpack.c.l.b16 %v13860
    %v14233 = vunpack.c.h.b16 %v13860
    %v14234 = vunpack.c.l.b16 %v13861
    %v14235 = vunpack.c.h.b16 %v13861
    %v14236 = vunpack.c.l.b16 %v13862
    %v14237 = vunpack.c.h.b16 %v13862
    %v14238 = vunpack.c.l.b16 %v13863
    %v14239 = vunpack.c.h.b16 %v13863
    %v14240 = vunpack.c.l.b16 %v13864
    %v14241 = vunpack.c.h.b16 %v13864
    %v14242 = vunpack.c.l.b16 %v13865
    %v14243 = vunpack.c.h.b16 %v13865
    %v14244 = vunpack.c.l.b16 %v13866
    %v14245 = vunpack.c.h.b16 %v13866
    %v14246 = vunpack.c.l.b16 %v13867
    %v14247 = vunpack.c.h.b16 %v13867
    %v14248 = vunpack.c.l.b16 %v13868
    %v14249 = vunpack.c.h.b16 %v13868
    %v14250 = vunpack.c.l.b16 %v13869
    %v14251 = vunpack.c.h.b16 %v13869
    %v14252 = vunpack.c.l.b16 %v13870
    %v14253 = vunpack.c.h.b16 %v13870
    %v14254 = vunpack.c.l.b16 %v13871
    %v14255 = vunpack.c.h.b16 %v13871
    %v14256 = vunpack.c.l.b16 %v13872
    %v14257 = vunpack.c.h.b16 %v13872
    %v14258 = vunpack.c.l.b16 %v13873
    %v14259 = vunpack.c.h.b16 %v13873
    %v14260 = vunpack.c.l.b16 %v13874
    %v14261 = vunpack.c.h.b16 %v13874
    %v14262 = vunpack.c.l.b16 %v13875
    %v14263 = vunpack.c.h.b16 %v13875
    %v14264 = vunpack.c.l.b16 %v13876
    %v14265 = vunpack.c.h.b16 %v13876
    %v14266 = vunpack.c.l.b16 %v13877
    %v14267 = vunpack.c.h.b16 %v13877
    %v14268 = vunpack.c.l.b16 %v13878
    %v14269 = vunpack.c.h.b16 %v13878
    %v14270 = vunpack.c.l.b16 %v13879
    %v14271 = vunpack.c.h.b16 %v13879
    %v14272 = vunpack.c.l.b16 %v13880
    %v14273 = vunpack.c.h.b16 %v13880
    %v14274 = vunpack.c.l.b16 %v13881
    %v14275 = vunpack.c.h.b16 %v13881
    %v14276 = vunpack.c.l.b16 %v13882
    %v14277 = vunpack.c.h.b16 %v13882
    %v14278 = vunpack.c.l.b16 %v13883
    %v14279 = vunpack.c.h.b16 %v13883
    %v14280 = vunpack.c.l.b16 %v13884
    %v14281 = vunpack.c.h.b16 %v13884
    %v14282 = vunpack.c.l.b16 %v13885
    %v14283 = vunpack.c.h.b16 %v13885
    %v14284 = vunpack.c.l.b16 %v13886
    %v14285 = vunpack.c.h.b16 %v13886
    %v14286 = vunpack.c.l.b16 %v13887
    %v14287 = vunpack.c.h.b16 %v13887
    %v14288 = vunpack.c.l.b16 %v13888
    %v14289 = vunpack.c.h.b16 %v13888
    %v14290 = vunpack.c.l.b16 %v13889
    %v14291 = vunpack.c.h.b16 %v13889
    %v14292 = vunpack.c.l.b16 %v13890
    %v14293 = vunpack.c.h.b16 %v13890
    %v14294 = vunpack.c.l.b16 %v13891
    %v14295 = vunpack.c.h.b16 %v13891
    %v14296 = vunpack.c.l.b16 %v13892
    %v14297 = vunpack.c.h.b16 %v13892
    %v14298 = vunpack.c.l.b16 %v13893
    %v14299 = vunpack.c.h.b16 %v13893
    %v14300 = vunpack.c.l.b16 %v13894
    %v14301 = vunpack.c.h.b16 %v13894
    %v14302 = vunpack.c.l.b16 %v13895
    %v14303 = vunpack.c.h.b16 %v13895
    %v14304 = vunpack.c.l.b16 %v13896
    %v14305 = vunpack.c.h.b16 %v13896
    %v14306 = vunpack.c.l.b16 %v13897
    %v14307 = vunpack.c.h.b16 %v13897
    %v14308 = vunpack.c.l.b16 %v13898
    %v14309 = vunpack.c.h.b16 %v13898
    %v14310 = vunpack.c.l.b16 %v13899
    %v14311 = vunpack.c.h.b16 %v13899
    %v14312 = vunpack.c.l.b16 %v13900
    %v14313 = vunpack.c.h.b16 %v13900
    %v14314 = vunpack.c.l.b16 %v13901
    %v14315 = vunpack.c.h.b16 %v13901
    %v14316 = vunpack.c.l.b16 %v13902
    %v14317 = vunpack.c.h.b16 %v13902
    %v14318 = vunpack.c.l.b16 %v13903
    %v14319 = vunpack.c.h.b16 %v13903
    %v14320 = vunpack.c.l.b16 %v13904
    %v14321 = vunpack.c.h.b16 %v13904
    %v14322 = vunpack.c.l.b16 %v13905
    %v14323 = vunpack.c.h.b16 %v13905
    %v14324 = vunpack.c.l.b16 %v13906
    %v14325 = vunpack.c.h.b16 %v13906
    %v14326 = vunpack.c.l.b16 %v13907
    %v14327 = vunpack.c.h.b16 %v13907
    %v14328 = vunpack.c.l.b16 %v13908
    %v14329 = vunpack.c.h.b16 %v13908
    %v14330 = vunpack.c.l.b16 %v13909
    %v14331 = vunpack.c.h.b16 %v13909
    %v14332 = vunpack.c.l.b16 %v13910
    %v14333 = vunpack.c.h.b16 %v13910
    %v14334 = vpack.c.b16 %v14082, %v14078
    %v14335 = vpack.c.b16 %v14083, %v14079
    %v14336 = vpack.c.b16 %v14084, %v14080
    %v14337 = vpack.c.b16 %v14085, %v14081
    %v14338 = vpack.c.b16 %v14090, %v14086
    %v14339 = vpack.c.b16 %v14091, %v14087
    %v14340 = vpack.c.b16 %v14092, %v14088
    %v14341 = vpack.c.b16 %v14093, %v14089
    %v14342 = vpack.c.b16 %v14098, %v14094
    %v14343 = vpack.c.b16 %v14099, %v14095
    %v14344 = vpack.c.b16 %v14100, %v14096
    %v14345 = vpack.c.b16 %v14101, %v14097
    %v14346 = vpack.c.b16 %v14106, %v14102
    %v14347 = vpack.c.b16 %v14107, %v14103
    %v14348 = vpack.c.b16 %v14108, %v14104
    %v14349 = vpack.c.b16 %v14109, %v14105
    %v14350 = vpack.c.b16 %v14114, %v14110
    %v14351 = vpack.c.b16 %v14115, %v14111
    %v14352 = vpack.c.b16 %v14116, %v14112
    %v14353 = vpack.c.b16 %v14117, %v14113
    %v14354 = vpack.c.b16 %v14122, %v14118
    %v14355 = vpack.c.b16 %v14123, %v14119
    %v14356 = vpack.c.b16 %v14124, %v14120
    %v14357 = vpack.c.b16 %v14125, %v14121
    %v14358 = vpack.c.b16 %v14130, %v14126
    %v14359 = vpack.c.b16 %v14131, %v14127
    %v14360 = vpack.c.b16 %v14132, %v14128
    %v14361 = vpack.c.b16 %v14133, %v14129
    %v14362 = vpack.c.b16 %v14138, %v14134
    %v14363 = vpack.c.b16 %v14139, %v14135
    %v14364 = vpack.c.b16 %v14140, %v14136
    %v14365 = vpack.c.b16 %v14141, %v14137
    %v14366 = vpack.c.b16 %v14146, %v14142
    %v14367 = vpack.c.b16 %v14147, %v14143
    %v14368 = vpack.c.b16 %v14148, %v14144
    %v14369 = vpack.c.b16 %v14149, %v14145
    %v14370 = vpack.c.b16 %v14154, %v14150
    %v14371 = vpack.c.b16 %v14155, %v14151
    %v14372 = vpack.c.b16 %v14156, %v14152
    %v14373 = vpack.c.b16 %v14157, %v14153
    %v14374 = vpack.c.b16 %v14162, %v14158
    %v14375 = vpack.c.b16 %v14163, %v14159
    %v14376 = vpack.c.b16 %v14164, %v14160
    %v14377 = vpack.c.b16 %v14165, %v14161
    %v14378 = vpack.c.b16 %v14170, %v14166
    %v14379 = vpack.c.b16 %v14171, %v14167
    %v14380 = vpack.c.b16 %v14172, %v14168
    %v14381 = vpack.c.b16 %v14173, %v14169
    %v14382 = vpack.c.b16 %v14178, %v14174
    %v14383 = vpack.c.b16 %v14179, %v14175
    %v14384 = vpack.c.b16 %v14180, %v14176
    %v14385 = vpack.c.b16 %v14181, %v14177
    %v14386 = vpack.c.b16 %v14186, %v14182
    %v14387 = vpack.c.b16 %v14187, %v14183
    %v14388 = vpack.c.b16 %v14188, %v14184
    %v14389 = vpack.c.b16 %v14189, %v14185
    %v14390 = vpack.c.b16 %v14194, %v14190
    %v14391 = vpack.c.b16 %v14195, %v14191
    %v14392 = vpack.c.b16 %v14196, %v14192
    %v14393 = vpack.c.b16 %v14197, %v14193
    %v14394 = vpack.c.b16 %v14202, %v14198
    %v14395 = vpack.c.b16 %v14203, %v14199
    %v14396 = vpack.c.b16 %v14204, %v14200
    %v14397 = vpack.c.b16 %v14205, %v14201
    %v14398 = vpack.c.b16 %v14210, %v14206
    %v14399 = vpack.c.b16 %v14211, %v14207
    %v14400 = vpack.c.b16 %v14212, %v14208
    %v14401 = vpack.c.b16 %v14213, %v14209
    %v14402 = vpack.c.b16 %v14218, %v14214
    %v14403 = vpack.c.b16 %v14219, %v14215
    %v14404 = vpack.c.b16 %v14220, %v14216
    %v14405 = vpack.c.b16 %v14221, %v14217
    %v14406 = vpack.c.b16 %v14226, %v14222
    %v14407 = vpack.c.b16 %v14227, %v14223
    %v14408 = vpack.c.b16 %v14228, %v14224
    %v14409 = vpack.c.b16 %v14229, %v14225
    %v14410 = vpack.c.b16 %v14234, %v14230
    %v14411 = vpack.c.b16 %v14235, %v14231
    %v14412 = vpack.c.b16 %v14236, %v14232
    %v14413 = vpack.c.b16 %v14237, %v14233
    %v14414 = vpack.c.b16 %v14242, %v14238
    %v14415 = vpack.c.b16 %v14243, %v14239
    %v14416 = vpack.c.b16 %v14244, %v14240
    %v14417 = vpack.c.b16 %v14245, %v14241
    %v14418 = vpack.c.b16 %v14250, %v14246
    %v14419 = vpack.c.b16 %v14251, %v14247
    %v14420 = vpack.c.b16 %v14252, %v14248
    %v14421 = vpack.c.b16 %v14253, %v14249
    %v14422 = vpack.c.b16 %v14258, %v14254
    %v14423 = vpack.c.b16 %v14259, %v14255
    %v14424 = vpack.c.b16 %v14260, %v14256
    %v14425 = vpack.c.b16 %v14261, %v14257
    %v14426 = vpack.c.b16 %v14266, %v14262
    %v14427 = vpack.c.b16 %v14267, %v14263
    %v14428 = vpack.c.b16 %v14268, %v14264
    %v14429 = vpack.c.b16 %v14269, %v14265
    %v14430 = vpack.c.b16 %v14274, %v14270
    %v14431 = vpack.c.b16 %v14275, %v14271
    %v14432 = vpack.c.b16 %v14276, %v14272
    %v14433 = vpack.c.b16 %v14277, %v14273
    %v14434 = vpack.c.b16 %v14282, %v14278
    %v14435 = vpack.c.b16 %v14283, %v14279
    %v14436 = vpack.c.b16 %v14284, %v14280
    %v14437 = vpack.c.b16 %v14285, %v14281
    %v14438 = vpack.c.b16 %v14290, %v14286
    %v14439 = vpack.c.b16 %v14291, %v14287
    %v14440 = vpack.c.b16 %v14292, %v14288
    %v14441 = vpack.c.b16 %v14293, %v14289
    %v14442 = vpack.c.b16 %v14298, %v14294
    %v14443 = vpack.c.b16 %v14299, %v14295
    %v14444 = vpack.c.b16 %v14300, %v14296
    %v14445 = vpack.c.b16 %v14301, %v14297
    %v14446 = vpack.c.b16 %v14306, %v14302
    %v14447 = vpack.c.b16 %v14307, %v14303
    %v14448 = vpack.c.b16 %v14308, %v14304
    %v14449 = vpack.c.b16 %v14309, %v14305
    %v14450 = vpack.c.b16 %v14314, %v14310
    %v14451 = vpack.c.b16 %v14315, %v14311
    %v14452 = vpack.c.b16 %v14316, %v14312
    %v14453 = vpack.c.b16 %v14317, %v14313
    %v14454 = vpack.c.b16 %v14322, %v14318
    %v14455 = vpack.c.b16 %v14323, %v14319
    %v14456 = vpack.c.b16 %v14324, %v14320
    %v14457 = vpack.c.b16 %v14325, %v14321
    %v14458 = vpack.c.b16 %v14330, %v14326
    %v14459 = vpack.c.b16 %v14331, %v14327
    %v14460 = vpack.c.b16 %v14332, %v14328
    %v14461 = vpack.c.b16 %v14333, %v14329
    %14590 = vmatprep.subr.bf16.mxu0 %v14363
    %14591 = vmatpush1.bf16.msra.mxu0 %v14362
    %14592 = vmatprep.subr.bf16.mxu0 %v14359
    %14593 = vmatpush1.bf16.msra.mxu0 %v14358
    %14594 = vmatprep.subr.bf16.mxu0 %v14355
    %14595 = vmatpush1.bf16.msra.mxu0 %v14354
    %14596 = vmatprep.subr.bf16.mxu0 %v14351
    %14597 = vmatpush1.bf16.msra.mxu0 %v14350
    %14598 = vmatprep.subr.bf16.mxu0 %v14347
    %14599 = vmatpush1.bf16.msra.mxu0 %v14346
    %14600 = vmatprep.subr.bf16.mxu0 %v14343
    %14601 = vmatpush1.bf16.msra.mxu0 %v14342
    %14602 = vmatprep.subr.bf16.mxu0 %v14339
    %14603 = vmatpush1.bf16.msra.mxu0 %v14338
    %14604 = vmatprep.subr.bf16.mxu0 %v14335
    %14605 = vmatpush1.bf16.msra.mxu0 %v14334
    %14606 = vmatprep.subr.bf16.mxu0 %v14395
    %14607 = vmatpush2.bf16.msra.mxu0 %v14394
    %14608 = vmatprep.subr.bf16.mxu0 %v14391
    %14609 = vmatpush2.bf16.msra.mxu0 %v14390
    %14610 = vmatprep.subr.bf16.mxu0 %v14387
    %14611 = vmatpush2.bf16.msra.mxu0 %v14386
    %14612 = vmatprep.subr.bf16.mxu0 %v14383
    %14613 = vmatpush2.bf16.msra.mxu0 %v14382
    %14614 = vmatprep.subr.bf16.mxu0 %v14379
    %14615 = vmatpush2.bf16.msra.mxu0 %v14378
    %14616 = vmatprep.subr.bf16.mxu0 %v14375
    %14617 = vmatpush2.bf16.msra.mxu0 %v14374
    %14618 = vmatprep.subr.bf16.mxu0 %v14371
    %14619 = vmatpush2.bf16.msra.mxu0 %v14370
    %14620 = vmatprep.subr.bf16.mxu0 %v14367
    %14621 = vmatpush2.bf16.msra.mxu0 %v14366
    %14622 = vmatprep.mubr.bf16.mxu0 %v13780
    %14623 = vmatmul.mubr.bf16.gmra.mxu0 %v13779
    %v14624 = vpop.f32.mrf.mxu0
    %v14625 = vadd.f32 %v13937, %v14624
    %v14626 = vpop.f32.mrf.mxu0
    %v14627 = vadd.f32 %v13941, %v14626
    %v14628 = vpop.f32.mrf.mxu0
    %v14629 = vadd.f32 %v13937, %v14628
    %v14630 = vpop.f32.mrf.mxu0
    %v14631 = vadd.f32 %v13941, %v14630
    %14632 = vdwg.mxu0
    %14633 = vmatprep.subr.bf16.mxu0 %v14427
    %14634 = vmatpush1.bf16.msra.mxu0 %v14426
    %14635 = vmatprep.subr.bf16.mxu0 %v14423
    %14636 = vmatpush1.bf16.msra.mxu0 %v14422
    %14637 = vmatprep.subr.bf16.mxu0 %v14419
    %14638 = vmatpush1.bf16.msra.mxu0 %v14418
    %14639 = vmatprep.subr.bf16.mxu0 %v14415
    %14640 = vmatpush1.bf16.msra.mxu0 %v14414
    %14641 = vmatprep.subr.bf16.mxu0 %v14411
    %14642 = vmatpush1.bf16.msra.mxu0 %v14410
    %14643 = vmatprep.subr.bf16.mxu0 %v14407
    %14644 = vmatpush1.bf16.msra.mxu0 %v14406
    %14645 = vmatprep.subr.bf16.mxu0 %v14403
    %14646 = vmatpush1.bf16.msra.mxu0 %v14402
    %14647 = vmatprep.subr.bf16.mxu0 %v14399
    %14648 = vmatpush1.bf16.msra.mxu0 %v14398
    %14649 = vmatprep.subr.bf16.mxu0 %v14459
    %14650 = vmatpush2.bf16.msra.mxu0 %v14458
    %14651 = vmatprep.subr.bf16.mxu0 %v14455
    %14652 = vmatpush2.bf16.msra.mxu0 %v14454
    %14653 = vmatprep.subr.bf16.mxu0 %v14451
    %14654 = vmatpush2.bf16.msra.mxu0 %v14450
    %14655 = vmatprep.subr.bf16.mxu0 %v14447
    %14656 = vmatpush2.bf16.msra.mxu0 %v14446
    %14657 = vmatprep.subr.bf16.mxu0 %v14443
    %14658 = vmatpush2.bf16.msra.mxu0 %v14442
    %14659 = vmatprep.subr.bf16.mxu0 %v14439
    %14660 = vmatpush2.bf16.msra.mxu0 %v14438
    %14661 = vmatprep.subr.bf16.mxu0 %v14435
    %14662 = vmatpush2.bf16.msra.mxu0 %v14434
    %14663 = vmatprep.subr.bf16.mxu0 %v14431
    %14664 = vmatpush2.bf16.msra.mxu0 %v14430
    %14665 = vmatprep.mubr.bf16.mxu0 %v13782
    %14666 = vmatmul.mubr.bf16.gmra.mxu0 %v13781
    %v14667 = vpop.f32.mrf.mxu0
    %v14668 = vadd.f32 %v14625, %v14667
    %v14669 = vpop.f32.mrf.mxu0
    %v14670 = vadd.f32 %v14627, %v14669
    %v14671 = vpop.f32.mrf.mxu0
    %v14672 = vadd.f32 %v14629, %v14671
    %v14673 = vpop.f32.mrf.mxu0
    %v14674 = vadd.f32 %v14631, %v14673
    %14675 = vdwg.mxu0
    %14676 = vmatprep.subr.bf16.mxu0 %v14365
    %14677 = vmatpush1.bf16.msra.mxu0 %v14364
    %14678 = vmatprep.subr.bf16.mxu0 %v14361
    %14679 = vmatpush1.bf16.msra.mxu0 %v14360
    %14680 = vmatprep.subr.bf16.mxu0 %v14357
    %14681 = vmatpush1.bf16.msra.mxu0 %v14356
    %14682 = vmatprep.subr.bf16.mxu0 %v14353
    %14683 = vmatpush1.bf16.msra.mxu0 %v14352
    %14684 = vmatprep.subr.bf16.mxu0 %v14349
    %14685 = vmatpush1.bf16.msra.mxu0 %v14348
    %14686 = vmatprep.subr.bf16.mxu0 %v14345
    %14687 = vmatpush1.bf16.msra.mxu0 %v14344
    %14688 = vmatprep.subr.bf16.mxu0 %v14341
    %14689 = vmatpush1.bf16.msra.mxu0 %v14340
    %14690 = vmatprep.subr.bf16.mxu0 %v14337
    %14691 = vmatpush1.bf16.msra.mxu0 %v14336
    %14692 = vmatprep.subr.bf16.mxu0 %v14397
    %14693 = vmatpush2.bf16.msra.mxu0 %v14396
    %14694 = vmatprep.subr.bf16.mxu0 %v14393
    %14695 = vmatpush2.bf16.msra.mxu0 %v14392
    %14696 = vmatprep.subr.bf16.mxu0 %v14389
    %14697 = vmatpush2.bf16.msra.mxu0 %v14388
    %14698 = vmatprep.subr.bf16.mxu0 %v14385
    %14699 = vmatpush2.bf16.msra.mxu0 %v14384
    %14700 = vmatprep.subr.bf16.mxu0 %v14381
    %14701 = vmatpush2.bf16.msra.mxu0 %v14380
    %14702 = vmatprep.subr.bf16.mxu0 %v14377
    %14703 = vmatpush2.bf16.msra.mxu0 %v14376
    %14704 = vmatprep.subr.bf16.mxu0 %v14373
    %14705 = vmatpush2.bf16.msra.mxu0 %v14372
    %14706 = vmatprep.subr.bf16.mxu0 %v14369
    %14707 = vmatpush2.bf16.msra.mxu0 %v14368
    %14708 = vmatprep.mubr.bf16.mxu0 %v13780
    %14709 = vmatmul.mubr.bf16.gmra.mxu0 %v13779
    %v14710 = vpop.f32.mrf.mxu0
    %v14711 = vadd.f32 %v13945, %v14710
    %v14712 = vpop.f32.mrf.mxu0
    %v14713 = vadd.f32 %v13949, %v14712
    %v14714 = vpop.f32.mrf.mxu0
    %v14715 = vadd.f32 %v13945, %v14714
    %v14716 = vpop.f32.mrf.mxu0
    %v14717 = vadd.f32 %v13949, %v14716
    %14718 = vdwg.mxu0
    %14719 = vmatprep.subr.bf16.mxu0 %v14429
    %14720 = vmatpush1.bf16.msra.mxu0 %v14428
    %14721 = vmatprep.subr.bf16.mxu0 %v14425
    %14722 = vmatpush1.bf16.msra.mxu0 %v14424
    %14723 = vmatprep.subr.bf16.mxu0 %v14421
    %14724 = vmatpush1.bf16.msra.mxu0 %v14420
    %14725 = vmatprep.subr.bf16.mxu0 %v14417
    %14726 = vmatpush1.bf16.msra.mxu0 %v14416
    %14727 = vmatprep.subr.bf16.mxu0 %v14413
    %14728 = vmatpush1.bf16.msra.mxu0 %v14412
    %14729 = vmatprep.subr.bf16.mxu0 %v14409
    %14730 = vmatpush1.bf16.msra.mxu0 %v14408
    %14731 = vmatprep.subr.bf16.mxu0 %v14405
    %14732 = vmatpush1.bf16.msra.mxu0 %v14404
    %14733 = vmatprep.subr.bf16.mxu0 %v14401
    %14734 = vmatpush1.bf16.msra.mxu0 %v14400
    %14735 = vmatprep.subr.bf16.mxu0 %v14461
    %14736 = vmatpush2.bf16.msra.mxu0 %v14460
    %14737 = vmatprep.subr.bf16.mxu0 %v14457
    %14738 = vmatpush2.bf16.msra.mxu0 %v14456
    %14739 = vmatprep.subr.bf16.mxu0 %v14453
    %14740 = vmatpush2.bf16.msra.mxu0 %v14452
    %14741 = vmatprep.subr.bf16.mxu0 %v14449
    %14742 = vmatpush2.bf16.msra.mxu0 %v14448
    %14743 = vmatprep.subr.bf16.mxu0 %v14445
    %14744 = vmatpush2.bf16.msra.mxu0 %v14444
    %14745 = vmatprep.subr.bf16.mxu0 %v14441
    %14746 = vmatpush2.bf16.msra.mxu0 %v14440
    %14747 = vmatprep.subr.bf16.mxu0 %v14437
    %14748 = vmatpush2.bf16.msra.mxu0 %v14436
    %14749 = vmatprep.subr.bf16.mxu0 %v14433
    %14750 = vmatpush2.bf16.msra.mxu0 %v14432
    %14751 = vmatprep.mubr.bf16.mxu0 %v13782
    %14752 = vmatmul.mubr.bf16.gmra.mxu0 %v13781
    %v14753 = vpop.f32.mrf.mxu0
    %v14754 = vadd.f32 %v14711, %v14753
    %v14755 = vpop.f32.mrf.mxu0
    %v14756 = vadd.f32 %v14713, %v14755
    %v14757 = vpop.f32.mrf.mxu0
    %v14758 = vadd.f32 %v14715, %v14757
    %v14759 = vpop.f32.mrf.mxu0
    %v14760 = vadd.f32 %v14717, %v14759
    %14761 = vdwg.mxu0
    %14762 = vst [vmem:[%s9] sm:$0xff] %v14668
    %14763 = vst [vmem:[%s9 + $0x8] sm:$0xff] %v14670
    %14764 = vst [vmem:[%s9 + $0x10] sm:$0xff] %v14754
    %14765 = vst [vmem:[%s9 + $0x18] sm:$0xff] %v14756
    %14766 = vst [vmem:[%s9 + $0x20] sm:$0xff] %v14672
    %14767 = vst [vmem:[%s9 + $0x28] sm:$0xff] %v14674
    %14768 = vst [vmem:[%s9 + $0x30] sm:$0xff] %v14758
    %14769 = vst [vmem:[%s9 + $0x38] sm:$0xff] %v14760
    // Predicated region
    $region70: #{mesh_decoder_forward.1} parent=1 // pred_check
      _
    $region71: #{mesh_decoder_forward.1} parent=1 // pred_check_branch
      %14771 = sbr.rel (0) target = $region73
    $region72: #{mesh_decoder_forward.1} parent=1 // pred_region
      _
    $region73: #{mesh_decoder_forward.1} parent=1 // pred_fallthru
      _
    // Predicated region
    $region74: #{mesh_decoder_forward.1} parent=1 // pred_check
      _
    $region75: #{mesh_decoder_forward.1} parent=1 // pred_check_branch
      %14773 = sbr.rel (0) target = $region77
    $region76: #{mesh_decoder_forward.1} parent=1 // pred_region
      _
    $region77: #{mesh_decoder_forward.1} parent=1 // pred_fallthru
      _
    %14774 = vsyncpa [#allocation3], 1
    %14775 = vsyncpa [#allocation5], 1
    %14776 = vsyncpa [#allocation8], 1
    %14777 = vsyncpa [#allocation11], 1
    %14778 = vsyncpa [#allocation14], 1

</llo_original>
